<compile_context>
chip_gen: v7x
topology: tpu7x:2x2x1
jax: 0.10.0
libtpu: 0.0.40
codegen_flags: <defaults>
</compile_context>

<pallas_src>
import functools

import jax
import jax.numpy as jnp
from jax import lax
from jax.experimental import pallas as pl
from jax.experimental.pallas import tpu as pltpu


# ------------------------------- fused kernel -------------------------------

def _fused_block_kernel(xp_ref, s1_ref, b1_ref, w1_ref, s2_ref, b2_ref,
                        w2_ref, s3_ref, b3_ref, w3_ref, sds_ref, bds_ref,
                        wds_ref, o_ref, *, cin, width, ho, wo):
    """One batch sample of the whole pre-act bottleneck block.

    xp_ref : (1, 4, cin, ho+1, wo+1)  parity-decomposed, top/left zero-padded x
             xp[0, 2*rp+cp, c, 1+i, 1+j] = x[c, 2i+rp, 2j+cp]
    o_ref  : (1, out_ch, ho, wo)      output, NCHW layout
    Weights are pre-shaped so the kernel only integer-indexes leading dims and
    broadcasts (no in-kernel reshapes).
    """
    # conv2 zero-padding mask: row 0 / col 0 of each (ho+1, wo+1) parity plane
    # must be exactly 0 *after* norm2/act2 (conv padding pads conv2's input).
    ri = lax.broadcasted_iota(jnp.int32, (1, ho + 1, wo + 1), 1)
    ci = lax.broadcasted_iota(jnp.int32, (1, ho + 1, wo + 1), 2)
    border = ((ri > 0) & (ci > 0)).astype(jnp.float32)

    s1 = s1_ref[...]
    b1 = b1_ref[...]
    s2 = s2_ref[...]
    b2 = b2_ref[...]

    # ---- norm1 -> act1 -> conv1(1x1) -> norm2 -> act2, per parity plane ----
    a2 = []
    for p_idx in range(4):
        xpp = xp_ref[0, p_idx]                        # (cin, ho+1, wo+1)
        a1 = jnp.maximum(xpp * s1 + b1, 0.0)
        z1 = w1_ref[0] * a1[0:1]                      # (width, ho+1, wo+1)
        for c in range(1, cin):
            z1 = z1 + w1_ref[c] * a1[c:c + 1]
        a2.append(jnp.maximum(z1 * s2 + b2, 0.0) * border)

    # ---- conv2: 3x3 / stride 2 / pad 1 as 9 shifted taps on parity planes --
    z2 = None
    for kh in range(3):
        rp = 0 if kh == 1 else 1                      # row parity used by tap
        dr = -1 if kh == 0 else 0                     # row shift of the window
        for kw in range(3):
            cp = 0 if kw == 1 else 1
            dc = -1 if kw == 0 else 0
            win = a2[2 * rp + cp][:, 1 + dr:1 + dr + ho, 1 + dc:1 + dc + wo]
            k = kh * 3 + kw
            for c in range(width):
                t = w2_ref[k, c] * win[c:c + 1]       # (width,1,1)*(1,ho,wo)
                z2 = t if z2 is None else z2 + t      # (width, ho, wo)

    # ---- norm3 -> act3 -> conv3(1x1) ----------------------------------------
    a3 = jnp.maximum(z2 * s3_ref[...] + b3_ref[...], 0.0)
    z3 = w3_ref[0] * a3[0:1]                          # (out_ch, ho, wo)
    for c in range(1, width):
        z3 = z3 + w3_ref[c] * a3[c:c + 1]

    # ---- downsample path: norm_ds + 1x1 stride-2 conv (even/even plane) ----
    xee = xp_ref[0, 0][:, 1:, 1:]                     # (cin, ho, wo) = x[:, ::2, ::2]
    rn = xee * sds_ref[...] + bds_ref[...]
    res = wds_ref[0] * rn[0:1]                        # (out_ch, ho, wo)
    for c in range(1, cin):
        res = res + wds_ref[c] * rn[c:c + 1]

    o_ref[0] = z3 + res


# --------------------------- block forward (wrapper) ------------------------

def preact_bottleneck_forward(x_nchw, p, *, stride):
    # TODO(synk): stride=1 / identity-residual variant (no parity decomposition
    # needed) and grouped 3x3 conv (groups > 1) are not implemented in this
    # fused kernel; this script instantiates the module with stride=2, groups=1.
    assert stride == 2 and p["w_ds"] is not None
    N, cin, H, W = x_nchw.shape
    assert H % 2 == 0 and W % 2 == 0
    ho, wo = H // 2, W // 2
    width = p["w1"].shape[1]
    out_ch = p["w3"].shape[1]

    x = x_nchw.astype(jnp.float32)
    # Single wrapper-side rearrangement: stride-2 space-to-depth into the four
    # (row, col) parity planes, plus a 1-row/1-col zero pad at the top/left
    # (the only padding a 3x3 / stride-2 / pad-1 conv on even H, W needs).
    xp = x.reshape(N, cin, ho, 2, wo, 2).transpose(0, 3, 5, 1, 2, 4)
    xp = xp.reshape(N, 4, cin, ho, wo)
    xp = jnp.pad(xp, ((0, 0), (0, 0), (0, 0), (1, 0), (1, 0)))

    # Parameters pre-shaped so the kernel only integer-indexes leading dims
    # and broadcasts (no in-kernel reshapes).
    s1 = p["scale1"].reshape(cin, 1, 1)
    b1 = p["shift1"].reshape(cin, 1, 1)
    s2 = p["scale2"].reshape(width, 1, 1)
    b2 = p["shift2"].reshape(width, 1, 1)
    s3 = p["scale3"].reshape(width, 1, 1)
    b3 = p["shift3"].reshape(width, 1, 1)
    sds = p["scale_ds"].reshape(cin, 1, 1)
    bds = p["shift_ds"].reshape(cin, 1, 1)
    w1b = p["w1"].reshape(cin, width, 1, 1)           # [c_in, c_out, 1, 1]
    w2b = p["w2"].reshape(9, width, width, 1, 1)      # [kh*3+kw, c_in, c_out, 1, 1]
    w3b = p["w3"].reshape(width, out_ch, 1, 1)
    wdsb = p["w_ds"].reshape(cin, out_ch, 1, 1)

    kernel = functools.partial(_fused_block_kernel,
                               cin=cin, width=width, ho=ho, wo=wo)
    c3 = lambda n: (0, 0, 0)
    c4 = lambda n: (0, 0, 0, 0)
    c5 = lambda n: (0, 0, 0, 0, 0)

    return pl.pallas_call(
        kernel,
        out_shape=jax.ShapeDtypeStruct((N, out_ch, ho, wo), jnp.float32),
        grid=(N,),
        in_specs=[
            pl.BlockSpec((1, 4, cin, ho + 1, wo + 1),
                         lambda n: (n, 0, 0, 0, 0)),       # parity planes of x
            pl.BlockSpec((cin, 1, 1), c3),                 # scale1
            pl.BlockSpec((cin, 1, 1), c3),                 # shift1
            pl.BlockSpec((cin, width, 1, 1), c4),          # w1
            pl.BlockSpec((width, 1, 1), c3),               # scale2
            pl.BlockSpec((width, 1, 1), c3),               # shift2
            pl.BlockSpec((9, width, width, 1, 1), c5),     # w2
            pl.BlockSpec((width, 1, 1), c3),               # scale3
            pl.BlockSpec((width, 1, 1), c3),               # shift3
            pl.BlockSpec((width, out_ch, 1, 1), c4),       # w3
            pl.BlockSpec((cin, 1, 1), c3),                 # scale_ds
            pl.BlockSpec((cin, 1, 1), c3),                 # shift_ds
            pl.BlockSpec((cin, out_ch, 1, 1), c4),         # w_ds
        ],
        out_specs=pl.BlockSpec((1, out_ch, ho, wo), lambda n: (n, 0, 0, 0)),
        compiler_params=pltpu.CompilerParams(
            dimension_semantics=("parallel",)),
    )(xp, s1, b1, w1b, s2, b2, w2b, s3, b3, w3b, sds, bds, wdsb)


# ------------------------------ parameter init ------------------------------

def init_params(key, in_planes, planes, stride, groups=1, width_factor=1.0):
    # TODO(synk): grouped 3x3 conv (groups > 1) would need a block-diagonal
    # contraction; this script instantiates the module with groups=1.
    assert groups == 1
    expansion = 4
    width = int(planes * width_factor) * groups
    out_ch = planes * expansion
    eps = 1e-5
    keys = jax.random.split(key, 20)
    ki = iter(range(20))

    def bn_affine(c):
        gamma = jax.random.uniform(keys[next(ki)], (c,), jnp.float32, 0.5, 1.5)
        beta = 0.1 * jax.random.normal(keys[next(ki)], (c,), jnp.float32)
        mean = 0.1 * jax.random.normal(keys[next(ki)], (c,), jnp.float32)
        var = jax.random.uniform(keys[next(ki)], (c,), jnp.float32, 0.5, 1.5)
        scale = gamma * lax.rsqrt(var + eps)
        shift = beta - mean * scale
        return scale, shift

    p = {}
    p["scale1"], p["shift1"] = bn_affine(in_planes)
    p["scale2"], p["shift2"] = bn_affine(width)
    p["scale3"], p["shift3"] = bn_affine(width)

    p["w1"] = (jnp.sqrt(2.0 / in_planes) *
               jax.random.normal(keys[next(ki)], (in_planes, width), jnp.float32))
    p["w2"] = (jnp.sqrt(2.0 / (9 * width)) *
               jax.random.normal(keys[next(ki)], (3, 3, width, width), jnp.float32))
    p["w3"] = (jnp.sqrt(2.0 / width) *
               jax.random.normal(keys[next(ki)], (width, out_ch), jnp.float32))

    if stride != 1 or in_planes != out_ch:
        p["scale_ds"], p["shift_ds"] = bn_affine(in_planes)
        p["w_ds"] = (jnp.sqrt(2.0 / in_planes) *
                     jax.random.normal(keys[next(ki)], (in_planes, out_ch),
                                       jnp.float32))
    else:
        p["scale_ds"] = p["shift_ds"] = p["w_ds"] = None
    return p


# ----------------------------- pure-JAX reference ---------------------------

def reference_forward(x_nchw, p, *, stride):
    s = stride
    x = jnp.transpose(x_nchw, (0, 2, 3, 1)).astype(jnp.float32)  # NHWC

    def bn(z, scale, shift):
        return z * scale.reshape(1, 1, 1, -1) + shift.reshape(1, 1, 1, -1)

    z = jnp.maximum(bn(x, p["scale1"], p["shift1"]), 0.0)
    z = jnp.einsum("nhwc,cd->nhwd", z, p["w1"])
    z = jnp.maximum(bn(z, p["scale2"], p["shift2"]), 0.0)
    z = lax.conv_general_dilated(z, p["w2"], (s, s), ((1, 1), (1, 1)),
                                 dimension_numbers=("NHWC", "HWIO", "NHWC"))
    z = jnp.maximum(bn(z, p["scale3"], p["shift3"]), 0.0)
    z = jnp.einsum("nhwc,cd->nhwd", z, p["w3"])
    if p["w_ds"] is not None:
        r = bn(x, p["scale_ds"], p["shift_ds"])
        r = jnp.einsum("nhwc,cd->nhwd", r[:, ::s, ::s, :], p["w_ds"])
    else:
        r = x
    return jnp.transpose(z + r, (0, 3, 1, 2))  # back to NCHW


# ----------------------------------- main -----------------------------------

if __name__ == "__main__":
    key = jax.random.PRNGKey(0)
    k_x, k_p = jax.random.split(key)

    N, in_planes, H, W = 2, 8, 16, 16
    planes, stride = 4, 2

    x = jax.random.normal(k_x, (N, in_planes, H, W), jnp.float32)  # NCHW input
    params = init_params(k_p, in_planes, planes, stride)

    fwd = jax.jit(functools.partial(preact_bottleneck_forward, stride=stride))
    out = jax.block_until_ready(fwd(x, params))
    ref = jax.block_until_ready(reference_forward(x, params, stride=stride))

    assert out.shape == (N, planes * 4, H // stride, W // stride), out.shape
    max_err = float(jnp.max(jnp.abs(out - ref)))
    assert max_err < 5e-2, f"max abs err {max_err}"
    print("KERNEL_OK")
</pallas_src>

<mosaic_0001>
module attributes {stable_mosaic.version = 11 : i64} {
  func.func @_fused_block_kernel(%arg0: i32, %arg1: memref<1x4x8x9x9xf32, #tpu.memory_space<vmem>>, %arg2: memref<8x1x1xf32, #tpu.memory_space<vmem>>, %arg3: memref<8x1x1xf32, #tpu.memory_space<vmem>>, %arg4: memref<8x4x1x1xf32, #tpu.memory_space<vmem>>, %arg5: memref<4x1x1xf32, #tpu.memory_space<vmem>>, %arg6: memref<4x1x1xf32, #tpu.memory_space<vmem>>, %arg7: memref<9x4x4x1x1xf32, #tpu.memory_space<vmem>>, %arg8: memref<4x1x1xf32, #tpu.memory_space<vmem>>, %arg9: memref<4x1x1xf32, #tpu.memory_space<vmem>>, %arg10: memref<4x16x1x1xf32, #tpu.memory_space<vmem>>, %arg11: memref<8x1x1xf32, #tpu.memory_space<vmem>>, %arg12: memref<8x1x1xf32, #tpu.memory_space<vmem>>, %arg13: memref<8x16x1x1xf32, #tpu.memory_space<vmem>>, %arg14: memref<1x16x8x8xf32, #tpu.memory_space<vmem>>) attributes {dimension_semantics = [#tpu.dimension_semantics<parallel>], iteration_bounds = array<i64: 2>, scalar_prefetch = 0 : i64, scratch_operands = 0 : i64, tpu.core_type = #tpu.core_type<tc>, window_params = [{transform_indices = @transform_0, window_bounds = array<i64: 1, 4, 8, 9, 9>}, {pipeline_mode = #tpu.pipeline_mode<synchronous>, transform_indices = @transform_1, window_bounds = array<i64: 8, 1, 1>}, {pipeline_mode = #tpu.pipeline_mode<synchronous>, transform_indices = @transform_2, window_bounds = array<i64: 8, 1, 1>}, {pipeline_mode = #tpu.pipeline_mode<synchronous>, transform_indices = @transform_3, window_bounds = array<i64: 8, 4, 1, 1>}, {pipeline_mode = #tpu.pipeline_mode<synchronous>, transform_indices = @transform_4, window_bounds = array<i64: 4, 1, 1>}, {pipeline_mode = #tpu.pipeline_mode<synchronous>, transform_indices = @transform_5, window_bounds = array<i64: 4, 1, 1>}, {pipeline_mode = #tpu.pipeline_mode<synchronous>, transform_indices = @transform_6, window_bounds = array<i64: 9, 4, 4, 1, 1>}, {pipeline_mode = #tpu.pipeline_mode<synchronous>, transform_indices = @transform_7, window_bounds = array<i64: 4, 1, 1>}, {pipeline_mode = #tpu.pipeline_mode<synchronous>, transform_indices = @transform_8, window_bounds = array<i64: 4, 1, 1>}, {pipeline_mode = #tpu.pipeline_mode<synchronous>, transform_indices = @transform_9, window_bounds = array<i64: 4, 16, 1, 1>}, {pipeline_mode = #tpu.pipeline_mode<synchronous>, transform_indices = @transform_10, window_bounds = array<i64: 8, 1, 1>}, {pipeline_mode = #tpu.pipeline_mode<synchronous>, transform_indices = @transform_11, window_bounds = array<i64: 8, 1, 1>}, {pipeline_mode = #tpu.pipeline_mode<synchronous>, transform_indices = @transform_12, window_bounds = array<i64: 8, 16, 1, 1>}, {transform_indices = @transform_13, window_bounds = array<i64: 1, 16, 8, 8>}]} {
    %0 = tpu.iota {dimensions = array<i32: 1>} : vector<1x9x9xi32>
    %1 = tpu.iota {dimensions = array<i32: 2>} : vector<1x9x9xi32>
    %c0_i32 = arith.constant 0 : i32
    %2 = vector.broadcast %c0_i32 : i32 to vector<1x9x9xi32>
    %3 = arith.cmpi sgt, %0, %2 : vector<1x9x9xi32>
    %c0_i32_0 = arith.constant 0 : i32
    %4 = vector.broadcast %c0_i32_0 : i32 to vector<1x9x9xi32>
    %5 = arith.cmpi sgt, %1, %4 : vector<1x9x9xi32>
    %6 = arith.andi %3, %5 : vector<1x9x9xi1>
    %7 = arith.extui %6 : vector<1x9x9xi1> to vector<1x9x9xi32>
    %8 = arith.sitofp %7 : vector<1x9x9xi32> to vector<1x9x9xf32>
    %c0 = arith.constant 0 : index
    %c0_1 = arith.constant 0 : index
    %c0_2 = arith.constant 0 : index
    %9 = vector.load %arg2[%c0, %c0_1, %c0_2] : memref<8x1x1xf32, #tpu.memory_space<vmem>>, vector<8x1x1xf32>
    %c0_3 = arith.constant 0 : index
    %c0_4 = arith.constant 0 : index
    %c0_5 = arith.constant 0 : index
    %10 = vector.load %arg3[%c0_3, %c0_4, %c0_5] : memref<8x1x1xf32, #tpu.memory_space<vmem>>, vector<8x1x1xf32>
    %c0_6 = arith.constant 0 : index
    %c0_7 = arith.constant 0 : index
    %c0_8 = arith.constant 0 : index
    %11 = vector.load %arg5[%c0_6, %c0_7, %c0_8] : memref<4x1x1xf32, #tpu.memory_space<vmem>>, vector<4x1x1xf32>
    %c0_9 = arith.constant 0 : index
    %c0_10 = arith.constant 0 : index
    %c0_11 = arith.constant 0 : index
    %12 = vector.load %arg6[%c0_9, %c0_10, %c0_11] : memref<4x1x1xf32, #tpu.memory_space<vmem>>, vector<4x1x1xf32>
    %c0_12 = arith.constant 0 : index
    %c0_13 = arith.constant 0 : index
    %c0_14 = arith.constant 0 : index
    %c0_15 = arith.constant 0 : index
    %c0_16 = arith.constant 0 : index
    %13 = vector.load %arg1[%c0_12, %c0_13, %c0_14, %c0_15, %c0_16] : memref<1x4x8x9x9xf32, #tpu.memory_space<vmem>>, vector<1x1x8x9x9xf32>
    %14 = vector.shape_cast %13 : vector<1x1x8x9x9xf32> to vector<8x9x9xf32>
    %15 = vector.broadcast %9 : vector<8x1x1xf32> to vector<8x9x9xf32>
    %16 = arith.mulf %14, %15 : vector<8x9x9xf32>
    %17 = vector.broadcast %10 : vector<8x1x1xf32> to vector<8x9x9xf32>
    %18 = arith.addf %16, %17 : vector<8x9x9xf32>
    %cst = arith.constant 0.000000e+00 : f32
    %19 = vector.broadcast %cst : f32 to vector<8x9x9xf32>
    %20 = arith.maximumf %18, %19 : vector<8x9x9xf32>
    %c0_17 = arith.constant 0 : index
    %c0_18 = arith.constant 0 : index
    %c0_19 = arith.constant 0 : index
    %c0_20 = arith.constant 0 : index
    %21 = vector.load %arg4[%c0_17, %c0_18, %c0_19, %c0_20] : memref<8x4x1x1xf32, #tpu.memory_space<vmem>>, vector<1x4x1x1xf32>
    %22 = vector.shape_cast %21 : vector<1x4x1x1xf32> to vector<4x1x1xf32>
    %23 = vector.extract_strided_slice %20 {offsets = [0, 0, 0], sizes = [1, 9, 9], strides = [1, 1, 1]} : vector<8x9x9xf32> to vector<1x9x9xf32>
    %24 = vector.broadcast %22 : vector<4x1x1xf32> to vector<4x9x9xf32>
    %25 = vector.broadcast %23 : vector<1x9x9xf32> to vector<4x9x9xf32>
    %26 = arith.mulf %24, %25 : vector<4x9x9xf32>
    %c1 = arith.constant 1 : index
    %c0_21 = arith.constant 0 : index
    %c0_22 = arith.constant 0 : index
    %c0_23 = arith.constant 0 : index
    %27 = vector.load %arg4[%c1, %c0_21, %c0_22, %c0_23] : memref<8x4x1x1xf32, #tpu.memory_space<vmem>>, vector<1x4x1x1xf32>
    %28 = vector.shape_cast %27 : vector<1x4x1x1xf32> to vector<4x1x1xf32>
    %29 = vector.extract_strided_slice %20 {offsets = [1, 0, 0], sizes = [1, 9, 9], strides = [1, 1, 1]} : vector<8x9x9xf32> to vector<1x9x9xf32>
    %30 = vector.broadcast %28 : vector<4x1x1xf32> to vector<4x9x9xf32>
    %31 = vector.broadcast %29 : vector<1x9x9xf32> to vector<4x9x9xf32>
    %32 = arith.mulf %30, %31 : vector<4x9x9xf32>
    %33 = arith.addf %26, %32 : vector<4x9x9xf32>
    %c2 = arith.constant 2 : index
    %c0_24 = arith.constant 0 : index
    %c0_25 = arith.constant 0 : index
    %c0_26 = arith.constant 0 : index
    %34 = vector.load %arg4[%c2, %c0_24, %c0_25, %c0_26] : memref<8x4x1x1xf32, #tpu.memory_space<vmem>>, vector<1x4x1x1xf32>
    %35 = vector.shape_cast %34 : vector<1x4x1x1xf32> to vector<4x1x1xf32>
    %36 = vector.extract_strided_slice %20 {offsets = [2, 0, 0], sizes = [1, 9, 9], strides = [1, 1, 1]} : vector<8x9x9xf32> to vector<1x9x9xf32>
    %37 = vector.broadcast %35 : vector<4x1x1xf32> to vector<4x9x9xf32>
    %38 = vector.broadcast %36 : vector<1x9x9xf32> to vector<4x9x9xf32>
    %39 = arith.mulf %37, %38 : vector<4x9x9xf32>
    %40 = arith.addf %33, %39 : vector<4x9x9xf32>
    %c3 = arith.constant 3 : index
    %c0_27 = arith.constant 0 : index
    %c0_28 = arith.constant 0 : index
    %c0_29 = arith.constant 0 : index
    %41 = vector.load %arg4[%c3, %c0_27, %c0_28, %c0_29] : memref<8x4x1x1xf32, #tpu.memory_space<vmem>>, vector<1x4x1x1xf32>
    %42 = vector.shape_cast %41 : vector<1x4x1x1xf32> to vector<4x1x1xf32>
    %43 = vector.extract_strided_slice %20 {offsets = [3, 0, 0], sizes = [1, 9, 9], strides = [1, 1, 1]} : vector<8x9x9xf32> to vector<1x9x9xf32>
    %44 = vector.broadcast %42 : vector<4x1x1xf32> to vector<4x9x9xf32>
    %45 = vector.broadcast %43 : vector<1x9x9xf32> to vector<4x9x9xf32>
    %46 = arith.mulf %44, %45 : vector<4x9x9xf32>
    %47 = arith.addf %40, %46 : vector<4x9x9xf32>
    %c4 = arith.constant 4 : index
    %c0_30 = arith.constant 0 : index
    %c0_31 = arith.constant 0 : index
    %c0_32 = arith.constant 0 : index
    %48 = vector.load %arg4[%c4, %c0_30, %c0_31, %c0_32] : memref<8x4x1x1xf32, #tpu.memory_space<vmem>>, vector<1x4x1x1xf32>
    %49 = vector.shape_cast %48 : vector<1x4x1x1xf32> to vector<4x1x1xf32>
    %50 = vector.extract_strided_slice %20 {offsets = [4, 0, 0], sizes = [1, 9, 9], strides = [1, 1, 1]} : vector<8x9x9xf32> to vector<1x9x9xf32>
    %51 = vector.broadcast %49 : vector<4x1x1xf32> to vector<4x9x9xf32>
    %52 = vector.broadcast %50 : vector<1x9x9xf32> to vector<4x9x9xf32>
    %53 = arith.mulf %51, %52 : vector<4x9x9xf32>
    %54 = arith.addf %47, %53 : vector<4x9x9xf32>
    %c5 = arith.constant 5 : index
    %c0_33 = arith.constant 0 : index
    %c0_34 = arith.constant 0 : index
    %c0_35 = arith.constant 0 : index
    %55 = vector.load %arg4[%c5, %c0_33, %c0_34, %c0_35] : memref<8x4x1x1xf32, #tpu.memory_space<vmem>>, vector<1x4x1x1xf32>
    %56 = vector.shape_cast %55 : vector<1x4x1x1xf32> to vector<4x1x1xf32>
    %57 = vector.extract_strided_slice %20 {offsets = [5, 0, 0], sizes = [1, 9, 9], strides = [1, 1, 1]} : vector<8x9x9xf32> to vector<1x9x9xf32>
    %58 = vector.broadcast %56 : vector<4x1x1xf32> to vector<4x9x9xf32>
    %59 = vector.broadcast %57 : vector<1x9x9xf32> to vector<4x9x9xf32>
    %60 = arith.mulf %58, %59 : vector<4x9x9xf32>
    %61 = arith.addf %54, %60 : vector<4x9x9xf32>
    %c6 = arith.constant 6 : index
    %c0_36 = arith.constant 0 : index
    %c0_37 = arith.constant 0 : index
    %c0_38 = arith.constant 0 : index
    %62 = vector.load %arg4[%c6, %c0_36, %c0_37, %c0_38] : memref<8x4x1x1xf32, #tpu.memory_space<vmem>>, vector<1x4x1x1xf32>
    %63 = vector.shape_cast %62 : vector<1x4x1x1xf32> to vector<4x1x1xf32>
    %64 = vector.extract_strided_slice %20 {offsets = [6, 0, 0], sizes = [1, 9, 9], strides = [1, 1, 1]} : vector<8x9x9xf32> to vector<1x9x9xf32>
    %65 = vector.broadcast %63 : vector<4x1x1xf32> to vector<4x9x9xf32>
    %66 = vector.broadcast %64 : vector<1x9x9xf32> to vector<4x9x9xf32>
    %67 = arith.mulf %65, %66 : vector<4x9x9xf32>
    %68 = arith.addf %61, %67 : vector<4x9x9xf32>
    %c7 = arith.constant 7 : index
    %c0_39 = arith.constant 0 : index
    %c0_40 = arith.constant 0 : index
    %c0_41 = arith.constant 0 : index
    %69 = vector.load %arg4[%c7, %c0_39, %c0_40, %c0_41] : memref<8x4x1x1xf32, #tpu.memory_space<vmem>>, vector<1x4x1x1xf32>
    %70 = vector.shape_cast %69 : vector<1x4x1x1xf32> to vector<4x1x1xf32>
    %71 = vector.extract_strided_slice %20 {offsets = [7, 0, 0], sizes = [1, 9, 9], strides = [1, 1, 1]} : vector<8x9x9xf32> to vector<1x9x9xf32>
    %72 = vector.broadcast %70 : vector<4x1x1xf32> to vector<4x9x9xf32>
    %73 = vector.broadcast %71 : vector<1x9x9xf32> to vector<4x9x9xf32>
    %74 = arith.mulf %72, %73 : vector<4x9x9xf32>
    %75 = arith.addf %68, %74 : vector<4x9x9xf32>
    %76 = vector.broadcast %11 : vector<4x1x1xf32> to vector<4x9x9xf32>
    %77 = arith.mulf %75, %76 : vector<4x9x9xf32>
    %78 = vector.broadcast %12 : vector<4x1x1xf32> to vector<4x9x9xf32>
    %79 = arith.addf %77, %78 : vector<4x9x9xf32>
    %cst_42 = arith.constant 0.000000e+00 : f32
    %80 = vector.broadcast %cst_42 : f32 to vector<4x9x9xf32>
    %81 = arith.maximumf %79, %80 : vector<4x9x9xf32>
    %82 = vector.broadcast %8 : vector<1x9x9xf32> to vector<4x9x9xf32>
    %83 = arith.mulf %81, %82 : vector<4x9x9xf32>
    %c0_43 = arith.constant 0 : index
    %c1_44 = arith.constant 1 : index
    %c0_45 = arith.constant 0 : index
    %c0_46 = arith.constant 0 : index
    %c0_47 = arith.constant 0 : index
    %84 = vector.load %arg1[%c0_43, %c1_44, %c0_45, %c0_46, %c0_47] : memref<1x4x8x9x9xf32, #tpu.memory_space<vmem>>, vector<1x1x8x9x9xf32>
    %85 = vector.shape_cast %84 : vector<1x1x8x9x9xf32> to vector<8x9x9xf32>
    %86 = vector.broadcast %9 : vector<8x1x1xf32> to vector<8x9x9xf32>
    %87 = arith.mulf %85, %86 : vector<8x9x9xf32>
    %88 = vector.broadcast %10 : vector<8x1x1xf32> to vector<8x9x9xf32>
    %89 = arith.addf %87, %88 : vector<8x9x9xf32>
    %cst_48 = arith.constant 0.000000e+00 : f32
    %90 = vector.broadcast %cst_48 : f32 to vector<8x9x9xf32>
    %91 = arith.maximumf %89, %90 : vector<8x9x9xf32>
    %c0_49 = arith.constant 0 : index
    %c0_50 = arith.constant 0 : index
    %c0_51 = arith.constant 0 : index
    %c0_52 = arith.constant 0 : index
    %92 = vector.load %arg4[%c0_49, %c0_50, %c0_51, %c0_52] : memref<8x4x1x1xf32, #tpu.memory_space<vmem>>, vector<1x4x1x1xf32>
    %93 = vector.shape_cast %92 : vector<1x4x1x1xf32> to vector<4x1x1xf32>
    %94 = vector.extract_strided_slice %91 {offsets = [0, 0, 0], sizes = [1, 9, 9], strides = [1, 1, 1]} : vector<8x9x9xf32> to vector<1x9x9xf32>
    %95 = vector.broadcast %93 : vector<4x1x1xf32> to vector<4x9x9xf32>
    %96 = vector.broadcast %94 : vector<1x9x9xf32> to vector<4x9x9xf32>
    %97 = arith.mulf %95, %96 : vector<4x9x9xf32>
    %c1_53 = arith.constant 1 : index
    %c0_54 = arith.constant 0 : index
    %c0_55 = arith.constant 0 : index
    %c0_56 = arith.constant 0 : index
    %98 = vector.load %arg4[%c1_53, %c0_54, %c0_55, %c0_56] : memref<8x4x1x1xf32, #tpu.memory_space<vmem>>, vector<1x4x1x1xf32>
    %99 = vector.shape_cast %98 : vector<1x4x1x1xf32> to vector<4x1x1xf32>
    %100 = vector.extract_strided_slice %91 {offsets = [1, 0, 0], sizes = [1, 9, 9], strides = [1, 1, 1]} : vector<8x9x9xf32> to vector<1x9x9xf32>
    %101 = vector.broadcast %99 : vector<4x1x1xf32> to vector<4x9x9xf32>
    %102 = vector.broadcast %100 : vector<1x9x9xf32> to vector<4x9x9xf32>
    %103 = arith.mulf %101, %102 : vector<4x9x9xf32>
    %104 = arith.addf %97, %103 : vector<4x9x9xf32>
    %c2_57 = arith.constant 2 : index
    %c0_58 = arith.constant 0 : index
    %c0_59 = arith.constant 0 : index
    %c0_60 = arith.constant 0 : index
    %105 = vector.load %arg4[%c2_57, %c0_58, %c0_59, %c0_60] : memref<8x4x1x1xf32, #tpu.memory_space<vmem>>, vector<1x4x1x1xf32>
    %106 = vector.shape_cast %105 : vector<1x4x1x1xf32> to vector<4x1x1xf32>
    %107 = vector.extract_strided_slice %91 {offsets = [2, 0, 0], sizes = [1, 9, 9], strides = [1, 1, 1]} : vector<8x9x9xf32> to vector<1x9x9xf32>
    %108 = vector.broadcast %106 : vector<4x1x1xf32> to vector<4x9x9xf32>
    %109 = vector.broadcast %107 : vector<1x9x9xf32> to vector<4x9x9xf32>
    %110 = arith.mulf %108, %109 : vector<4x9x9xf32>
    %111 = arith.addf %104, %110 : vector<4x9x9xf32>
    %c3_61 = arith.constant 3 : index
    %c0_62 = arith.constant 0 : index
    %c0_63 = arith.constant 0 : index
    %c0_64 = arith.constant 0 : index
    %112 = vector.load %arg4[%c3_61, %c0_62, %c0_63, %c0_64] : memref<8x4x1x1xf32, #tpu.memory_space<vmem>>, vector<1x4x1x1xf32>
    %113 = vector.shape_cast %112 : vector<1x4x1x1xf32> to vector<4x1x1xf32>
    %114 = vector.extract_strided_slice %91 {offsets = [3, 0, 0], sizes = [1, 9, 9], strides = [1, 1, 1]} : vector<8x9x9xf32> to vector<1x9x9xf32>
    %115 = vector.broadcast %113 : vector<4x1x1xf32> to vector<4x9x9xf32>
    %116 = vector.broadcast %114 : vector<1x9x9xf32> to vector<4x9x9xf32>
    %117 = arith.mulf %115, %116 : vector<4x9x9xf32>
    %118 = arith.addf %111, %117 : vector<4x9x9xf32>
    %c4_65 = arith.constant 4 : index
    %c0_66 = arith.constant 0 : index
    %c0_67 = arith.constant 0 : index
    %c0_68 = arith.constant 0 : index
    %119 = vector.load %arg4[%c4_65, %c0_66, %c0_67, %c0_68] : memref<8x4x1x1xf32, #tpu.memory_space<vmem>>, vector<1x4x1x1xf32>
    %120 = vector.shape_cast %119 : vector<1x4x1x1xf32> to vector<4x1x1xf32>
    %121 = vector.extract_strided_slice %91 {offsets = [4, 0, 0], sizes = [1, 9, 9], strides = [1, 1, 1]} : vector<8x9x9xf32> to vector<1x9x9xf32>
    %122 = vector.broadcast %120 : vector<4x1x1xf32> to vector<4x9x9xf32>
    %123 = vector.broadcast %121 : vector<1x9x9xf32> to vector<4x9x9xf32>
    %124 = arith.mulf %122, %123 : vector<4x9x9xf32>
    %125 = arith.addf %118, %124 : vector<4x9x9xf32>
    %c5_69 = arith.constant 5 : index
    %c0_70 = arith.constant 0 : index
    %c0_71 = arith.constant 0 : index
    %c0_72 = arith.constant 0 : index
    %126 = vector.load %arg4[%c5_69, %c0_70, %c0_71, %c0_72] : memref<8x4x1x1xf32, #tpu.memory_space<vmem>>, vector<1x4x1x1xf32>
    %127 = vector.shape_cast %126 : vector<1x4x1x1xf32> to vector<4x1x1xf32>
    %128 = vector.extract_strided_slice %91 {offsets = [5, 0, 0], sizes = [1, 9, 9], strides = [1, 1, 1]} : vector<8x9x9xf32> to vector<1x9x9xf32>
    %129 = vector.broadcast %127 : vector<4x1x1xf32> to vector<4x9x9xf32>
    %130 = vector.broadcast %128 : vector<1x9x9xf32> to vector<4x9x9xf32>
    %131 = arith.mulf %129, %130 : vector<4x9x9xf32>
    %132 = arith.addf %125, %131 : vector<4x9x9xf32>
    %c6_73 = arith.constant 6 : index
    %c0_74 = arith.constant 0 : index
    %c0_75 = arith.constant 0 : index
    %c0_76 = arith.constant 0 : index
    %133 = vector.load %arg4[%c6_73, %c0_74, %c0_75, %c0_76] : memref<8x4x1x1xf32, #tpu.memory_space<vmem>>, vector<1x4x1x1xf32>
    %134 = vector.shape_cast %133 : vector<1x4x1x1xf32> to vector<4x1x1xf32>
    %135 = vector.extract_strided_slice %91 {offsets = [6, 0, 0], sizes = [1, 9, 9], strides = [1, 1, 1]} : vector<8x9x9xf32> to vector<1x9x9xf32>
    %136 = vector.broadcast %134 : vector<4x1x1xf32> to vector<4x9x9xf32>
    %137 = vector.broadcast %135 : vector<1x9x9xf32> to vector<4x9x9xf32>
    %138 = arith.mulf %136, %137 : vector<4x9x9xf32>
    %139 = arith.addf %132, %138 : vector<4x9x9xf32>
    %c7_77 = arith.constant 7 : index
    %c0_78 = arith.constant 0 : index
    %c0_79 = arith.constant 0 : index
    %c0_80 = arith.constant 0 : index
    %140 = vector.load %arg4[%c7_77, %c0_78, %c0_79, %c0_80] : memref<8x4x1x1xf32, #tpu.memory_space<vmem>>, vector<1x4x1x1xf32>
    %141 = vector.shape_cast %140 : vector<1x4x1x1xf32> to vector<4x1x1xf32>
    %142 = vector.extract_strided_slice %91 {offsets = [7, 0, 0], sizes = [1, 9, 9], strides = [1, 1, 1]} : vector<8x9x9xf32> to vector<1x9x9xf32>
    %143 = vector.broadcast %141 : vector<4x1x1xf32> to vector<4x9x9xf32>
    %144 = vector.broadcast %142 : vector<1x9x9xf32> to vector<4x9x9xf32>
    %145 = arith.mulf %143, %144 : vector<4x9x9xf32>
    %146 = arith.addf %139, %145 : vector<4x9x9xf32>
    %147 = vector.broadcast %11 : vector<4x1x1xf32> to vector<4x9x9xf32>
    %148 = arith.mulf %146, %147 : vector<4x9x9xf32>
    %149 = vector.broadcast %12 : vector<4x1x1xf32> to vector<4x9x9xf32>
    %150 = arith.addf %148, %149 : vector<4x9x9xf32>
    %cst_81 = arith.constant 0.000000e+00 : f32
    %151 = vector.broadcast %cst_81 : f32 to vector<4x9x9xf32>
    %152 = arith.maximumf %150, %151 : vector<4x9x9xf32>
    %153 = vector.broadcast %8 : vector<1x9x9xf32> to vector<4x9x9xf32>
    %154 = arith.mulf %152, %153 : vector<4x9x9xf32>
    %c0_82 = arith.constant 0 : index
    %c2_83 = arith.constant 2 : index
    %c0_84 = arith.constant 0 : index
    %c0_85 = arith.constant 0 : index
    %c0_86 = arith.constant 0 : index
    %155 = vector.load %arg1[%c0_82, %c2_83, %c0_84, %c0_85, %c0_86] : memref<1x4x8x9x9xf32, #tpu.memory_space<vmem>>, vector<1x1x8x9x9xf32>
    %156 = vector.shape_cast %155 : vector<1x1x8x9x9xf32> to vector<8x9x9xf32>
    %157 = vector.broadcast %9 : vector<8x1x1xf32> to vector<8x9x9xf32>
    %158 = arith.mulf %156, %157 : vector<8x9x9xf32>
    %159 = vector.broadcast %10 : vector<8x1x1xf32> to vector<8x9x9xf32>
    %160 = arith.addf %158, %159 : vector<8x9x9xf32>
    %cst_87 = arith.constant 0.000000e+00 : f32
    %161 = vector.broadcast %cst_87 : f32 to vector<8x9x9xf32>
    %162 = arith.maximumf %160, %161 : vector<8x9x9xf32>
    %c0_88 = arith.constant 0 : index
    %c0_89 = arith.constant 0 : index
    %c0_90 = arith.constant 0 : index
    %c0_91 = arith.constant 0 : index
    %163 = vector.load %arg4[%c0_88, %c0_89, %c0_90, %c0_91] : memref<8x4x1x1xf32, #tpu.memory_space<vmem>>, vector<1x4x1x1xf32>
    %164 = vector.shape_cast %163 : vector<1x4x1x1xf32> to vector<4x1x1xf32>
    %165 = vector.extract_strided_slice %162 {offsets = [0, 0, 0], sizes = [1, 9, 9], strides = [1, 1, 1]} : vector<8x9x9xf32> to vector<1x9x9xf32>
    %166 = vector.broadcast %164 : vector<4x1x1xf32> to vector<4x9x9xf32>
    %167 = vector.broadcast %165 : vector<1x9x9xf32> to vector<4x9x9xf32>
    %168 = arith.mulf %166, %167 : vector<4x9x9xf32>
    %c1_92 = arith.constant 1 : index
    %c0_93 = arith.constant 0 : index
    %c0_94 = arith.constant 0 : index
    %c0_95 = arith.constant 0 : index
    %169 = vector.load %arg4[%c1_92, %c0_93, %c0_94, %c0_95] : memref<8x4x1x1xf32, #tpu.memory_space<vmem>>, vector<1x4x1x1xf32>
    %170 = vector.shape_cast %169 : vector<1x4x1x1xf32> to vector<4x1x1xf32>
    %171 = vector.extract_strided_slice %162 {offsets = [1, 0, 0], sizes = [1, 9, 9], strides = [1, 1, 1]} : vector<8x9x9xf32> to vector<1x9x9xf32>
    %172 = vector.broadcast %170 : vector<4x1x1xf32> to vector<4x9x9xf32>
    %173 = vector.broadcast %171 : vector<1x9x9xf32> to vector<4x9x9xf32>
    %174 = arith.mulf %172, %173 : vector<4x9x9xf32>
    %175 = arith.addf %168, %174 : vector<4x9x9xf32>
    %c2_96 = arith.constant 2 : index
    %c0_97 = arith.constant 0 : index
    %c0_98 = arith.constant 0 : index
    %c0_99 = arith.constant 0 : index
    %176 = vector.load %arg4[%c2_96, %c0_97, %c0_98, %c0_99] : memref<8x4x1x1xf32, #tpu.memory_space<vmem>>, vector<1x4x1x1xf32>
    %177 = vector.shape_cast %176 : vector<1x4x1x1xf32> to vector<4x1x1xf32>
    %178 = vector.extract_strided_slice %162 {offsets = [2, 0, 0], sizes = [1, 9, 9], strides = [1, 1, 1]} : vector<8x9x9xf32> to vector<1x9x9xf32>
    %179 = vector.broadcast %177 : vector<4x1x1xf32> to vector<4x9x9xf32>
    %180 = vector.broadcast %178 : vector<1x9x9xf32> to vector<4x9x9xf32>
    %181 = arith.mulf %179, %180 : vector<4x9x9xf32>
    %182 = arith.addf %175, %181 : vector<4x9x9xf32>
    %c3_100 = arith.constant 3 : index
    %c0_101 = arith.constant 0 : index
    %c0_102 = arith.constant 0 : index
    %c0_103 = arith.constant 0 : index
    %183 = vector.load %arg4[%c3_100, %c0_101, %c0_102, %c0_103] : memref<8x4x1x1xf32, #tpu.memory_space<vmem>>, vector<1x4x1x1xf32>
    %184 = vector.shape_cast %183 : vector<1x4x1x1xf32> to vector<4x1x1xf32>
    %185 = vector.extract_strided_slice %162 {offsets = [3, 0, 0], sizes = [1, 9, 9], strides = [1, 1, 1]} : vector<8x9x9xf32> to vector<1x9x9xf32>
    %186 = vector.broadcast %184 : vector<4x1x1xf32> to vector<4x9x9xf32>
    %187 = vector.broadcast %185 : vector<1x9x9xf32> to vector<4x9x9xf32>
    %188 = arith.mulf %186, %187 : vector<4x9x9xf32>
    %189 = arith.addf %182, %188 : vector<4x9x9xf32>
    %c4_104 = arith.constant 4 : index
    %c0_105 = arith.constant 0 : index
    %c0_106 = arith.constant 0 : index
    %c0_107 = arith.constant 0 : index
    %190 = vector.load %arg4[%c4_104, %c0_105, %c0_106, %c0_107] : memref<8x4x1x1xf32, #tpu.memory_space<vmem>>, vector<1x4x1x1xf32>
    %191 = vector.shape_cast %190 : vector<1x4x1x1xf32> to vector<4x1x1xf32>
    %192 = vector.extract_strided_slice %162 {offsets = [4, 0, 0], sizes = [1, 9, 9], strides = [1, 1, 1]} : vector<8x9x9xf32> to vector<1x9x9xf32>
    %193 = vector.broadcast %191 : vector<4x1x1xf32> to vector<4x9x9xf32>
    %194 = vector.broadcast %192 : vector<1x9x9xf32> to vector<4x9x9xf32>
    %195 = arith.mulf %193, %194 : vector<4x9x9xf32>
    %196 = arith.addf %189, %195 : vector<4x9x9xf32>
    %c5_108 = arith.constant 5 : index
    %c0_109 = arith.constant 0 : index
    %c0_110 = arith.constant 0 : index
    %c0_111 = arith.constant 0 : index
    %197 = vector.load %arg4[%c5_108, %c0_109, %c0_110, %c0_111] : memref<8x4x1x1xf32, #tpu.memory_space<vmem>>, vector<1x4x1x1xf32>
    %198 = vector.shape_cast %197 : vector<1x4x1x1xf32> to vector<4x1x1xf32>
    %199 = vector.extract_strided_slice %162 {offsets = [5, 0, 0], sizes = [1, 9, 9], strides = [1, 1, 1]} : vector<8x9x9xf32> to vector<1x9x9xf32>
    %200 = vector.broadcast %198 : vector<4x1x1xf32> to vector<4x9x9xf32>
    %201 = vector.broadcast %199 : vector<1x9x9xf32> to vector<4x9x9xf32>
    %202 = arith.mulf %200, %201 : vector<4x9x9xf32>
    %203 = arith.addf %196, %202 : vector<4x9x9xf32>
    %c6_112 = arith.constant 6 : index
    %c0_113 = arith.constant 0 : index
    %c0_114 = arith.constant 0 : index
    %c0_115 = arith.constant 0 : index
    %204 = vector.load %arg4[%c6_112, %c0_113, %c0_114, %c0_115] : memref<8x4x1x1xf32, #tpu.memory_space<vmem>>, vector<1x4x1x1xf32>
    %205 = vector.shape_cast %204 : vector<1x4x1x1xf32> to vector<4x1x1xf32>
    %206 = vector.extract_strided_slice %162 {offsets = [6, 0, 0], sizes = [1, 9, 9], strides = [1, 1, 1]} : vector<8x9x9xf32> to vector<1x9x9xf32>
    %207 = vector.broadcast %205 : vector<4x1x1xf32> to vector<4x9x9xf32>
    %208 = vector.broadcast %206 : vector<1x9x9xf32> to vector<4x9x9xf32>
    %209 = arith.mulf %207, %208 : vector<4x9x9xf32>
    %210 = arith.addf %203, %209 : vector<4x9x9xf32>
    %c7_116 = arith.constant 7 : index
    %c0_117 = arith.constant 0 : index
    %c0_118 = arith.constant 0 : index
    %c0_119 = arith.constant 0 : index
    %211 = vector.load %arg4[%c7_116, %c0_117, %c0_118, %c0_119] : memref<8x4x1x1xf32, #tpu.memory_space<vmem>>, vector<1x4x1x1xf32>
    %212 = vector.shape_cast %211 : vector<1x4x1x1xf32> to vector<4x1x1xf32>
    %213 = vector.extract_strided_slice %162 {offsets = [7, 0, 0], sizes = [1, 9, 9], strides = [1, 1, 1]} : vector<8x9x9xf32> to vector<1x9x9xf32>
    %214 = vector.broadcast %212 : vector<4x1x1xf32> to vector<4x9x9xf32>
    %215 = vector.broadcast %213 : vector<1x9x9xf32> to vector<4x9x9xf32>
    %216 = arith.mulf %214, %215 : vector<4x9x9xf32>
    %217 = arith.addf %210, %216 : vector<4x9x9xf32>
    %218 = vector.broadcast %11 : vector<4x1x1xf32> to vector<4x9x9xf32>
    %219 = arith.mulf %217, %218 : vector<4x9x9xf32>
    %220 = vector.broadcast %12 : vector<4x1x1xf32> to vector<4x9x9xf32>
    %221 = arith.addf %219, %220 : vector<4x9x9xf32>
    %cst_120 = arith.constant 0.000000e+00 : f32
    %222 = vector.broadcast %cst_120 : f32 to vector<4x9x9xf32>
    %223 = arith.maximumf %221, %222 : vector<4x9x9xf32>
    %224 = vector.broadcast %8 : vector<1x9x9xf32> to vector<4x9x9xf32>
    %225 = arith.mulf %223, %224 : vector<4x9x9xf32>
    %c0_121 = arith.constant 0 : index
    %c3_122 = arith.constant 3 : index
    %c0_123 = arith.constant 0 : index
    %c0_124 = arith.constant 0 : index
    %c0_125 = arith.constant 0 : index
    %226 = vector.load %arg1[%c0_121, %c3_122, %c0_123, %c0_124, %c0_125] : memref<1x4x8x9x9xf32, #tpu.memory_space<vmem>>, vector<1x1x8x9x9xf32>
    %227 = vector.shape_cast %226 : vector<1x1x8x9x9xf32> to vector<8x9x9xf32>
    %228 = vector.broadcast %9 : vector<8x1x1xf32> to vector<8x9x9xf32>
    %229 = arith.mulf %227, %228 : vector<8x9x9xf32>
    %230 = vector.broadcast %10 : vector<8x1x1xf32> to vector<8x9x9xf32>
    %231 = arith.addf %229, %230 : vector<8x9x9xf32>
    %cst_126 = arith.constant 0.000000e+00 : f32
    %232 = vector.broadcast %cst_126 : f32 to vector<8x9x9xf32>
    %233 = arith.maximumf %231, %232 : vector<8x9x9xf32>
    %c0_127 = arith.constant 0 : index
    %c0_128 = arith.constant 0 : index
    %c0_129 = arith.constant 0 : index
    %c0_130 = arith.constant 0 : index
    %234 = vector.load %arg4[%c0_127, %c0_128, %c0_129, %c0_130] : memref<8x4x1x1xf32, #tpu.memory_space<vmem>>, vector<1x4x1x1xf32>
    %235 = vector.shape_cast %234 : vector<1x4x1x1xf32> to vector<4x1x1xf32>
    %236 = vector.extract_strided_slice %233 {offsets = [0, 0, 0], sizes = [1, 9, 9], strides = [1, 1, 1]} : vector<8x9x9xf32> to vector<1x9x9xf32>
    %237 = vector.broadcast %235 : vector<4x1x1xf32> to vector<4x9x9xf32>
    %238 = vector.broadcast %236 : vector<1x9x9xf32> to vector<4x9x9xf32>
    %239 = arith.mulf %237, %238 : vector<4x9x9xf32>
    %c1_131 = arith.constant 1 : index
    %c0_132 = arith.constant 0 : index
    %c0_133 = arith.constant 0 : index
    %c0_134 = arith.constant 0 : index
    %240 = vector.load %arg4[%c1_131, %c0_132, %c0_133, %c0_134] : memref<8x4x1x1xf32, #tpu.memory_space<vmem>>, vector<1x4x1x1xf32>
    %241 = vector.shape_cast %240 : vector<1x4x1x1xf32> to vector<4x1x1xf32>
    %242 = vector.extract_strided_slice %233 {offsets = [1, 0, 0], sizes = [1, 9, 9], strides = [1, 1, 1]} : vector<8x9x9xf32> to vector<1x9x9xf32>
    %243 = vector.broadcast %241 : vector<4x1x1xf32> to vector<4x9x9xf32>
    %244 = vector.broadcast %242 : vector<1x9x9xf32> to vector<4x9x9xf32>
    %245 = arith.mulf %243, %244 : vector<4x9x9xf32>
    %246 = arith.addf %239, %245 : vector<4x9x9xf32>
    %c2_135 = arith.constant 2 : index
    %c0_136 = arith.constant 0 : index
    %c0_137 = arith.constant 0 : index
    %c0_138 = arith.constant 0 : index
    %247 = vector.load %arg4[%c2_135, %c0_136, %c0_137, %c0_138] : memref<8x4x1x1xf32, #tpu.memory_space<vmem>>, vector<1x4x1x1xf32>
    %248 = vector.shape_cast %247 : vector<1x4x1x1xf32> to vector<4x1x1xf32>
    %249 = vector.extract_strided_slice %233 {offsets = [2, 0, 0], sizes = [1, 9, 9], strides = [1, 1, 1]} : vector<8x9x9xf32> to vector<1x9x9xf32>
    %250 = vector.broadcast %248 : vector<4x1x1xf32> to vector<4x9x9xf32>
    %251 = vector.broadcast %249 : vector<1x9x9xf32> to vector<4x9x9xf32>
    %252 = arith.mulf %250, %251 : vector<4x9x9xf32>
    %253 = arith.addf %246, %252 : vector<4x9x9xf32>
    %c3_139 = arith.constant 3 : index
    %c0_140 = arith.constant 0 : index
    %c0_141 = arith.constant 0 : index
    %c0_142 = arith.constant 0 : index
    %254 = vector.load %arg4[%c3_139, %c0_140, %c0_141, %c0_142] : memref<8x4x1x1xf32, #tpu.memory_space<vmem>>, vector<1x4x1x1xf32>
    %255 = vector.shape_cast %254 : vector<1x4x1x1xf32> to vector<4x1x1xf32>
    %256 = vector.extract_strided_slice %233 {offsets = [3, 0, 0], sizes = [1, 9, 9], strides = [1, 1, 1]} : vector<8x9x9xf32> to vector<1x9x9xf32>
    %257 = vector.broadcast %255 : vector<4x1x1xf32> to vector<4x9x9xf32>
    %258 = vector.broadcast %256 : vector<1x9x9xf32> to vector<4x9x9xf32>
    %259 = arith.mulf %257, %258 : vector<4x9x9xf32>
    %260 = arith.addf %253, %259 : vector<4x9x9xf32>
    %c4_143 = arith.constant 4 : index
    %c0_144 = arith.constant 0 : index
    %c0_145 = arith.constant 0 : index
    %c0_146 = arith.constant 0 : index
    %261 = vector.load %arg4[%c4_143, %c0_144, %c0_145, %c0_146] : memref<8x4x1x1xf32, #tpu.memory_space<vmem>>, vector<1x4x1x1xf32>
    %262 = vector.shape_cast %261 : vector<1x4x1x1xf32> to vector<4x1x1xf32>
    %263 = vector.extract_strided_slice %233 {offsets = [4, 0, 0], sizes = [1, 9, 9], strides = [1, 1, 1]} : vector<8x9x9xf32> to vector<1x9x9xf32>
    %264 = vector.broadcast %262 : vector<4x1x1xf32> to vector<4x9x9xf32>
    %265 = vector.broadcast %263 : vector<1x9x9xf32> to vector<4x9x9xf32>
    %266 = arith.mulf %264, %265 : vector<4x9x9xf32>
    %267 = arith.addf %260, %266 : vector<4x9x9xf32>
    %c5_147 = arith.constant 5 : index
    %c0_148 = arith.constant 0 : index
    %c0_149 = arith.constant 0 : index
    %c0_150 = arith.constant 0 : index
    %268 = vector.load %arg4[%c5_147, %c0_148, %c0_149, %c0_150] : memref<8x4x1x1xf32, #tpu.memory_space<vmem>>, vector<1x4x1x1xf32>
    %269 = vector.shape_cast %268 : vector<1x4x1x1xf32> to vector<4x1x1xf32>
    %270 = vector.extract_strided_slice %233 {offsets = [5, 0, 0], sizes = [1, 9, 9], strides = [1, 1, 1]} : vector<8x9x9xf32> to vector<1x9x9xf32>
    %271 = vector.broadcast %269 : vector<4x1x1xf32> to vector<4x9x9xf32>
    %272 = vector.broadcast %270 : vector<1x9x9xf32> to vector<4x9x9xf32>
    %273 = arith.mulf %271, %272 : vector<4x9x9xf32>
    %274 = arith.addf %267, %273 : vector<4x9x9xf32>
    %c6_151 = arith.constant 6 : index
    %c0_152 = arith.constant 0 : index
    %c0_153 = arith.constant 0 : index
    %c0_154 = arith.constant 0 : index
    %275 = vector.load %arg4[%c6_151, %c0_152, %c0_153, %c0_154] : memref<8x4x1x1xf32, #tpu.memory_space<vmem>>, vector<1x4x1x1xf32>
    %276 = vector.shape_cast %275 : vector<1x4x1x1xf32> to vector<4x1x1xf32>
    %277 = vector.extract_strided_slice %233 {offsets = [6, 0, 0], sizes = [1, 9, 9], strides = [1, 1, 1]} : vector<8x9x9xf32> to vector<1x9x9xf32>
    %278 = vector.broadcast %276 : vector<4x1x1xf32> to vector<4x9x9xf32>
    %279 = vector.broadcast %277 : vector<1x9x9xf32> to vector<4x9x9xf32>
    %280 = arith.mulf %278, %279 : vector<4x9x9xf32>
    %281 = arith.addf %274, %280 : vector<4x9x9xf32>
    %c7_155 = arith.constant 7 : index
    %c0_156 = arith.constant 0 : index
    %c0_157 = arith.constant 0 : index
    %c0_158 = arith.constant 0 : index
    %282 = vector.load %arg4[%c7_155, %c0_156, %c0_157, %c0_158] : memref<8x4x1x1xf32, #tpu.memory_space<vmem>>, vector<1x4x1x1xf32>
    %283 = vector.shape_cast %282 : vector<1x4x1x1xf32> to vector<4x1x1xf32>
    %284 = vector.extract_strided_slice %233 {offsets = [7, 0, 0], sizes = [1, 9, 9], strides = [1, 1, 1]} : vector<8x9x9xf32> to vector<1x9x9xf32>
    %285 = vector.broadcast %283 : vector<4x1x1xf32> to vector<4x9x9xf32>
    %286 = vector.broadcast %284 : vector<1x9x9xf32> to vector<4x9x9xf32>
    %287 = arith.mulf %285, %286 : vector<4x9x9xf32>
    %288 = arith.addf %281, %287 : vector<4x9x9xf32>
    %289 = vector.broadcast %11 : vector<4x1x1xf32> to vector<4x9x9xf32>
    %290 = arith.mulf %288, %289 : vector<4x9x9xf32>
    %291 = vector.broadcast %12 : vector<4x1x1xf32> to vector<4x9x9xf32>
    %292 = arith.addf %290, %291 : vector<4x9x9xf32>
    %cst_159 = arith.constant 0.000000e+00 : f32
    %293 = vector.broadcast %cst_159 : f32 to vector<4x9x9xf32>
    %294 = arith.maximumf %292, %293 : vector<4x9x9xf32>
    %295 = vector.broadcast %8 : vector<1x9x9xf32> to vector<4x9x9xf32>
    %296 = arith.mulf %294, %295 : vector<4x9x9xf32>
    %297 = vector.extract_strided_slice %296 {offsets = [0, 0, 0], sizes = [4, 8, 8], strides = [1, 1, 1]} : vector<4x9x9xf32> to vector<4x8x8xf32>
    %c0_160 = arith.constant 0 : index
    %c0_161 = arith.constant 0 : index
    %c0_162 = arith.constant 0 : index
    %c0_163 = arith.constant 0 : index
    %c0_164 = arith.constant 0 : index
    %298 = vector.load %arg7[%c0_160, %c0_161, %c0_162, %c0_163, %c0_164] : memref<9x4x4x1x1xf32, #tpu.memory_space<vmem>>, vector<1x1x4x1x1xf32>
    %299 = vector.shape_cast %298 : vector<1x1x4x1x1xf32> to vector<4x1x1xf32>
    %300 = vector.extract_strided_slice %297 {offsets = [0, 0, 0], sizes = [1, 8, 8], strides = [1, 1, 1]} : vector<4x8x8xf32> to vector<1x8x8xf32>
    %301 = vector.broadcast %299 : vector<4x1x1xf32> to vector<4x8x8xf32>
    %302 = vector.broadcast %300 : vector<1x8x8xf32> to vector<4x8x8xf32>
    %303 = arith.mulf %301, %302 : vector<4x8x8xf32>
    %c0_165 = arith.constant 0 : index
    %c1_166 = arith.constant 1 : index
    %c0_167 = arith.constant 0 : index
    %c0_168 = arith.constant 0 : index
    %c0_169 = arith.constant 0 : index
    %304 = vector.load %arg7[%c0_165, %c1_166, %c0_167, %c0_168, %c0_169] : memref<9x4x4x1x1xf32, #tpu.memory_space<vmem>>, vector<1x1x4x1x1xf32>
    %305 = vector.shape_cast %304 : vector<1x1x4x1x1xf32> to vector<4x1x1xf32>
    %306 = vector.extract_strided_slice %297 {offsets = [1, 0, 0], sizes = [1, 8, 8], strides = [1, 1, 1]} : vector<4x8x8xf32> to vector<1x8x8xf32>
    %307 = vector.broadcast %305 : vector<4x1x1xf32> to vector<4x8x8xf32>
    %308 = vector.broadcast %306 : vector<1x8x8xf32> to vector<4x8x8xf32>
    %309 = arith.mulf %307, %308 : vector<4x8x8xf32>
    %310 = arith.addf %303, %309 : vector<4x8x8xf32>
    %c0_170 = arith.constant 0 : index
    %c2_171 = arith.constant 2 : index
    %c0_172 = arith.constant 0 : index
    %c0_173 = arith.constant 0 : index
    %c0_174 = arith.constant 0 : index
    %311 = vector.load %arg7[%c0_170, %c2_171, %c0_172, %c0_173, %c0_174] : memref<9x4x4x1x1xf32, #tpu.memory_space<vmem>>, vector<1x1x4x1x1xf32>
    %312 = vector.shape_cast %311 : vector<1x1x4x1x1xf32> to vector<4x1x1xf32>
    %313 = vector.extract_strided_slice %297 {offsets = [2, 0, 0], sizes = [1, 8, 8], strides = [1, 1, 1]} : vector<4x8x8xf32> to vector<1x8x8xf32>
    %314 = vector.broadcast %312 : vector<4x1x1xf32> to vector<4x8x8xf32>
    %315 = vector.broadcast %313 : vector<1x8x8xf32> to vector<4x8x8xf32>
    %316 = arith.mulf %314, %315 : vector<4x8x8xf32>
    %317 = arith.addf %310, %316 : vector<4x8x8xf32>
    %c0_175 = arith.constant 0 : index
    %c3_176 = arith.constant 3 : index
    %c0_177 = arith.constant 0 : index
    %c0_178 = arith.constant 0 : index
    %c0_179 = arith.constant 0 : index
    %318 = vector.load %arg7[%c0_175, %c3_176, %c0_177, %c0_178, %c0_179] : memref<9x4x4x1x1xf32, #tpu.memory_space<vmem>>, vector<1x1x4x1x1xf32>
    %319 = vector.shape_cast %318 : vector<1x1x4x1x1xf32> to vector<4x1x1xf32>
    %320 = vector.extract_strided_slice %297 {offsets = [3, 0, 0], sizes = [1, 8, 8], strides = [1, 1, 1]} : vector<4x8x8xf32> to vector<1x8x8xf32>
    %321 = vector.broadcast %319 : vector<4x1x1xf32> to vector<4x8x8xf32>
    %322 = vector.broadcast %320 : vector<1x8x8xf32> to vector<4x8x8xf32>
    %323 = arith.mulf %321, %322 : vector<4x8x8xf32>
    %324 = arith.addf %317, %323 : vector<4x8x8xf32>
    %325 = vector.extract_strided_slice %225 {offsets = [0, 0, 1], sizes = [4, 8, 8], strides = [1, 1, 1]} : vector<4x9x9xf32> to vector<4x8x8xf32>
    %c1_180 = arith.constant 1 : index
    %c0_181 = arith.constant 0 : index
    %c0_182 = arith.constant 0 : index
    %c0_183 = arith.constant 0 : index
    %c0_184 = arith.constant 0 : index
    %326 = vector.load %arg7[%c1_180, %c0_181, %c0_182, %c0_183, %c0_184] : memref<9x4x4x1x1xf32, #tpu.memory_space<vmem>>, vector<1x1x4x1x1xf32>
    %327 = vector.shape_cast %326 : vector<1x1x4x1x1xf32> to vector<4x1x1xf32>
    %328 = vector.extract_strided_slice %325 {offsets = [0, 0, 0], sizes = [1, 8, 8], strides = [1, 1, 1]} : vector<4x8x8xf32> to vector<1x8x8xf32>
    %329 = vector.broadcast %327 : vector<4x1x1xf32> to vector<4x8x8xf32>
    %330 = vector.broadcast %328 : vector<1x8x8xf32> to vector<4x8x8xf32>
    %331 = arith.mulf %329, %330 : vector<4x8x8xf32>
    %332 = arith.addf %324, %331 : vector<4x8x8xf32>
    %c1_185 = arith.constant 1 : index
    %c1_186 = arith.constant 1 : index
    %c0_187 = arith.constant 0 : index
    %c0_188 = arith.constant 0 : index
    %c0_189 = arith.constant 0 : index
    %333 = vector.load %arg7[%c1_185, %c1_186, %c0_187, %c0_188, %c0_189] : memref<9x4x4x1x1xf32, #tpu.memory_space<vmem>>, vector<1x1x4x1x1xf32>
    %334 = vector.shape_cast %333 : vector<1x1x4x1x1xf32> to vector<4x1x1xf32>
    %335 = vector.extract_strided_slice %325 {offsets = [1, 0, 0], sizes = [1, 8, 8], strides = [1, 1, 1]} : vector<4x8x8xf32> to vector<1x8x8xf32>
    %336 = vector.broadcast %334 : vector<4x1x1xf32> to vector<4x8x8xf32>
    %337 = vector.broadcast %335 : vector<1x8x8xf32> to vector<4x8x8xf32>
    %338 = arith.mulf %336, %337 : vector<4x8x8xf32>
    %339 = arith.addf %332, %338 : vector<4x8x8xf32>
    %c1_190 = arith.constant 1 : index
    %c2_191 = arith.constant 2 : index
    %c0_192 = arith.constant 0 : index
    %c0_193 = arith.constant 0 : index
    %c0_194 = arith.constant 0 : index
    %340 = vector.load %arg7[%c1_190, %c2_191, %c0_192, %c0_193, %c0_194] : memref<9x4x4x1x1xf32, #tpu.memory_space<vmem>>, vector<1x1x4x1x1xf32>
    %341 = vector.shape_cast %340 : vector<1x1x4x1x1xf32> to vector<4x1x1xf32>
    %342 = vector.extract_strided_slice %325 {offsets = [2, 0, 0], sizes = [1, 8, 8], strides = [1, 1, 1]} : vector<4x8x8xf32> to vector<1x8x8xf32>
    %343 = vector.broadcast %341 : vector<4x1x1xf32> to vector<4x8x8xf32>
    %344 = vector.broadcast %342 : vector<1x8x8xf32> to vector<4x8x8xf32>
    %345 = arith.mulf %343, %344 : vector<4x8x8xf32>
    %346 = arith.addf %339, %345 : vector<4x8x8xf32>
    %c1_195 = arith.constant 1 : index
    %c3_196 = arith.constant 3 : index
    %c0_197 = arith.constant 0 : index
    %c0_198 = arith.constant 0 : index
    %c0_199 = arith.constant 0 : index
    %347 = vector.load %arg7[%c1_195, %c3_196, %c0_197, %c0_198, %c0_199] : memref<9x4x4x1x1xf32, #tpu.memory_space<vmem>>, vector<1x1x4x1x1xf32>
    %348 = vector.shape_cast %347 : vector<1x1x4x1x1xf32> to vector<4x1x1xf32>
    %349 = vector.extract_strided_slice %325 {offsets = [3, 0, 0], sizes = [1, 8, 8], strides = [1, 1, 1]} : vector<4x8x8xf32> to vector<1x8x8xf32>
    %350 = vector.broadcast %348 : vector<4x1x1xf32> to vector<4x8x8xf32>
    %351 = vector.broadcast %349 : vector<1x8x8xf32> to vector<4x8x8xf32>
    %352 = arith.mulf %350, %351 : vector<4x8x8xf32>
    %353 = arith.addf %346, %352 : vector<4x8x8xf32>
    %354 = vector.extract_strided_slice %296 {offsets = [0, 0, 1], sizes = [4, 8, 8], strides = [1, 1, 1]} : vector<4x9x9xf32> to vector<4x8x8xf32>
    %c2_200 = arith.constant 2 : index
    %c0_201 = arith.constant 0 : index
    %c0_202 = arith.constant 0 : index
    %c0_203 = arith.constant 0 : index
    %c0_204 = arith.constant 0 : index
    %355 = vector.load %arg7[%c2_200, %c0_201, %c0_202, %c0_203, %c0_204] : memref<9x4x4x1x1xf32, #tpu.memory_space<vmem>>, vector<1x1x4x1x1xf32>
    %356 = vector.shape_cast %355 : vector<1x1x4x1x1xf32> to vector<4x1x1xf32>
    %357 = vector.extract_strided_slice %354 {offsets = [0, 0, 0], sizes = [1, 8, 8], strides = [1, 1, 1]} : vector<4x8x8xf32> to vector<1x8x8xf32>
    %358 = vector.broadcast %356 : vector<4x1x1xf32> to vector<4x8x8xf32>
    %359 = vector.broadcast %357 : vector<1x8x8xf32> to vector<4x8x8xf32>
    %360 = arith.mulf %358, %359 : vector<4x8x8xf32>
    %361 = arith.addf %353, %360 : vector<4x8x8xf32>
    %c2_205 = arith.constant 2 : index
    %c1_206 = arith.constant 1 : index
    %c0_207 = arith.constant 0 : index
    %c0_208 = arith.constant 0 : index
    %c0_209 = arith.constant 0 : index
    %362 = vector.load %arg7[%c2_205, %c1_206, %c0_207, %c0_208, %c0_209] : memref<9x4x4x1x1xf32, #tpu.memory_space<vmem>>, vector<1x1x4x1x1xf32>
    %363 = vector.shape_cast %362 : vector<1x1x4x1x1xf32> to vector<4x1x1xf32>
    %364 = vector.extract_strided_slice %354 {offsets = [1, 0, 0], sizes = [1, 8, 8], strides = [1, 1, 1]} : vector<4x8x8xf32> to vector<1x8x8xf32>
    %365 = vector.broadcast %363 : vector<4x1x1xf32> to vector<4x8x8xf32>
    %366 = vector.broadcast %364 : vector<1x8x8xf32> to vector<4x8x8xf32>
    %367 = arith.mulf %365, %366 : vector<4x8x8xf32>
    %368 = arith.addf %361, %367 : vector<4x8x8xf32>
    %c2_210 = arith.constant 2 : index
    %c2_211 = arith.constant 2 : index
    %c0_212 = arith.constant 0 : index
    %c0_213 = arith.constant 0 : index
    %c0_214 = arith.constant 0 : index
    %369 = vector.load %arg7[%c2_210, %c2_211, %c0_212, %c0_213, %c0_214] : memref<9x4x4x1x1xf32, #tpu.memory_space<vmem>>, vector<1x1x4x1x1xf32>
    %370 = vector.shape_cast %369 : vector<1x1x4x1x1xf32> to vector<4x1x1xf32>
    %371 = vector.extract_strided_slice %354 {offsets = [2, 0, 0], sizes = [1, 8, 8], strides = [1, 1, 1]} : vector<4x8x8xf32> to vector<1x8x8xf32>
    %372 = vector.broadcast %370 : vector<4x1x1xf32> to vector<4x8x8xf32>
    %373 = vector.broadcast %371 : vector<1x8x8xf32> to vector<4x8x8xf32>
    %374 = arith.mulf %372, %373 : vector<4x8x8xf32>
    %375 = arith.addf %368, %374 : vector<4x8x8xf32>
    %c2_215 = arith.constant 2 : index
    %c3_216 = arith.constant 3 : index
    %c0_217 = arith.constant 0 : index
    %c0_218 = arith.constant 0 : index
    %c0_219 = arith.constant 0 : index
    %376 = vector.load %arg7[%c2_215, %c3_216, %c0_217, %c0_218, %c0_219] : memref<9x4x4x1x1xf32, #tpu.memory_space<vmem>>, vector<1x1x4x1x1xf32>
    %377 = vector.shape_cast %376 : vector<1x1x4x1x1xf32> to vector<4x1x1xf32>
    %378 = vector.extract_strided_slice %354 {offsets = [3, 0, 0], sizes = [1, 8, 8], strides = [1, 1, 1]} : vector<4x8x8xf32> to vector<1x8x8xf32>
    %379 = vector.broadcast %377 : vector<4x1x1xf32> to vector<4x8x8xf32>
    %380 = vector.broadcast %378 : vector<1x8x8xf32> to vector<4x8x8xf32>
    %381 = arith.mulf %379, %380 : vector<4x8x8xf32>
    %382 = arith.addf %375, %381 : vector<4x8x8xf32>
    %383 = vector.extract_strided_slice %154 {offsets = [0, 1, 0], sizes = [4, 8, 8], strides = [1, 1, 1]} : vector<4x9x9xf32> to vector<4x8x8xf32>
    %c3_220 = arith.constant 3 : index
    %c0_221 = arith.constant 0 : index
    %c0_222 = arith.constant 0 : index
    %c0_223 = arith.constant 0 : index
    %c0_224 = arith.constant 0 : index
    %384 = vector.load %arg7[%c3_220, %c0_221, %c0_222, %c0_223, %c0_224] : memref<9x4x4x1x1xf32, #tpu.memory_space<vmem>>, vector<1x1x4x1x1xf32>
    %385 = vector.shape_cast %384 : vector<1x1x4x1x1xf32> to vector<4x1x1xf32>
    %386 = vector.extract_strided_slice %383 {offsets = [0, 0, 0], sizes = [1, 8, 8], strides = [1, 1, 1]} : vector<4x8x8xf32> to vector<1x8x8xf32>
    %387 = vector.broadcast %385 : vector<4x1x1xf32> to vector<4x8x8xf32>
    %388 = vector.broadcast %386 : vector<1x8x8xf32> to vector<4x8x8xf32>
    %389 = arith.mulf %387, %388 : vector<4x8x8xf32>
    %390 = arith.addf %382, %389 : vector<4x8x8xf32>
    %c3_225 = arith.constant 3 : index
    %c1_226 = arith.constant 1 : index
    %c0_227 = arith.constant 0 : index
    %c0_228 = arith.constant 0 : index
    %c0_229 = arith.constant 0 : index
    %391 = vector.load %arg7[%c3_225, %c1_226, %c0_227, %c0_228, %c0_229] : memref<9x4x4x1x1xf32, #tpu.memory_space<vmem>>, vector<1x1x4x1x1xf32>
    %392 = vector.shape_cast %391 : vector<1x1x4x1x1xf32> to vector<4x1x1xf32>
    %393 = vector.extract_strided_slice %383 {offsets = [1, 0, 0], sizes = [1, 8, 8], strides = [1, 1, 1]} : vector<4x8x8xf32> to vector<1x8x8xf32>
    %394 = vector.broadcast %392 : vector<4x1x1xf32> to vector<4x8x8xf32>
    %395 = vector.broadcast %393 : vector<1x8x8xf32> to vector<4x8x8xf32>
    %396 = arith.mulf %394, %395 : vector<4x8x8xf32>
    %397 = arith.addf %390, %396 : vector<4x8x8xf32>
    %c3_230 = arith.constant 3 : index
    %c2_231 = arith.constant 2 : index
    %c0_232 = arith.constant 0 : index
    %c0_233 = arith.constant 0 : index
    %c0_234 = arith.constant 0 : index
    %398 = vector.load %arg7[%c3_230, %c2_231, %c0_232, %c0_233, %c0_234] : memref<9x4x4x1x1xf32, #tpu.memory_space<vmem>>, vector<1x1x4x1x1xf32>
    %399 = vector.shape_cast %398 : vector<1x1x4x1x1xf32> to vector<4x1x1xf32>
    %400 = vector.extract_strided_slice %383 {offsets = [2, 0, 0], sizes = [1, 8, 8], strides = [1, 1, 1]} : vector<4x8x8xf32> to vector<1x8x8xf32>
    %401 = vector.broadcast %399 : vector<4x1x1xf32> to vector<4x8x8xf32>
    %402 = vector.broadcast %400 : vector<1x8x8xf32> to vector<4x8x8xf32>
    %403 = arith.mulf %401, %402 : vector<4x8x8xf32>
    %404 = arith.addf %397, %403 : vector<4x8x8xf32>
    %c3_235 = arith.constant 3 : index
    %c3_236 = arith.constant 3 : index
    %c0_237 = arith.constant 0 : index
    %c0_238 = arith.constant 0 : index
    %c0_239 = arith.constant 0 : index
    %405 = vector.load %arg7[%c3_235, %c3_236, %c0_237, %c0_238, %c0_239] : memref<9x4x4x1x1xf32, #tpu.memory_space<vmem>>, vector<1x1x4x1x1xf32>
    %406 = vector.shape_cast %405 : vector<1x1x4x1x1xf32> to vector<4x1x1xf32>
    %407 = vector.extract_strided_slice %383 {offsets = [3, 0, 0], sizes = [1, 8, 8], strides = [1, 1, 1]} : vector<4x8x8xf32> to vector<1x8x8xf32>
    %408 = vector.broadcast %406 : vector<4x1x1xf32> to vector<4x8x8xf32>
    %409 = vector.broadcast %407 : vector<1x8x8xf32> to vector<4x8x8xf32>
    %410 = arith.mulf %408, %409 : vector<4x8x8xf32>
    %411 = arith.addf %404, %410 : vector<4x8x8xf32>
    %412 = vector.extract_strided_slice %83 {offsets = [0, 1, 1], sizes = [4, 8, 8], strides = [1, 1, 1]} : vector<4x9x9xf32> to vector<4x8x8xf32>
    %c4_240 = arith.constant 4 : index
    %c0_241 = arith.constant 0 : index
    %c0_242 = arith.constant 0 : index
    %c0_243 = arith.constant 0 : index
    %c0_244 = arith.constant 0 : index
    %413 = vector.load %arg7[%c4_240, %c0_241, %c0_242, %c0_243, %c0_244] : memref<9x4x4x1x1xf32, #tpu.memory_space<vmem>>, vector<1x1x4x1x1xf32>
    %414 = vector.shape_cast %413 : vector<1x1x4x1x1xf32> to vector<4x1x1xf32>
    %415 = vector.extract_strided_slice %412 {offsets = [0, 0, 0], sizes = [1, 8, 8], strides = [1, 1, 1]} : vector<4x8x8xf32> to vector<1x8x8xf32>
    %416 = vector.broadcast %414 : vector<4x1x1xf32> to vector<4x8x8xf32>
    %417 = vector.broadcast %415 : vector<1x8x8xf32> to vector<4x8x8xf32>
    %418 = arith.mulf %416, %417 : vector<4x8x8xf32>
    %419 = arith.addf %411, %418 : vector<4x8x8xf32>
    %c4_245 = arith.constant 4 : index
    %c1_246 = arith.constant 1 : index
    %c0_247 = arith.constant 0 : index
    %c0_248 = arith.constant 0 : index
    %c0_249 = arith.constant 0 : index
    %420 = vector.load %arg7[%c4_245, %c1_246, %c0_247, %c0_248, %c0_249] : memref<9x4x4x1x1xf32, #tpu.memory_space<vmem>>, vector<1x1x4x1x1xf32>
    %421 = vector.shape_cast %420 : vector<1x1x4x1x1xf32> to vector<4x1x1xf32>
    %422 = vector.extract_strided_slice %412 {offsets = [1, 0, 0], sizes = [1, 8, 8], strides = [1, 1, 1]} : vector<4x8x8xf32> to vector<1x8x8xf32>
    %423 = vector.broadcast %421 : vector<4x1x1xf32> to vector<4x8x8xf32>
    %424 = vector.broadcast %422 : vector<1x8x8xf32> to vector<4x8x8xf32>
    %425 = arith.mulf %423, %424 : vector<4x8x8xf32>
    %426 = arith.addf %419, %425 : vector<4x8x8xf32>
    %c4_250 = arith.constant 4 : index
    %c2_251 = arith.constant 2 : index
    %c0_252 = arith.constant 0 : index
    %c0_253 = arith.constant 0 : index
    %c0_254 = arith.constant 0 : index
    %427 = vector.load %arg7[%c4_250, %c2_251, %c0_252, %c0_253, %c0_254] : memref<9x4x4x1x1xf32, #tpu.memory_space<vmem>>, vector<1x1x4x1x1xf32>
    %428 = vector.shape_cast %427 : vector<1x1x4x1x1xf32> to vector<4x1x1xf32>
    %429 = vector.extract_strided_slice %412 {offsets = [2, 0, 0], sizes = [1, 8, 8], strides = [1, 1, 1]} : vector<4x8x8xf32> to vector<1x8x8xf32>
    %430 = vector.broadcast %428 : vector<4x1x1xf32> to vector<4x8x8xf32>
    %431 = vector.broadcast %429 : vector<1x8x8xf32> to vector<4x8x8xf32>
    %432 = arith.mulf %430, %431 : vector<4x8x8xf32>
    %433 = arith.addf %426, %432 : vector<4x8x8xf32>
    %c4_255 = arith.constant 4 : index
    %c3_256 = arith.constant 3 : index
    %c0_257 = arith.constant 0 : index
    %c0_258 = arith.constant 0 : index
    %c0_259 = arith.constant 0 : index
    %434 = vector.load %arg7[%c4_255, %c3_256, %c0_257, %c0_258, %c0_259] : memref<9x4x4x1x1xf32, #tpu.memory_space<vmem>>, vector<1x1x4x1x1xf32>
    %435 = vector.shape_cast %434 : vector<1x1x4x1x1xf32> to vector<4x1x1xf32>
    %436 = vector.extract_strided_slice %412 {offsets = [3, 0, 0], sizes = [1, 8, 8], strides = [1, 1, 1]} : vector<4x8x8xf32> to vector<1x8x8xf32>
    %437 = vector.broadcast %435 : vector<4x1x1xf32> to vector<4x8x8xf32>
    %438 = vector.broadcast %436 : vector<1x8x8xf32> to vector<4x8x8xf32>
    %439 = arith.mulf %437, %438 : vector<4x8x8xf32>
    %440 = arith.addf %433, %439 : vector<4x8x8xf32>
    %441 = vector.extract_strided_slice %154 {offsets = [0, 1, 1], sizes = [4, 8, 8], strides = [1, 1, 1]} : vector<4x9x9xf32> to vector<4x8x8xf32>
    %c5_260 = arith.constant 5 : index
    %c0_261 = arith.constant 0 : index
    %c0_262 = arith.constant 0 : index
    %c0_263 = arith.constant 0 : index
    %c0_264 = arith.constant 0 : index
    %442 = vector.load %arg7[%c5_260, %c0_261, %c0_262, %c0_263, %c0_264] : memref<9x4x4x1x1xf32, #tpu.memory_space<vmem>>, vector<1x1x4x1x1xf32>
    %443 = vector.shape_cast %442 : vector<1x1x4x1x1xf32> to vector<4x1x1xf32>
    %444 = vector.extract_strided_slice %441 {offsets = [0, 0, 0], sizes = [1, 8, 8], strides = [1, 1, 1]} : vector<4x8x8xf32> to vector<1x8x8xf32>
    %445 = vector.broadcast %443 : vector<4x1x1xf32> to vector<4x8x8xf32>
    %446 = vector.broadcast %444 : vector<1x8x8xf32> to vector<4x8x8xf32>
    %447 = arith.mulf %445, %446 : vector<4x8x8xf32>
    %448 = arith.addf %440, %447 : vector<4x8x8xf32>
    %c5_265 = arith.constant 5 : index
    %c1_266 = arith.constant 1 : index
    %c0_267 = arith.constant 0 : index
    %c0_268 = arith.constant 0 : index
    %c0_269 = arith.constant 0 : index
    %449 = vector.load %arg7[%c5_265, %c1_266, %c0_267, %c0_268, %c0_269] : memref<9x4x4x1x1xf32, #tpu.memory_space<vmem>>, vector<1x1x4x1x1xf32>
    %450 = vector.shape_cast %449 : vector<1x1x4x1x1xf32> to vector<4x1x1xf32>
    %451 = vector.extract_strided_slice %441 {offsets = [1, 0, 0], sizes = [1, 8, 8], strides = [1, 1, 1]} : vector<4x8x8xf32> to vector<1x8x8xf32>
    %452 = vector.broadcast %450 : vector<4x1x1xf32> to vector<4x8x8xf32>
    %453 = vector.broadcast %451 : vector<1x8x8xf32> to vector<4x8x8xf32>
    %454 = arith.mulf %452, %453 : vector<4x8x8xf32>
    %455 = arith.addf %448, %454 : vector<4x8x8xf32>
    %c5_270 = arith.constant 5 : index
    %c2_271 = arith.constant 2 : index
    %c0_272 = arith.constant 0 : index
    %c0_273 = arith.constant 0 : index
    %c0_274 = arith.constant 0 : index
    %456 = vector.load %arg7[%c5_270, %c2_271, %c0_272, %c0_273, %c0_274] : memref<9x4x4x1x1xf32, #tpu.memory_space<vmem>>, vector<1x1x4x1x1xf32>
    %457 = vector.shape_cast %456 : vector<1x1x4x1x1xf32> to vector<4x1x1xf32>
    %458 = vector.extract_strided_slice %441 {offsets = [2, 0, 0], sizes = [1, 8, 8], strides = [1, 1, 1]} : vector<4x8x8xf32> to vector<1x8x8xf32>
    %459 = vector.broadcast %457 : vector<4x1x1xf32> to vector<4x8x8xf32>
    %460 = vector.broadcast %458 : vector<1x8x8xf32> to vector<4x8x8xf32>
    %461 = arith.mulf %459, %460 : vector<4x8x8xf32>
    %462 = arith.addf %455, %461 : vector<4x8x8xf32>
    %c5_275 = arith.constant 5 : index
    %c3_276 = arith.constant 3 : index
    %c0_277 = arith.constant 0 : index
    %c0_278 = arith.constant 0 : index
    %c0_279 = arith.constant 0 : index
    %463 = vector.load %arg7[%c5_275, %c3_276, %c0_277, %c0_278, %c0_279] : memref<9x4x4x1x1xf32, #tpu.memory_space<vmem>>, vector<1x1x4x1x1xf32>
    %464 = vector.shape_cast %463 : vector<1x1x4x1x1xf32> to vector<4x1x1xf32>
    %465 = vector.extract_strided_slice %441 {offsets = [3, 0, 0], sizes = [1, 8, 8], strides = [1, 1, 1]} : vector<4x8x8xf32> to vector<1x8x8xf32>
    %466 = vector.broadcast %464 : vector<4x1x1xf32> to vector<4x8x8xf32>
    %467 = vector.broadcast %465 : vector<1x8x8xf32> to vector<4x8x8xf32>
    %468 = arith.mulf %466, %467 : vector<4x8x8xf32>
    %469 = arith.addf %462, %468 : vector<4x8x8xf32>
    %470 = vector.extract_strided_slice %296 {offsets = [0, 1, 0], sizes = [4, 8, 8], strides = [1, 1, 1]} : vector<4x9x9xf32> to vector<4x8x8xf32>
    %c6_280 = arith.constant 6 : index
    %c0_281 = arith.constant 0 : index
    %c0_282 = arith.constant 0 : index
    %c0_283 = arith.constant 0 : index
    %c0_284 = arith.constant 0 : index
    %471 = vector.load %arg7[%c6_280, %c0_281, %c0_282, %c0_283, %c0_284] : memref<9x4x4x1x1xf32, #tpu.memory_space<vmem>>, vector<1x1x4x1x1xf32>
    %472 = vector.shape_cast %471 : vector<1x1x4x1x1xf32> to vector<4x1x1xf32>
    %473 = vector.extract_strided_slice %470 {offsets = [0, 0, 0], sizes = [1, 8, 8], strides = [1, 1, 1]} : vector<4x8x8xf32> to vector<1x8x8xf32>
    %474 = vector.broadcast %472 : vector<4x1x1xf32> to vector<4x8x8xf32>
    %475 = vector.broadcast %473 : vector<1x8x8xf32> to vector<4x8x8xf32>
    %476 = arith.mulf %474, %475 : vector<4x8x8xf32>
    %477 = arith.addf %469, %476 : vector<4x8x8xf32>
    %c6_285 = arith.constant 6 : index
    %c1_286 = arith.constant 1 : index
    %c0_287 = arith.constant 0 : index
    %c0_288 = arith.constant 0 : index
    %c0_289 = arith.constant 0 : index
    %478 = vector.load %arg7[%c6_285, %c1_286, %c0_287, %c0_288, %c0_289] : memref<9x4x4x1x1xf32, #tpu.memory_space<vmem>>, vector<1x1x4x1x1xf32>
    %479 = vector.shape_cast %478 : vector<1x1x4x1x1xf32> to vector<4x1x1xf32>
    %480 = vector.extract_strided_slice %470 {offsets = [1, 0, 0], sizes = [1, 8, 8], strides = [1, 1, 1]} : vector<4x8x8xf32> to vector<1x8x8xf32>
    %481 = vector.broadcast %479 : vector<4x1x1xf32> to vector<4x8x8xf32>
    %482 = vector.broadcast %480 : vector<1x8x8xf32> to vector<4x8x8xf32>
    %483 = arith.mulf %481, %482 : vector<4x8x8xf32>
    %484 = arith.addf %477, %483 : vector<4x8x8xf32>
    %c6_290 = arith.constant 6 : index
    %c2_291 = arith.constant 2 : index
    %c0_292 = arith.constant 0 : index
    %c0_293 = arith.constant 0 : index
    %c0_294 = arith.constant 0 : index
    %485 = vector.load %arg7[%c6_290, %c2_291, %c0_292, %c0_293, %c0_294] : memref<9x4x4x1x1xf32, #tpu.memory_space<vmem>>, vector<1x1x4x1x1xf32>
    %486 = vector.shape_cast %485 : vector<1x1x4x1x1xf32> to vector<4x1x1xf32>
    %487 = vector.extract_strided_slice %470 {offsets = [2, 0, 0], sizes = [1, 8, 8], strides = [1, 1, 1]} : vector<4x8x8xf32> to vector<1x8x8xf32>
    %488 = vector.broadcast %486 : vector<4x1x1xf32> to vector<4x8x8xf32>
    %489 = vector.broadcast %487 : vector<1x8x8xf32> to vector<4x8x8xf32>
    %490 = arith.mulf %488, %489 : vector<4x8x8xf32>
    %491 = arith.addf %484, %490 : vector<4x8x8xf32>
    %c6_295 = arith.constant 6 : index
    %c3_296 = arith.constant 3 : index
    %c0_297 = arith.constant 0 : index
    %c0_298 = arith.constant 0 : index
    %c0_299 = arith.constant 0 : index
    %492 = vector.load %arg7[%c6_295, %c3_296, %c0_297, %c0_298, %c0_299] : memref<9x4x4x1x1xf32, #tpu.memory_space<vmem>>, vector<1x1x4x1x1xf32>
    %493 = vector.shape_cast %492 : vector<1x1x4x1x1xf32> to vector<4x1x1xf32>
    %494 = vector.extract_strided_slice %470 {offsets = [3, 0, 0], sizes = [1, 8, 8], strides = [1, 1, 1]} : vector<4x8x8xf32> to vector<1x8x8xf32>
    %495 = vector.broadcast %493 : vector<4x1x1xf32> to vector<4x8x8xf32>
    %496 = vector.broadcast %494 : vector<1x8x8xf32> to vector<4x8x8xf32>
    %497 = arith.mulf %495, %496 : vector<4x8x8xf32>
    %498 = arith.addf %491, %497 : vector<4x8x8xf32>
    %499 = vector.extract_strided_slice %225 {offsets = [0, 1, 1], sizes = [4, 8, 8], strides = [1, 1, 1]} : vector<4x9x9xf32> to vector<4x8x8xf32>
    %c7_300 = arith.constant 7 : index
    %c0_301 = arith.constant 0 : index
    %c0_302 = arith.constant 0 : index
    %c0_303 = arith.constant 0 : index
    %c0_304 = arith.constant 0 : index
    %500 = vector.load %arg7[%c7_300, %c0_301, %c0_302, %c0_303, %c0_304] : memref<9x4x4x1x1xf32, #tpu.memory_space<vmem>>, vector<1x1x4x1x1xf32>
    %501 = vector.shape_cast %500 : vector<1x1x4x1x1xf32> to vector<4x1x1xf32>
    %502 = vector.extract_strided_slice %499 {offsets = [0, 0, 0], sizes = [1, 8, 8], strides = [1, 1, 1]} : vector<4x8x8xf32> to vector<1x8x8xf32>
    %503 = vector.broadcast %501 : vector<4x1x1xf32> to vector<4x8x8xf32>
    %504 = vector.broadcast %502 : vector<1x8x8xf32> to vector<4x8x8xf32>
    %505 = arith.mulf %503, %504 : vector<4x8x8xf32>
    %506 = arith.addf %498, %505 : vector<4x8x8xf32>
    %c7_305 = arith.constant 7 : index
    %c1_306 = arith.constant 1 : index
    %c0_307 = arith.constant 0 : index
    %c0_308 = arith.constant 0 : index
    %c0_309 = arith.constant 0 : index
    %507 = vector.load %arg7[%c7_305, %c1_306, %c0_307, %c0_308, %c0_309] : memref<9x4x4x1x1xf32, #tpu.memory_space<vmem>>, vector<1x1x4x1x1xf32>
    %508 = vector.shape_cast %507 : vector<1x1x4x1x1xf32> to vector<4x1x1xf32>
    %509 = vector.extract_strided_slice %499 {offsets = [1, 0, 0], sizes = [1, 8, 8], strides = [1, 1, 1]} : vector<4x8x8xf32> to vector<1x8x8xf32>
    %510 = vector.broadcast %508 : vector<4x1x1xf32> to vector<4x8x8xf32>
    %511 = vector.broadcast %509 : vector<1x8x8xf32> to vector<4x8x8xf32>
    %512 = arith.mulf %510, %511 : vector<4x8x8xf32>
    %513 = arith.addf %506, %512 : vector<4x8x8xf32>
    %c7_310 = arith.constant 7 : index
    %c2_311 = arith.constant 2 : index
    %c0_312 = arith.constant 0 : index
    %c0_313 = arith.constant 0 : index
    %c0_314 = arith.constant 0 : index
    %514 = vector.load %arg7[%c7_310, %c2_311, %c0_312, %c0_313, %c0_314] : memref<9x4x4x1x1xf32, #tpu.memory_space<vmem>>, vector<1x1x4x1x1xf32>
    %515 = vector.shape_cast %514 : vector<1x1x4x1x1xf32> to vector<4x1x1xf32>
    %516 = vector.extract_strided_slice %499 {offsets = [2, 0, 0], sizes = [1, 8, 8], strides = [1, 1, 1]} : vector<4x8x8xf32> to vector<1x8x8xf32>
    %517 = vector.broadcast %515 : vector<4x1x1xf32> to vector<4x8x8xf32>
    %518 = vector.broadcast %516 : vector<1x8x8xf32> to vector<4x8x8xf32>
    %519 = arith.mulf %517, %518 : vector<4x8x8xf32>
    %520 = arith.addf %513, %519 : vector<4x8x8xf32>
    %c7_315 = arith.constant 7 : index
    %c3_316 = arith.constant 3 : index
    %c0_317 = arith.constant 0 : index
    %c0_318 = arith.constant 0 : index
    %c0_319 = arith.constant 0 : index
    %521 = vector.load %arg7[%c7_315, %c3_316, %c0_317, %c0_318, %c0_319] : memref<9x4x4x1x1xf32, #tpu.memory_space<vmem>>, vector<1x1x4x1x1xf32>
    %522 = vector.shape_cast %521 : vector<1x1x4x1x1xf32> to vector<4x1x1xf32>
    %523 = vector.extract_strided_slice %499 {offsets = [3, 0, 0], sizes = [1, 8, 8], strides = [1, 1, 1]} : vector<4x8x8xf32> to vector<1x8x8xf32>
    %524 = vector.broadcast %522 : vector<4x1x1xf32> to vector<4x8x8xf32>
    %525 = vector.broadcast %523 : vector<1x8x8xf32> to vector<4x8x8xf32>
    %526 = arith.mulf %524, %525 : vector<4x8x8xf32>
    %527 = arith.addf %520, %526 : vector<4x8x8xf32>
    %528 = vector.extract_strided_slice %296 {offsets = [0, 1, 1], sizes = [4, 8, 8], strides = [1, 1, 1]} : vector<4x9x9xf32> to vector<4x8x8xf32>
    %c8 = arith.constant 8 : index
    %c0_320 = arith.constant 0 : index
    %c0_321 = arith.constant 0 : index
    %c0_322 = arith.constant 0 : index
    %c0_323 = arith.constant 0 : index
    %529 = vector.load %arg7[%c8, %c0_320, %c0_321, %c0_322, %c0_323] : memref<9x4x4x1x1xf32, #tpu.memory_space<vmem>>, vector<1x1x4x1x1xf32>
    %530 = vector.shape_cast %529 : vector<1x1x4x1x1xf32> to vector<4x1x1xf32>
    %531 = vector.extract_strided_slice %528 {offsets = [0, 0, 0], sizes = [1, 8, 8], strides = [1, 1, 1]} : vector<4x8x8xf32> to vector<1x8x8xf32>
    %532 = vector.broadcast %530 : vector<4x1x1xf32> to vector<4x8x8xf32>
    %533 = vector.broadcast %531 : vector<1x8x8xf32> to vector<4x8x8xf32>
    %534 = arith.mulf %532, %533 : vector<4x8x8xf32>
    %535 = arith.addf %527, %534 : vector<4x8x8xf32>
    %c8_324 = arith.constant 8 : index
    %c1_325 = arith.constant 1 : index
    %c0_326 = arith.constant 0 : index
    %c0_327 = arith.constant 0 : index
    %c0_328 = arith.constant 0 : index
    %536 = vector.load %arg7[%c8_324, %c1_325, %c0_326, %c0_327, %c0_328] : memref<9x4x4x1x1xf32, #tpu.memory_space<vmem>>, vector<1x1x4x1x1xf32>
    %537 = vector.shape_cast %536 : vector<1x1x4x1x1xf32> to vector<4x1x1xf32>
    %538 = vector.extract_strided_slice %528 {offsets = [1, 0, 0], sizes = [1, 8, 8], strides = [1, 1, 1]} : vector<4x8x8xf32> to vector<1x8x8xf32>
    %539 = vector.broadcast %537 : vector<4x1x1xf32> to vector<4x8x8xf32>
    %540 = vector.broadcast %538 : vector<1x8x8xf32> to vector<4x8x8xf32>
    %541 = arith.mulf %539, %540 : vector<4x8x8xf32>
    %542 = arith.addf %535, %541 : vector<4x8x8xf32>
    %c8_329 = arith.constant 8 : index
    %c2_330 = arith.constant 2 : index
    %c0_331 = arith.constant 0 : index
    %c0_332 = arith.constant 0 : index
    %c0_333 = arith.constant 0 : index
    %543 = vector.load %arg7[%c8_329, %c2_330, %c0_331, %c0_332, %c0_333] : memref<9x4x4x1x1xf32, #tpu.memory_space<vmem>>, vector<1x1x4x1x1xf32>
    %544 = vector.shape_cast %543 : vector<1x1x4x1x1xf32> to vector<4x1x1xf32>
    %545 = vector.extract_strided_slice %528 {offsets = [2, 0, 0], sizes = [1, 8, 8], strides = [1, 1, 1]} : vector<4x8x8xf32> to vector<1x8x8xf32>
    %546 = vector.broadcast %544 : vector<4x1x1xf32> to vector<4x8x8xf32>
    %547 = vector.broadcast %545 : vector<1x8x8xf32> to vector<4x8x8xf32>
    %548 = arith.mulf %546, %547 : vector<4x8x8xf32>
    %549 = arith.addf %542, %548 : vector<4x8x8xf32>
    %c8_334 = arith.constant 8 : index
    %c3_335 = arith.constant 3 : index
    %c0_336 = arith.constant 0 : index
    %c0_337 = arith.constant 0 : index
    %c0_338 = arith.constant 0 : index
    %550 = vector.load %arg7[%c8_334, %c3_335, %c0_336, %c0_337, %c0_338] : memref<9x4x4x1x1xf32, #tpu.memory_space<vmem>>, vector<1x1x4x1x1xf32>
    %551 = vector.shape_cast %550 : vector<1x1x4x1x1xf32> to vector<4x1x1xf32>
    %552 = vector.extract_strided_slice %528 {offsets = [3, 0, 0], sizes = [1, 8, 8], strides = [1, 1, 1]} : vector<4x8x8xf32> to vector<1x8x8xf32>
    %553 = vector.broadcast %551 : vector<4x1x1xf32> to vector<4x8x8xf32>
    %554 = vector.broadcast %552 : vector<1x8x8xf32> to vector<4x8x8xf32>
    %555 = arith.mulf %553, %554 : vector<4x8x8xf32>
    %556 = arith.addf %549, %555 : vector<4x8x8xf32>
    %c0_339 = arith.constant 0 : index
    %c0_340 = arith.constant 0 : index
    %c0_341 = arith.constant 0 : index
    %557 = vector.load %arg8[%c0_339, %c0_340, %c0_341] : memref<4x1x1xf32, #tpu.memory_space<vmem>>, vector<4x1x1xf32>
    %558 = vector.broadcast %557 : vector<4x1x1xf32> to vector<4x8x8xf32>
    %559 = arith.mulf %556, %558 : vector<4x8x8xf32>
    %c0_342 = arith.constant 0 : index
    %c0_343 = arith.constant 0 : index
    %c0_344 = arith.constant 0 : index
    %560 = vector.load %arg9[%c0_342, %c0_343, %c0_344] : memref<4x1x1xf32, #tpu.memory_space<vmem>>, vector<4x1x1xf32>
    %561 = vector.broadcast %560 : vector<4x1x1xf32> to vector<4x8x8xf32>
    %562 = arith.addf %559, %561 : vector<4x8x8xf32>
    %cst_345 = arith.constant 0.000000e+00 : f32
    %563 = vector.broadcast %cst_345 : f32 to vector<4x8x8xf32>
    %564 = arith.maximumf %562, %563 : vector<4x8x8xf32>
    %c0_346 = arith.constant 0 : index
    %c0_347 = arith.constant 0 : index
    %c0_348 = arith.constant 0 : index
    %c0_349 = arith.constant 0 : index
    %565 = vector.load %arg10[%c0_346, %c0_347, %c0_348, %c0_349] : memref<4x16x1x1xf32, #tpu.memory_space<vmem>>, vector<1x16x1x1xf32>
    %566 = vector.shape_cast %565 : vector<1x16x1x1xf32> to vector<16x1x1xf32>
    %567 = vector.extract_strided_slice %564 {offsets = [0, 0, 0], sizes = [1, 8, 8], strides = [1, 1, 1]} : vector<4x8x8xf32> to vector<1x8x8xf32>
    %568 = vector.broadcast %566 : vector<16x1x1xf32> to vector<16x8x8xf32>
    %569 = vector.broadcast %567 : vector<1x8x8xf32> to vector<16x8x8xf32>
    %570 = arith.mulf %568, %569 : vector<16x8x8xf32>
    %c1_350 = arith.constant 1 : index
    %c0_351 = arith.constant 0 : index
    %c0_352 = arith.constant 0 : index
    %c0_353 = arith.constant 0 : index
    %571 = vector.load %arg10[%c1_350, %c0_351, %c0_352, %c0_353] : memref<4x16x1x1xf32, #tpu.memory_space<vmem>>, vector<1x16x1x1xf32>
    %572 = vector.shape_cast %571 : vector<1x16x1x1xf32> to vector<16x1x1xf32>
    %573 = vector.extract_strided_slice %564 {offsets = [1, 0, 0], sizes = [1, 8, 8], strides = [1, 1, 1]} : vector<4x8x8xf32> to vector<1x8x8xf32>
    %574 = vector.broadcast %572 : vector<16x1x1xf32> to vector<16x8x8xf32>
    %575 = vector.broadcast %573 : vector<1x8x8xf32> to vector<16x8x8xf32>
    %576 = arith.mulf %574, %575 : vector<16x8x8xf32>
    %577 = arith.addf %570, %576 : vector<16x8x8xf32>
    %c2_354 = arith.constant 2 : index
    %c0_355 = arith.constant 0 : index
    %c0_356 = arith.constant 0 : index
    %c0_357 = arith.constant 0 : index
    %578 = vector.load %arg10[%c2_354, %c0_355, %c0_356, %c0_357] : memref<4x16x1x1xf32, #tpu.memory_space<vmem>>, vector<1x16x1x1xf32>
    %579 = vector.shape_cast %578 : vector<1x16x1x1xf32> to vector<16x1x1xf32>
    %580 = vector.extract_strided_slice %564 {offsets = [2, 0, 0], sizes = [1, 8, 8], strides = [1, 1, 1]} : vector<4x8x8xf32> to vector<1x8x8xf32>
    %581 = vector.broadcast %579 : vector<16x1x1xf32> to vector<16x8x8xf32>
    %582 = vector.broadcast %580 : vector<1x8x8xf32> to vector<16x8x8xf32>
    %583 = arith.mulf %581, %582 : vector<16x8x8xf32>
    %584 = arith.addf %577, %583 : vector<16x8x8xf32>
    %c3_358 = arith.constant 3 : index
    %c0_359 = arith.constant 0 : index
    %c0_360 = arith.constant 0 : index
    %c0_361 = arith.constant 0 : index
    %585 = vector.load %arg10[%c3_358, %c0_359, %c0_360, %c0_361] : memref<4x16x1x1xf32, #tpu.memory_space<vmem>>, vector<1x16x1x1xf32>
    %586 = vector.shape_cast %585 : vector<1x16x1x1xf32> to vector<16x1x1xf32>
    %587 = vector.extract_strided_slice %564 {offsets = [3, 0, 0], sizes = [1, 8, 8], strides = [1, 1, 1]} : vector<4x8x8xf32> to vector<1x8x8xf32>
    %588 = vector.broadcast %586 : vector<16x1x1xf32> to vector<16x8x8xf32>
    %589 = vector.broadcast %587 : vector<1x8x8xf32> to vector<16x8x8xf32>
    %590 = arith.mulf %588, %589 : vector<16x8x8xf32>
    %591 = arith.addf %584, %590 : vector<16x8x8xf32>
    %c0_362 = arith.constant 0 : index
    %c0_363 = arith.constant 0 : index
    %c0_364 = arith.constant 0 : index
    %c0_365 = arith.constant 0 : index
    %c0_366 = arith.constant 0 : index
    %592 = vector.load %arg1[%c0_362, %c0_363, %c0_364, %c0_365, %c0_366] : memref<1x4x8x9x9xf32, #tpu.memory_space<vmem>>, vector<1x1x8x9x9xf32>
    %593 = vector.shape_cast %592 : vector<1x1x8x9x9xf32> to vector<8x9x9xf32>
    %594 = vector.extract_strided_slice %593 {offsets = [0, 1, 1], sizes = [8, 8, 8], strides = [1, 1, 1]} : vector<8x9x9xf32> to vector<8x8x8xf32>
    %c0_367 = arith.constant 0 : index
    %c0_368 = arith.constant 0 : index
    %c0_369 = arith.constant 0 : index
    %595 = vector.load %arg11[%c0_367, %c0_368, %c0_369] : memref<8x1x1xf32, #tpu.memory_space<vmem>>, vector<8x1x1xf32>
    %596 = vector.broadcast %595 : vector<8x1x1xf32> to vector<8x8x8xf32>
    %597 = arith.mulf %594, %596 : vector<8x8x8xf32>
    %c0_370 = arith.constant 0 : index
    %c0_371 = arith.constant 0 : index
    %c0_372 = arith.constant 0 : index
    %598 = vector.load %arg12[%c0_370, %c0_371, %c0_372] : memref<8x1x1xf32, #tpu.memory_space<vmem>>, vector<8x1x1xf32>
    %599 = vector.broadcast %598 : vector<8x1x1xf32> to vector<8x8x8xf32>
    %600 = arith.addf %597, %599 : vector<8x8x8xf32>
    %c0_373 = arith.constant 0 : index
    %c0_374 = arith.constant 0 : index
    %c0_375 = arith.constant 0 : index
    %c0_376 = arith.constant 0 : index
    %601 = vector.load %arg13[%c0_373, %c0_374, %c0_375, %c0_376] : memref<8x16x1x1xf32, #tpu.memory_space<vmem>>, vector<1x16x1x1xf32>
    %602 = vector.shape_cast %601 : vector<1x16x1x1xf32> to vector<16x1x1xf32>
    %603 = vector.extract_strided_slice %600 {offsets = [0, 0, 0], sizes = [1, 8, 8], strides = [1, 1, 1]} : vector<8x8x8xf32> to vector<1x8x8xf32>
    %604 = vector.broadcast %602 : vector<16x1x1xf32> to vector<16x8x8xf32>
    %605 = vector.broadcast %603 : vector<1x8x8xf32> to vector<16x8x8xf32>
    %606 = arith.mulf %604, %605 : vector<16x8x8xf32>
    %c1_377 = arith.constant 1 : index
    %c0_378 = arith.constant 0 : index
    %c0_379 = arith.constant 0 : index
    %c0_380 = arith.constant 0 : index
    %607 = vector.load %arg13[%c1_377, %c0_378, %c0_379, %c0_380] : memref<8x16x1x1xf32, #tpu.memory_space<vmem>>, vector<1x16x1x1xf32>
    %608 = vector.shape_cast %607 : vector<1x16x1x1xf32> to vector<16x1x1xf32>
    %609 = vector.extract_strided_slice %600 {offsets = [1, 0, 0], sizes = [1, 8, 8], strides = [1, 1, 1]} : vector<8x8x8xf32> to vector<1x8x8xf32>
    %610 = vector.broadcast %608 : vector<16x1x1xf32> to vector<16x8x8xf32>
    %611 = vector.broadcast %609 : vector<1x8x8xf32> to vector<16x8x8xf32>
    %612 = arith.mulf %610, %611 : vector<16x8x8xf32>
    %613 = arith.addf %606, %612 : vector<16x8x8xf32>
    %c2_381 = arith.constant 2 : index
    %c0_382 = arith.constant 0 : index
    %c0_383 = arith.constant 0 : index
    %c0_384 = arith.constant 0 : index
    %614 = vector.load %arg13[%c2_381, %c0_382, %c0_383, %c0_384] : memref<8x16x1x1xf32, #tpu.memory_space<vmem>>, vector<1x16x1x1xf32>
    %615 = vector.shape_cast %614 : vector<1x16x1x1xf32> to vector<16x1x1xf32>
    %616 = vector.extract_strided_slice %600 {offsets = [2, 0, 0], sizes = [1, 8, 8], strides = [1, 1, 1]} : vector<8x8x8xf32> to vector<1x8x8xf32>
    %617 = vector.broadcast %615 : vector<16x1x1xf32> to vector<16x8x8xf32>
    %618 = vector.broadcast %616 : vector<1x8x8xf32> to vector<16x8x8xf32>
    %619 = arith.mulf %617, %618 : vector<16x8x8xf32>
    %620 = arith.addf %613, %619 : vector<16x8x8xf32>
    %c3_385 = arith.constant 3 : index
    %c0_386 = arith.constant 0 : index
    %c0_387 = arith.constant 0 : index
    %c0_388 = arith.constant 0 : index
    %621 = vector.load %arg13[%c3_385, %c0_386, %c0_387, %c0_388] : memref<8x16x1x1xf32, #tpu.memory_space<vmem>>, vector<1x16x1x1xf32>
    %622 = vector.shape_cast %621 : vector<1x16x1x1xf32> to vector<16x1x1xf32>
    %623 = vector.extract_strided_slice %600 {offsets = [3, 0, 0], sizes = [1, 8, 8], strides = [1, 1, 1]} : vector<8x8x8xf32> to vector<1x8x8xf32>
    %624 = vector.broadcast %622 : vector<16x1x1xf32> to vector<16x8x8xf32>
    %625 = vector.broadcast %623 : vector<1x8x8xf32> to vector<16x8x8xf32>
    %626 = arith.mulf %624, %625 : vector<16x8x8xf32>
    %627 = arith.addf %620, %626 : vector<16x8x8xf32>
    %c4_389 = arith.constant 4 : index
    %c0_390 = arith.constant 0 : index
    %c0_391 = arith.constant 0 : index
    %c0_392 = arith.constant 0 : index
    %628 = vector.load %arg13[%c4_389, %c0_390, %c0_391, %c0_392] : memref<8x16x1x1xf32, #tpu.memory_space<vmem>>, vector<1x16x1x1xf32>
    %629 = vector.shape_cast %628 : vector<1x16x1x1xf32> to vector<16x1x1xf32>
    %630 = vector.extract_strided_slice %600 {offsets = [4, 0, 0], sizes = [1, 8, 8], strides = [1, 1, 1]} : vector<8x8x8xf32> to vector<1x8x8xf32>
    %631 = vector.broadcast %629 : vector<16x1x1xf32> to vector<16x8x8xf32>
    %632 = vector.broadcast %630 : vector<1x8x8xf32> to vector<16x8x8xf32>
    %633 = arith.mulf %631, %632 : vector<16x8x8xf32>
    %634 = arith.addf %627, %633 : vector<16x8x8xf32>
    %c5_393 = arith.constant 5 : index
    %c0_394 = arith.constant 0 : index
    %c0_395 = arith.constant 0 : index
    %c0_396 = arith.constant 0 : index
    %635 = vector.load %arg13[%c5_393, %c0_394, %c0_395, %c0_396] : memref<8x16x1x1xf32, #tpu.memory_space<vmem>>, vector<1x16x1x1xf32>
    %636 = vector.shape_cast %635 : vector<1x16x1x1xf32> to vector<16x1x1xf32>
    %637 = vector.extract_strided_slice %600 {offsets = [5, 0, 0], sizes = [1, 8, 8], strides = [1, 1, 1]} : vector<8x8x8xf32> to vector<1x8x8xf32>
    %638 = vector.broadcast %636 : vector<16x1x1xf32> to vector<16x8x8xf32>
    %639 = vector.broadcast %637 : vector<1x8x8xf32> to vector<16x8x8xf32>
    %640 = arith.mulf %638, %639 : vector<16x8x8xf32>
    %641 = arith.addf %634, %640 : vector<16x8x8xf32>
    %c6_397 = arith.constant 6 : index
    %c0_398 = arith.constant 0 : index
    %c0_399 = arith.constant 0 : index
    %c0_400 = arith.constant 0 : index
    %642 = vector.load %arg13[%c6_397, %c0_398, %c0_399, %c0_400] : memref<8x16x1x1xf32, #tpu.memory_space<vmem>>, vector<1x16x1x1xf32>
    %643 = vector.shape_cast %642 : vector<1x16x1x1xf32> to vector<16x1x1xf32>
    %644 = vector.extract_strided_slice %600 {offsets = [6, 0, 0], sizes = [1, 8, 8], strides = [1, 1, 1]} : vector<8x8x8xf32> to vector<1x8x8xf32>
    %645 = vector.broadcast %643 : vector<16x1x1xf32> to vector<16x8x8xf32>
    %646 = vector.broadcast %644 : vector<1x8x8xf32> to vector<16x8x8xf32>
    %647 = arith.mulf %645, %646 : vector<16x8x8xf32>
    %648 = arith.addf %641, %647 : vector<16x8x8xf32>
    %c7_401 = arith.constant 7 : index
    %c0_402 = arith.constant 0 : index
    %c0_403 = arith.constant 0 : index
    %c0_404 = arith.constant 0 : index
    %649 = vector.load %arg13[%c7_401, %c0_402, %c0_403, %c0_404] : memref<8x16x1x1xf32, #tpu.memory_space<vmem>>, vector<1x16x1x1xf32>
    %650 = vector.shape_cast %649 : vector<1x16x1x1xf32> to vector<16x1x1xf32>
    %651 = vector.extract_strided_slice %600 {offsets = [7, 0, 0], sizes = [1, 8, 8], strides = [1, 1, 1]} : vector<8x8x8xf32> to vector<1x8x8xf32>
    %652 = vector.broadcast %650 : vector<16x1x1xf32> to vector<16x8x8xf32>
    %653 = vector.broadcast %651 : vector<1x8x8xf32> to vector<16x8x8xf32>
    %654 = arith.mulf %652, %653 : vector<16x8x8xf32>
    %655 = arith.addf %648, %654 : vector<16x8x8xf32>
    %656 = arith.addf %591, %655 : vector<16x8x8xf32>
    %c0_405 = arith.constant 0 : index
    %c0_406 = arith.constant 0 : index
    %c0_407 = arith.constant 0 : index
    %c0_408 = arith.constant 0 : index
    %657 = vector.load %arg14[%c0_405, %c0_406, %c0_407, %c0_408] : memref<1x16x8x8xf32, #tpu.memory_space<vmem>>, vector<1x16x8x8xf32>
    %658 = vector.shape_cast %657 : vector<1x16x8x8xf32> to vector<16x8x8xf32>
    %659 = vector.shape_cast %656 : vector<16x8x8xf32> to vector<1x16x8x8xf32>
    tpu.vector_store %arg14[%c0_405, %c0_406, %c0_407, %c0_408], %659 {strides = array<i32>} : memref<1x16x8x8xf32, #tpu.memory_space<vmem>>, vector<1x16x8x8xf32>,
    return
  }
  func.func @transform_0(%arg0: i32) -> (i32, i32, i32, i32, i32) {
    %c0_i32 = arith.constant 0 : i32
    %c0_i32_0 = arith.constant 0 : i32
    %c0_i32_1 = arith.constant 0 : i32
    %c0_i32_2 = arith.constant 0 : i32
    %c0_i32_3 = arith.constant 0 : i32
    return %arg0, %c0_i32, %c0_i32_0, %c0_i32_1, %c0_i32_2 : i32, i32, i32, i32, i32
  }
  func.func @transform_1(%arg0: i32) -> (i32, i32, i32) {
    %c0_i32 = arith.constant 0 : i32
    %c0_i32_0 = arith.constant 0 : i32
    %c0_i32_1 = arith.constant 0 : i32
    %c0_i32_2 = arith.constant 0 : i32
    return %c0_i32, %c0_i32_0, %c0_i32_1 : i32, i32, i32
  }
  func.func @transform_2(%arg0: i32) -> (i32, i32, i32) {
    %c0_i32 = arith.constant 0 : i32
    %c0_i32_0 = arith.constant 0 : i32
    %c0_i32_1 = arith.constant 0 : i32
    %c0_i32_2 = arith.constant 0 : i32
    return %c0_i32, %c0_i32_0, %c0_i32_1 : i32, i32, i32
  }
  func.func @transform_3(%arg0: i32) -> (i32, i32, i32, i32) {
    %c0_i32 = arith.constant 0 : i32
    %c0_i32_0 = arith.constant 0 : i32
    %c0_i32_1 = arith.constant 0 : i32
    %c0_i32_2 = arith.constant 0 : i32
    %c0_i32_3 = arith.constant 0 : i32
    return %c0_i32, %c0_i32_0, %c0_i32_1, %c0_i32_2 : i32, i32, i32, i32
  }
  func.func @transform_4(%arg0: i32) -> (i32, i32, i32) {
    %c0_i32 = arith.constant 0 : i32
    %c0_i32_0 = arith.constant 0 : i32
    %c0_i32_1 = arith.constant 0 : i32
    %c0_i32_2 = arith.constant 0 : i32
    return %c0_i32, %c0_i32_0, %c0_i32_1 : i32, i32, i32
  }
  func.func @transform_5(%arg0: i32) -> (i32, i32, i32) {
    %c0_i32 = arith.constant 0 : i32
    %c0_i32_0 = arith.constant 0 : i32
    %c0_i32_1 = arith.constant 0 : i32
    %c0_i32_2 = arith.constant 0 : i32
    return %c0_i32, %c0_i32_0, %c0_i32_1 : i32, i32, i32
  }
  func.func @transform_6(%arg0: i32) -> (i32, i32, i32, i32, i32) {
    %c0_i32 = arith.constant 0 : i32
    %c0_i32_0 = arith.constant 0 : i32
    %c0_i32_1 = arith.constant 0 : i32
    %c0_i32_2 = arith.constant 0 : i32
    %c0_i32_3 = arith.constant 0 : i32
    %c0_i32_4 = arith.constant 0 : i32
    return %c0_i32, %c0_i32_0, %c0_i32_1, %c0_i32_2, %c0_i32_3 : i32, i32, i32, i32, i32
  }
  func.func @transform_7(%arg0: i32) -> (i32, i32, i32) {
    %c0_i32 = arith.constant 0 : i32
    %c0_i32_0 = arith.constant 0 : i32
    %c0_i32_1 = arith.constant 0 : i32
    %c0_i32_2 = arith.constant 0 : i32
    return %c0_i32, %c0_i32_0, %c0_i32_1 : i32, i32, i32
  }
  func.func @transform_8(%arg0: i32) -> (i32, i32, i32) {
    %c0_i32 = arith.constant 0 : i32
    %c0_i32_0 = arith.constant 0 : i32
    %c0_i32_1 = arith.constant 0 : i32
    %c0_i32_2 = arith.constant 0 : i32
    return %c0_i32, %c0_i32_0, %c0_i32_1 : i32, i32, i32
  }
  func.func @transform_9(%arg0: i32) -> (i32, i32, i32, i32) {
    %c0_i32 = arith.constant 0 : i32
    %c0_i32_0 = arith.constant 0 : i32
    %c0_i32_1 = arith.constant 0 : i32
    %c0_i32_2 = arith.constant 0 : i32
    %c0_i32_3 = arith.constant 0 : i32
    return %c0_i32, %c0_i32_0, %c0_i32_1, %c0_i32_2 : i32, i32, i32, i32
  }
  func.func @transform_10(%arg0: i32) -> (i32, i32, i32) {
    %c0_i32 = arith.constant 0 : i32
    %c0_i32_0 = arith.constant 0 : i32
    %c0_i32_1 = arith.constant 0 : i32
    %c0_i32_2 = arith.constant 0 : i32
    return %c0_i32, %c0_i32_0, %c0_i32_1 : i32, i32, i32
  }
  func.func @transform_11(%arg0: i32) -> (i32, i32, i32) {
    %c0_i32 = arith.constant 0 : i32
    %c0_i32_0 = arith.constant 0 : i32
    %c0_i32_1 = arith.constant 0 : i32
    %c0_i32_2 = arith.constant 0 : i32
    return %c0_i32, %c0_i32_0, %c0_i32_1 : i32, i32, i32
  }
  func.func @transform_12(%arg0: i32) -> (i32, i32, i32, i32) {
    %c0_i32 = arith.constant 0 : i32
    %c0_i32_0 = arith.constant 0 : i32
    %c0_i32_1 = arith.constant 0 : i32
    %c0_i32_2 = arith.constant 0 : i32
    %c0_i32_3 = arith.constant 0 : i32
    return %c0_i32, %c0_i32_0, %c0_i32_1, %c0_i32_2 : i32, i32, i32, i32
  }
  func.func @transform_13(%arg0: i32) -> (i32, i32, i32, i32) {
    %c0_i32 = arith.constant 0 : i32
    %c0_i32_0 = arith.constant 0 : i32
    %c0_i32_1 = arith.constant 0 : i32
    %c0_i32_2 = arith.constant 0 : i32
    return %arg0, %c0_i32, %c0_i32_0, %c0_i32_1 : i32, i32, i32, i32
  }
}

</mosaic_0001>

<llo_original>
// kernel: preact_bottleneck_forward.1
$region0: #{preact_bottleneck_forward.1}
  #allocation0 [shape = 'u32[]', space=smem, size = 0x4, offset = 0x4, fixed_abs, tag = 'smem constant byte address 0x4 - core index']
  #allocation1 [shape = 'u32[144,128]{1,0:T(1,128)}', space=vmem, size = 0x12000, scoped, tag = 'internal scratch']
  %s0 = inlined_call_operand.vmem [shape: f32[2,4,8,9,9], index: 0, kind: input, shape index: {}]
  %s1 = inlined_call_operand.vmem [shape: f32[8,1,1], index: 1, kind: input, shape index: {}]
  %s2 = inlined_call_operand.vmem [shape: f32[8,1,1], index: 2, kind: input, shape index: {}]
  %s3 = inlined_call_operand.vmem [shape: f32[8,4,1,1], index: 3, kind: input, shape index: {}]
  %s4 = inlined_call_operand.vmem [shape: f32[4,1,1], index: 4, kind: input, shape index: {}]
  %s5 = inlined_call_operand.vmem [shape: f32[4,1,1], index: 5, kind: input, shape index: {}]
  %s6 = inlined_call_operand.vmem [shape: f32[9,4,4,1,1], index: 6, kind: input, shape index: {}]
  %s7 = inlined_call_operand.vmem [shape: f32[4,1,1], index: 7, kind: input, shape index: {}]
  %s8 = inlined_call_operand.vmem [shape: f32[4,1,1], index: 8, kind: input, shape index: {}]
  %s9 = inlined_call_operand.vmem [shape: f32[4,16,1,1], index: 9, kind: input, shape index: {}]
  %s10 = inlined_call_operand.vmem [shape: f32[8,1,1], index: 10, kind: input, shape index: {}]
  %s11 = inlined_call_operand.vmem [shape: f32[8,1,1], index: 11, kind: input, shape index: {}]
  %s12 = inlined_call_operand.vmem [shape: f32[8,16,1,1], index: 12, kind: input, shape index: {}]
  %s13 = inlined_call_operand.vmem [shape: f32[2,16,8,8], index: 13, kind: output, shape index: {}]
  %s14 = sld [smem:[#allocation0]]
  $region85: #{preact_bottleneck_forward.1} parent=0
    _
  %s16 = ssub.s32 1, %s14
  %s17 = scalar_select 0, %s16, %s14
  loop: start=0, step=1, limit=4
  $region2: #{preact_bottleneck_forward.1} parent=0 // loop_pre_header
    _
  $region3: #{preact_bottleneck_forward.1} parent=0 // loop_header
    %s19 = sphi 0, %s23
    %p20 = scmp.ge.s32.totalorder %s19, 4
    %s29 = sphi 0, %s31
    %s32 = sphi 0, %s29
    %s33 = sphi 0, %s32
    %s49 = sphi 0, %s33
    %s53 = sphi 0, %s53
    %s55 = sphi 0, %s53
    %s56 = sphi 0, %s55
    %s70 = sphi 0, %s56
    %s74 = sphi 0, %s74
    %s76 = sphi 0, %s74
    %s77 = sphi 0, %s76
    %s91 = sphi 0, %s77
    %s95 = sphi 0, %s95
    %s97 = sphi 0, %s95
    %s98 = sphi 0, %s97
    %s112 = sphi 0, %s98
    %s116 = sphi 0, %s116
    %s118 = sphi 0, %s116
    %s119 = sphi 0, %s118
    %s133 = sphi 0, %s119
    %s137 = sphi 0, %s137
    %s139 = sphi 0, %s137
    %s140 = sphi 0, %s139
    %s154 = sphi 0, %s140
    %s158 = sphi 0, %s158
    %s160 = sphi 0, %s158
    %s161 = sphi 0, %s160
    %s175 = sphi 0, %s161
    %s179 = sphi 0, %s179
    %s181 = sphi 0, %s179
    %s182 = sphi 0, %s181
    %s196 = sphi 0, %s182
    %s200 = sphi 0, %s200
    %s202 = sphi 0, %s200
    %s203 = sphi 0, %s202
    %s217 = sphi 0, %s203
    %s221 = sphi 0, %s221
    %s223 = sphi 0, %s221
    %s224 = sphi 0, %s223
    %s238 = sphi 0, %s224
    %s242 = sphi 0, %s242
    %s244 = sphi 0, %s242
    %s245 = sphi 0, %s244
    %s259 = sphi 0, %s245
    %s263 = sphi 0, %s263
    %s265 = sphi 0, %s263
    %s266 = sphi 0, %s265
    %s280 = sphi 0, %s266
    %s284 = sphi 0, %s284
    %s286 = sphi 0, %s284
    %s287 = sphi 0, %s286
    %s301 = sphi 0, %s287
    %s307 = sphi 0, %s309
    %s310 = sphi 0, %s307
    %s311 = sphi 0, %s310
    %s327 = sphi 0, %s311
  $region4: #{preact_bottleneck_forward.1} parent=0 // loop_header_branch
    %22 = sbr.rel (%p20) target = $region8
  $region5: #{preact_bottleneck_forward.1} parent=0 // loop_body
    %s24 = ssub.s32 %s19, 1
    %s25 = ssub.s32 %s19, 2
    %s26 = sadd.s32 %s19, 1
    %s27 = ssub.s32 %s19, %s26
    %p28 = scmp.eq.s32.totalorder %s27, 0
    %s30 = sadd.s32 %s29, 1
    %s31 = scalar_select %p28, %s29, %s30
    %p34 = pneg %p28
    %p35 = scmp.eq.s32.totalorder %s19, 1
    %p36 = por %p34, %p35
    %p37 = scmp.ne.s32.totalorder %s29, %s32
    %p38 = scmp.eq.s32.totalorder %s19, 0
    %p39 = por %p37, %p38
    %p40 = scmp.ne.s32.totalorder %s29, %s32
    %p41 = scmp.eq.s32.totalorder %s24, 1
    %p42 = por %p40, %p41
    %p43 = scmp.ne.s32.totalorder %s32, %s33
    %p44 = scmp.eq.s32.totalorder %s24, 0
    %p45 = por %p43, %p44
    %p46 = scmp.ne.s32.totalorder %s32, %s33
    %p47 = scmp.eq.s32.totalorder %s25, 1
    %p48 = por %p46, %p47
    %p50 = scmp.ne.s32.totalorder %s33, %s49
    %p51 = scmp.eq.s32.totalorder %s25, 0
    %p52 = por %p50, %p51
    %s54 = sadd.s32 %s53, 1
    %p57 = scmp.eq.s32.totalorder %s19, 1
    %p58 = scmp.ne.s32.totalorder %s53, %s55
    %p59 = scmp.eq.s32.totalorder %s19, 0
    %p60 = por %p58, %p59
    %p61 = scmp.ne.s32.totalorder %s53, %s55
    %p62 = scmp.eq.s32.totalorder %s24, 1
    %p63 = por %p61, %p62
    %p64 = scmp.ne.s32.totalorder %s55, %s56
    %p65 = scmp.eq.s32.totalorder %s24, 0
    %p66 = por %p64, %p65
    %p67 = scmp.ne.s32.totalorder %s55, %s56
    %p68 = scmp.eq.s32.totalorder %s25, 1
    %p69 = por %p67, %p68
    %p71 = scmp.ne.s32.totalorder %s56, %s70
    %p72 = scmp.eq.s32.totalorder %s25, 0
    %p73 = por %p71, %p72
    %s75 = sadd.s32 %s74, 1
    %p78 = scmp.eq.s32.totalorder %s19, 1
    %p79 = scmp.ne.s32.totalorder %s74, %s76
    %p80 = scmp.eq.s32.totalorder %s19, 0
    %p81 = por %p79, %p80
    %p82 = scmp.ne.s32.totalorder %s74, %s76
    %p83 = scmp.eq.s32.totalorder %s24, 1
    %p84 = por %p82, %p83
    %p85 = scmp.ne.s32.totalorder %s76, %s77
    %p86 = scmp.eq.s32.totalorder %s24, 0
    %p87 = por %p85, %p86
    %p88 = scmp.ne.s32.totalorder %s76, %s77
    %p89 = scmp.eq.s32.totalorder %s25, 1
    %p90 = por %p88, %p89
    %p92 = scmp.ne.s32.totalorder %s77, %s91
    %p93 = scmp.eq.s32.totalorder %s25, 0
    %p94 = por %p92, %p93
    %s96 = sadd.s32 %s95, 1
    %p99 = scmp.eq.s32.totalorder %s19, 1
    %p100 = scmp.ne.s32.totalorder %s95, %s97
    %p101 = scmp.eq.s32.totalorder %s19, 0
    %p102 = por %p100, %p101
    %p103 = scmp.ne.s32.totalorder %s95, %s97
    %p104 = scmp.eq.s32.totalorder %s24, 1
    %p105 = por %p103, %p104
    %p106 = scmp.ne.s32.totalorder %s97, %s98
    %p107 = scmp.eq.s32.totalorder %s24, 0
    %p108 = por %p106, %p107
    %p109 = scmp.ne.s32.totalorder %s97, %s98
    %p110 = scmp.eq.s32.totalorder %s25, 1
    %p111 = por %p109, %p110
    %p113 = scmp.ne.s32.totalorder %s98, %s112
    %p114 = scmp.eq.s32.totalorder %s25, 0
    %p115 = por %p113, %p114
    %s117 = sadd.s32 %s116, 1
    %p120 = scmp.eq.s32.totalorder %s19, 1
    %p121 = scmp.ne.s32.totalorder %s116, %s118
    %p122 = scmp.eq.s32.totalorder %s19, 0
    %p123 = por %p121, %p122
    %p124 = scmp.ne.s32.totalorder %s116, %s118
    %p125 = scmp.eq.s32.totalorder %s24, 1
    %p126 = por %p124, %p125
    %p127 = scmp.ne.s32.totalorder %s118, %s119
    %p128 = scmp.eq.s32.totalorder %s24, 0
    %p129 = por %p127, %p128
    %p130 = scmp.ne.s32.totalorder %s118, %s119
    %p131 = scmp.eq.s32.totalorder %s25, 1
    %p132 = por %p130, %p131
    %p134 = scmp.ne.s32.totalorder %s119, %s133
    %p135 = scmp.eq.s32.totalorder %s25, 0
    %p136 = por %p134, %p135
    %s138 = sadd.s32 %s137, 1
    %p141 = scmp.eq.s32.totalorder %s19, 1
    %p142 = scmp.ne.s32.totalorder %s137, %s139
    %p143 = scmp.eq.s32.totalorder %s19, 0
    %p144 = por %p142, %p143
    %p145 = scmp.ne.s32.totalorder %s137, %s139
    %p146 = scmp.eq.s32.totalorder %s24, 1
    %p147 = por %p145, %p146
    %p148 = scmp.ne.s32.totalorder %s139, %s140
    %p149 = scmp.eq.s32.totalorder %s24, 0
    %p150 = por %p148, %p149
    %p151 = scmp.ne.s32.totalorder %s139, %s140
    %p152 = scmp.eq.s32.totalorder %s25, 1
    %p153 = por %p151, %p152
    %p155 = scmp.ne.s32.totalorder %s140, %s154
    %p156 = scmp.eq.s32.totalorder %s25, 0
    %p157 = por %p155, %p156
    %s159 = sadd.s32 %s158, 1
    %p162 = scmp.eq.s32.totalorder %s19, 1
    %p163 = scmp.ne.s32.totalorder %s158, %s160
    %p164 = scmp.eq.s32.totalorder %s19, 0
    %p165 = por %p163, %p164
    %p166 = scmp.ne.s32.totalorder %s158, %s160
    %p167 = scmp.eq.s32.totalorder %s24, 1
    %p168 = por %p166, %p167
    %p169 = scmp.ne.s32.totalorder %s160, %s161
    %p170 = scmp.eq.s32.totalorder %s24, 0
    %p171 = por %p169, %p170
    %p172 = scmp.ne.s32.totalorder %s160, %s161
    %p173 = scmp.eq.s32.totalorder %s25, 1
    %p174 = por %p172, %p173
    %p176 = scmp.ne.s32.totalorder %s161, %s175
    %p177 = scmp.eq.s32.totalorder %s25, 0
    %p178 = por %p176, %p177
    %s180 = sadd.s32 %s179, 1
    %p183 = scmp.eq.s32.totalorder %s19, 1
    %p184 = scmp.ne.s32.totalorder %s179, %s181
    %p185 = scmp.eq.s32.totalorder %s19, 0
    %p186 = por %p184, %p185
    %p187 = scmp.ne.s32.totalorder %s179, %s181
    %p188 = scmp.eq.s32.totalorder %s24, 1
    %p189 = por %p187, %p188
    %p190 = scmp.ne.s32.totalorder %s181, %s182
    %p191 = scmp.eq.s32.totalorder %s24, 0
    %p192 = por %p190, %p191
    %p193 = scmp.ne.s32.totalorder %s181, %s182
    %p194 = scmp.eq.s32.totalorder %s25, 1
    %p195 = por %p193, %p194
    %p197 = scmp.ne.s32.totalorder %s182, %s196
    %p198 = scmp.eq.s32.totalorder %s25, 0
    %p199 = por %p197, %p198
    %s201 = sadd.s32 %s200, 1
    %p204 = scmp.eq.s32.totalorder %s19, 1
    %p205 = scmp.ne.s32.totalorder %s200, %s202
    %p206 = scmp.eq.s32.totalorder %s19, 0
    %p207 = por %p205, %p206
    %p208 = scmp.ne.s32.totalorder %s200, %s202
    %p209 = scmp.eq.s32.totalorder %s24, 1
    %p210 = por %p208, %p209
    %p211 = scmp.ne.s32.totalorder %s202, %s203
    %p212 = scmp.eq.s32.totalorder %s24, 0
    %p213 = por %p211, %p212
    %p214 = scmp.ne.s32.totalorder %s202, %s203
    %p215 = scmp.eq.s32.totalorder %s25, 1
    %p216 = por %p214, %p215
    %p218 = scmp.ne.s32.totalorder %s203, %s217
    %p219 = scmp.eq.s32.totalorder %s25, 0
    %p220 = por %p218, %p219
    %s222 = sadd.s32 %s221, 1
    %p225 = scmp.eq.s32.totalorder %s19, 1
    %p226 = scmp.ne.s32.totalorder %s221, %s223
    %p227 = scmp.eq.s32.totalorder %s19, 0
    %p228 = por %p226, %p227
    %p229 = scmp.ne.s32.totalorder %s221, %s223
    %p230 = scmp.eq.s32.totalorder %s24, 1
    %p231 = por %p229, %p230
    %p232 = scmp.ne.s32.totalorder %s223, %s224
    %p233 = scmp.eq.s32.totalorder %s24, 0
    %p234 = por %p232, %p233
    %p235 = scmp.ne.s32.totalorder %s223, %s224
    %p236 = scmp.eq.s32.totalorder %s25, 1
    %p237 = por %p235, %p236
    %p239 = scmp.ne.s32.totalorder %s224, %s238
    %p240 = scmp.eq.s32.totalorder %s25, 0
    %p241 = por %p239, %p240
    %s243 = sadd.s32 %s242, 1
    %p246 = scmp.eq.s32.totalorder %s19, 1
    %p247 = scmp.ne.s32.totalorder %s242, %s244
    %p248 = scmp.eq.s32.totalorder %s19, 0
    %p249 = por %p247, %p248
    %p250 = scmp.ne.s32.totalorder %s242, %s244
    %p251 = scmp.eq.s32.totalorder %s24, 1
    %p252 = por %p250, %p251
    %p253 = scmp.ne.s32.totalorder %s244, %s245
    %p254 = scmp.eq.s32.totalorder %s24, 0
    %p255 = por %p253, %p254
    %p256 = scmp.ne.s32.totalorder %s244, %s245
    %p257 = scmp.eq.s32.totalorder %s25, 1
    %p258 = por %p256, %p257
    %p260 = scmp.ne.s32.totalorder %s245, %s259
    %p261 = scmp.eq.s32.totalorder %s25, 0
    %p262 = por %p260, %p261
    %s264 = sadd.s32 %s263, 1
    %p267 = scmp.eq.s32.totalorder %s19, 1
    %p268 = scmp.ne.s32.totalorder %s263, %s265
    %p269 = scmp.eq.s32.totalorder %s19, 0
    %p270 = por %p268, %p269
    %p271 = scmp.ne.s32.totalorder %s263, %s265
    %p272 = scmp.eq.s32.totalorder %s24, 1
    %p273 = por %p271, %p272
    %p274 = scmp.ne.s32.totalorder %s265, %s266
    %p275 = scmp.eq.s32.totalorder %s24, 0
    %p276 = por %p274, %p275
    %p277 = scmp.ne.s32.totalorder %s265, %s266
    %p278 = scmp.eq.s32.totalorder %s25, 1
    %p279 = por %p277, %p278
    %p281 = scmp.ne.s32.totalorder %s266, %s280
    %p282 = scmp.eq.s32.totalorder %s25, 0
    %p283 = por %p281, %p282
    %s285 = sadd.s32 %s284, 1
    %p288 = scmp.eq.s32.totalorder %s19, 1
    %p289 = scmp.ne.s32.totalorder %s284, %s286
    %p290 = scmp.eq.s32.totalorder %s19, 0
    %p291 = por %p289, %p290
    %p292 = scmp.ne.s32.totalorder %s284, %s286
    %p293 = scmp.eq.s32.totalorder %s24, 1
    %p294 = por %p292, %p293
    %p295 = scmp.ne.s32.totalorder %s286, %s287
    %p296 = scmp.eq.s32.totalorder %s24, 0
    %p297 = por %p295, %p296
    %p298 = scmp.ne.s32.totalorder %s286, %s287
    %p299 = scmp.eq.s32.totalorder %s25, 1
    %p300 = por %p298, %p299
    %p302 = scmp.ne.s32.totalorder %s287, %s301
    %p303 = scmp.eq.s32.totalorder %s25, 0
    %p304 = por %p302, %p303
    %s305 = ssub.s32 %s19, %s26
    %p306 = scmp.eq.s32.totalorder %s305, 0
    %s308 = sadd.s32 %s307, 1
    %s309 = scalar_select %p306, %s307, %s308
    %p312 = pneg %p306
    %p313 = scmp.eq.s32.totalorder %s19, 1
    %p314 = por %p312, %p313
    %p315 = scmp.ne.s32.totalorder %s307, %s310
    %p316 = scmp.eq.s32.totalorder %s19, 0
    %p317 = por %p315, %p316
    %p318 = scmp.ne.s32.totalorder %s307, %s310
    %p319 = scmp.eq.s32.totalorder %s24, 1
    %p320 = por %p318, %p319
    %p321 = scmp.ne.s32.totalorder %s310, %s311
    %p322 = scmp.eq.s32.totalorder %s24, 0
    %p323 = por %p321, %p322
    %p324 = scmp.ne.s32.totalorder %s310, %s311
    %p325 = scmp.eq.s32.totalorder %s25, 1
    %p326 = por %p324, %p325
    %p328 = scmp.ne.s32.totalorder %s311, %s327
    %p329 = scmp.eq.s32.totalorder %s25, 0
    %p330 = por %p328, %p329
    %p331 = scmp.le.s32.totalorder 1, %s19
    %p332 = scmp.lt.s32.totalorder %s19, 3
    %p333 = pnand %p331, %p332
    %p334 = pneg %p333
    // Predicated region
    $region9: #{preact_bottleneck_forward.1} parent=5 // pred_check
      _
    $region10: #{preact_bottleneck_forward.1} parent=5 // pred_check_branch
      %336 = sbr.rel (%p333) target = $region12
    $region11: #{preact_bottleneck_forward.1} parent=5 // pred_region
      %s337 = ssub.s32 %s19, 1
      // Predicated region
      $region13: #{preact_bottleneck_forward.1} parent=11 // pred_check
        %p338 = pneg %p66
      $region14: #{preact_bottleneck_forward.1} parent=11 // pred_check_branch
        %340 = sbr.rel (%p338) target = $region16
      $region15: #{preact_bottleneck_forward.1} parent=11 // pred_region
        _
      $region16: #{preact_bottleneck_forward.1} parent=11 // pred_fallthru
        _
      // Predicated region
      $region17: #{preact_bottleneck_forward.1} parent=11 // pred_check
        %p341 = pneg %p87
      $region18: #{preact_bottleneck_forward.1} parent=11 // pred_check_branch
        %343 = sbr.rel (%p341) target = $region20
      $region19: #{preact_bottleneck_forward.1} parent=11 // pred_region
        _
      $region20: #{preact_bottleneck_forward.1} parent=11 // pred_fallthru
        _
      // Predicated region
      $region21: #{preact_bottleneck_forward.1} parent=11 // pred_check
        %p344 = pneg %p108
      $region22: #{preact_bottleneck_forward.1} parent=11 // pred_check_branch
        %346 = sbr.rel (%p344) target = $region24
      $region23: #{preact_bottleneck_forward.1} parent=11 // pred_region
        _
      $region24: #{preact_bottleneck_forward.1} parent=11 // pred_fallthru
        _
      // Predicated region
      $region25: #{preact_bottleneck_forward.1} parent=11 // pred_check
        %p347 = pneg %p129
      $region26: #{preact_bottleneck_forward.1} parent=11 // pred_check_branch
        %349 = sbr.rel (%p347) target = $region28
      $region27: #{preact_bottleneck_forward.1} parent=11 // pred_region
        _
      $region28: #{preact_bottleneck_forward.1} parent=11 // pred_fallthru
        _
      // Predicated region
      $region29: #{preact_bottleneck_forward.1} parent=11 // pred_check
        %p350 = pneg %p150
      $region30: #{preact_bottleneck_forward.1} parent=11 // pred_check_branch
        %352 = sbr.rel (%p350) target = $region32
      $region31: #{preact_bottleneck_forward.1} parent=11 // pred_region
        _
      $region32: #{preact_bottleneck_forward.1} parent=11 // pred_fallthru
        _
      // Predicated region
      $region33: #{preact_bottleneck_forward.1} parent=11 // pred_check
        %p353 = pneg %p171
      $region34: #{preact_bottleneck_forward.1} parent=11 // pred_check_branch
        %355 = sbr.rel (%p353) target = $region36
      $region35: #{preact_bottleneck_forward.1} parent=11 // pred_region
        _
      $region36: #{preact_bottleneck_forward.1} parent=11 // pred_fallthru
        _
      // Predicated region
      $region37: #{preact_bottleneck_forward.1} parent=11 // pred_check
        %p356 = pneg %p192
      $region38: #{preact_bottleneck_forward.1} parent=11 // pred_check_branch
        %358 = sbr.rel (%p356) target = $region40
      $region39: #{preact_bottleneck_forward.1} parent=11 // pred_region
        _
      $region40: #{preact_bottleneck_forward.1} parent=11 // pred_fallthru
        _
      // Predicated region
      $region41: #{preact_bottleneck_forward.1} parent=11 // pred_check
        %p359 = pneg %p213
      $region42: #{preact_bottleneck_forward.1} parent=11 // pred_check_branch
        %361 = sbr.rel (%p359) target = $region44
      $region43: #{preact_bottleneck_forward.1} parent=11 // pred_region
        _
      $region44: #{preact_bottleneck_forward.1} parent=11 // pred_fallthru
        _
      // Predicated region
      $region45: #{preact_bottleneck_forward.1} parent=11 // pred_check
        %p362 = pneg %p234
      $region46: #{preact_bottleneck_forward.1} parent=11 // pred_check_branch
        %364 = sbr.rel (%p362) target = $region48
      $region47: #{preact_bottleneck_forward.1} parent=11 // pred_region
        _
      $region48: #{preact_bottleneck_forward.1} parent=11 // pred_fallthru
        _
      // Predicated region
      $region49: #{preact_bottleneck_forward.1} parent=11 // pred_check
        %p365 = pneg %p255
      $region50: #{preact_bottleneck_forward.1} parent=11 // pred_check_branch
        %367 = sbr.rel (%p365) target = $region52
      $region51: #{preact_bottleneck_forward.1} parent=11 // pred_region
        _
      $region52: #{preact_bottleneck_forward.1} parent=11 // pred_fallthru
        _
      // Predicated region
      $region53: #{preact_bottleneck_forward.1} parent=11 // pred_check
        %p368 = pneg %p276
      $region54: #{preact_bottleneck_forward.1} parent=11 // pred_check_branch
        %370 = sbr.rel (%p368) target = $region56
      $region55: #{preact_bottleneck_forward.1} parent=11 // pred_region
        _
      $region56: #{preact_bottleneck_forward.1} parent=11 // pred_fallthru
        _
      // Predicated region
      $region57: #{preact_bottleneck_forward.1} parent=11 // pred_check
        %p371 = pneg %p297
      $region58: #{preact_bottleneck_forward.1} parent=11 // pred_check_branch
        %373 = sbr.rel (%p371) target = $region60
      $region59: #{preact_bottleneck_forward.1} parent=11 // pred_region
        _
      $region60: #{preact_bottleneck_forward.1} parent=11 // pred_fallthru
        _
    $region12: #{preact_bottleneck_forward.1} parent=5 // pred_fallthru
      _
    %p374 = scmp.lt.s32.totalorder %s19, 2
    // Predicated region
    $region61: #{preact_bottleneck_forward.1} parent=5 // pred_check
      %p375 = pneg %p374
    $region62: #{preact_bottleneck_forward.1} parent=5 // pred_check_branch
      %377 = sbr.rel (%p375) target = $region64
    $region63: #{preact_bottleneck_forward.1} parent=5 // pred_region
      // Predicated region
      $region65: #{preact_bottleneck_forward.1} parent=63 // pred_check
        %p378 = pneg %p39
      $region66: #{preact_bottleneck_forward.1} parent=63 // pred_check_branch
        %380 = sbr.rel (%p378) target = $region68
      $region67: #{preact_bottleneck_forward.1} parent=63 // pred_region
        %p381 = scmp.lt.s32.totalorder %s19, 1
        %s382 = scalar_select %p381, %s19, 1
        %s383 = smul.addr %s382, 64
        %s384 = smul.addr %s383, 8
        %s385 = scalar_lea.vmem %s0, %s384
      $region68: #{preact_bottleneck_forward.1} parent=63 // pred_fallthru
        _
    $region64: #{preact_bottleneck_forward.1} parent=5 // pred_fallthru
      _
    %p386 = scmp.le.s32.totalorder 1, %s19
    %p387 = scmp.lt.s32.totalorder %s19, 3
    %p388 = pnand %p386, %p387
    %p389 = pneg %p388
    // Predicated region
    $region69: #{preact_bottleneck_forward.1} parent=5 // pred_check
      _
    $region70: #{preact_bottleneck_forward.1} parent=5 // pred_check_branch
      %391 = sbr.rel (%p388) target = $region72
    $region71: #{preact_bottleneck_forward.1} parent=5 // pred_region
      %s392 = ssub.s32 %s19, 1
      %p393 = scmp.lt.s32.totalorder %s24, 1
      %s394 = scalar_select %p393, %s24, 1
      %s395 = smul.addr %s394, 64
      %s396 = smul.addr %s395, 8
      %s397 = scalar_lea.vmem %s0, %s396
      %p398 = pneg %p45
      %p399 = pneg %p42
      %p400 = pneg %p66
      %p401 = pneg %p63
      %p402 = pneg %p87
      %p403 = pneg %p84
      %p404 = pneg %p108
      %p405 = pneg %p105
      %p406 = pneg %p129
      %p407 = pneg %p126
      %p408 = pneg %p150
      %p409 = pneg %p147
      %p410 = pneg %p171
      %p411 = pneg %p168
      %p412 = pneg %p192
      %p413 = pneg %p189
      %p414 = pneg %p213
      %p415 = pneg %p210
      %p416 = pneg %p234
      %p417 = pneg %p231
      %p418 = pneg %p255
      %p419 = pneg %p252
      %p420 = pneg %p276
      %p421 = pneg %p273
      %p422 = pneg %p297
      %p423 = pneg %p294
      %p424 = pneg %p323
      %p425 = pneg %p320
      %p426 = scmp.lt.s32.totalorder %s24, 1
      %s427 = scalar_select %p426, %s24, 1
      %s428 = smul.addr %s427, 16
      %s429 = smul.addr %s428, 8
      %s430 = scalar_lea.vmem %s13, %s429
      %p431 = scmp.lt.s32.totalorder %s24, 1
      %s432 = scalar_select %p431, %s24, 1
      %s433 = smul.addr %s432, 64
      %s434 = smul.addr %s433, 8
      %s435 = scalar_lea.vmem %s0, %s434
      %p436 = scmp.lt.s32.totalorder %s24, 1
      %s437 = scalar_select %p436, %s24, 1
      %s438 = smul.addr %s437, 16
      %s439 = smul.addr %s438, 8
      %s440 = scalar_lea.vmem %s13, %s439
      %v441 = vlaneseq
      %v442 = vshrl.u32 %v441, 7
      %v443 = vadd.s32 %v442, 8
      %v444 = vlaneseq
      %v445 = vand.u32 %v444, 127
      %vm446 = vcmp.gt.s32.totalorder %v442, 0
      %vm447 = vcmp.gt.s32.totalorder %v443, 0
      %vm448 = vcmp.gt.s32.totalorder %v445, 0
      %vm449 = vmand %vm446, %vm448
      %vm450 = vmand %vm447, %vm448
      %v451 = vsel %vm449, 1, 0
      %v452 = vsel %vm450, 1, 0
      %v453 = vcvt.s32.f32 %v451
      %v454 = vcvt.s32.f32 %v452
      %v455 = vld [vmem:[%s1] sm:$0x1]
      %v456 = vld [vmem:[%s1 + $0x1] sm:$0x1]
      %v457 = vld [vmem:[%s1 + $0x2] sm:$0x1]
      %v458 = vld [vmem:[%s1 + $0x3] sm:$0x1]
      %v459 = vld [vmem:[%s1 + $0x4] sm:$0x1]
      %v460 = vld [vmem:[%s1 + $0x5] sm:$0x1]
      %v461 = vld [vmem:[%s1 + $0x6] sm:$0x1]
      %v462 = vld [vmem:[%s1 + $0x7] sm:$0x1]
      %v463 = vld [vmem:[%s2] sm:$0x1]
      %v464 = vld [vmem:[%s2 + $0x1] sm:$0x1]
      %v465 = vld [vmem:[%s2 + $0x2] sm:$0x1]
      %v466 = vld [vmem:[%s2 + $0x3] sm:$0x1]
      %v467 = vld [vmem:[%s2 + $0x4] sm:$0x1]
      %v468 = vld [vmem:[%s2 + $0x5] sm:$0x1]
      %v469 = vld [vmem:[%s2 + $0x6] sm:$0x1]
      %v470 = vld [vmem:[%s2 + $0x7] sm:$0x1]
      %v471 = vld [vmem:[%s4] sm:$0x1]
      %v472 = vld [vmem:[%s4 + $0x1] sm:$0x1]
      %v473 = vld [vmem:[%s4 + $0x2] sm:$0x1]
      %v474 = vld [vmem:[%s4 + $0x3] sm:$0x1]
      %v475 = vld [vmem:[%s5] sm:$0x1]
      %v476 = vld [vmem:[%s5 + $0x1] sm:$0x1]
      %v477 = vld [vmem:[%s5 + $0x2] sm:$0x1]
      %v478 = vld [vmem:[%s5 + $0x3] sm:$0x1]
      %v479 = vld [vmem:[%s435] sm:$0xff]
      %v480 = vld [vmem:[%s435 + $0x8] sm:$0x1]
      %v481 = vld [vmem:[%s435 + $0x10] sm:$0xff]
      %v482 = vld [vmem:[%s435 + $0x18] sm:$0x1]
      %v483 = vld [vmem:[%s435 + $0x20] sm:$0xff]
      %v484 = vld [vmem:[%s435 + $0x28] sm:$0x1]
      %v485 = vld [vmem:[%s435 + $0x30] sm:$0xff]
      %v486 = vld [vmem:[%s435 + $0x38] sm:$0x1]
      %v487 = vld [vmem:[%s435 + $0x40] sm:$0xff]
      %v488 = vld [vmem:[%s435 + $0x48] sm:$0x1]
      %v489 = vld [vmem:[%s435 + $0x50] sm:$0xff]
      %v490 = vld [vmem:[%s435 + $0x58] sm:$0x1]
      %v491 = vld [vmem:[%s435 + $0x60] sm:$0xff]
      %v492 = vld [vmem:[%s435 + $0x68] sm:$0x1]
      %v493 = vld [vmem:[%s435 + $0x70] sm:$0xff]
      %v494 = vld [vmem:[%s435 + $0x78] sm:$0x1]
      %v503 = vlaneseq
      %v504 = vshrl.u32 %v503, 7
      %v505 = vsub.s32 0, %v504
      %v506 = vrot.slane %v455, %v505
      %v507 = vlaneseq
      %v508 = vshrl.u32 %v507, 7
      %v509 = vsub.s32 0, %v508
      %v510 = vrot.slane %v456, %v509
      %v511 = vlaneseq
      %v512 = vshrl.u32 %v511, 7
      %v513 = vsub.s32 0, %v512
      %v514 = vrot.slane %v457, %v513
      %v515 = vlaneseq
      %v516 = vshrl.u32 %v515, 7
      %v517 = vsub.s32 0, %v516
      %v518 = vrot.slane %v458, %v517
      %v519 = vlaneseq
      %v520 = vshrl.u32 %v519, 7
      %v521 = vsub.s32 0, %v520
      %v522 = vrot.slane %v459, %v521
      %v523 = vlaneseq
      %v524 = vshrl.u32 %v523, 7
      %v525 = vsub.s32 0, %v524
      %v526 = vrot.slane %v460, %v525
      %v527 = vlaneseq
      %v528 = vshrl.u32 %v527, 7
      %v529 = vsub.s32 0, %v528
      %v530 = vrot.slane %v461, %v529
      %v531 = vlaneseq
      %v532 = vshrl.u32 %v531, 7
      %v533 = vsub.s32 0, %v532
      %v534 = vrot.slane %v462, %v533
      %535 = vset.pattern.permute.xlu0 0
      %536 = vperm.xlu0 %535, %v506
      %v537 = vpop.permute.xlu0 %536
      %539 = vset.pattern.permute.xlu0 0
      %540 = vperm.xlu0 %539, %v510
      %v541 = vpop.permute.xlu0 %540
      %543 = vset.pattern.permute.xlu0 0
      %544 = vperm.xlu0 %543, %v514
      %v545 = vpop.permute.xlu0 %544
      %547 = vset.pattern.permute.xlu0 0
      %548 = vperm.xlu0 %547, %v518
      %v549 = vpop.permute.xlu0 %548
      %551 = vset.pattern.permute.xlu0 0
      %552 = vperm.xlu0 %551, %v522
      %v553 = vpop.permute.xlu0 %552
      %555 = vset.pattern.permute.xlu0 0
      %556 = vperm.xlu0 %555, %v526
      %v557 = vpop.permute.xlu0 %556
      %559 = vset.pattern.permute.xlu0 0
      %560 = vperm.xlu0 %559, %v530
      %v561 = vpop.permute.xlu0 %560
      %563 = vset.pattern.permute.xlu0 0
      %564 = vperm.xlu0 %563, %v534
      %v565 = vpop.permute.xlu0 %564
      %v567 = vmul.f32 %v479, %v537
      %v568 = vmul.f32 %v480, %v537
      %v569 = vmul.f32 %v481, %v541
      %v570 = vmul.f32 %v482, %v541
      %v571 = vmul.f32 %v483, %v545
      %v572 = vmul.f32 %v484, %v545
      %v573 = vmul.f32 %v485, %v549
      %v574 = vmul.f32 %v486, %v549
      %v575 = vmul.f32 %v487, %v553
      %v576 = vmul.f32 %v488, %v553
      %v577 = vmul.f32 %v489, %v557
      %v578 = vmul.f32 %v490, %v557
      %v579 = vmul.f32 %v491, %v561
      %v580 = vmul.f32 %v492, %v561
      %v581 = vmul.f32 %v493, %v565
      %v582 = vmul.f32 %v494, %v565
      %v591 = vlaneseq
      %v592 = vshrl.u32 %v591, 7
      %v593 = vsub.s32 0, %v592
      %v594 = vrot.slane %v463, %v593
      %v595 = vlaneseq
      %v596 = vshrl.u32 %v595, 7
      %v597 = vsub.s32 0, %v596
      %v598 = vrot.slane %v464, %v597
      %v599 = vlaneseq
      %v600 = vshrl.u32 %v599, 7
      %v601 = vsub.s32 0, %v600
      %v602 = vrot.slane %v465, %v601
      %v603 = vlaneseq
      %v604 = vshrl.u32 %v603, 7
      %v605 = vsub.s32 0, %v604
      %v606 = vrot.slane %v466, %v605
      %v607 = vlaneseq
      %v608 = vshrl.u32 %v607, 7
      %v609 = vsub.s32 0, %v608
      %v610 = vrot.slane %v467, %v609
      %v611 = vlaneseq
      %v612 = vshrl.u32 %v611, 7
      %v613 = vsub.s32 0, %v612
      %v614 = vrot.slane %v468, %v613
      %v615 = vlaneseq
      %v616 = vshrl.u32 %v615, 7
      %v617 = vsub.s32 0, %v616
      %v618 = vrot.slane %v469, %v617
      %v619 = vlaneseq
      %v620 = vshrl.u32 %v619, 7
      %v621 = vsub.s32 0, %v620
      %v622 = vrot.slane %v470, %v621
      %623 = vset.pattern.permute.xlu0 0
      %624 = vperm.xlu0 %623, %v594
      %v625 = vpop.permute.xlu0 %624
      %627 = vset.pattern.permute.xlu0 0
      %628 = vperm.xlu0 %627, %v598
      %v629 = vpop.permute.xlu0 %628
      %631 = vset.pattern.permute.xlu0 0
      %632 = vperm.xlu0 %631, %v602
      %v633 = vpop.permute.xlu0 %632
      %635 = vset.pattern.permute.xlu0 0
      %636 = vperm.xlu0 %635, %v606
      %v637 = vpop.permute.xlu0 %636
      %639 = vset.pattern.permute.xlu0 0
      %640 = vperm.xlu0 %639, %v610
      %v641 = vpop.permute.xlu0 %640
      %643 = vset.pattern.permute.xlu0 0
      %644 = vperm.xlu0 %643, %v614
      %v645 = vpop.permute.xlu0 %644
      %647 = vset.pattern.permute.xlu0 0
      %648 = vperm.xlu0 %647, %v618
      %v649 = vpop.permute.xlu0 %648
      %651 = vset.pattern.permute.xlu0 0
      %652 = vperm.xlu0 %651, %v622
      %v653 = vpop.permute.xlu0 %652
      %v655 = vadd.f32 %v567, %v625
      %v656 = vadd.f32 %v568, %v625
      %v657 = vadd.f32 %v569, %v629
      %v658 = vadd.f32 %v570, %v629
      %v659 = vadd.f32 %v571, %v633
      %v660 = vadd.f32 %v572, %v633
      %v661 = vadd.f32 %v573, %v637
      %v662 = vadd.f32 %v574, %v637
      %v663 = vadd.f32 %v575, %v641
      %v664 = vadd.f32 %v576, %v641
      %v665 = vadd.f32 %v577, %v645
      %v666 = vadd.f32 %v578, %v645
      %v667 = vadd.f32 %v579, %v649
      %v668 = vadd.f32 %v580, %v649
      %v669 = vadd.f32 %v581, %v653
      %v670 = vadd.f32 %v582, %v653
      %v671 = vmax.f32 %v655, 0.0
      %v672 = vmax.f32 %v656, 0.0
      %v673 = vmax.f32 %v657, 0.0
      %v674 = vmax.f32 %v658, 0.0
      %v675 = vmax.f32 %v659, 0.0
      %v676 = vmax.f32 %v660, 0.0
      %v677 = vmax.f32 %v661, 0.0
      %v678 = vmax.f32 %v662, 0.0
      %v679 = vmax.f32 %v663, 0.0
      %v680 = vmax.f32 %v664, 0.0
      %v681 = vmax.f32 %v665, 0.0
      %v682 = vmax.f32 %v666, 0.0
      %v683 = vmax.f32 %v667, 0.0
      %v684 = vmax.f32 %v668, 0.0
      %v685 = vmax.f32 %v669, 0.0
      %v686 = vmax.f32 %v670, 0.0
      %v687 = vld [vmem:[%s3] sm:$0x1]
      %v688 = vld [vmem:[%s3 + $0x1] sm:$0x1]
      %v689 = vld [vmem:[%s3 + $0x2] sm:$0x1]
      %v690 = vld [vmem:[%s3 + $0x3] sm:$0x1]
      %v695 = vlaneseq
      %v696 = vshrl.u32 %v695, 7
      %v697 = vsub.s32 0, %v696
      %v698 = vrot.slane %v687, %v697
      %v699 = vlaneseq
      %v700 = vshrl.u32 %v699, 7
      %v701 = vsub.s32 0, %v700
      %v702 = vrot.slane %v688, %v701
      %v703 = vlaneseq
      %v704 = vshrl.u32 %v703, 7
      %v705 = vsub.s32 0, %v704
      %v706 = vrot.slane %v689, %v705
      %v707 = vlaneseq
      %v708 = vshrl.u32 %v707, 7
      %v709 = vsub.s32 0, %v708
      %v710 = vrot.slane %v690, %v709
      %711 = vset.pattern.permute.xlu0 0
      %712 = vperm.xlu0 %711, %v698
      %v713 = vpop.permute.xlu0 %712
      %715 = vset.pattern.permute.xlu0 0
      %716 = vperm.xlu0 %715, %v702
      %v717 = vpop.permute.xlu0 %716
      %719 = vset.pattern.permute.xlu0 0
      %720 = vperm.xlu0 %719, %v706
      %v721 = vpop.permute.xlu0 %720
      %723 = vset.pattern.permute.xlu0 0
      %724 = vperm.xlu0 %723, %v710
      %v725 = vpop.permute.xlu0 %724
      %v727 = vmul.f32 %v713, %v671
      %v728 = vmul.f32 %v713, %v672
      %v729 = vmul.f32 %v717, %v671
      %v730 = vmul.f32 %v717, %v672
      %v731 = vmul.f32 %v721, %v671
      %v732 = vmul.f32 %v721, %v672
      %v733 = vmul.f32 %v725, %v671
      %v734 = vmul.f32 %v725, %v672
      %s735 = scalar_lea.vmem %s3, 4
      %v736 = vld [vmem:[%s735] sm:$0x1]
      %v737 = vld [vmem:[%s735 + $0x1] sm:$0x1]
      %v738 = vld [vmem:[%s735 + $0x2] sm:$0x1]
      %v739 = vld [vmem:[%s735 + $0x3] sm:$0x1]
      %v744 = vlaneseq
      %v745 = vshrl.u32 %v744, 7
      %v746 = vsub.s32 0, %v745
      %v747 = vrot.slane %v736, %v746
      %v748 = vlaneseq
      %v749 = vshrl.u32 %v748, 7
      %v750 = vsub.s32 0, %v749
      %v751 = vrot.slane %v737, %v750
      %v752 = vlaneseq
      %v753 = vshrl.u32 %v752, 7
      %v754 = vsub.s32 0, %v753
      %v755 = vrot.slane %v738, %v754
      %v756 = vlaneseq
      %v757 = vshrl.u32 %v756, 7
      %v758 = vsub.s32 0, %v757
      %v759 = vrot.slane %v739, %v758
      %760 = vset.pattern.permute.xlu0 0
      %761 = vperm.xlu0 %760, %v747
      %v762 = vpop.permute.xlu0 %761
      %764 = vset.pattern.permute.xlu0 0
      %765 = vperm.xlu0 %764, %v751
      %v766 = vpop.permute.xlu0 %765
      %768 = vset.pattern.permute.xlu0 0
      %769 = vperm.xlu0 %768, %v755
      %v770 = vpop.permute.xlu0 %769
      %772 = vset.pattern.permute.xlu0 0
      %773 = vperm.xlu0 %772, %v759
      %v774 = vpop.permute.xlu0 %773
      %v776 = vmul.f32 %v762, %v673
      %v777 = vmul.f32 %v762, %v674
      %v778 = vmul.f32 %v766, %v673
      %v779 = vmul.f32 %v766, %v674
      %v780 = vmul.f32 %v770, %v673
      %v781 = vmul.f32 %v770, %v674
      %v782 = vmul.f32 %v774, %v673
      %v783 = vmul.f32 %v774, %v674
      %v784 = vadd.f32 %v727, %v776
      %v785 = vadd.f32 %v728, %v777
      %v786 = vadd.f32 %v729, %v778
      %v787 = vadd.f32 %v730, %v779
      %v788 = vadd.f32 %v731, %v780
      %v789 = vadd.f32 %v732, %v781
      %v790 = vadd.f32 %v733, %v782
      %v791 = vadd.f32 %v734, %v783
      %s792 = scalar_lea.vmem %s3, 8
      %v793 = vld [vmem:[%s792] sm:$0x1]
      %v794 = vld [vmem:[%s792 + $0x1] sm:$0x1]
      %v795 = vld [vmem:[%s792 + $0x2] sm:$0x1]
      %v796 = vld [vmem:[%s792 + $0x3] sm:$0x1]
      %v801 = vlaneseq
      %v802 = vshrl.u32 %v801, 7
      %v803 = vsub.s32 0, %v802
      %v804 = vrot.slane %v793, %v803
      %v805 = vlaneseq
      %v806 = vshrl.u32 %v805, 7
      %v807 = vsub.s32 0, %v806
      %v808 = vrot.slane %v794, %v807
      %v809 = vlaneseq
      %v810 = vshrl.u32 %v809, 7
      %v811 = vsub.s32 0, %v810
      %v812 = vrot.slane %v795, %v811
      %v813 = vlaneseq
      %v814 = vshrl.u32 %v813, 7
      %v815 = vsub.s32 0, %v814
      %v816 = vrot.slane %v796, %v815
      %817 = vset.pattern.permute.xlu0 0
      %818 = vperm.xlu0 %817, %v804
      %v819 = vpop.permute.xlu0 %818
      %821 = vset.pattern.permute.xlu0 0
      %822 = vperm.xlu0 %821, %v808
      %v823 = vpop.permute.xlu0 %822
      %825 = vset.pattern.permute.xlu0 0
      %826 = vperm.xlu0 %825, %v812
      %v827 = vpop.permute.xlu0 %826
      %829 = vset.pattern.permute.xlu0 0
      %830 = vperm.xlu0 %829, %v816
      %v831 = vpop.permute.xlu0 %830
      %v833 = vmul.f32 %v819, %v675
      %v834 = vmul.f32 %v819, %v676
      %v835 = vmul.f32 %v823, %v675
      %v836 = vmul.f32 %v823, %v676
      %v837 = vmul.f32 %v827, %v675
      %v838 = vmul.f32 %v827, %v676
      %v839 = vmul.f32 %v831, %v675
      %v840 = vmul.f32 %v831, %v676
      %v841 = vadd.f32 %v784, %v833
      %v842 = vadd.f32 %v785, %v834
      %v843 = vadd.f32 %v786, %v835
      %v844 = vadd.f32 %v787, %v836
      %v845 = vadd.f32 %v788, %v837
      %v846 = vadd.f32 %v789, %v838
      %v847 = vadd.f32 %v790, %v839
      %v848 = vadd.f32 %v791, %v840
      %s849 = scalar_lea.vmem %s3, 12
      %v850 = vld [vmem:[%s849] sm:$0x1]
      %v851 = vld [vmem:[%s849 + $0x1] sm:$0x1]
      %v852 = vld [vmem:[%s849 + $0x2] sm:$0x1]
      %v853 = vld [vmem:[%s849 + $0x3] sm:$0x1]
      %v858 = vlaneseq
      %v859 = vshrl.u32 %v858, 7
      %v860 = vsub.s32 0, %v859
      %v861 = vrot.slane %v850, %v860
      %v862 = vlaneseq
      %v863 = vshrl.u32 %v862, 7
      %v864 = vsub.s32 0, %v863
      %v865 = vrot.slane %v851, %v864
      %v866 = vlaneseq
      %v867 = vshrl.u32 %v866, 7
      %v868 = vsub.s32 0, %v867
      %v869 = vrot.slane %v852, %v868
      %v870 = vlaneseq
      %v871 = vshrl.u32 %v870, 7
      %v872 = vsub.s32 0, %v871
      %v873 = vrot.slane %v853, %v872
      %874 = vset.pattern.permute.xlu0 0
      %875 = vperm.xlu0 %874, %v861
      %v876 = vpop.permute.xlu0 %875
      %878 = vset.pattern.permute.xlu0 0
      %879 = vperm.xlu0 %878, %v865
      %v880 = vpop.permute.xlu0 %879
      %882 = vset.pattern.permute.xlu0 0
      %883 = vperm.xlu0 %882, %v869
      %v884 = vpop.permute.xlu0 %883
      %886 = vset.pattern.permute.xlu0 0
      %887 = vperm.xlu0 %886, %v873
      %v888 = vpop.permute.xlu0 %887
      %v890 = vmul.f32 %v876, %v677
      %v891 = vmul.f32 %v876, %v678
      %v892 = vmul.f32 %v880, %v677
      %v893 = vmul.f32 %v880, %v678
      %v894 = vmul.f32 %v884, %v677
      %v895 = vmul.f32 %v884, %v678
      %v896 = vmul.f32 %v888, %v677
      %v897 = vmul.f32 %v888, %v678
      %v898 = vadd.f32 %v841, %v890
      %v899 = vadd.f32 %v842, %v891
      %v900 = vadd.f32 %v843, %v892
      %v901 = vadd.f32 %v844, %v893
      %v902 = vadd.f32 %v845, %v894
      %v903 = vadd.f32 %v846, %v895
      %v904 = vadd.f32 %v847, %v896
      %v905 = vadd.f32 %v848, %v897
      %s906 = scalar_lea.vmem %s3, 16
      %v907 = vld [vmem:[%s906] sm:$0x1]
      %v908 = vld [vmem:[%s906 + $0x1] sm:$0x1]
      %v909 = vld [vmem:[%s906 + $0x2] sm:$0x1]
      %v910 = vld [vmem:[%s906 + $0x3] sm:$0x1]
      %v915 = vlaneseq
      %v916 = vshrl.u32 %v915, 7
      %v917 = vsub.s32 0, %v916
      %v918 = vrot.slane %v907, %v917
      %v919 = vlaneseq
      %v920 = vshrl.u32 %v919, 7
      %v921 = vsub.s32 0, %v920
      %v922 = vrot.slane %v908, %v921
      %v923 = vlaneseq
      %v924 = vshrl.u32 %v923, 7
      %v925 = vsub.s32 0, %v924
      %v926 = vrot.slane %v909, %v925
      %v927 = vlaneseq
      %v928 = vshrl.u32 %v927, 7
      %v929 = vsub.s32 0, %v928
      %v930 = vrot.slane %v910, %v929
      %931 = vset.pattern.permute.xlu0 0
      %932 = vperm.xlu0 %931, %v918
      %v933 = vpop.permute.xlu0 %932
      %935 = vset.pattern.permute.xlu0 0
      %936 = vperm.xlu0 %935, %v922
      %v937 = vpop.permute.xlu0 %936
      %939 = vset.pattern.permute.xlu0 0
      %940 = vperm.xlu0 %939, %v926
      %v941 = vpop.permute.xlu0 %940
      %943 = vset.pattern.permute.xlu0 0
      %944 = vperm.xlu0 %943, %v930
      %v945 = vpop.permute.xlu0 %944
      %v947 = vmul.f32 %v933, %v679
      %v948 = vmul.f32 %v933, %v680
      %v949 = vmul.f32 %v937, %v679
      %v950 = vmul.f32 %v937, %v680
      %v951 = vmul.f32 %v941, %v679
      %v952 = vmul.f32 %v941, %v680
      %v953 = vmul.f32 %v945, %v679
      %v954 = vmul.f32 %v945, %v680
      %v955 = vadd.f32 %v898, %v947
      %v956 = vadd.f32 %v899, %v948
      %v957 = vadd.f32 %v900, %v949
      %v958 = vadd.f32 %v901, %v950
      %v959 = vadd.f32 %v902, %v951
      %v960 = vadd.f32 %v903, %v952
      %v961 = vadd.f32 %v904, %v953
      %v962 = vadd.f32 %v905, %v954
      %s963 = scalar_lea.vmem %s3, 20
      %v964 = vld [vmem:[%s963] sm:$0x1]
      %v965 = vld [vmem:[%s963 + $0x1] sm:$0x1]
      %v966 = vld [vmem:[%s963 + $0x2] sm:$0x1]
      %v967 = vld [vmem:[%s963 + $0x3] sm:$0x1]
      %v972 = vlaneseq
      %v973 = vshrl.u32 %v972, 7
      %v974 = vsub.s32 0, %v973
      %v975 = vrot.slane %v964, %v974
      %v976 = vlaneseq
      %v977 = vshrl.u32 %v976, 7
      %v978 = vsub.s32 0, %v977
      %v979 = vrot.slane %v965, %v978
      %v980 = vlaneseq
      %v981 = vshrl.u32 %v980, 7
      %v982 = vsub.s32 0, %v981
      %v983 = vrot.slane %v966, %v982
      %v984 = vlaneseq
      %v985 = vshrl.u32 %v984, 7
      %v986 = vsub.s32 0, %v985
      %v987 = vrot.slane %v967, %v986
      %988 = vset.pattern.permute.xlu0 0
      %989 = vperm.xlu0 %988, %v975
      %v990 = vpop.permute.xlu0 %989
      %992 = vset.pattern.permute.xlu0 0
      %993 = vperm.xlu0 %992, %v979
      %v994 = vpop.permute.xlu0 %993
      %996 = vset.pattern.permute.xlu0 0
      %997 = vperm.xlu0 %996, %v983
      %v998 = vpop.permute.xlu0 %997
      %1000 = vset.pattern.permute.xlu0 0
      %1001 = vperm.xlu0 %1000, %v987
      %v1002 = vpop.permute.xlu0 %1001
      %v1004 = vmul.f32 %v990, %v681
      %v1005 = vmul.f32 %v990, %v682
      %v1006 = vmul.f32 %v994, %v681
      %v1007 = vmul.f32 %v994, %v682
      %v1008 = vmul.f32 %v998, %v681
      %v1009 = vmul.f32 %v998, %v682
      %v1010 = vmul.f32 %v1002, %v681
      %v1011 = vmul.f32 %v1002, %v682
      %v1012 = vadd.f32 %v955, %v1004
      %v1013 = vadd.f32 %v956, %v1005
      %v1014 = vadd.f32 %v957, %v1006
      %v1015 = vadd.f32 %v958, %v1007
      %v1016 = vadd.f32 %v959, %v1008
      %v1017 = vadd.f32 %v960, %v1009
      %v1018 = vadd.f32 %v961, %v1010
      %v1019 = vadd.f32 %v962, %v1011
      %s1020 = scalar_lea.vmem %s3, 24
      %v1021 = vld [vmem:[%s1020] sm:$0x1]
      %v1022 = vld [vmem:[%s1020 + $0x1] sm:$0x1]
      %v1023 = vld [vmem:[%s1020 + $0x2] sm:$0x1]
      %v1024 = vld [vmem:[%s1020 + $0x3] sm:$0x1]
      %v1029 = vlaneseq
      %v1030 = vshrl.u32 %v1029, 7
      %v1031 = vsub.s32 0, %v1030
      %v1032 = vrot.slane %v1021, %v1031
      %v1033 = vlaneseq
      %v1034 = vshrl.u32 %v1033, 7
      %v1035 = vsub.s32 0, %v1034
      %v1036 = vrot.slane %v1022, %v1035
      %v1037 = vlaneseq
      %v1038 = vshrl.u32 %v1037, 7
      %v1039 = vsub.s32 0, %v1038
      %v1040 = vrot.slane %v1023, %v1039
      %v1041 = vlaneseq
      %v1042 = vshrl.u32 %v1041, 7
      %v1043 = vsub.s32 0, %v1042
      %v1044 = vrot.slane %v1024, %v1043
      %1045 = vset.pattern.permute.xlu0 0
      %1046 = vperm.xlu0 %1045, %v1032
      %v1047 = vpop.permute.xlu0 %1046
      %1049 = vset.pattern.permute.xlu0 0
      %1050 = vperm.xlu0 %1049, %v1036
      %v1051 = vpop.permute.xlu0 %1050
      %1053 = vset.pattern.permute.xlu0 0
      %1054 = vperm.xlu0 %1053, %v1040
      %v1055 = vpop.permute.xlu0 %1054
      %1057 = vset.pattern.permute.xlu0 0
      %1058 = vperm.xlu0 %1057, %v1044
      %v1059 = vpop.permute.xlu0 %1058
      %v1061 = vmul.f32 %v1047, %v683
      %v1062 = vmul.f32 %v1047, %v684
      %v1063 = vmul.f32 %v1051, %v683
      %v1064 = vmul.f32 %v1051, %v684
      %v1065 = vmul.f32 %v1055, %v683
      %v1066 = vmul.f32 %v1055, %v684
      %v1067 = vmul.f32 %v1059, %v683
      %v1068 = vmul.f32 %v1059, %v684
      %v1069 = vadd.f32 %v1012, %v1061
      %v1070 = vadd.f32 %v1013, %v1062
      %v1071 = vadd.f32 %v1014, %v1063
      %v1072 = vadd.f32 %v1015, %v1064
      %v1073 = vadd.f32 %v1016, %v1065
      %v1074 = vadd.f32 %v1017, %v1066
      %v1075 = vadd.f32 %v1018, %v1067
      %v1076 = vadd.f32 %v1019, %v1068
      %s1077 = scalar_lea.vmem %s3, 28
      %v1078 = vld [vmem:[%s1077] sm:$0x1]
      %v1079 = vld [vmem:[%s1077 + $0x1] sm:$0x1]
      %v1080 = vld [vmem:[%s1077 + $0x2] sm:$0x1]
      %v1081 = vld [vmem:[%s1077 + $0x3] sm:$0x1]
      %v1086 = vlaneseq
      %v1087 = vshrl.u32 %v1086, 7
      %v1088 = vsub.s32 0, %v1087
      %v1089 = vrot.slane %v1078, %v1088
      %v1090 = vlaneseq
      %v1091 = vshrl.u32 %v1090, 7
      %v1092 = vsub.s32 0, %v1091
      %v1093 = vrot.slane %v1079, %v1092
      %v1094 = vlaneseq
      %v1095 = vshrl.u32 %v1094, 7
      %v1096 = vsub.s32 0, %v1095
      %v1097 = vrot.slane %v1080, %v1096
      %v1098 = vlaneseq
      %v1099 = vshrl.u32 %v1098, 7
      %v1100 = vsub.s32 0, %v1099
      %v1101 = vrot.slane %v1081, %v1100
      %1102 = vset.pattern.permute.xlu0 0
      %1103 = vperm.xlu0 %1102, %v1089
      %v1104 = vpop.permute.xlu0 %1103
      %1106 = vset.pattern.permute.xlu0 0
      %1107 = vperm.xlu0 %1106, %v1093
      %v1108 = vpop.permute.xlu0 %1107
      %1110 = vset.pattern.permute.xlu0 0
      %1111 = vperm.xlu0 %1110, %v1097
      %v1112 = vpop.permute.xlu0 %1111
      %1114 = vset.pattern.permute.xlu0 0
      %1115 = vperm.xlu0 %1114, %v1101
      %v1116 = vpop.permute.xlu0 %1115
      %v1118 = vmul.f32 %v1104, %v685
      %v1119 = vmul.f32 %v1104, %v686
      %v1120 = vmul.f32 %v1108, %v685
      %v1121 = vmul.f32 %v1108, %v686
      %v1122 = vmul.f32 %v1112, %v685
      %v1123 = vmul.f32 %v1112, %v686
      %v1124 = vmul.f32 %v1116, %v685
      %v1125 = vmul.f32 %v1116, %v686
      %v1126 = vadd.f32 %v1069, %v1118
      %v1127 = vadd.f32 %v1070, %v1119
      %v1128 = vadd.f32 %v1071, %v1120
      %v1129 = vadd.f32 %v1072, %v1121
      %v1130 = vadd.f32 %v1073, %v1122
      %v1131 = vadd.f32 %v1074, %v1123
      %v1132 = vadd.f32 %v1075, %v1124
      %v1133 = vadd.f32 %v1076, %v1125
      %v1138 = vlaneseq
      %v1139 = vshrl.u32 %v1138, 7
      %v1140 = vsub.s32 0, %v1139
      %v1141 = vrot.slane %v471, %v1140
      %v1142 = vlaneseq
      %v1143 = vshrl.u32 %v1142, 7
      %v1144 = vsub.s32 0, %v1143
      %v1145 = vrot.slane %v472, %v1144
      %v1146 = vlaneseq
      %v1147 = vshrl.u32 %v1146, 7
      %v1148 = vsub.s32 0, %v1147
      %v1149 = vrot.slane %v473, %v1148
      %v1150 = vlaneseq
      %v1151 = vshrl.u32 %v1150, 7
      %v1152 = vsub.s32 0, %v1151
      %v1153 = vrot.slane %v474, %v1152
      %1154 = vset.pattern.permute.xlu0 0
      %1155 = vperm.xlu0 %1154, %v1141
      %v1156 = vpop.permute.xlu0 %1155
      %1158 = vset.pattern.permute.xlu0 0
      %1159 = vperm.xlu0 %1158, %v1145
      %v1160 = vpop.permute.xlu0 %1159
      %1162 = vset.pattern.permute.xlu0 0
      %1163 = vperm.xlu0 %1162, %v1149
      %v1164 = vpop.permute.xlu0 %1163
      %1166 = vset.pattern.permute.xlu0 0
      %1167 = vperm.xlu0 %1166, %v1153
      %v1168 = vpop.permute.xlu0 %1167
      %v1170 = vmul.f32 %v1126, %v1156
      %v1171 = vmul.f32 %v1127, %v1156
      %v1172 = vmul.f32 %v1128, %v1160
      %v1173 = vmul.f32 %v1129, %v1160
      %v1174 = vmul.f32 %v1130, %v1164
      %v1175 = vmul.f32 %v1131, %v1164
      %v1176 = vmul.f32 %v1132, %v1168
      %v1177 = vmul.f32 %v1133, %v1168
      %v1182 = vlaneseq
      %v1183 = vshrl.u32 %v1182, 7
      %v1184 = vsub.s32 0, %v1183
      %v1185 = vrot.slane %v475, %v1184
      %v1186 = vlaneseq
      %v1187 = vshrl.u32 %v1186, 7
      %v1188 = vsub.s32 0, %v1187
      %v1189 = vrot.slane %v476, %v1188
      %v1190 = vlaneseq
      %v1191 = vshrl.u32 %v1190, 7
      %v1192 = vsub.s32 0, %v1191
      %v1193 = vrot.slane %v477, %v1192
      %v1194 = vlaneseq
      %v1195 = vshrl.u32 %v1194, 7
      %v1196 = vsub.s32 0, %v1195
      %v1197 = vrot.slane %v478, %v1196
      %1198 = vset.pattern.permute.xlu0 0
      %1199 = vperm.xlu0 %1198, %v1185
      %v1200 = vpop.permute.xlu0 %1199
      %1202 = vset.pattern.permute.xlu0 0
      %1203 = vperm.xlu0 %1202, %v1189
      %v1204 = vpop.permute.xlu0 %1203
      %1206 = vset.pattern.permute.xlu0 0
      %1207 = vperm.xlu0 %1206, %v1193
      %v1208 = vpop.permute.xlu0 %1207
      %1210 = vset.pattern.permute.xlu0 0
      %1211 = vperm.xlu0 %1210, %v1197
      %v1212 = vpop.permute.xlu0 %1211
      %v1214 = vadd.f32 %v1170, %v1200
      %v1215 = vadd.f32 %v1171, %v1200
      %v1216 = vadd.f32 %v1172, %v1204
      %v1217 = vadd.f32 %v1173, %v1204
      %v1218 = vadd.f32 %v1174, %v1208
      %v1219 = vadd.f32 %v1175, %v1208
      %v1220 = vadd.f32 %v1176, %v1212
      %v1221 = vadd.f32 %v1177, %v1212
      %v1222 = vmax.f32 %v1214, 0.0
      %v1223 = vmax.f32 %v1215, 0.0
      %v1224 = vmax.f32 %v1216, 0.0
      %v1225 = vmax.f32 %v1217, 0.0
      %v1226 = vmax.f32 %v1218, 0.0
      %v1227 = vmax.f32 %v1219, 0.0
      %v1228 = vmax.f32 %v1220, 0.0
      %v1229 = vmax.f32 %v1221, 0.0
      %v1230 = vmul.f32 %v1222, %v453
      %v1231 = vmul.f32 %v1223, %v454
      %v1232 = vmul.f32 %v1224, %v453
      %v1233 = vmul.f32 %v1225, %v454
      %v1234 = vmul.f32 %v1226, %v453
      %v1235 = vmul.f32 %v1227, %v454
      %v1236 = vmul.f32 %v1228, %v453
      %v1237 = vmul.f32 %v1229, %v454
      %s1238 = scalar_lea.vmem %s435, 128
      %v1239 = vld [vmem:[%s1238] sm:$0xff]
      %v1240 = vld [vmem:[%s1238 + $0x8] sm:$0x1]
      %v1241 = vld [vmem:[%s1238 + $0x10] sm:$0xff]
      %v1242 = vld [vmem:[%s1238 + $0x18] sm:$0x1]
      %v1243 = vld [vmem:[%s1238 + $0x20] sm:$0xff]
      %v1244 = vld [vmem:[%s1238 + $0x28] sm:$0x1]
      %v1245 = vld [vmem:[%s1238 + $0x30] sm:$0xff]
      %v1246 = vld [vmem:[%s1238 + $0x38] sm:$0x1]
      %v1247 = vld [vmem:[%s1238 + $0x40] sm:$0xff]
      %v1248 = vld [vmem:[%s1238 + $0x48] sm:$0x1]
      %v1249 = vld [vmem:[%s1238 + $0x50] sm:$0xff]
      %v1250 = vld [vmem:[%s1238 + $0x58] sm:$0x1]
      %v1251 = vld [vmem:[%s1238 + $0x60] sm:$0xff]
      %v1252 = vld [vmem:[%s1238 + $0x68] sm:$0x1]
      %v1253 = vld [vmem:[%s1238 + $0x70] sm:$0xff]
      %v1254 = vld [vmem:[%s1238 + $0x78] sm:$0x1]
      %v1255 = vmul.f32 %v1239, %v537
      %v1256 = vmul.f32 %v1240, %v537
      %v1257 = vmul.f32 %v1241, %v541
      %v1258 = vmul.f32 %v1242, %v541
      %v1259 = vmul.f32 %v1243, %v545
      %v1260 = vmul.f32 %v1244, %v545
      %v1261 = vmul.f32 %v1245, %v549
      %v1262 = vmul.f32 %v1246, %v549
      %v1263 = vmul.f32 %v1247, %v553
      %v1264 = vmul.f32 %v1248, %v553
      %v1265 = vmul.f32 %v1249, %v557
      %v1266 = vmul.f32 %v1250, %v557
      %v1267 = vmul.f32 %v1251, %v561
      %v1268 = vmul.f32 %v1252, %v561
      %v1269 = vmul.f32 %v1253, %v565
      %v1270 = vmul.f32 %v1254, %v565
      %v1271 = vadd.f32 %v1255, %v625
      %v1272 = vadd.f32 %v1256, %v625
      %v1273 = vadd.f32 %v1257, %v629
      %v1274 = vadd.f32 %v1258, %v629
      %v1275 = vadd.f32 %v1259, %v633
      %v1276 = vadd.f32 %v1260, %v633
      %v1277 = vadd.f32 %v1261, %v637
      %v1278 = vadd.f32 %v1262, %v637
      %v1279 = vadd.f32 %v1263, %v641
      %v1280 = vadd.f32 %v1264, %v641
      %v1281 = vadd.f32 %v1265, %v645
      %v1282 = vadd.f32 %v1266, %v645
      %v1283 = vadd.f32 %v1267, %v649
      %v1284 = vadd.f32 %v1268, %v649
      %v1285 = vadd.f32 %v1269, %v653
      %v1286 = vadd.f32 %v1270, %v653
      %v1287 = vmax.f32 %v1271, 0.0
      %v1288 = vmax.f32 %v1272, 0.0
      %v1289 = vmax.f32 %v1273, 0.0
      %v1290 = vmax.f32 %v1274, 0.0
      %v1291 = vmax.f32 %v1275, 0.0
      %v1292 = vmax.f32 %v1276, 0.0
      %v1293 = vmax.f32 %v1277, 0.0
      %v1294 = vmax.f32 %v1278, 0.0
      %v1295 = vmax.f32 %v1279, 0.0
      %v1296 = vmax.f32 %v1280, 0.0
      %v1297 = vmax.f32 %v1281, 0.0
      %v1298 = vmax.f32 %v1282, 0.0
      %v1299 = vmax.f32 %v1283, 0.0
      %v1300 = vmax.f32 %v1284, 0.0
      %v1301 = vmax.f32 %v1285, 0.0
      %v1302 = vmax.f32 %v1286, 0.0
      %v1303 = vmul.f32 %v713, %v1287
      %v1304 = vmul.f32 %v713, %v1288
      %v1305 = vmul.f32 %v717, %v1287
      %v1306 = vmul.f32 %v717, %v1288
      %v1307 = vmul.f32 %v721, %v1287
      %v1308 = vmul.f32 %v721, %v1288
      %v1309 = vmul.f32 %v725, %v1287
      %v1310 = vmul.f32 %v725, %v1288
      %v1311 = vmul.f32 %v762, %v1289
      %v1312 = vmul.f32 %v762, %v1290
      %v1313 = vmul.f32 %v766, %v1289
      %v1314 = vmul.f32 %v766, %v1290
      %v1315 = vmul.f32 %v770, %v1289
      %v1316 = vmul.f32 %v770, %v1290
      %v1317 = vmul.f32 %v774, %v1289
      %v1318 = vmul.f32 %v774, %v1290
      %v1319 = vadd.f32 %v1303, %v1311
      %v1320 = vadd.f32 %v1304, %v1312
      %v1321 = vadd.f32 %v1305, %v1313
      %v1322 = vadd.f32 %v1306, %v1314
      %v1323 = vadd.f32 %v1307, %v1315
      %v1324 = vadd.f32 %v1308, %v1316
      %v1325 = vadd.f32 %v1309, %v1317
      %v1326 = vadd.f32 %v1310, %v1318
      %v1327 = vmul.f32 %v819, %v1291
      %v1328 = vmul.f32 %v819, %v1292
      %v1329 = vmul.f32 %v823, %v1291
      %v1330 = vmul.f32 %v823, %v1292
      %v1331 = vmul.f32 %v827, %v1291
      %v1332 = vmul.f32 %v827, %v1292
      %v1333 = vmul.f32 %v831, %v1291
      %v1334 = vmul.f32 %v831, %v1292
      %v1335 = vadd.f32 %v1319, %v1327
      %v1336 = vadd.f32 %v1320, %v1328
      %v1337 = vadd.f32 %v1321, %v1329
      %v1338 = vadd.f32 %v1322, %v1330
      %v1339 = vadd.f32 %v1323, %v1331
      %v1340 = vadd.f32 %v1324, %v1332
      %v1341 = vadd.f32 %v1325, %v1333
      %v1342 = vadd.f32 %v1326, %v1334
      %v1343 = vmul.f32 %v876, %v1293
      %v1344 = vmul.f32 %v876, %v1294
      %v1345 = vmul.f32 %v880, %v1293
      %v1346 = vmul.f32 %v880, %v1294
      %v1347 = vmul.f32 %v884, %v1293
      %v1348 = vmul.f32 %v884, %v1294
      %v1349 = vmul.f32 %v888, %v1293
      %v1350 = vmul.f32 %v888, %v1294
      %v1351 = vadd.f32 %v1335, %v1343
      %v1352 = vadd.f32 %v1336, %v1344
      %v1353 = vadd.f32 %v1337, %v1345
      %v1354 = vadd.f32 %v1338, %v1346
      %v1355 = vadd.f32 %v1339, %v1347
      %v1356 = vadd.f32 %v1340, %v1348
      %v1357 = vadd.f32 %v1341, %v1349
      %v1358 = vadd.f32 %v1342, %v1350
      %v1359 = vmul.f32 %v933, %v1295
      %v1360 = vmul.f32 %v933, %v1296
      %v1361 = vmul.f32 %v937, %v1295
      %v1362 = vmul.f32 %v937, %v1296
      %v1363 = vmul.f32 %v941, %v1295
      %v1364 = vmul.f32 %v941, %v1296
      %v1365 = vmul.f32 %v945, %v1295
      %v1366 = vmul.f32 %v945, %v1296
      %v1367 = vadd.f32 %v1351, %v1359
      %v1368 = vadd.f32 %v1352, %v1360
      %v1369 = vadd.f32 %v1353, %v1361
      %v1370 = vadd.f32 %v1354, %v1362
      %v1371 = vadd.f32 %v1355, %v1363
      %v1372 = vadd.f32 %v1356, %v1364
      %v1373 = vadd.f32 %v1357, %v1365
      %v1374 = vadd.f32 %v1358, %v1366
      %v1375 = vmul.f32 %v990, %v1297
      %v1376 = vmul.f32 %v990, %v1298
      %v1377 = vmul.f32 %v994, %v1297
      %v1378 = vmul.f32 %v994, %v1298
      %v1379 = vmul.f32 %v998, %v1297
      %v1380 = vmul.f32 %v998, %v1298
      %v1381 = vmul.f32 %v1002, %v1297
      %v1382 = vmul.f32 %v1002, %v1298
      %v1383 = vadd.f32 %v1367, %v1375
      %v1384 = vadd.f32 %v1368, %v1376
      %v1385 = vadd.f32 %v1369, %v1377
      %v1386 = vadd.f32 %v1370, %v1378
      %v1387 = vadd.f32 %v1371, %v1379
      %v1388 = vadd.f32 %v1372, %v1380
      %v1389 = vadd.f32 %v1373, %v1381
      %v1390 = vadd.f32 %v1374, %v1382
      %v1391 = vmul.f32 %v1047, %v1299
      %v1392 = vmul.f32 %v1047, %v1300
      %v1393 = vmul.f32 %v1051, %v1299
      %v1394 = vmul.f32 %v1051, %v1300
      %v1395 = vmul.f32 %v1055, %v1299
      %v1396 = vmul.f32 %v1055, %v1300
      %v1397 = vmul.f32 %v1059, %v1299
      %v1398 = vmul.f32 %v1059, %v1300
      %v1399 = vadd.f32 %v1383, %v1391
      %v1400 = vadd.f32 %v1384, %v1392
      %v1401 = vadd.f32 %v1385, %v1393
      %v1402 = vadd.f32 %v1386, %v1394
      %v1403 = vadd.f32 %v1387, %v1395
      %v1404 = vadd.f32 %v1388, %v1396
      %v1405 = vadd.f32 %v1389, %v1397
      %v1406 = vadd.f32 %v1390, %v1398
      %v1407 = vmul.f32 %v1104, %v1301
      %v1408 = vmul.f32 %v1104, %v1302
      %v1409 = vmul.f32 %v1108, %v1301
      %v1410 = vmul.f32 %v1108, %v1302
      %v1411 = vmul.f32 %v1112, %v1301
      %v1412 = vmul.f32 %v1112, %v1302
      %v1413 = vmul.f32 %v1116, %v1301
      %v1414 = vmul.f32 %v1116, %v1302
      %v1415 = vadd.f32 %v1399, %v1407
      %v1416 = vadd.f32 %v1400, %v1408
      %v1417 = vadd.f32 %v1401, %v1409
      %v1418 = vadd.f32 %v1402, %v1410
      %v1419 = vadd.f32 %v1403, %v1411
      %v1420 = vadd.f32 %v1404, %v1412
      %v1421 = vadd.f32 %v1405, %v1413
      %v1422 = vadd.f32 %v1406, %v1414
      %v1423 = vmul.f32 %v1415, %v1156
      %v1424 = vmul.f32 %v1416, %v1156
      %v1425 = vmul.f32 %v1417, %v1160
      %v1426 = vmul.f32 %v1418, %v1160
      %v1427 = vmul.f32 %v1419, %v1164
      %v1428 = vmul.f32 %v1420, %v1164
      %v1429 = vmul.f32 %v1421, %v1168
      %v1430 = vmul.f32 %v1422, %v1168
      %v1431 = vadd.f32 %v1423, %v1200
      %v1432 = vadd.f32 %v1424, %v1200
      %v1433 = vadd.f32 %v1425, %v1204
      %v1434 = vadd.f32 %v1426, %v1204
      %v1435 = vadd.f32 %v1427, %v1208
      %v1436 = vadd.f32 %v1428, %v1208
      %v1437 = vadd.f32 %v1429, %v1212
      %v1438 = vadd.f32 %v1430, %v1212
      %v1439 = vmax.f32 %v1431, 0.0
      %v1440 = vmax.f32 %v1432, 0.0
      %v1441 = vmax.f32 %v1433, 0.0
      %v1442 = vmax.f32 %v1434, 0.0
      %v1443 = vmax.f32 %v1435, 0.0
      %v1444 = vmax.f32 %v1436, 0.0
      %v1445 = vmax.f32 %v1437, 0.0
      %v1446 = vmax.f32 %v1438, 0.0
      %v1447 = vmul.f32 %v1439, %v453
      %v1448 = vmul.f32 %v1440, %v454
      %v1449 = vmul.f32 %v1441, %v453
      %v1450 = vmul.f32 %v1442, %v454
      %v1451 = vmul.f32 %v1443, %v453
      %v1452 = vmul.f32 %v1444, %v454
      %v1453 = vmul.f32 %v1445, %v453
      %v1454 = vmul.f32 %v1446, %v454
      %s1455 = scalar_lea.vmem %s435, 256
      %v1456 = vld [vmem:[%s1455] sm:$0xff]
      %v1457 = vld [vmem:[%s1455 + $0x8] sm:$0x1]
      %v1458 = vld [vmem:[%s1455 + $0x10] sm:$0xff]
      %v1459 = vld [vmem:[%s1455 + $0x18] sm:$0x1]
      %v1460 = vld [vmem:[%s1455 + $0x20] sm:$0xff]
      %v1461 = vld [vmem:[%s1455 + $0x28] sm:$0x1]
      %v1462 = vld [vmem:[%s1455 + $0x30] sm:$0xff]
      %v1463 = vld [vmem:[%s1455 + $0x38] sm:$0x1]
      %v1464 = vld [vmem:[%s1455 + $0x40] sm:$0xff]
      %v1465 = vld [vmem:[%s1455 + $0x48] sm:$0x1]
      %v1466 = vld [vmem:[%s1455 + $0x50] sm:$0xff]
      %v1467 = vld [vmem:[%s1455 + $0x58] sm:$0x1]
      %v1468 = vld [vmem:[%s1455 + $0x60] sm:$0xff]
      %v1469 = vld [vmem:[%s1455 + $0x68] sm:$0x1]
      %v1470 = vld [vmem:[%s1455 + $0x70] sm:$0xff]
      %v1471 = vld [vmem:[%s1455 + $0x78] sm:$0x1]
      %v1472 = vmul.f32 %v1456, %v537
      %v1473 = vmul.f32 %v1457, %v537
      %v1474 = vmul.f32 %v1458, %v541
      %v1475 = vmul.f32 %v1459, %v541
      %v1476 = vmul.f32 %v1460, %v545
      %v1477 = vmul.f32 %v1461, %v545
      %v1478 = vmul.f32 %v1462, %v549
      %v1479 = vmul.f32 %v1463, %v549
      %v1480 = vmul.f32 %v1464, %v553
      %v1481 = vmul.f32 %v1465, %v553
      %v1482 = vmul.f32 %v1466, %v557
      %v1483 = vmul.f32 %v1467, %v557
      %v1484 = vmul.f32 %v1468, %v561
      %v1485 = vmul.f32 %v1469, %v561
      %v1486 = vmul.f32 %v1470, %v565
      %v1487 = vmul.f32 %v1471, %v565
      %v1488 = vadd.f32 %v1472, %v625
      %v1489 = vadd.f32 %v1473, %v625
      %v1490 = vadd.f32 %v1474, %v629
      %v1491 = vadd.f32 %v1475, %v629
      %v1492 = vadd.f32 %v1476, %v633
      %v1493 = vadd.f32 %v1477, %v633
      %v1494 = vadd.f32 %v1478, %v637
      %v1495 = vadd.f32 %v1479, %v637
      %v1496 = vadd.f32 %v1480, %v641
      %v1497 = vadd.f32 %v1481, %v641
      %v1498 = vadd.f32 %v1482, %v645
      %v1499 = vadd.f32 %v1483, %v645
      %v1500 = vadd.f32 %v1484, %v649
      %v1501 = vadd.f32 %v1485, %v649
      %v1502 = vadd.f32 %v1486, %v653
      %v1503 = vadd.f32 %v1487, %v653
      %v1504 = vmax.f32 %v1488, 0.0
      %v1505 = vmax.f32 %v1489, 0.0
      %v1506 = vmax.f32 %v1490, 0.0
      %v1507 = vmax.f32 %v1491, 0.0
      %v1508 = vmax.f32 %v1492, 0.0
      %v1509 = vmax.f32 %v1493, 0.0
      %v1510 = vmax.f32 %v1494, 0.0
      %v1511 = vmax.f32 %v1495, 0.0
      %v1512 = vmax.f32 %v1496, 0.0
      %v1513 = vmax.f32 %v1497, 0.0
      %v1514 = vmax.f32 %v1498, 0.0
      %v1515 = vmax.f32 %v1499, 0.0
      %v1516 = vmax.f32 %v1500, 0.0
      %v1517 = vmax.f32 %v1501, 0.0
      %v1518 = vmax.f32 %v1502, 0.0
      %v1519 = vmax.f32 %v1503, 0.0
      %v1520 = vmul.f32 %v713, %v1504
      %v1521 = vmul.f32 %v713, %v1505
      %v1522 = vmul.f32 %v717, %v1504
      %v1523 = vmul.f32 %v717, %v1505
      %v1524 = vmul.f32 %v721, %v1504
      %v1525 = vmul.f32 %v721, %v1505
      %v1526 = vmul.f32 %v725, %v1504
      %v1527 = vmul.f32 %v725, %v1505
      %v1528 = vmul.f32 %v762, %v1506
      %v1529 = vmul.f32 %v762, %v1507
      %v1530 = vmul.f32 %v766, %v1506
      %v1531 = vmul.f32 %v766, %v1507
      %v1532 = vmul.f32 %v770, %v1506
      %v1533 = vmul.f32 %v770, %v1507
      %v1534 = vmul.f32 %v774, %v1506
      %v1535 = vmul.f32 %v774, %v1507
      %v1536 = vadd.f32 %v1520, %v1528
      %v1537 = vadd.f32 %v1521, %v1529
      %v1538 = vadd.f32 %v1522, %v1530
      %v1539 = vadd.f32 %v1523, %v1531
      %v1540 = vadd.f32 %v1524, %v1532
      %v1541 = vadd.f32 %v1525, %v1533
      %v1542 = vadd.f32 %v1526, %v1534
      %v1543 = vadd.f32 %v1527, %v1535
      %v1544 = vmul.f32 %v819, %v1508
      %v1545 = vmul.f32 %v819, %v1509
      %v1546 = vmul.f32 %v823, %v1508
      %v1547 = vmul.f32 %v823, %v1509
      %v1548 = vmul.f32 %v827, %v1508
      %v1549 = vmul.f32 %v827, %v1509
      %v1550 = vmul.f32 %v831, %v1508
      %v1551 = vmul.f32 %v831, %v1509
      %v1552 = vadd.f32 %v1536, %v1544
      %v1553 = vadd.f32 %v1537, %v1545
      %v1554 = vadd.f32 %v1538, %v1546
      %v1555 = vadd.f32 %v1539, %v1547
      %v1556 = vadd.f32 %v1540, %v1548
      %v1557 = vadd.f32 %v1541, %v1549
      %v1558 = vadd.f32 %v1542, %v1550
      %v1559 = vadd.f32 %v1543, %v1551
      %v1560 = vmul.f32 %v876, %v1510
      %v1561 = vmul.f32 %v876, %v1511
      %v1562 = vmul.f32 %v880, %v1510
      %v1563 = vmul.f32 %v880, %v1511
      %v1564 = vmul.f32 %v884, %v1510
      %v1565 = vmul.f32 %v884, %v1511
      %v1566 = vmul.f32 %v888, %v1510
      %v1567 = vmul.f32 %v888, %v1511
      %v1568 = vadd.f32 %v1552, %v1560
      %v1569 = vadd.f32 %v1553, %v1561
      %v1570 = vadd.f32 %v1554, %v1562
      %v1571 = vadd.f32 %v1555, %v1563
      %v1572 = vadd.f32 %v1556, %v1564
      %v1573 = vadd.f32 %v1557, %v1565
      %v1574 = vadd.f32 %v1558, %v1566
      %v1575 = vadd.f32 %v1559, %v1567
      %v1576 = vmul.f32 %v933, %v1512
      %v1577 = vmul.f32 %v933, %v1513
      %v1578 = vmul.f32 %v937, %v1512
      %v1579 = vmul.f32 %v937, %v1513
      %v1580 = vmul.f32 %v941, %v1512
      %v1581 = vmul.f32 %v941, %v1513
      %v1582 = vmul.f32 %v945, %v1512
      %v1583 = vmul.f32 %v945, %v1513
      %v1584 = vadd.f32 %v1568, %v1576
      %v1585 = vadd.f32 %v1569, %v1577
      %v1586 = vadd.f32 %v1570, %v1578
      %v1587 = vadd.f32 %v1571, %v1579
      %v1588 = vadd.f32 %v1572, %v1580
      %v1589 = vadd.f32 %v1573, %v1581
      %v1590 = vadd.f32 %v1574, %v1582
      %v1591 = vadd.f32 %v1575, %v1583
      %v1592 = vmul.f32 %v990, %v1514
      %v1593 = vmul.f32 %v990, %v1515
      %v1594 = vmul.f32 %v994, %v1514
      %v1595 = vmul.f32 %v994, %v1515
      %v1596 = vmul.f32 %v998, %v1514
      %v1597 = vmul.f32 %v998, %v1515
      %v1598 = vmul.f32 %v1002, %v1514
      %v1599 = vmul.f32 %v1002, %v1515
      %v1600 = vadd.f32 %v1584, %v1592
      %v1601 = vadd.f32 %v1585, %v1593
      %v1602 = vadd.f32 %v1586, %v1594
      %v1603 = vadd.f32 %v1587, %v1595
      %v1604 = vadd.f32 %v1588, %v1596
      %v1605 = vadd.f32 %v1589, %v1597
      %v1606 = vadd.f32 %v1590, %v1598
      %v1607 = vadd.f32 %v1591, %v1599
      %v1608 = vmul.f32 %v1047, %v1516
      %v1609 = vmul.f32 %v1047, %v1517
      %v1610 = vmul.f32 %v1051, %v1516
      %v1611 = vmul.f32 %v1051, %v1517
      %v1612 = vmul.f32 %v1055, %v1516
      %v1613 = vmul.f32 %v1055, %v1517
      %v1614 = vmul.f32 %v1059, %v1516
      %v1615 = vmul.f32 %v1059, %v1517
      %v1616 = vadd.f32 %v1600, %v1608
      %v1617 = vadd.f32 %v1601, %v1609
      %v1618 = vadd.f32 %v1602, %v1610
      %v1619 = vadd.f32 %v1603, %v1611
      %v1620 = vadd.f32 %v1604, %v1612
      %v1621 = vadd.f32 %v1605, %v1613
      %v1622 = vadd.f32 %v1606, %v1614
      %v1623 = vadd.f32 %v1607, %v1615
      %v1624 = vmul.f32 %v1104, %v1518
      %v1625 = vmul.f32 %v1104, %v1519
      %v1626 = vmul.f32 %v1108, %v1518
      %v1627 = vmul.f32 %v1108, %v1519
      %v1628 = vmul.f32 %v1112, %v1518
      %v1629 = vmul.f32 %v1112, %v1519
      %v1630 = vmul.f32 %v1116, %v1518
      %v1631 = vmul.f32 %v1116, %v1519
      %v1632 = vadd.f32 %v1616, %v1624
      %v1633 = vadd.f32 %v1617, %v1625
      %v1634 = vadd.f32 %v1618, %v1626
      %v1635 = vadd.f32 %v1619, %v1627
      %v1636 = vadd.f32 %v1620, %v1628
      %v1637 = vadd.f32 %v1621, %v1629
      %v1638 = vadd.f32 %v1622, %v1630
      %v1639 = vadd.f32 %v1623, %v1631
      %v1640 = vmul.f32 %v1632, %v1156
      %v1641 = vmul.f32 %v1633, %v1156
      %v1642 = vmul.f32 %v1634, %v1160
      %v1643 = vmul.f32 %v1635, %v1160
      %v1644 = vmul.f32 %v1636, %v1164
      %v1645 = vmul.f32 %v1637, %v1164
      %v1646 = vmul.f32 %v1638, %v1168
      %v1647 = vmul.f32 %v1639, %v1168
      %v1648 = vadd.f32 %v1640, %v1200
      %v1649 = vadd.f32 %v1641, %v1200
      %v1650 = vadd.f32 %v1642, %v1204
      %v1651 = vadd.f32 %v1643, %v1204
      %v1652 = vadd.f32 %v1644, %v1208
      %v1653 = vadd.f32 %v1645, %v1208
      %v1654 = vadd.f32 %v1646, %v1212
      %v1655 = vadd.f32 %v1647, %v1212
      %v1656 = vmax.f32 %v1648, 0.0
      %v1657 = vmax.f32 %v1649, 0.0
      %v1658 = vmax.f32 %v1650, 0.0
      %v1659 = vmax.f32 %v1651, 0.0
      %v1660 = vmax.f32 %v1652, 0.0
      %v1661 = vmax.f32 %v1653, 0.0
      %v1662 = vmax.f32 %v1654, 0.0
      %v1663 = vmax.f32 %v1655, 0.0
      %v1664 = vmul.f32 %v1656, %v453
      %v1665 = vmul.f32 %v1657, %v454
      %v1666 = vmul.f32 %v1658, %v453
      %v1667 = vmul.f32 %v1659, %v454
      %v1668 = vmul.f32 %v1660, %v453
      %v1669 = vmul.f32 %v1661, %v454
      %v1670 = vmul.f32 %v1662, %v453
      %v1671 = vmul.f32 %v1663, %v454
      %s1672 = scalar_lea.vmem %s435, 384
      %v1673 = vld [vmem:[%s1672] sm:$0xff]
      %v1674 = vld [vmem:[%s1672 + $0x8] sm:$0x1]
      %v1675 = vld [vmem:[%s1672 + $0x10] sm:$0xff]
      %v1676 = vld [vmem:[%s1672 + $0x18] sm:$0x1]
      %v1677 = vld [vmem:[%s1672 + $0x20] sm:$0xff]
      %v1678 = vld [vmem:[%s1672 + $0x28] sm:$0x1]
      %v1679 = vld [vmem:[%s1672 + $0x30] sm:$0xff]
      %v1680 = vld [vmem:[%s1672 + $0x38] sm:$0x1]
      %v1681 = vld [vmem:[%s1672 + $0x40] sm:$0xff]
      %v1682 = vld [vmem:[%s1672 + $0x48] sm:$0x1]
      %v1683 = vld [vmem:[%s1672 + $0x50] sm:$0xff]
      %v1684 = vld [vmem:[%s1672 + $0x58] sm:$0x1]
      %v1685 = vld [vmem:[%s1672 + $0x60] sm:$0xff]
      %v1686 = vld [vmem:[%s1672 + $0x68] sm:$0x1]
      %v1687 = vld [vmem:[%s1672 + $0x70] sm:$0xff]
      %v1688 = vld [vmem:[%s1672 + $0x78] sm:$0x1]
      %v1689 = vmul.f32 %v1673, %v537
      %v1690 = vmul.f32 %v1674, %v537
      %v1691 = vmul.f32 %v1675, %v541
      %v1692 = vmul.f32 %v1676, %v541
      %v1693 = vmul.f32 %v1677, %v545
      %v1694 = vmul.f32 %v1678, %v545
      %v1695 = vmul.f32 %v1679, %v549
      %v1696 = vmul.f32 %v1680, %v549
      %v1697 = vmul.f32 %v1681, %v553
      %v1698 = vmul.f32 %v1682, %v553
      %v1699 = vmul.f32 %v1683, %v557
      %v1700 = vmul.f32 %v1684, %v557
      %v1701 = vmul.f32 %v1685, %v561
      %v1702 = vmul.f32 %v1686, %v561
      %v1703 = vmul.f32 %v1687, %v565
      %v1704 = vmul.f32 %v1688, %v565
      %v1705 = vadd.f32 %v1689, %v625
      %v1706 = vadd.f32 %v1690, %v625
      %v1707 = vadd.f32 %v1691, %v629
      %v1708 = vadd.f32 %v1692, %v629
      %v1709 = vadd.f32 %v1693, %v633
      %v1710 = vadd.f32 %v1694, %v633
      %v1711 = vadd.f32 %v1695, %v637
      %v1712 = vadd.f32 %v1696, %v637
      %v1713 = vadd.f32 %v1697, %v641
      %v1714 = vadd.f32 %v1698, %v641
      %v1715 = vadd.f32 %v1699, %v645
      %v1716 = vadd.f32 %v1700, %v645
      %v1717 = vadd.f32 %v1701, %v649
      %v1718 = vadd.f32 %v1702, %v649
      %v1719 = vadd.f32 %v1703, %v653
      %v1720 = vadd.f32 %v1704, %v653
      %v1721 = vmax.f32 %v1705, 0.0
      %v1722 = vmax.f32 %v1706, 0.0
      %v1723 = vmax.f32 %v1707, 0.0
      %v1724 = vmax.f32 %v1708, 0.0
      %v1725 = vmax.f32 %v1709, 0.0
      %v1726 = vmax.f32 %v1710, 0.0
      %v1727 = vmax.f32 %v1711, 0.0
      %v1728 = vmax.f32 %v1712, 0.0
      %v1729 = vmax.f32 %v1713, 0.0
      %v1730 = vmax.f32 %v1714, 0.0
      %v1731 = vmax.f32 %v1715, 0.0
      %v1732 = vmax.f32 %v1716, 0.0
      %v1733 = vmax.f32 %v1717, 0.0
      %v1734 = vmax.f32 %v1718, 0.0
      %v1735 = vmax.f32 %v1719, 0.0
      %v1736 = vmax.f32 %v1720, 0.0
      %v1737 = vmul.f32 %v713, %v1721
      %v1738 = vmul.f32 %v713, %v1722
      %v1739 = vmul.f32 %v717, %v1721
      %v1740 = vmul.f32 %v717, %v1722
      %v1741 = vmul.f32 %v721, %v1721
      %v1742 = vmul.f32 %v721, %v1722
      %v1743 = vmul.f32 %v725, %v1721
      %v1744 = vmul.f32 %v725, %v1722
      %v1745 = vmul.f32 %v762, %v1723
      %v1746 = vmul.f32 %v762, %v1724
      %v1747 = vmul.f32 %v766, %v1723
      %v1748 = vmul.f32 %v766, %v1724
      %v1749 = vmul.f32 %v770, %v1723
      %v1750 = vmul.f32 %v770, %v1724
      %v1751 = vmul.f32 %v774, %v1723
      %v1752 = vmul.f32 %v774, %v1724
      %v1753 = vadd.f32 %v1737, %v1745
      %v1754 = vadd.f32 %v1738, %v1746
      %v1755 = vadd.f32 %v1739, %v1747
      %v1756 = vadd.f32 %v1740, %v1748
      %v1757 = vadd.f32 %v1741, %v1749
      %v1758 = vadd.f32 %v1742, %v1750
      %v1759 = vadd.f32 %v1743, %v1751
      %v1760 = vadd.f32 %v1744, %v1752
      %v1761 = vmul.f32 %v819, %v1725
      %v1762 = vmul.f32 %v819, %v1726
      %v1763 = vmul.f32 %v823, %v1725
      %v1764 = vmul.f32 %v823, %v1726
      %v1765 = vmul.f32 %v827, %v1725
      %v1766 = vmul.f32 %v827, %v1726
      %v1767 = vmul.f32 %v831, %v1725
      %v1768 = vmul.f32 %v831, %v1726
      %v1769 = vadd.f32 %v1753, %v1761
      %v1770 = vadd.f32 %v1754, %v1762
      %v1771 = vadd.f32 %v1755, %v1763
      %v1772 = vadd.f32 %v1756, %v1764
      %v1773 = vadd.f32 %v1757, %v1765
      %v1774 = vadd.f32 %v1758, %v1766
      %v1775 = vadd.f32 %v1759, %v1767
      %v1776 = vadd.f32 %v1760, %v1768
      %v1777 = vmul.f32 %v876, %v1727
      %v1778 = vmul.f32 %v876, %v1728
      %v1779 = vmul.f32 %v880, %v1727
      %v1780 = vmul.f32 %v880, %v1728
      %v1781 = vmul.f32 %v884, %v1727
      %v1782 = vmul.f32 %v884, %v1728
      %v1783 = vmul.f32 %v888, %v1727
      %v1784 = vmul.f32 %v888, %v1728
      %v1785 = vadd.f32 %v1769, %v1777
      %v1786 = vadd.f32 %v1770, %v1778
      %v1787 = vadd.f32 %v1771, %v1779
      %v1788 = vadd.f32 %v1772, %v1780
      %v1789 = vadd.f32 %v1773, %v1781
      %v1790 = vadd.f32 %v1774, %v1782
      %v1791 = vadd.f32 %v1775, %v1783
      %v1792 = vadd.f32 %v1776, %v1784
      %v1793 = vmul.f32 %v933, %v1729
      %v1794 = vmul.f32 %v933, %v1730
      %v1795 = vmul.f32 %v937, %v1729
      %v1796 = vmul.f32 %v937, %v1730
      %v1797 = vmul.f32 %v941, %v1729
      %v1798 = vmul.f32 %v941, %v1730
      %v1799 = vmul.f32 %v945, %v1729
      %v1800 = vmul.f32 %v945, %v1730
      %v1801 = vadd.f32 %v1785, %v1793
      %v1802 = vadd.f32 %v1786, %v1794
      %v1803 = vadd.f32 %v1787, %v1795
      %v1804 = vadd.f32 %v1788, %v1796
      %v1805 = vadd.f32 %v1789, %v1797
      %v1806 = vadd.f32 %v1790, %v1798
      %v1807 = vadd.f32 %v1791, %v1799
      %v1808 = vadd.f32 %v1792, %v1800
      %v1809 = vmul.f32 %v990, %v1731
      %v1810 = vmul.f32 %v990, %v1732
      %v1811 = vmul.f32 %v994, %v1731
      %v1812 = vmul.f32 %v994, %v1732
      %v1813 = vmul.f32 %v998, %v1731
      %v1814 = vmul.f32 %v998, %v1732
      %v1815 = vmul.f32 %v1002, %v1731
      %v1816 = vmul.f32 %v1002, %v1732
      %v1817 = vadd.f32 %v1801, %v1809
      %v1818 = vadd.f32 %v1802, %v1810
      %v1819 = vadd.f32 %v1803, %v1811
      %v1820 = vadd.f32 %v1804, %v1812
      %v1821 = vadd.f32 %v1805, %v1813
      %v1822 = vadd.f32 %v1806, %v1814
      %v1823 = vadd.f32 %v1807, %v1815
      %v1824 = vadd.f32 %v1808, %v1816
      %v1825 = vmul.f32 %v1047, %v1733
      %v1826 = vmul.f32 %v1047, %v1734
      %v1827 = vmul.f32 %v1051, %v1733
      %v1828 = vmul.f32 %v1051, %v1734
      %v1829 = vmul.f32 %v1055, %v1733
      %v1830 = vmul.f32 %v1055, %v1734
      %v1831 = vmul.f32 %v1059, %v1733
      %v1832 = vmul.f32 %v1059, %v1734
      %v1833 = vadd.f32 %v1817, %v1825
      %v1834 = vadd.f32 %v1818, %v1826
      %v1835 = vadd.f32 %v1819, %v1827
      %v1836 = vadd.f32 %v1820, %v1828
      %v1837 = vadd.f32 %v1821, %v1829
      %v1838 = vadd.f32 %v1822, %v1830
      %v1839 = vadd.f32 %v1823, %v1831
      %v1840 = vadd.f32 %v1824, %v1832
      %v1841 = vmul.f32 %v1104, %v1735
      %v1842 = vmul.f32 %v1104, %v1736
      %v1843 = vmul.f32 %v1108, %v1735
      %v1844 = vmul.f32 %v1108, %v1736
      %v1845 = vmul.f32 %v1112, %v1735
      %v1846 = vmul.f32 %v1112, %v1736
      %v1847 = vmul.f32 %v1116, %v1735
      %v1848 = vmul.f32 %v1116, %v1736
      %v1849 = vadd.f32 %v1833, %v1841
      %v1850 = vadd.f32 %v1834, %v1842
      %v1851 = vadd.f32 %v1835, %v1843
      %v1852 = vadd.f32 %v1836, %v1844
      %v1853 = vadd.f32 %v1837, %v1845
      %v1854 = vadd.f32 %v1838, %v1846
      %v1855 = vadd.f32 %v1839, %v1847
      %v1856 = vadd.f32 %v1840, %v1848
      %v1857 = vmul.f32 %v1849, %v1156
      %v1858 = vmul.f32 %v1850, %v1156
      %v1859 = vmul.f32 %v1851, %v1160
      %v1860 = vmul.f32 %v1852, %v1160
      %v1861 = vmul.f32 %v1853, %v1164
      %v1862 = vmul.f32 %v1854, %v1164
      %v1863 = vmul.f32 %v1855, %v1168
      %v1864 = vmul.f32 %v1856, %v1168
      %v1865 = vadd.f32 %v1857, %v1200
      %v1866 = vadd.f32 %v1858, %v1200
      %v1867 = vadd.f32 %v1859, %v1204
      %v1868 = vadd.f32 %v1860, %v1204
      %v1869 = vadd.f32 %v1861, %v1208
      %v1870 = vadd.f32 %v1862, %v1208
      %v1871 = vadd.f32 %v1863, %v1212
      %v1872 = vadd.f32 %v1864, %v1212
      %v1873 = vmax.f32 %v1865, 0.0
      %v1874 = vmax.f32 %v1866, 0.0
      %v1875 = vmax.f32 %v1867, 0.0
      %v1876 = vmax.f32 %v1868, 0.0
      %v1877 = vmax.f32 %v1869, 0.0
      %v1878 = vmax.f32 %v1870, 0.0
      %v1879 = vmax.f32 %v1871, 0.0
      %v1880 = vmax.f32 %v1872, 0.0
      %v1881 = vmul.f32 %v1873, %v453
      %v1882 = vmul.f32 %v1874, %v454
      %v1883 = vmul.f32 %v1875, %v453
      %v1884 = vmul.f32 %v1876, %v454
      %v1885 = vmul.f32 %v1877, %v453
      %v1886 = vmul.f32 %v1878, %v454
      %v1887 = vmul.f32 %v1879, %v453
      %v1888 = vmul.f32 %v1880, %v454
      %v1889 = vld [vmem:[%s6] sm:$0x1]
      %v1890 = vld [vmem:[%s6 + $0x1] sm:$0x1]
      %v1891 = vld [vmem:[%s6 + $0x2] sm:$0x1]
      %v1892 = vld [vmem:[%s6 + $0x3] sm:$0x1]
      %v1897 = vlaneseq
      %v1898 = vshrl.u32 %v1897, 7
      %v1899 = vsub.s32 0, %v1898
      %v1900 = vrot.slane %v1889, %v1899
      %v1901 = vlaneseq
      %v1902 = vshrl.u32 %v1901, 7
      %v1903 = vsub.s32 0, %v1902
      %v1904 = vrot.slane %v1890, %v1903
      %v1905 = vlaneseq
      %v1906 = vshrl.u32 %v1905, 7
      %v1907 = vsub.s32 0, %v1906
      %v1908 = vrot.slane %v1891, %v1907
      %v1909 = vlaneseq
      %v1910 = vshrl.u32 %v1909, 7
      %v1911 = vsub.s32 0, %v1910
      %v1912 = vrot.slane %v1892, %v1911
      %1913 = vset.pattern.permute.xlu0 0
      %1914 = vperm.xlu0 %1913, %v1900
      %v1915 = vpop.permute.xlu0 %1914
      %1917 = vset.pattern.permute.xlu0 0
      %1918 = vperm.xlu0 %1917, %v1904
      %v1919 = vpop.permute.xlu0 %1918
      %1921 = vset.pattern.permute.xlu0 0
      %1922 = vperm.xlu0 %1921, %v1908
      %v1923 = vpop.permute.xlu0 %1922
      %1925 = vset.pattern.permute.xlu0 0
      %1926 = vperm.xlu0 %1925, %v1912
      %v1927 = vpop.permute.xlu0 %1926
      %v1929 = vmul.f32 %v1915, %v1881
      %v1930 = vmul.f32 %v1919, %v1881
      %v1931 = vmul.f32 %v1923, %v1881
      %v1932 = vmul.f32 %v1927, %v1881
      %s1933 = scalar_lea.vmem %s6, 4
      %v1934 = vld [vmem:[%s1933] sm:$0x1]
      %v1935 = vld [vmem:[%s1933 + $0x1] sm:$0x1]
      %v1936 = vld [vmem:[%s1933 + $0x2] sm:$0x1]
      %v1937 = vld [vmem:[%s1933 + $0x3] sm:$0x1]
      %v1942 = vlaneseq
      %v1943 = vshrl.u32 %v1942, 7
      %v1944 = vsub.s32 0, %v1943
      %v1945 = vrot.slane %v1934, %v1944
      %v1946 = vlaneseq
      %v1947 = vshrl.u32 %v1946, 7
      %v1948 = vsub.s32 0, %v1947
      %v1949 = vrot.slane %v1935, %v1948
      %v1950 = vlaneseq
      %v1951 = vshrl.u32 %v1950, 7
      %v1952 = vsub.s32 0, %v1951
      %v1953 = vrot.slane %v1936, %v1952
      %v1954 = vlaneseq
      %v1955 = vshrl.u32 %v1954, 7
      %v1956 = vsub.s32 0, %v1955
      %v1957 = vrot.slane %v1937, %v1956
      %1958 = vset.pattern.permute.xlu0 0
      %1959 = vperm.xlu0 %1958, %v1945
      %v1960 = vpop.permute.xlu0 %1959
      %1962 = vset.pattern.permute.xlu0 0
      %1963 = vperm.xlu0 %1962, %v1949
      %v1964 = vpop.permute.xlu0 %1963
      %1966 = vset.pattern.permute.xlu0 0
      %1967 = vperm.xlu0 %1966, %v1953
      %v1968 = vpop.permute.xlu0 %1967
      %1970 = vset.pattern.permute.xlu0 0
      %1971 = vperm.xlu0 %1970, %v1957
      %v1972 = vpop.permute.xlu0 %1971
      %v1974 = vmul.f32 %v1960, %v1883
      %v1975 = vmul.f32 %v1964, %v1883
      %v1976 = vmul.f32 %v1968, %v1883
      %v1977 = vmul.f32 %v1972, %v1883
      %v1978 = vadd.f32 %v1929, %v1974
      %v1979 = vadd.f32 %v1930, %v1975
      %v1980 = vadd.f32 %v1931, %v1976
      %v1981 = vadd.f32 %v1932, %v1977
      %s1982 = scalar_lea.vmem %s6, 8
      %v1983 = vld [vmem:[%s1982] sm:$0x1]
      %v1984 = vld [vmem:[%s1982 + $0x1] sm:$0x1]
      %v1985 = vld [vmem:[%s1982 + $0x2] sm:$0x1]
      %v1986 = vld [vmem:[%s1982 + $0x3] sm:$0x1]
      %v1991 = vlaneseq
      %v1992 = vshrl.u32 %v1991, 7
      %v1993 = vsub.s32 0, %v1992
      %v1994 = vrot.slane %v1983, %v1993
      %v1995 = vlaneseq
      %v1996 = vshrl.u32 %v1995, 7
      %v1997 = vsub.s32 0, %v1996
      %v1998 = vrot.slane %v1984, %v1997
      %v1999 = vlaneseq
      %v2000 = vshrl.u32 %v1999, 7
      %v2001 = vsub.s32 0, %v2000
      %v2002 = vrot.slane %v1985, %v2001
      %v2003 = vlaneseq
      %v2004 = vshrl.u32 %v2003, 7
      %v2005 = vsub.s32 0, %v2004
      %v2006 = vrot.slane %v1986, %v2005
      %2007 = vset.pattern.permute.xlu0 0
      %2008 = vperm.xlu0 %2007, %v1994
      %v2009 = vpop.permute.xlu0 %2008
      %2011 = vset.pattern.permute.xlu0 0
      %2012 = vperm.xlu0 %2011, %v1998
      %v2013 = vpop.permute.xlu0 %2012
      %2015 = vset.pattern.permute.xlu0 0
      %2016 = vperm.xlu0 %2015, %v2002
      %v2017 = vpop.permute.xlu0 %2016
      %2019 = vset.pattern.permute.xlu0 0
      %2020 = vperm.xlu0 %2019, %v2006
      %v2021 = vpop.permute.xlu0 %2020
      %v2023 = vmul.f32 %v2009, %v1885
      %v2024 = vmul.f32 %v2013, %v1885
      %v2025 = vmul.f32 %v2017, %v1885
      %v2026 = vmul.f32 %v2021, %v1885
      %v2027 = vadd.f32 %v1978, %v2023
      %v2028 = vadd.f32 %v1979, %v2024
      %v2029 = vadd.f32 %v1980, %v2025
      %v2030 = vadd.f32 %v1981, %v2026
      %s2031 = scalar_lea.vmem %s6, 12
      %v2032 = vld [vmem:[%s2031] sm:$0x1]
      %v2033 = vld [vmem:[%s2031 + $0x1] sm:$0x1]
      %v2034 = vld [vmem:[%s2031 + $0x2] sm:$0x1]
      %v2035 = vld [vmem:[%s2031 + $0x3] sm:$0x1]
      %v2040 = vlaneseq
      %v2041 = vshrl.u32 %v2040, 7
      %v2042 = vsub.s32 0, %v2041
      %v2043 = vrot.slane %v2032, %v2042
      %v2044 = vlaneseq
      %v2045 = vshrl.u32 %v2044, 7
      %v2046 = vsub.s32 0, %v2045
      %v2047 = vrot.slane %v2033, %v2046
      %v2048 = vlaneseq
      %v2049 = vshrl.u32 %v2048, 7
      %v2050 = vsub.s32 0, %v2049
      %v2051 = vrot.slane %v2034, %v2050
      %v2052 = vlaneseq
      %v2053 = vshrl.u32 %v2052, 7
      %v2054 = vsub.s32 0, %v2053
      %v2055 = vrot.slane %v2035, %v2054
      %2056 = vset.pattern.permute.xlu0 0
      %2057 = vperm.xlu0 %2056, %v2043
      %v2058 = vpop.permute.xlu0 %2057
      %2060 = vset.pattern.permute.xlu0 0
      %2061 = vperm.xlu0 %2060, %v2047
      %v2062 = vpop.permute.xlu0 %2061
      %2064 = vset.pattern.permute.xlu0 0
      %2065 = vperm.xlu0 %2064, %v2051
      %v2066 = vpop.permute.xlu0 %2065
      %2068 = vset.pattern.permute.xlu0 0
      %2069 = vperm.xlu0 %2068, %v2055
      %v2070 = vpop.permute.xlu0 %2069
      %v2072 = vmul.f32 %v2058, %v1887
      %v2073 = vmul.f32 %v2062, %v1887
      %v2074 = vmul.f32 %v2066, %v1887
      %v2075 = vmul.f32 %v2070, %v1887
      %v2076 = vadd.f32 %v2027, %v2072
      %v2077 = vadd.f32 %v2028, %v2073
      %v2078 = vadd.f32 %v2029, %v2074
      %v2079 = vadd.f32 %v2030, %v2075
      %s2080 = scalar_lea.vmem %s6, 16
      %v2081 = vld [vmem:[%s2080] sm:$0x1]
      %v2082 = vld [vmem:[%s2080 + $0x1] sm:$0x1]
      %v2083 = vld [vmem:[%s2080 + $0x2] sm:$0x1]
      %v2084 = vld [vmem:[%s2080 + $0x3] sm:$0x1]
      %v2089 = vlaneseq
      %v2090 = vshrl.u32 %v2089, 7
      %v2091 = vsub.s32 0, %v2090
      %v2092 = vrot.slane %v2081, %v2091
      %v2093 = vlaneseq
      %v2094 = vshrl.u32 %v2093, 7
      %v2095 = vsub.s32 0, %v2094
      %v2096 = vrot.slane %v2082, %v2095
      %v2097 = vlaneseq
      %v2098 = vshrl.u32 %v2097, 7
      %v2099 = vsub.s32 0, %v2098
      %v2100 = vrot.slane %v2083, %v2099
      %v2101 = vlaneseq
      %v2102 = vshrl.u32 %v2101, 7
      %v2103 = vsub.s32 0, %v2102
      %v2104 = vrot.slane %v2084, %v2103
      %2105 = vset.pattern.permute.xlu0 0
      %2106 = vperm.xlu0 %2105, %v2092
      %v2107 = vpop.permute.xlu0 %2106
      %2109 = vset.pattern.permute.xlu0 0
      %2110 = vperm.xlu0 %2109, %v2096
      %v2111 = vpop.permute.xlu0 %2110
      %2113 = vset.pattern.permute.xlu0 0
      %2114 = vperm.xlu0 %2113, %v2100
      %v2115 = vpop.permute.xlu0 %2114
      %2117 = vset.pattern.permute.xlu0 0
      %2118 = vperm.xlu0 %2117, %v2104
      %v2119 = vpop.permute.xlu0 %2118
      %v2121 = vmul.f32 %v2107, %v1664
      %v2122 = vmul.f32 %v2111, %v1664
      %v2123 = vmul.f32 %v2115, %v1664
      %v2124 = vmul.f32 %v2119, %v1664
      %2129 = vrot.lane.b32.xlu0 %v2121, 127
      %v2130 = vpop.permute.xlu0 %2129
      %2131 = vrot.lane.b32.xlu0 %v2122, 127
      %v2132 = vpop.permute.xlu0 %2131
      %2133 = vrot.lane.b32.xlu0 %v2123, 127
      %v2134 = vpop.permute.xlu0 %2133
      %2135 = vrot.lane.b32.xlu0 %v2124, 127
      %v2136 = vpop.permute.xlu0 %2135
      %v2141 = vadd.f32 %v2076, %v2130
      %v2142 = vadd.f32 %v2077, %v2132
      %v2143 = vadd.f32 %v2078, %v2134
      %v2144 = vadd.f32 %v2079, %v2136
      %s2145 = scalar_lea.vmem %s6, 20
      %v2146 = vld [vmem:[%s2145] sm:$0x1]
      %v2147 = vld [vmem:[%s2145 + $0x1] sm:$0x1]
      %v2148 = vld [vmem:[%s2145 + $0x2] sm:$0x1]
      %v2149 = vld [vmem:[%s2145 + $0x3] sm:$0x1]
      %v2154 = vlaneseq
      %v2155 = vshrl.u32 %v2154, 7
      %v2156 = vsub.s32 0, %v2155
      %v2157 = vrot.slane %v2146, %v2156
      %v2158 = vlaneseq
      %v2159 = vshrl.u32 %v2158, 7
      %v2160 = vsub.s32 0, %v2159
      %v2161 = vrot.slane %v2147, %v2160
      %v2162 = vlaneseq
      %v2163 = vshrl.u32 %v2162, 7
      %v2164 = vsub.s32 0, %v2163
      %v2165 = vrot.slane %v2148, %v2164
      %v2166 = vlaneseq
      %v2167 = vshrl.u32 %v2166, 7
      %v2168 = vsub.s32 0, %v2167
      %v2169 = vrot.slane %v2149, %v2168
      %2170 = vset.pattern.permute.xlu0 0
      %2171 = vperm.xlu0 %2170, %v2157
      %v2172 = vpop.permute.xlu0 %2171
      %2174 = vset.pattern.permute.xlu0 0
      %2175 = vperm.xlu0 %2174, %v2161
      %v2176 = vpop.permute.xlu0 %2175
      %2178 = vset.pattern.permute.xlu0 0
      %2179 = vperm.xlu0 %2178, %v2165
      %v2180 = vpop.permute.xlu0 %2179
      %2182 = vset.pattern.permute.xlu0 0
      %2183 = vperm.xlu0 %2182, %v2169
      %v2184 = vpop.permute.xlu0 %2183
      %v2186 = vmul.f32 %v2172, %v1666
      %v2187 = vmul.f32 %v2176, %v1666
      %v2188 = vmul.f32 %v2180, %v1666
      %v2189 = vmul.f32 %v2184, %v1666
      %2194 = vrot.lane.b32.xlu0 %v2186, 127
      %v2195 = vpop.permute.xlu0 %2194
      %2196 = vrot.lane.b32.xlu0 %v2187, 127
      %v2197 = vpop.permute.xlu0 %2196
      %2198 = vrot.lane.b32.xlu0 %v2188, 127
      %v2199 = vpop.permute.xlu0 %2198
      %2200 = vrot.lane.b32.xlu0 %v2189, 127
      %v2201 = vpop.permute.xlu0 %2200
      %v2206 = vadd.f32 %v2141, %v2195
      %v2207 = vadd.f32 %v2142, %v2197
      %v2208 = vadd.f32 %v2143, %v2199
      %v2209 = vadd.f32 %v2144, %v2201
      %s2210 = scalar_lea.vmem %s6, 24
      %v2211 = vld [vmem:[%s2210] sm:$0x1]
      %v2212 = vld [vmem:[%s2210 + $0x1] sm:$0x1]
      %v2213 = vld [vmem:[%s2210 + $0x2] sm:$0x1]
      %v2214 = vld [vmem:[%s2210 + $0x3] sm:$0x1]
      %v2219 = vlaneseq
      %v2220 = vshrl.u32 %v2219, 7
      %v2221 = vsub.s32 0, %v2220
      %v2222 = vrot.slane %v2211, %v2221
      %v2223 = vlaneseq
      %v2224 = vshrl.u32 %v2223, 7
      %v2225 = vsub.s32 0, %v2224
      %v2226 = vrot.slane %v2212, %v2225
      %v2227 = vlaneseq
      %v2228 = vshrl.u32 %v2227, 7
      %v2229 = vsub.s32 0, %v2228
      %v2230 = vrot.slane %v2213, %v2229
      %v2231 = vlaneseq
      %v2232 = vshrl.u32 %v2231, 7
      %v2233 = vsub.s32 0, %v2232
      %v2234 = vrot.slane %v2214, %v2233
      %2235 = vset.pattern.permute.xlu0 0
      %2236 = vperm.xlu0 %2235, %v2222
      %v2237 = vpop.permute.xlu0 %2236
      %2239 = vset.pattern.permute.xlu0 0
      %2240 = vperm.xlu0 %2239, %v2226
      %v2241 = vpop.permute.xlu0 %2240
      %2243 = vset.pattern.permute.xlu0 0
      %2244 = vperm.xlu0 %2243, %v2230
      %v2245 = vpop.permute.xlu0 %2244
      %2247 = vset.pattern.permute.xlu0 0
      %2248 = vperm.xlu0 %2247, %v2234
      %v2249 = vpop.permute.xlu0 %2248
      %v2251 = vmul.f32 %v2237, %v1668
      %v2252 = vmul.f32 %v2241, %v1668
      %v2253 = vmul.f32 %v2245, %v1668
      %v2254 = vmul.f32 %v2249, %v1668
      %2259 = vrot.lane.b32.xlu0 %v2251, 127
      %v2260 = vpop.permute.xlu0 %2259
      %2261 = vrot.lane.b32.xlu0 %v2252, 127
      %v2262 = vpop.permute.xlu0 %2261
      %2263 = vrot.lane.b32.xlu0 %v2253, 127
      %v2264 = vpop.permute.xlu0 %2263
      %2265 = vrot.lane.b32.xlu0 %v2254, 127
      %v2266 = vpop.permute.xlu0 %2265
      %v2271 = vadd.f32 %v2206, %v2260
      %v2272 = vadd.f32 %v2207, %v2262
      %v2273 = vadd.f32 %v2208, %v2264
      %v2274 = vadd.f32 %v2209, %v2266
      %s2275 = scalar_lea.vmem %s6, 28
      %v2276 = vld [vmem:[%s2275] sm:$0x1]
      %v2277 = vld [vmem:[%s2275 + $0x1] sm:$0x1]
      %v2278 = vld [vmem:[%s2275 + $0x2] sm:$0x1]
      %v2279 = vld [vmem:[%s2275 + $0x3] sm:$0x1]
      %v2284 = vlaneseq
      %v2285 = vshrl.u32 %v2284, 7
      %v2286 = vsub.s32 0, %v2285
      %v2287 = vrot.slane %v2276, %v2286
      %v2288 = vlaneseq
      %v2289 = vshrl.u32 %v2288, 7
      %v2290 = vsub.s32 0, %v2289
      %v2291 = vrot.slane %v2277, %v2290
      %v2292 = vlaneseq
      %v2293 = vshrl.u32 %v2292, 7
      %v2294 = vsub.s32 0, %v2293
      %v2295 = vrot.slane %v2278, %v2294
      %v2296 = vlaneseq
      %v2297 = vshrl.u32 %v2296, 7
      %v2298 = vsub.s32 0, %v2297
      %v2299 = vrot.slane %v2279, %v2298
      %2300 = vset.pattern.permute.xlu0 0
      %2301 = vperm.xlu0 %2300, %v2287
      %v2302 = vpop.permute.xlu0 %2301
      %2304 = vset.pattern.permute.xlu0 0
      %2305 = vperm.xlu0 %2304, %v2291
      %v2306 = vpop.permute.xlu0 %2305
      %2308 = vset.pattern.permute.xlu0 0
      %2309 = vperm.xlu0 %2308, %v2295
      %v2310 = vpop.permute.xlu0 %2309
      %2312 = vset.pattern.permute.xlu0 0
      %2313 = vperm.xlu0 %2312, %v2299
      %v2314 = vpop.permute.xlu0 %2313
      %v2316 = vmul.f32 %v2302, %v1670
      %v2317 = vmul.f32 %v2306, %v1670
      %v2318 = vmul.f32 %v2310, %v1670
      %v2319 = vmul.f32 %v2314, %v1670
      %2324 = vrot.lane.b32.xlu0 %v2316, 127
      %v2325 = vpop.permute.xlu0 %2324
      %2326 = vrot.lane.b32.xlu0 %v2317, 127
      %v2327 = vpop.permute.xlu0 %2326
      %2328 = vrot.lane.b32.xlu0 %v2318, 127
      %v2329 = vpop.permute.xlu0 %2328
      %2330 = vrot.lane.b32.xlu0 %v2319, 127
      %v2331 = vpop.permute.xlu0 %2330
      %v2336 = vadd.f32 %v2271, %v2325
      %v2337 = vadd.f32 %v2272, %v2327
      %v2338 = vadd.f32 %v2273, %v2329
      %v2339 = vadd.f32 %v2274, %v2331
      %s2340 = scalar_lea.vmem %s6, 32
      %v2341 = vld [vmem:[%s2340] sm:$0x1]
      %v2342 = vld [vmem:[%s2340 + $0x1] sm:$0x1]
      %v2343 = vld [vmem:[%s2340 + $0x2] sm:$0x1]
      %v2344 = vld [vmem:[%s2340 + $0x3] sm:$0x1]
      %v2349 = vlaneseq
      %v2350 = vshrl.u32 %v2349, 7
      %v2351 = vsub.s32 0, %v2350
      %v2352 = vrot.slane %v2341, %v2351
      %v2353 = vlaneseq
      %v2354 = vshrl.u32 %v2353, 7
      %v2355 = vsub.s32 0, %v2354
      %v2356 = vrot.slane %v2342, %v2355
      %v2357 = vlaneseq
      %v2358 = vshrl.u32 %v2357, 7
      %v2359 = vsub.s32 0, %v2358
      %v2360 = vrot.slane %v2343, %v2359
      %v2361 = vlaneseq
      %v2362 = vshrl.u32 %v2361, 7
      %v2363 = vsub.s32 0, %v2362
      %v2364 = vrot.slane %v2344, %v2363
      %2365 = vset.pattern.permute.xlu0 0
      %2366 = vperm.xlu0 %2365, %v2352
      %v2367 = vpop.permute.xlu0 %2366
      %2369 = vset.pattern.permute.xlu0 0
      %2370 = vperm.xlu0 %2369, %v2356
      %v2371 = vpop.permute.xlu0 %2370
      %2373 = vset.pattern.permute.xlu0 0
      %2374 = vperm.xlu0 %2373, %v2360
      %v2375 = vpop.permute.xlu0 %2374
      %2377 = vset.pattern.permute.xlu0 0
      %2378 = vperm.xlu0 %2377, %v2364
      %v2379 = vpop.permute.xlu0 %2378
      %v2381 = vmul.f32 %v2367, %v1881
      %v2382 = vmul.f32 %v2371, %v1881
      %v2383 = vmul.f32 %v2375, %v1881
      %v2384 = vmul.f32 %v2379, %v1881
      %2389 = vrot.lane.b32.xlu0 %v2381, 127
      %v2390 = vpop.permute.xlu0 %2389
      %2391 = vrot.lane.b32.xlu0 %v2382, 127
      %v2392 = vpop.permute.xlu0 %2391
      %2393 = vrot.lane.b32.xlu0 %v2383, 127
      %v2394 = vpop.permute.xlu0 %2393
      %2395 = vrot.lane.b32.xlu0 %v2384, 127
      %v2396 = vpop.permute.xlu0 %2395
      %v2401 = vadd.f32 %v2336, %v2390
      %v2402 = vadd.f32 %v2337, %v2392
      %v2403 = vadd.f32 %v2338, %v2394
      %v2404 = vadd.f32 %v2339, %v2396
      %s2405 = scalar_lea.vmem %s6, 36
      %v2406 = vld [vmem:[%s2405] sm:$0x1]
      %v2407 = vld [vmem:[%s2405 + $0x1] sm:$0x1]
      %v2408 = vld [vmem:[%s2405 + $0x2] sm:$0x1]
      %v2409 = vld [vmem:[%s2405 + $0x3] sm:$0x1]
      %v2414 = vlaneseq
      %v2415 = vshrl.u32 %v2414, 7
      %v2416 = vsub.s32 0, %v2415
      %v2417 = vrot.slane %v2406, %v2416
      %v2418 = vlaneseq
      %v2419 = vshrl.u32 %v2418, 7
      %v2420 = vsub.s32 0, %v2419
      %v2421 = vrot.slane %v2407, %v2420
      %v2422 = vlaneseq
      %v2423 = vshrl.u32 %v2422, 7
      %v2424 = vsub.s32 0, %v2423
      %v2425 = vrot.slane %v2408, %v2424
      %v2426 = vlaneseq
      %v2427 = vshrl.u32 %v2426, 7
      %v2428 = vsub.s32 0, %v2427
      %v2429 = vrot.slane %v2409, %v2428
      %2430 = vset.pattern.permute.xlu0 0
      %2431 = vperm.xlu0 %2430, %v2417
      %v2432 = vpop.permute.xlu0 %2431
      %2434 = vset.pattern.permute.xlu0 0
      %2435 = vperm.xlu0 %2434, %v2421
      %v2436 = vpop.permute.xlu0 %2435
      %2438 = vset.pattern.permute.xlu0 0
      %2439 = vperm.xlu0 %2438, %v2425
      %v2440 = vpop.permute.xlu0 %2439
      %2442 = vset.pattern.permute.xlu0 0
      %2443 = vperm.xlu0 %2442, %v2429
      %v2444 = vpop.permute.xlu0 %2443
      %v2446 = vmul.f32 %v2432, %v1883
      %v2447 = vmul.f32 %v2436, %v1883
      %v2448 = vmul.f32 %v2440, %v1883
      %v2449 = vmul.f32 %v2444, %v1883
      %2454 = vrot.lane.b32.xlu0 %v2446, 127
      %v2455 = vpop.permute.xlu0 %2454
      %2456 = vrot.lane.b32.xlu0 %v2447, 127
      %v2457 = vpop.permute.xlu0 %2456
      %2458 = vrot.lane.b32.xlu0 %v2448, 127
      %v2459 = vpop.permute.xlu0 %2458
      %2460 = vrot.lane.b32.xlu0 %v2449, 127
      %v2461 = vpop.permute.xlu0 %2460
      %v2466 = vadd.f32 %v2401, %v2455
      %v2467 = vadd.f32 %v2402, %v2457
      %v2468 = vadd.f32 %v2403, %v2459
      %v2469 = vadd.f32 %v2404, %v2461
      %s2470 = scalar_lea.vmem %s6, 40
      %v2471 = vld [vmem:[%s2470] sm:$0x1]
      %v2472 = vld [vmem:[%s2470 + $0x1] sm:$0x1]
      %v2473 = vld [vmem:[%s2470 + $0x2] sm:$0x1]
      %v2474 = vld [vmem:[%s2470 + $0x3] sm:$0x1]
      %v2479 = vlaneseq
      %v2480 = vshrl.u32 %v2479, 7
      %v2481 = vsub.s32 0, %v2480
      %v2482 = vrot.slane %v2471, %v2481
      %v2483 = vlaneseq
      %v2484 = vshrl.u32 %v2483, 7
      %v2485 = vsub.s32 0, %v2484
      %v2486 = vrot.slane %v2472, %v2485
      %v2487 = vlaneseq
      %v2488 = vshrl.u32 %v2487, 7
      %v2489 = vsub.s32 0, %v2488
      %v2490 = vrot.slane %v2473, %v2489
      %v2491 = vlaneseq
      %v2492 = vshrl.u32 %v2491, 7
      %v2493 = vsub.s32 0, %v2492
      %v2494 = vrot.slane %v2474, %v2493
      %2495 = vset.pattern.permute.xlu0 0
      %2496 = vperm.xlu0 %2495, %v2482
      %v2497 = vpop.permute.xlu0 %2496
      %2499 = vset.pattern.permute.xlu0 0
      %2500 = vperm.xlu0 %2499, %v2486
      %v2501 = vpop.permute.xlu0 %2500
      %2503 = vset.pattern.permute.xlu0 0
      %2504 = vperm.xlu0 %2503, %v2490
      %v2505 = vpop.permute.xlu0 %2504
      %2507 = vset.pattern.permute.xlu0 0
      %2508 = vperm.xlu0 %2507, %v2494
      %v2509 = vpop.permute.xlu0 %2508
      %v2511 = vmul.f32 %v2497, %v1885
      %v2512 = vmul.f32 %v2501, %v1885
      %v2513 = vmul.f32 %v2505, %v1885
      %v2514 = vmul.f32 %v2509, %v1885
      %2519 = vrot.lane.b32.xlu0 %v2511, 127
      %v2520 = vpop.permute.xlu0 %2519
      %2521 = vrot.lane.b32.xlu0 %v2512, 127
      %v2522 = vpop.permute.xlu0 %2521
      %2523 = vrot.lane.b32.xlu0 %v2513, 127
      %v2524 = vpop.permute.xlu0 %2523
      %2525 = vrot.lane.b32.xlu0 %v2514, 127
      %v2526 = vpop.permute.xlu0 %2525
      %v2531 = vadd.f32 %v2466, %v2520
      %v2532 = vadd.f32 %v2467, %v2522
      %v2533 = vadd.f32 %v2468, %v2524
      %v2534 = vadd.f32 %v2469, %v2526
      %s2535 = scalar_lea.vmem %s6, 44
      %v2536 = vld [vmem:[%s2535] sm:$0x1]
      %v2537 = vld [vmem:[%s2535 + $0x1] sm:$0x1]
      %v2538 = vld [vmem:[%s2535 + $0x2] sm:$0x1]
      %v2539 = vld [vmem:[%s2535 + $0x3] sm:$0x1]
      %v2544 = vlaneseq
      %v2545 = vshrl.u32 %v2544, 7
      %v2546 = vsub.s32 0, %v2545
      %v2547 = vrot.slane %v2536, %v2546
      %v2548 = vlaneseq
      %v2549 = vshrl.u32 %v2548, 7
      %v2550 = vsub.s32 0, %v2549
      %v2551 = vrot.slane %v2537, %v2550
      %v2552 = vlaneseq
      %v2553 = vshrl.u32 %v2552, 7
      %v2554 = vsub.s32 0, %v2553
      %v2555 = vrot.slane %v2538, %v2554
      %v2556 = vlaneseq
      %v2557 = vshrl.u32 %v2556, 7
      %v2558 = vsub.s32 0, %v2557
      %v2559 = vrot.slane %v2539, %v2558
      %2560 = vset.pattern.permute.xlu0 0
      %2561 = vperm.xlu0 %2560, %v2547
      %v2562 = vpop.permute.xlu0 %2561
      %2564 = vset.pattern.permute.xlu0 0
      %2565 = vperm.xlu0 %2564, %v2551
      %v2566 = vpop.permute.xlu0 %2565
      %2568 = vset.pattern.permute.xlu0 0
      %2569 = vperm.xlu0 %2568, %v2555
      %v2570 = vpop.permute.xlu0 %2569
      %2572 = vset.pattern.permute.xlu0 0
      %2573 = vperm.xlu0 %2572, %v2559
      %v2574 = vpop.permute.xlu0 %2573
      %v2576 = vmul.f32 %v2562, %v1887
      %v2577 = vmul.f32 %v2566, %v1887
      %v2578 = vmul.f32 %v2570, %v1887
      %v2579 = vmul.f32 %v2574, %v1887
      %2584 = vrot.lane.b32.xlu0 %v2576, 127
      %v2585 = vpop.permute.xlu0 %2584
      %2586 = vrot.lane.b32.xlu0 %v2577, 127
      %v2587 = vpop.permute.xlu0 %2586
      %2588 = vrot.lane.b32.xlu0 %v2578, 127
      %v2589 = vpop.permute.xlu0 %2588
      %2590 = vrot.lane.b32.xlu0 %v2579, 127
      %v2591 = vpop.permute.xlu0 %2590
      %v2596 = vadd.f32 %v2531, %v2585
      %v2597 = vadd.f32 %v2532, %v2587
      %v2598 = vadd.f32 %v2533, %v2589
      %v2599 = vadd.f32 %v2534, %v2591
      %s2600 = scalar_lea.vmem %s6, 48
      %v2601 = vld [vmem:[%s2600] sm:$0x1]
      %v2602 = vld [vmem:[%s2600 + $0x1] sm:$0x1]
      %v2603 = vld [vmem:[%s2600 + $0x2] sm:$0x1]
      %v2604 = vld [vmem:[%s2600 + $0x3] sm:$0x1]
      %v2609 = vlaneseq
      %v2610 = vshrl.u32 %v2609, 7
      %v2611 = vsub.s32 0, %v2610
      %v2612 = vrot.slane %v2601, %v2611
      %v2613 = vlaneseq
      %v2614 = vshrl.u32 %v2613, 7
      %v2615 = vsub.s32 0, %v2614
      %v2616 = vrot.slane %v2602, %v2615
      %v2617 = vlaneseq
      %v2618 = vshrl.u32 %v2617, 7
      %v2619 = vsub.s32 0, %v2618
      %v2620 = vrot.slane %v2603, %v2619
      %v2621 = vlaneseq
      %v2622 = vshrl.u32 %v2621, 7
      %v2623 = vsub.s32 0, %v2622
      %v2624 = vrot.slane %v2604, %v2623
      %2625 = vset.pattern.permute.xlu0 0
      %2626 = vperm.xlu0 %2625, %v2612
      %v2627 = vpop.permute.xlu0 %2626
      %2629 = vset.pattern.permute.xlu0 0
      %2630 = vperm.xlu0 %2629, %v2616
      %v2631 = vpop.permute.xlu0 %2630
      %2633 = vset.pattern.permute.xlu0 0
      %2634 = vperm.xlu0 %2633, %v2620
      %v2635 = vpop.permute.xlu0 %2634
      %2637 = vset.pattern.permute.xlu0 0
      %2638 = vperm.xlu0 %2637, %v2624
      %v2639 = vpop.permute.xlu0 %2638
      %v2641 = vmul.f32 %v2627, %v1447
      %v2642 = vmul.f32 %v2627, %v1448
      %v2643 = vmul.f32 %v2631, %v1447
      %v2644 = vmul.f32 %v2631, %v1448
      %v2645 = vmul.f32 %v2635, %v1447
      %v2646 = vmul.f32 %v2635, %v1448
      %v2647 = vmul.f32 %v2639, %v1447
      %v2648 = vmul.f32 %v2639, %v1448
      %vm2657 = vcmask 1046528
      %v2658 = vrot.slane %v2641, 1
      %v2659 = vrot.slane %v2642, 1
      %v2660 = vsel %vm2657, %v2658, %v2659
      %v2661 = vrot.slane %v2643, 1
      %v2662 = vrot.slane %v2644, 1
      %v2663 = vsel %vm2657, %v2661, %v2662
      %v2664 = vrot.slane %v2645, 1
      %v2665 = vrot.slane %v2646, 1
      %v2666 = vsel %vm2657, %v2664, %v2665
      %v2667 = vrot.slane %v2647, 1
      %v2668 = vrot.slane %v2648, 1
      %v2669 = vsel %vm2657, %v2667, %v2668
      %v2674 = vadd.f32 %v2596, %v2660
      %v2675 = vadd.f32 %v2597, %v2663
      %v2676 = vadd.f32 %v2598, %v2666
      %v2677 = vadd.f32 %v2599, %v2669
      %s2678 = scalar_lea.vmem %s6, 52
      %v2679 = vld [vmem:[%s2678] sm:$0x1]
      %v2680 = vld [vmem:[%s2678 + $0x1] sm:$0x1]
      %v2681 = vld [vmem:[%s2678 + $0x2] sm:$0x1]
      %v2682 = vld [vmem:[%s2678 + $0x3] sm:$0x1]
      %v2687 = vlaneseq
      %v2688 = vshrl.u32 %v2687, 7
      %v2689 = vsub.s32 0, %v2688
      %v2690 = vrot.slane %v2679, %v2689
      %v2691 = vlaneseq
      %v2692 = vshrl.u32 %v2691, 7
      %v2693 = vsub.s32 0, %v2692
      %v2694 = vrot.slane %v2680, %v2693
      %v2695 = vlaneseq
      %v2696 = vshrl.u32 %v2695, 7
      %v2697 = vsub.s32 0, %v2696
      %v2698 = vrot.slane %v2681, %v2697
      %v2699 = vlaneseq
      %v2700 = vshrl.u32 %v2699, 7
      %v2701 = vsub.s32 0, %v2700
      %v2702 = vrot.slane %v2682, %v2701
      %2703 = vset.pattern.permute.xlu0 0
      %2704 = vperm.xlu0 %2703, %v2690
      %v2705 = vpop.permute.xlu0 %2704
      %2707 = vset.pattern.permute.xlu0 0
      %2708 = vperm.xlu0 %2707, %v2694
      %v2709 = vpop.permute.xlu0 %2708
      %2711 = vset.pattern.permute.xlu0 0
      %2712 = vperm.xlu0 %2711, %v2698
      %v2713 = vpop.permute.xlu0 %2712
      %2715 = vset.pattern.permute.xlu0 0
      %2716 = vperm.xlu0 %2715, %v2702
      %v2717 = vpop.permute.xlu0 %2716
      %v2719 = vmul.f32 %v2705, %v1449
      %v2720 = vmul.f32 %v2705, %v1450
      %v2721 = vmul.f32 %v2709, %v1449
      %v2722 = vmul.f32 %v2709, %v1450
      %v2723 = vmul.f32 %v2713, %v1449
      %v2724 = vmul.f32 %v2713, %v1450
      %v2725 = vmul.f32 %v2717, %v1449
      %v2726 = vmul.f32 %v2717, %v1450
      %v2735 = vrot.slane %v2719, 1
      %v2736 = vrot.slane %v2720, 1
      %v2737 = vsel %vm2657, %v2735, %v2736
      %v2738 = vrot.slane %v2721, 1
      %v2739 = vrot.slane %v2722, 1
      %v2740 = vsel %vm2657, %v2738, %v2739
      %v2741 = vrot.slane %v2723, 1
      %v2742 = vrot.slane %v2724, 1
      %v2743 = vsel %vm2657, %v2741, %v2742
      %v2744 = vrot.slane %v2725, 1
      %v2745 = vrot.slane %v2726, 1
      %v2746 = vsel %vm2657, %v2744, %v2745
      %v2751 = vadd.f32 %v2674, %v2737
      %v2752 = vadd.f32 %v2675, %v2740
      %v2753 = vadd.f32 %v2676, %v2743
      %v2754 = vadd.f32 %v2677, %v2746
      %s2755 = scalar_lea.vmem %s6, 56
      %v2756 = vld [vmem:[%s2755] sm:$0x1]
      %v2757 = vld [vmem:[%s2755 + $0x1] sm:$0x1]
      %v2758 = vld [vmem:[%s2755 + $0x2] sm:$0x1]
      %v2759 = vld [vmem:[%s2755 + $0x3] sm:$0x1]
      %v2764 = vlaneseq
      %v2765 = vshrl.u32 %v2764, 7
      %v2766 = vsub.s32 0, %v2765
      %v2767 = vrot.slane %v2756, %v2766
      %v2768 = vlaneseq
      %v2769 = vshrl.u32 %v2768, 7
      %v2770 = vsub.s32 0, %v2769
      %v2771 = vrot.slane %v2757, %v2770
      %v2772 = vlaneseq
      %v2773 = vshrl.u32 %v2772, 7
      %v2774 = vsub.s32 0, %v2773
      %v2775 = vrot.slane %v2758, %v2774
      %v2776 = vlaneseq
      %v2777 = vshrl.u32 %v2776, 7
      %v2778 = vsub.s32 0, %v2777
      %v2779 = vrot.slane %v2759, %v2778
      %2780 = vset.pattern.permute.xlu0 0
      %2781 = vperm.xlu0 %2780, %v2767
      %v2782 = vpop.permute.xlu0 %2781
      %2784 = vset.pattern.permute.xlu0 0
      %2785 = vperm.xlu0 %2784, %v2771
      %v2786 = vpop.permute.xlu0 %2785
      %2788 = vset.pattern.permute.xlu0 0
      %2789 = vperm.xlu0 %2788, %v2775
      %v2790 = vpop.permute.xlu0 %2789
      %2792 = vset.pattern.permute.xlu0 0
      %2793 = vperm.xlu0 %2792, %v2779
      %v2794 = vpop.permute.xlu0 %2793
      %v2796 = vmul.f32 %v2782, %v1451
      %v2797 = vmul.f32 %v2782, %v1452
      %v2798 = vmul.f32 %v2786, %v1451
      %v2799 = vmul.f32 %v2786, %v1452
      %v2800 = vmul.f32 %v2790, %v1451
      %v2801 = vmul.f32 %v2790, %v1452
      %v2802 = vmul.f32 %v2794, %v1451
      %v2803 = vmul.f32 %v2794, %v1452
      %v2812 = vrot.slane %v2796, 1
      %v2813 = vrot.slane %v2797, 1
      %v2814 = vsel %vm2657, %v2812, %v2813
      %v2815 = vrot.slane %v2798, 1
      %v2816 = vrot.slane %v2799, 1
      %v2817 = vsel %vm2657, %v2815, %v2816
      %v2818 = vrot.slane %v2800, 1
      %v2819 = vrot.slane %v2801, 1
      %v2820 = vsel %vm2657, %v2818, %v2819
      %v2821 = vrot.slane %v2802, 1
      %v2822 = vrot.slane %v2803, 1
      %v2823 = vsel %vm2657, %v2821, %v2822
      %v2828 = vadd.f32 %v2751, %v2814
      %v2829 = vadd.f32 %v2752, %v2817
      %v2830 = vadd.f32 %v2753, %v2820
      %v2831 = vadd.f32 %v2754, %v2823
      %s2832 = scalar_lea.vmem %s6, 60
      %v2833 = vld [vmem:[%s2832] sm:$0x1]
      %v2834 = vld [vmem:[%s2832 + $0x1] sm:$0x1]
      %v2835 = vld [vmem:[%s2832 + $0x2] sm:$0x1]
      %v2836 = vld [vmem:[%s2832 + $0x3] sm:$0x1]
      %v2841 = vlaneseq
      %v2842 = vshrl.u32 %v2841, 7
      %v2843 = vsub.s32 0, %v2842
      %v2844 = vrot.slane %v2833, %v2843
      %v2845 = vlaneseq
      %v2846 = vshrl.u32 %v2845, 7
      %v2847 = vsub.s32 0, %v2846
      %v2848 = vrot.slane %v2834, %v2847
      %v2849 = vlaneseq
      %v2850 = vshrl.u32 %v2849, 7
      %v2851 = vsub.s32 0, %v2850
      %v2852 = vrot.slane %v2835, %v2851
      %v2853 = vlaneseq
      %v2854 = vshrl.u32 %v2853, 7
      %v2855 = vsub.s32 0, %v2854
      %v2856 = vrot.slane %v2836, %v2855
      %2857 = vset.pattern.permute.xlu0 0
      %2858 = vperm.xlu0 %2857, %v2844
      %v2859 = vpop.permute.xlu0 %2858
      %2861 = vset.pattern.permute.xlu0 0
      %2862 = vperm.xlu0 %2861, %v2848
      %v2863 = vpop.permute.xlu0 %2862
      %2865 = vset.pattern.permute.xlu0 0
      %2866 = vperm.xlu0 %2865, %v2852
      %v2867 = vpop.permute.xlu0 %2866
      %2869 = vset.pattern.permute.xlu0 0
      %2870 = vperm.xlu0 %2869, %v2856
      %v2871 = vpop.permute.xlu0 %2870
      %v2873 = vmul.f32 %v2859, %v1453
      %v2874 = vmul.f32 %v2859, %v1454
      %v2875 = vmul.f32 %v2863, %v1453
      %v2876 = vmul.f32 %v2863, %v1454
      %v2877 = vmul.f32 %v2867, %v1453
      %v2878 = vmul.f32 %v2867, %v1454
      %v2879 = vmul.f32 %v2871, %v1453
      %v2880 = vmul.f32 %v2871, %v1454
      %v2889 = vrot.slane %v2873, 1
      %v2890 = vrot.slane %v2874, 1
      %v2891 = vsel %vm2657, %v2889, %v2890
      %v2892 = vrot.slane %v2875, 1
      %v2893 = vrot.slane %v2876, 1
      %v2894 = vsel %vm2657, %v2892, %v2893
      %v2895 = vrot.slane %v2877, 1
      %v2896 = vrot.slane %v2878, 1
      %v2897 = vsel %vm2657, %v2895, %v2896
      %v2898 = vrot.slane %v2879, 1
      %v2899 = vrot.slane %v2880, 1
      %v2900 = vsel %vm2657, %v2898, %v2899
      %v2905 = vadd.f32 %v2828, %v2891
      %v2906 = vadd.f32 %v2829, %v2894
      %v2907 = vadd.f32 %v2830, %v2897
      %v2908 = vadd.f32 %v2831, %v2900
      %s2909 = scalar_lea.vmem %s6, 64
      %v2910 = vld [vmem:[%s2909] sm:$0x1]
      %v2911 = vld [vmem:[%s2909 + $0x1] sm:$0x1]
      %v2912 = vld [vmem:[%s2909 + $0x2] sm:$0x1]
      %v2913 = vld [vmem:[%s2909 + $0x3] sm:$0x1]
      %v2918 = vlaneseq
      %v2919 = vshrl.u32 %v2918, 7
      %v2920 = vsub.s32 0, %v2919
      %v2921 = vrot.slane %v2910, %v2920
      %v2922 = vlaneseq
      %v2923 = vshrl.u32 %v2922, 7
      %v2924 = vsub.s32 0, %v2923
      %v2925 = vrot.slane %v2911, %v2924
      %v2926 = vlaneseq
      %v2927 = vshrl.u32 %v2926, 7
      %v2928 = vsub.s32 0, %v2927
      %v2929 = vrot.slane %v2912, %v2928
      %v2930 = vlaneseq
      %v2931 = vshrl.u32 %v2930, 7
      %v2932 = vsub.s32 0, %v2931
      %v2933 = vrot.slane %v2913, %v2932
      %2934 = vset.pattern.permute.xlu0 0
      %2935 = vperm.xlu0 %2934, %v2921
      %v2936 = vpop.permute.xlu0 %2935
      %2938 = vset.pattern.permute.xlu0 0
      %2939 = vperm.xlu0 %2938, %v2925
      %v2940 = vpop.permute.xlu0 %2939
      %2942 = vset.pattern.permute.xlu0 0
      %2943 = vperm.xlu0 %2942, %v2929
      %v2944 = vpop.permute.xlu0 %2943
      %2946 = vset.pattern.permute.xlu0 0
      %2947 = vperm.xlu0 %2946, %v2933
      %v2948 = vpop.permute.xlu0 %2947
      %v2950 = vmul.f32 %v2936, %v1230
      %v2951 = vmul.f32 %v2936, %v1231
      %v2952 = vmul.f32 %v2940, %v1230
      %v2953 = vmul.f32 %v2940, %v1231
      %v2954 = vmul.f32 %v2944, %v1230
      %v2955 = vmul.f32 %v2944, %v1231
      %v2956 = vmul.f32 %v2948, %v1230
      %v2957 = vmul.f32 %v2948, %v1231
      %v2966 = vrot.slane %v2950, 1
      %v2967 = vrot.slane %v2951, 1
      %v2968 = vsel %vm2657, %v2966, %v2967
      %v2969 = vrot.slane %v2952, 1
      %v2970 = vrot.slane %v2953, 1
      %v2971 = vsel %vm2657, %v2969, %v2970
      %v2972 = vrot.slane %v2954, 1
      %v2973 = vrot.slane %v2955, 1
      %v2974 = vsel %vm2657, %v2972, %v2973
      %v2975 = vrot.slane %v2956, 1
      %v2976 = vrot.slane %v2957, 1
      %v2977 = vsel %vm2657, %v2975, %v2976
      %2978 = vrot.lane.b32.xlu0 %v2968, 127
      %v2979 = vpop.permute.xlu0 %2978
      %2980 = vrot.lane.b32.xlu0 %v2971, 127
      %v2981 = vpop.permute.xlu0 %2980
      %2982 = vrot.lane.b32.xlu0 %v2974, 127
      %v2983 = vpop.permute.xlu0 %2982
      %2984 = vrot.lane.b32.xlu0 %v2977, 127
      %v2985 = vpop.permute.xlu0 %2984
      %v2990 = vadd.f32 %v2905, %v2979
      %v2991 = vadd.f32 %v2906, %v2981
      %v2992 = vadd.f32 %v2907, %v2983
      %v2993 = vadd.f32 %v2908, %v2985
      %s2994 = scalar_lea.vmem %s6, 68
      %v2995 = vld [vmem:[%s2994] sm:$0x1]
      %v2996 = vld [vmem:[%s2994 + $0x1] sm:$0x1]
      %v2997 = vld [vmem:[%s2994 + $0x2] sm:$0x1]
      %v2998 = vld [vmem:[%s2994 + $0x3] sm:$0x1]
      %v3003 = vlaneseq
      %v3004 = vshrl.u32 %v3003, 7
      %v3005 = vsub.s32 0, %v3004
      %v3006 = vrot.slane %v2995, %v3005
      %v3007 = vlaneseq
      %v3008 = vshrl.u32 %v3007, 7
      %v3009 = vsub.s32 0, %v3008
      %v3010 = vrot.slane %v2996, %v3009
      %v3011 = vlaneseq
      %v3012 = vshrl.u32 %v3011, 7
      %v3013 = vsub.s32 0, %v3012
      %v3014 = vrot.slane %v2997, %v3013
      %v3015 = vlaneseq
      %v3016 = vshrl.u32 %v3015, 7
      %v3017 = vsub.s32 0, %v3016
      %v3018 = vrot.slane %v2998, %v3017
      %3019 = vset.pattern.permute.xlu0 0
      %3020 = vperm.xlu0 %3019, %v3006
      %v3021 = vpop.permute.xlu0 %3020
      %3023 = vset.pattern.permute.xlu0 0
      %3024 = vperm.xlu0 %3023, %v3010
      %v3025 = vpop.permute.xlu0 %3024
      %3027 = vset.pattern.permute.xlu0 0
      %3028 = vperm.xlu0 %3027, %v3014
      %v3029 = vpop.permute.xlu0 %3028
      %3031 = vset.pattern.permute.xlu0 0
      %3032 = vperm.xlu0 %3031, %v3018
      %v3033 = vpop.permute.xlu0 %3032
      %v3035 = vmul.f32 %v3021, %v1232
      %v3036 = vmul.f32 %v3021, %v1233
      %v3037 = vmul.f32 %v3025, %v1232
      %v3038 = vmul.f32 %v3025, %v1233
      %v3039 = vmul.f32 %v3029, %v1232
      %v3040 = vmul.f32 %v3029, %v1233
      %v3041 = vmul.f32 %v3033, %v1232
      %v3042 = vmul.f32 %v3033, %v1233
      %v3051 = vrot.slane %v3035, 1
      %v3052 = vrot.slane %v3036, 1
      %v3053 = vsel %vm2657, %v3051, %v3052
      %v3054 = vrot.slane %v3037, 1
      %v3055 = vrot.slane %v3038, 1
      %v3056 = vsel %vm2657, %v3054, %v3055
      %v3057 = vrot.slane %v3039, 1
      %v3058 = vrot.slane %v3040, 1
      %v3059 = vsel %vm2657, %v3057, %v3058
      %v3060 = vrot.slane %v3041, 1
      %v3061 = vrot.slane %v3042, 1
      %v3062 = vsel %vm2657, %v3060, %v3061
      %3063 = vrot.lane.b32.xlu0 %v3053, 127
      %v3064 = vpop.permute.xlu0 %3063
      %3065 = vrot.lane.b32.xlu0 %v3056, 127
      %v3066 = vpop.permute.xlu0 %3065
      %3067 = vrot.lane.b32.xlu0 %v3059, 127
      %v3068 = vpop.permute.xlu0 %3067
      %3069 = vrot.lane.b32.xlu0 %v3062, 127
      %v3070 = vpop.permute.xlu0 %3069
      %v3075 = vadd.f32 %v2990, %v3064
      %v3076 = vadd.f32 %v2991, %v3066
      %v3077 = vadd.f32 %v2992, %v3068
      %v3078 = vadd.f32 %v2993, %v3070
      %s3079 = scalar_lea.vmem %s6, 72
      %v3080 = vld [vmem:[%s3079] sm:$0x1]
      %v3081 = vld [vmem:[%s3079 + $0x1] sm:$0x1]
      %v3082 = vld [vmem:[%s3079 + $0x2] sm:$0x1]
      %v3083 = vld [vmem:[%s3079 + $0x3] sm:$0x1]
      %v3088 = vlaneseq
      %v3089 = vshrl.u32 %v3088, 7
      %v3090 = vsub.s32 0, %v3089
      %v3091 = vrot.slane %v3080, %v3090
      %v3092 = vlaneseq
      %v3093 = vshrl.u32 %v3092, 7
      %v3094 = vsub.s32 0, %v3093
      %v3095 = vrot.slane %v3081, %v3094
      %v3096 = vlaneseq
      %v3097 = vshrl.u32 %v3096, 7
      %v3098 = vsub.s32 0, %v3097
      %v3099 = vrot.slane %v3082, %v3098
      %v3100 = vlaneseq
      %v3101 = vshrl.u32 %v3100, 7
      %v3102 = vsub.s32 0, %v3101
      %v3103 = vrot.slane %v3083, %v3102
      %3104 = vset.pattern.permute.xlu0 0
      %3105 = vperm.xlu0 %3104, %v3091
      %v3106 = vpop.permute.xlu0 %3105
      %3108 = vset.pattern.permute.xlu0 0
      %3109 = vperm.xlu0 %3108, %v3095
      %v3110 = vpop.permute.xlu0 %3109
      %3112 = vset.pattern.permute.xlu0 0
      %3113 = vperm.xlu0 %3112, %v3099
      %v3114 = vpop.permute.xlu0 %3113
      %3116 = vset.pattern.permute.xlu0 0
      %3117 = vperm.xlu0 %3116, %v3103
      %v3118 = vpop.permute.xlu0 %3117
      %v3120 = vmul.f32 %v3106, %v1234
      %v3121 = vmul.f32 %v3106, %v1235
      %v3122 = vmul.f32 %v3110, %v1234
      %v3123 = vmul.f32 %v3110, %v1235
      %v3124 = vmul.f32 %v3114, %v1234
      %v3125 = vmul.f32 %v3114, %v1235
      %v3126 = vmul.f32 %v3118, %v1234
      %v3127 = vmul.f32 %v3118, %v1235
      %v3136 = vrot.slane %v3120, 1
      %v3137 = vrot.slane %v3121, 1
      %v3138 = vsel %vm2657, %v3136, %v3137
      %v3139 = vrot.slane %v3122, 1
      %v3140 = vrot.slane %v3123, 1
      %v3141 = vsel %vm2657, %v3139, %v3140
      %v3142 = vrot.slane %v3124, 1
      %v3143 = vrot.slane %v3125, 1
      %v3144 = vsel %vm2657, %v3142, %v3143
      %v3145 = vrot.slane %v3126, 1
      %v3146 = vrot.slane %v3127, 1
      %v3147 = vsel %vm2657, %v3145, %v3146
      %3148 = vrot.lane.b32.xlu0 %v3138, 127
      %v3149 = vpop.permute.xlu0 %3148
      %3150 = vrot.lane.b32.xlu0 %v3141, 127
      %v3151 = vpop.permute.xlu0 %3150
      %3152 = vrot.lane.b32.xlu0 %v3144, 127
      %v3153 = vpop.permute.xlu0 %3152
      %3154 = vrot.lane.b32.xlu0 %v3147, 127
      %v3155 = vpop.permute.xlu0 %3154
      %v3160 = vadd.f32 %v3075, %v3149
      %v3161 = vadd.f32 %v3076, %v3151
      %v3162 = vadd.f32 %v3077, %v3153
      %v3163 = vadd.f32 %v3078, %v3155
      %s3164 = scalar_lea.vmem %s6, 76
      %v3165 = vld [vmem:[%s3164] sm:$0x1]
      %v3166 = vld [vmem:[%s3164 + $0x1] sm:$0x1]
      %v3167 = vld [vmem:[%s3164 + $0x2] sm:$0x1]
      %v3168 = vld [vmem:[%s3164 + $0x3] sm:$0x1]
      %v3173 = vlaneseq
      %v3174 = vshrl.u32 %v3173, 7
      %v3175 = vsub.s32 0, %v3174
      %v3176 = vrot.slane %v3165, %v3175
      %v3177 = vlaneseq
      %v3178 = vshrl.u32 %v3177, 7
      %v3179 = vsub.s32 0, %v3178
      %v3180 = vrot.slane %v3166, %v3179
      %v3181 = vlaneseq
      %v3182 = vshrl.u32 %v3181, 7
      %v3183 = vsub.s32 0, %v3182
      %v3184 = vrot.slane %v3167, %v3183
      %v3185 = vlaneseq
      %v3186 = vshrl.u32 %v3185, 7
      %v3187 = vsub.s32 0, %v3186
      %v3188 = vrot.slane %v3168, %v3187
      %3189 = vset.pattern.permute.xlu0 0
      %3190 = vperm.xlu0 %3189, %v3176
      %v3191 = vpop.permute.xlu0 %3190
      %3193 = vset.pattern.permute.xlu0 0
      %3194 = vperm.xlu0 %3193, %v3180
      %v3195 = vpop.permute.xlu0 %3194
      %3197 = vset.pattern.permute.xlu0 0
      %3198 = vperm.xlu0 %3197, %v3184
      %v3199 = vpop.permute.xlu0 %3198
      %3201 = vset.pattern.permute.xlu0 0
      %3202 = vperm.xlu0 %3201, %v3188
      %v3203 = vpop.permute.xlu0 %3202
      %v3205 = vmul.f32 %v3191, %v1236
      %v3206 = vmul.f32 %v3191, %v1237
      %v3207 = vmul.f32 %v3195, %v1236
      %v3208 = vmul.f32 %v3195, %v1237
      %v3209 = vmul.f32 %v3199, %v1236
      %v3210 = vmul.f32 %v3199, %v1237
      %v3211 = vmul.f32 %v3203, %v1236
      %v3212 = vmul.f32 %v3203, %v1237
      %v3221 = vrot.slane %v3205, 1
      %v3222 = vrot.slane %v3206, 1
      %v3223 = vsel %vm2657, %v3221, %v3222
      %v3224 = vrot.slane %v3207, 1
      %v3225 = vrot.slane %v3208, 1
      %v3226 = vsel %vm2657, %v3224, %v3225
      %v3227 = vrot.slane %v3209, 1
      %v3228 = vrot.slane %v3210, 1
      %v3229 = vsel %vm2657, %v3227, %v3228
      %v3230 = vrot.slane %v3211, 1
      %v3231 = vrot.slane %v3212, 1
      %v3232 = vsel %vm2657, %v3230, %v3231
      %3233 = vrot.lane.b32.xlu0 %v3223, 127
      %v3234 = vpop.permute.xlu0 %3233
      %3235 = vrot.lane.b32.xlu0 %v3226, 127
      %v3236 = vpop.permute.xlu0 %3235
      %3237 = vrot.lane.b32.xlu0 %v3229, 127
      %v3238 = vpop.permute.xlu0 %3237
      %3239 = vrot.lane.b32.xlu0 %v3232, 127
      %v3240 = vpop.permute.xlu0 %3239
      %v3245 = vadd.f32 %v3160, %v3234
      %v3246 = vadd.f32 %v3161, %v3236
      %v3247 = vadd.f32 %v3162, %v3238
      %v3248 = vadd.f32 %v3163, %v3240
      %s3249 = scalar_lea.vmem %s6, 80
      %v3250 = vld [vmem:[%s3249] sm:$0x1]
      %v3251 = vld [vmem:[%s3249 + $0x1] sm:$0x1]
      %v3252 = vld [vmem:[%s3249 + $0x2] sm:$0x1]
      %v3253 = vld [vmem:[%s3249 + $0x3] sm:$0x1]
      %v3258 = vlaneseq
      %v3259 = vshrl.u32 %v3258, 7
      %v3260 = vsub.s32 0, %v3259
      %v3261 = vrot.slane %v3250, %v3260
      %v3262 = vlaneseq
      %v3263 = vshrl.u32 %v3262, 7
      %v3264 = vsub.s32 0, %v3263
      %v3265 = vrot.slane %v3251, %v3264
      %v3266 = vlaneseq
      %v3267 = vshrl.u32 %v3266, 7
      %v3268 = vsub.s32 0, %v3267
      %v3269 = vrot.slane %v3252, %v3268
      %v3270 = vlaneseq
      %v3271 = vshrl.u32 %v3270, 7
      %v3272 = vsub.s32 0, %v3271
      %v3273 = vrot.slane %v3253, %v3272
      %3274 = vset.pattern.permute.xlu0 0
      %3275 = vperm.xlu0 %3274, %v3261
      %v3276 = vpop.permute.xlu0 %3275
      %3278 = vset.pattern.permute.xlu0 0
      %3279 = vperm.xlu0 %3278, %v3265
      %v3280 = vpop.permute.xlu0 %3279
      %3282 = vset.pattern.permute.xlu0 0
      %3283 = vperm.xlu0 %3282, %v3269
      %v3284 = vpop.permute.xlu0 %3283
      %3286 = vset.pattern.permute.xlu0 0
      %3287 = vperm.xlu0 %3286, %v3273
      %v3288 = vpop.permute.xlu0 %3287
      %v3290 = vmul.f32 %v3276, %v1447
      %v3291 = vmul.f32 %v3276, %v1448
      %v3292 = vmul.f32 %v3280, %v1447
      %v3293 = vmul.f32 %v3280, %v1448
      %v3294 = vmul.f32 %v3284, %v1447
      %v3295 = vmul.f32 %v3284, %v1448
      %v3296 = vmul.f32 %v3288, %v1447
      %v3297 = vmul.f32 %v3288, %v1448
      %v3306 = vrot.slane %v3290, 1
      %v3307 = vrot.slane %v3291, 1
      %v3308 = vsel %vm2657, %v3306, %v3307
      %v3309 = vrot.slane %v3292, 1
      %v3310 = vrot.slane %v3293, 1
      %v3311 = vsel %vm2657, %v3309, %v3310
      %v3312 = vrot.slane %v3294, 1
      %v3313 = vrot.slane %v3295, 1
      %v3314 = vsel %vm2657, %v3312, %v3313
      %v3315 = vrot.slane %v3296, 1
      %v3316 = vrot.slane %v3297, 1
      %v3317 = vsel %vm2657, %v3315, %v3316
      %3318 = vrot.lane.b32.xlu0 %v3308, 127
      %v3319 = vpop.permute.xlu0 %3318
      %3320 = vrot.lane.b32.xlu0 %v3311, 127
      %v3321 = vpop.permute.xlu0 %3320
      %3322 = vrot.lane.b32.xlu0 %v3314, 127
      %v3323 = vpop.permute.xlu0 %3322
      %3324 = vrot.lane.b32.xlu0 %v3317, 127
      %v3325 = vpop.permute.xlu0 %3324
      %v3330 = vadd.f32 %v3245, %v3319
      %v3331 = vadd.f32 %v3246, %v3321
      %v3332 = vadd.f32 %v3247, %v3323
      %v3333 = vadd.f32 %v3248, %v3325
      %s3334 = scalar_lea.vmem %s6, 84
      %v3335 = vld [vmem:[%s3334] sm:$0x1]
      %v3336 = vld [vmem:[%s3334 + $0x1] sm:$0x1]
      %v3337 = vld [vmem:[%s3334 + $0x2] sm:$0x1]
      %v3338 = vld [vmem:[%s3334 + $0x3] sm:$0x1]
      %v3343 = vlaneseq
      %v3344 = vshrl.u32 %v3343, 7
      %v3345 = vsub.s32 0, %v3344
      %v3346 = vrot.slane %v3335, %v3345
      %v3347 = vlaneseq
      %v3348 = vshrl.u32 %v3347, 7
      %v3349 = vsub.s32 0, %v3348
      %v3350 = vrot.slane %v3336, %v3349
      %v3351 = vlaneseq
      %v3352 = vshrl.u32 %v3351, 7
      %v3353 = vsub.s32 0, %v3352
      %v3354 = vrot.slane %v3337, %v3353
      %v3355 = vlaneseq
      %v3356 = vshrl.u32 %v3355, 7
      %v3357 = vsub.s32 0, %v3356
      %v3358 = vrot.slane %v3338, %v3357
      %3359 = vset.pattern.permute.xlu0 0
      %3360 = vperm.xlu0 %3359, %v3346
      %v3361 = vpop.permute.xlu0 %3360
      %3363 = vset.pattern.permute.xlu0 0
      %3364 = vperm.xlu0 %3363, %v3350
      %v3365 = vpop.permute.xlu0 %3364
      %3367 = vset.pattern.permute.xlu0 0
      %3368 = vperm.xlu0 %3367, %v3354
      %v3369 = vpop.permute.xlu0 %3368
      %3371 = vset.pattern.permute.xlu0 0
      %3372 = vperm.xlu0 %3371, %v3358
      %v3373 = vpop.permute.xlu0 %3372
      %v3375 = vmul.f32 %v3361, %v1449
      %v3376 = vmul.f32 %v3361, %v1450
      %v3377 = vmul.f32 %v3365, %v1449
      %v3378 = vmul.f32 %v3365, %v1450
      %v3379 = vmul.f32 %v3369, %v1449
      %v3380 = vmul.f32 %v3369, %v1450
      %v3381 = vmul.f32 %v3373, %v1449
      %v3382 = vmul.f32 %v3373, %v1450
      %v3391 = vrot.slane %v3375, 1
      %v3392 = vrot.slane %v3376, 1
      %v3393 = vsel %vm2657, %v3391, %v3392
      %v3394 = vrot.slane %v3377, 1
      %v3395 = vrot.slane %v3378, 1
      %v3396 = vsel %vm2657, %v3394, %v3395
      %v3397 = vrot.slane %v3379, 1
      %v3398 = vrot.slane %v3380, 1
      %v3399 = vsel %vm2657, %v3397, %v3398
      %v3400 = vrot.slane %v3381, 1
      %v3401 = vrot.slane %v3382, 1
      %v3402 = vsel %vm2657, %v3400, %v3401
      %3403 = vrot.lane.b32.xlu0 %v3393, 127
      %v3404 = vpop.permute.xlu0 %3403
      %3405 = vrot.lane.b32.xlu0 %v3396, 127
      %v3406 = vpop.permute.xlu0 %3405
      %3407 = vrot.lane.b32.xlu0 %v3399, 127
      %v3408 = vpop.permute.xlu0 %3407
      %3409 = vrot.lane.b32.xlu0 %v3402, 127
      %v3410 = vpop.permute.xlu0 %3409
      %v3415 = vadd.f32 %v3330, %v3404
      %v3416 = vadd.f32 %v3331, %v3406
      %v3417 = vadd.f32 %v3332, %v3408
      %v3418 = vadd.f32 %v3333, %v3410
      %s3419 = scalar_lea.vmem %s6, 88
      %v3420 = vld [vmem:[%s3419] sm:$0x1]
      %v3421 = vld [vmem:[%s3419 + $0x1] sm:$0x1]
      %v3422 = vld [vmem:[%s3419 + $0x2] sm:$0x1]
      %v3423 = vld [vmem:[%s3419 + $0x3] sm:$0x1]
      %v3428 = vlaneseq
      %v3429 = vshrl.u32 %v3428, 7
      %v3430 = vsub.s32 0, %v3429
      %v3431 = vrot.slane %v3420, %v3430
      %v3432 = vlaneseq
      %v3433 = vshrl.u32 %v3432, 7
      %v3434 = vsub.s32 0, %v3433
      %v3435 = vrot.slane %v3421, %v3434
      %v3436 = vlaneseq
      %v3437 = vshrl.u32 %v3436, 7
      %v3438 = vsub.s32 0, %v3437
      %v3439 = vrot.slane %v3422, %v3438
      %v3440 = vlaneseq
      %v3441 = vshrl.u32 %v3440, 7
      %v3442 = vsub.s32 0, %v3441
      %v3443 = vrot.slane %v3423, %v3442
      %3444 = vset.pattern.permute.xlu0 0
      %3445 = vperm.xlu0 %3444, %v3431
      %v3446 = vpop.permute.xlu0 %3445
      %3448 = vset.pattern.permute.xlu0 0
      %3449 = vperm.xlu0 %3448, %v3435
      %v3450 = vpop.permute.xlu0 %3449
      %3452 = vset.pattern.permute.xlu0 0
      %3453 = vperm.xlu0 %3452, %v3439
      %v3454 = vpop.permute.xlu0 %3453
      %3456 = vset.pattern.permute.xlu0 0
      %3457 = vperm.xlu0 %3456, %v3443
      %v3458 = vpop.permute.xlu0 %3457
      %v3460 = vmul.f32 %v3446, %v1451
      %v3461 = vmul.f32 %v3446, %v1452
      %v3462 = vmul.f32 %v3450, %v1451
      %v3463 = vmul.f32 %v3450, %v1452
      %v3464 = vmul.f32 %v3454, %v1451
      %v3465 = vmul.f32 %v3454, %v1452
      %v3466 = vmul.f32 %v3458, %v1451
      %v3467 = vmul.f32 %v3458, %v1452
      %v3476 = vrot.slane %v3460, 1
      %v3477 = vrot.slane %v3461, 1
      %v3478 = vsel %vm2657, %v3476, %v3477
      %v3479 = vrot.slane %v3462, 1
      %v3480 = vrot.slane %v3463, 1
      %v3481 = vsel %vm2657, %v3479, %v3480
      %v3482 = vrot.slane %v3464, 1
      %v3483 = vrot.slane %v3465, 1
      %v3484 = vsel %vm2657, %v3482, %v3483
      %v3485 = vrot.slane %v3466, 1
      %v3486 = vrot.slane %v3467, 1
      %v3487 = vsel %vm2657, %v3485, %v3486
      %3488 = vrot.lane.b32.xlu0 %v3478, 127
      %v3489 = vpop.permute.xlu0 %3488
      %3490 = vrot.lane.b32.xlu0 %v3481, 127
      %v3491 = vpop.permute.xlu0 %3490
      %3492 = vrot.lane.b32.xlu0 %v3484, 127
      %v3493 = vpop.permute.xlu0 %3492
      %3494 = vrot.lane.b32.xlu0 %v3487, 127
      %v3495 = vpop.permute.xlu0 %3494
      %v3500 = vadd.f32 %v3415, %v3489
      %v3501 = vadd.f32 %v3416, %v3491
      %v3502 = vadd.f32 %v3417, %v3493
      %v3503 = vadd.f32 %v3418, %v3495
      %s3504 = scalar_lea.vmem %s6, 92
      %v3505 = vld [vmem:[%s3504] sm:$0x1]
      %v3506 = vld [vmem:[%s3504 + $0x1] sm:$0x1]
      %v3507 = vld [vmem:[%s3504 + $0x2] sm:$0x1]
      %v3508 = vld [vmem:[%s3504 + $0x3] sm:$0x1]
      %v3513 = vlaneseq
      %v3514 = vshrl.u32 %v3513, 7
      %v3515 = vsub.s32 0, %v3514
      %v3516 = vrot.slane %v3505, %v3515
      %v3517 = vlaneseq
      %v3518 = vshrl.u32 %v3517, 7
      %v3519 = vsub.s32 0, %v3518
      %v3520 = vrot.slane %v3506, %v3519
      %v3521 = vlaneseq
      %v3522 = vshrl.u32 %v3521, 7
      %v3523 = vsub.s32 0, %v3522
      %v3524 = vrot.slane %v3507, %v3523
      %v3525 = vlaneseq
      %v3526 = vshrl.u32 %v3525, 7
      %v3527 = vsub.s32 0, %v3526
      %v3528 = vrot.slane %v3508, %v3527
      %3529 = vset.pattern.permute.xlu0 0
      %3530 = vperm.xlu0 %3529, %v3516
      %v3531 = vpop.permute.xlu0 %3530
      %3533 = vset.pattern.permute.xlu0 0
      %3534 = vperm.xlu0 %3533, %v3520
      %v3535 = vpop.permute.xlu0 %3534
      %3537 = vset.pattern.permute.xlu0 0
      %3538 = vperm.xlu0 %3537, %v3524
      %v3539 = vpop.permute.xlu0 %3538
      %3541 = vset.pattern.permute.xlu0 0
      %3542 = vperm.xlu0 %3541, %v3528
      %v3543 = vpop.permute.xlu0 %3542
      %v3545 = vmul.f32 %v3531, %v1453
      %v3546 = vmul.f32 %v3531, %v1454
      %v3547 = vmul.f32 %v3535, %v1453
      %v3548 = vmul.f32 %v3535, %v1454
      %v3549 = vmul.f32 %v3539, %v1453
      %v3550 = vmul.f32 %v3539, %v1454
      %v3551 = vmul.f32 %v3543, %v1453
      %v3552 = vmul.f32 %v3543, %v1454
      %v3561 = vrot.slane %v3545, 1
      %v3562 = vrot.slane %v3546, 1
      %v3563 = vsel %vm2657, %v3561, %v3562
      %v3564 = vrot.slane %v3547, 1
      %v3565 = vrot.slane %v3548, 1
      %v3566 = vsel %vm2657, %v3564, %v3565
      %v3567 = vrot.slane %v3549, 1
      %v3568 = vrot.slane %v3550, 1
      %v3569 = vsel %vm2657, %v3567, %v3568
      %v3570 = vrot.slane %v3551, 1
      %v3571 = vrot.slane %v3552, 1
      %v3572 = vsel %vm2657, %v3570, %v3571
      %3573 = vrot.lane.b32.xlu0 %v3563, 127
      %v3574 = vpop.permute.xlu0 %3573
      %3575 = vrot.lane.b32.xlu0 %v3566, 127
      %v3576 = vpop.permute.xlu0 %3575
      %3577 = vrot.lane.b32.xlu0 %v3569, 127
      %v3578 = vpop.permute.xlu0 %3577
      %3579 = vrot.lane.b32.xlu0 %v3572, 127
      %v3580 = vpop.permute.xlu0 %3579
      %v3585 = vadd.f32 %v3500, %v3574
      %v3586 = vadd.f32 %v3501, %v3576
      %v3587 = vadd.f32 %v3502, %v3578
      %v3588 = vadd.f32 %v3503, %v3580
      %s3589 = scalar_lea.vmem %s6, 96
      %v3590 = vld [vmem:[%s3589] sm:$0x1]
      %v3591 = vld [vmem:[%s3589 + $0x1] sm:$0x1]
      %v3592 = vld [vmem:[%s3589 + $0x2] sm:$0x1]
      %v3593 = vld [vmem:[%s3589 + $0x3] sm:$0x1]
      %v3598 = vlaneseq
      %v3599 = vshrl.u32 %v3598, 7
      %v3600 = vsub.s32 0, %v3599
      %v3601 = vrot.slane %v3590, %v3600
      %v3602 = vlaneseq
      %v3603 = vshrl.u32 %v3602, 7
      %v3604 = vsub.s32 0, %v3603
      %v3605 = vrot.slane %v3591, %v3604
      %v3606 = vlaneseq
      %v3607 = vshrl.u32 %v3606, 7
      %v3608 = vsub.s32 0, %v3607
      %v3609 = vrot.slane %v3592, %v3608
      %v3610 = vlaneseq
      %v3611 = vshrl.u32 %v3610, 7
      %v3612 = vsub.s32 0, %v3611
      %v3613 = vrot.slane %v3593, %v3612
      %3614 = vset.pattern.permute.xlu0 0
      %3615 = vperm.xlu0 %3614, %v3601
      %v3616 = vpop.permute.xlu0 %3615
      %3618 = vset.pattern.permute.xlu0 0
      %3619 = vperm.xlu0 %3618, %v3605
      %v3620 = vpop.permute.xlu0 %3619
      %3622 = vset.pattern.permute.xlu0 0
      %3623 = vperm.xlu0 %3622, %v3609
      %v3624 = vpop.permute.xlu0 %3623
      %3626 = vset.pattern.permute.xlu0 0
      %3627 = vperm.xlu0 %3626, %v3613
      %v3628 = vpop.permute.xlu0 %3627
      %v3630 = vmul.f32 %v3616, %v1881
      %v3631 = vmul.f32 %v3616, %v1882
      %v3632 = vmul.f32 %v3620, %v1881
      %v3633 = vmul.f32 %v3620, %v1882
      %v3634 = vmul.f32 %v3624, %v1881
      %v3635 = vmul.f32 %v3624, %v1882
      %v3636 = vmul.f32 %v3628, %v1881
      %v3637 = vmul.f32 %v3628, %v1882
      %v3646 = vrot.slane %v3630, 1
      %v3647 = vrot.slane %v3631, 1
      %v3648 = vsel %vm2657, %v3646, %v3647
      %v3649 = vrot.slane %v3632, 1
      %v3650 = vrot.slane %v3633, 1
      %v3651 = vsel %vm2657, %v3649, %v3650
      %v3652 = vrot.slane %v3634, 1
      %v3653 = vrot.slane %v3635, 1
      %v3654 = vsel %vm2657, %v3652, %v3653
      %v3655 = vrot.slane %v3636, 1
      %v3656 = vrot.slane %v3637, 1
      %v3657 = vsel %vm2657, %v3655, %v3656
      %v3662 = vadd.f32 %v3585, %v3648
      %v3663 = vadd.f32 %v3586, %v3651
      %v3664 = vadd.f32 %v3587, %v3654
      %v3665 = vadd.f32 %v3588, %v3657
      %s3666 = scalar_lea.vmem %s6, 100
      %v3667 = vld [vmem:[%s3666] sm:$0x1]
      %v3668 = vld [vmem:[%s3666 + $0x1] sm:$0x1]
      %v3669 = vld [vmem:[%s3666 + $0x2] sm:$0x1]
      %v3670 = vld [vmem:[%s3666 + $0x3] sm:$0x1]
      %v3675 = vlaneseq
      %v3676 = vshrl.u32 %v3675, 7
      %v3677 = vsub.s32 0, %v3676
      %v3678 = vrot.slane %v3667, %v3677
      %v3679 = vlaneseq
      %v3680 = vshrl.u32 %v3679, 7
      %v3681 = vsub.s32 0, %v3680
      %v3682 = vrot.slane %v3668, %v3681
      %v3683 = vlaneseq
      %v3684 = vshrl.u32 %v3683, 7
      %v3685 = vsub.s32 0, %v3684
      %v3686 = vrot.slane %v3669, %v3685
      %v3687 = vlaneseq
      %v3688 = vshrl.u32 %v3687, 7
      %v3689 = vsub.s32 0, %v3688
      %v3690 = vrot.slane %v3670, %v3689
      %3691 = vset.pattern.permute.xlu0 0
      %3692 = vperm.xlu0 %3691, %v3678
      %v3693 = vpop.permute.xlu0 %3692
      %3695 = vset.pattern.permute.xlu0 0
      %3696 = vperm.xlu0 %3695, %v3682
      %v3697 = vpop.permute.xlu0 %3696
      %3699 = vset.pattern.permute.xlu0 0
      %3700 = vperm.xlu0 %3699, %v3686
      %v3701 = vpop.permute.xlu0 %3700
      %3703 = vset.pattern.permute.xlu0 0
      %3704 = vperm.xlu0 %3703, %v3690
      %v3705 = vpop.permute.xlu0 %3704
      %v3707 = vmul.f32 %v3693, %v1883
      %v3708 = vmul.f32 %v3693, %v1884
      %v3709 = vmul.f32 %v3697, %v1883
      %v3710 = vmul.f32 %v3697, %v1884
      %v3711 = vmul.f32 %v3701, %v1883
      %v3712 = vmul.f32 %v3701, %v1884
      %v3713 = vmul.f32 %v3705, %v1883
      %v3714 = vmul.f32 %v3705, %v1884
      %v3723 = vrot.slane %v3707, 1
      %v3724 = vrot.slane %v3708, 1
      %v3725 = vsel %vm2657, %v3723, %v3724
      %v3726 = vrot.slane %v3709, 1
      %v3727 = vrot.slane %v3710, 1
      %v3728 = vsel %vm2657, %v3726, %v3727
      %v3729 = vrot.slane %v3711, 1
      %v3730 = vrot.slane %v3712, 1
      %v3731 = vsel %vm2657, %v3729, %v3730
      %v3732 = vrot.slane %v3713, 1
      %v3733 = vrot.slane %v3714, 1
      %v3734 = vsel %vm2657, %v3732, %v3733
      %v3739 = vadd.f32 %v3662, %v3725
      %v3740 = vadd.f32 %v3663, %v3728
      %v3741 = vadd.f32 %v3664, %v3731
      %v3742 = vadd.f32 %v3665, %v3734
      %s3743 = scalar_lea.vmem %s6, 104
      %v3744 = vld [vmem:[%s3743] sm:$0x1]
      %v3745 = vld [vmem:[%s3743 + $0x1] sm:$0x1]
      %v3746 = vld [vmem:[%s3743 + $0x2] sm:$0x1]
      %v3747 = vld [vmem:[%s3743 + $0x3] sm:$0x1]
      %v3752 = vlaneseq
      %v3753 = vshrl.u32 %v3752, 7
      %v3754 = vsub.s32 0, %v3753
      %v3755 = vrot.slane %v3744, %v3754
      %v3756 = vlaneseq
      %v3757 = vshrl.u32 %v3756, 7
      %v3758 = vsub.s32 0, %v3757
      %v3759 = vrot.slane %v3745, %v3758
      %v3760 = vlaneseq
      %v3761 = vshrl.u32 %v3760, 7
      %v3762 = vsub.s32 0, %v3761
      %v3763 = vrot.slane %v3746, %v3762
      %v3764 = vlaneseq
      %v3765 = vshrl.u32 %v3764, 7
      %v3766 = vsub.s32 0, %v3765
      %v3767 = vrot.slane %v3747, %v3766
      %3768 = vset.pattern.permute.xlu0 0
      %3769 = vperm.xlu0 %3768, %v3755
      %v3770 = vpop.permute.xlu0 %3769
      %3772 = vset.pattern.permute.xlu0 0
      %3773 = vperm.xlu0 %3772, %v3759
      %v3774 = vpop.permute.xlu0 %3773
      %3776 = vset.pattern.permute.xlu0 0
      %3777 = vperm.xlu0 %3776, %v3763
      %v3778 = vpop.permute.xlu0 %3777
      %3780 = vset.pattern.permute.xlu0 0
      %3781 = vperm.xlu0 %3780, %v3767
      %v3782 = vpop.permute.xlu0 %3781
      %v3784 = vmul.f32 %v3770, %v1885
      %v3785 = vmul.f32 %v3770, %v1886
      %v3786 = vmul.f32 %v3774, %v1885
      %v3787 = vmul.f32 %v3774, %v1886
      %v3788 = vmul.f32 %v3778, %v1885
      %v3789 = vmul.f32 %v3778, %v1886
      %v3790 = vmul.f32 %v3782, %v1885
      %v3791 = vmul.f32 %v3782, %v1886
      %v3800 = vrot.slane %v3784, 1
      %v3801 = vrot.slane %v3785, 1
      %v3802 = vsel %vm2657, %v3800, %v3801
      %v3803 = vrot.slane %v3786, 1
      %v3804 = vrot.slane %v3787, 1
      %v3805 = vsel %vm2657, %v3803, %v3804
      %v3806 = vrot.slane %v3788, 1
      %v3807 = vrot.slane %v3789, 1
      %v3808 = vsel %vm2657, %v3806, %v3807
      %v3809 = vrot.slane %v3790, 1
      %v3810 = vrot.slane %v3791, 1
      %v3811 = vsel %vm2657, %v3809, %v3810
      %v3816 = vadd.f32 %v3739, %v3802
      %v3817 = vadd.f32 %v3740, %v3805
      %v3818 = vadd.f32 %v3741, %v3808
      %v3819 = vadd.f32 %v3742, %v3811
      %s3820 = scalar_lea.vmem %s6, 108
      %v3821 = vld [vmem:[%s3820] sm:$0x1]
      %v3822 = vld [vmem:[%s3820 + $0x1] sm:$0x1]
      %v3823 = vld [vmem:[%s3820 + $0x2] sm:$0x1]
      %v3824 = vld [vmem:[%s3820 + $0x3] sm:$0x1]
      %v3829 = vlaneseq
      %v3830 = vshrl.u32 %v3829, 7
      %v3831 = vsub.s32 0, %v3830
      %v3832 = vrot.slane %v3821, %v3831
      %v3833 = vlaneseq
      %v3834 = vshrl.u32 %v3833, 7
      %v3835 = vsub.s32 0, %v3834
      %v3836 = vrot.slane %v3822, %v3835
      %v3837 = vlaneseq
      %v3838 = vshrl.u32 %v3837, 7
      %v3839 = vsub.s32 0, %v3838
      %v3840 = vrot.slane %v3823, %v3839
      %v3841 = vlaneseq
      %v3842 = vshrl.u32 %v3841, 7
      %v3843 = vsub.s32 0, %v3842
      %v3844 = vrot.slane %v3824, %v3843
      %3845 = vset.pattern.permute.xlu0 0
      %3846 = vperm.xlu0 %3845, %v3832
      %v3847 = vpop.permute.xlu0 %3846
      %3849 = vset.pattern.permute.xlu0 0
      %3850 = vperm.xlu0 %3849, %v3836
      %v3851 = vpop.permute.xlu0 %3850
      %3853 = vset.pattern.permute.xlu0 0
      %3854 = vperm.xlu0 %3853, %v3840
      %v3855 = vpop.permute.xlu0 %3854
      %3857 = vset.pattern.permute.xlu0 0
      %3858 = vperm.xlu0 %3857, %v3844
      %v3859 = vpop.permute.xlu0 %3858
      %v3861 = vmul.f32 %v3847, %v1887
      %v3862 = vmul.f32 %v3847, %v1888
      %v3863 = vmul.f32 %v3851, %v1887
      %v3864 = vmul.f32 %v3851, %v1888
      %v3865 = vmul.f32 %v3855, %v1887
      %v3866 = vmul.f32 %v3855, %v1888
      %v3867 = vmul.f32 %v3859, %v1887
      %v3868 = vmul.f32 %v3859, %v1888
      %v3877 = vrot.slane %v3861, 1
      %v3878 = vrot.slane %v3862, 1
      %v3879 = vsel %vm2657, %v3877, %v3878
      %v3880 = vrot.slane %v3863, 1
      %v3881 = vrot.slane %v3864, 1
      %v3882 = vsel %vm2657, %v3880, %v3881
      %v3883 = vrot.slane %v3865, 1
      %v3884 = vrot.slane %v3866, 1
      %v3885 = vsel %vm2657, %v3883, %v3884
      %v3886 = vrot.slane %v3867, 1
      %v3887 = vrot.slane %v3868, 1
      %v3888 = vsel %vm2657, %v3886, %v3887
      %v3893 = vadd.f32 %v3816, %v3879
      %v3894 = vadd.f32 %v3817, %v3882
      %v3895 = vadd.f32 %v3818, %v3885
      %v3896 = vadd.f32 %v3819, %v3888
      %s3897 = scalar_lea.vmem %s6, 112
      %v3898 = vld [vmem:[%s3897] sm:$0x1]
      %v3899 = vld [vmem:[%s3897 + $0x1] sm:$0x1]
      %v3900 = vld [vmem:[%s3897 + $0x2] sm:$0x1]
      %v3901 = vld [vmem:[%s3897 + $0x3] sm:$0x1]
      %v3906 = vlaneseq
      %v3907 = vshrl.u32 %v3906, 7
      %v3908 = vsub.s32 0, %v3907
      %v3909 = vrot.slane %v3898, %v3908
      %v3910 = vlaneseq
      %v3911 = vshrl.u32 %v3910, 7
      %v3912 = vsub.s32 0, %v3911
      %v3913 = vrot.slane %v3899, %v3912
      %v3914 = vlaneseq
      %v3915 = vshrl.u32 %v3914, 7
      %v3916 = vsub.s32 0, %v3915
      %v3917 = vrot.slane %v3900, %v3916
      %v3918 = vlaneseq
      %v3919 = vshrl.u32 %v3918, 7
      %v3920 = vsub.s32 0, %v3919
      %v3921 = vrot.slane %v3901, %v3920
      %3922 = vset.pattern.permute.xlu0 0
      %3923 = vperm.xlu0 %3922, %v3909
      %v3924 = vpop.permute.xlu0 %3923
      %3926 = vset.pattern.permute.xlu0 0
      %3927 = vperm.xlu0 %3926, %v3913
      %v3928 = vpop.permute.xlu0 %3927
      %3930 = vset.pattern.permute.xlu0 0
      %3931 = vperm.xlu0 %3930, %v3917
      %v3932 = vpop.permute.xlu0 %3931
      %3934 = vset.pattern.permute.xlu0 0
      %3935 = vperm.xlu0 %3934, %v3921
      %v3936 = vpop.permute.xlu0 %3935
      %v3938 = vmul.f32 %v3924, %v1664
      %v3939 = vmul.f32 %v3924, %v1665
      %v3940 = vmul.f32 %v3928, %v1664
      %v3941 = vmul.f32 %v3928, %v1665
      %v3942 = vmul.f32 %v3932, %v1664
      %v3943 = vmul.f32 %v3932, %v1665
      %v3944 = vmul.f32 %v3936, %v1664
      %v3945 = vmul.f32 %v3936, %v1665
      %v3954 = vrot.slane %v3938, 1
      %v3955 = vrot.slane %v3939, 1
      %v3956 = vsel %vm2657, %v3954, %v3955
      %v3957 = vrot.slane %v3940, 1
      %v3958 = vrot.slane %v3941, 1
      %v3959 = vsel %vm2657, %v3957, %v3958
      %v3960 = vrot.slane %v3942, 1
      %v3961 = vrot.slane %v3943, 1
      %v3962 = vsel %vm2657, %v3960, %v3961
      %v3963 = vrot.slane %v3944, 1
      %v3964 = vrot.slane %v3945, 1
      %v3965 = vsel %vm2657, %v3963, %v3964
      %3966 = vrot.lane.b32.xlu0 %v3956, 127
      %v3967 = vpop.permute.xlu0 %3966
      %3968 = vrot.lane.b32.xlu0 %v3959, 127
      %v3969 = vpop.permute.xlu0 %3968
      %3970 = vrot.lane.b32.xlu0 %v3962, 127
      %v3971 = vpop.permute.xlu0 %3970
      %3972 = vrot.lane.b32.xlu0 %v3965, 127
      %v3973 = vpop.permute.xlu0 %3972
      %v3978 = vadd.f32 %v3893, %v3967
      %v3979 = vadd.f32 %v3894, %v3969
      %v3980 = vadd.f32 %v3895, %v3971
      %v3981 = vadd.f32 %v3896, %v3973
      %s3982 = scalar_lea.vmem %s6, 116
      %v3983 = vld [vmem:[%s3982] sm:$0x1]
      %v3984 = vld [vmem:[%s3982 + $0x1] sm:$0x1]
      %v3985 = vld [vmem:[%s3982 + $0x2] sm:$0x1]
      %v3986 = vld [vmem:[%s3982 + $0x3] sm:$0x1]
      %v3991 = vlaneseq
      %v3992 = vshrl.u32 %v3991, 7
      %v3993 = vsub.s32 0, %v3992
      %v3994 = vrot.slane %v3983, %v3993
      %v3995 = vlaneseq
      %v3996 = vshrl.u32 %v3995, 7
      %v3997 = vsub.s32 0, %v3996
      %v3998 = vrot.slane %v3984, %v3997
      %v3999 = vlaneseq
      %v4000 = vshrl.u32 %v3999, 7
      %v4001 = vsub.s32 0, %v4000
      %v4002 = vrot.slane %v3985, %v4001
      %v4003 = vlaneseq
      %v4004 = vshrl.u32 %v4003, 7
      %v4005 = vsub.s32 0, %v4004
      %v4006 = vrot.slane %v3986, %v4005
      %4007 = vset.pattern.permute.xlu0 0
      %4008 = vperm.xlu0 %4007, %v3994
      %v4009 = vpop.permute.xlu0 %4008
      %4011 = vset.pattern.permute.xlu0 0
      %4012 = vperm.xlu0 %4011, %v3998
      %v4013 = vpop.permute.xlu0 %4012
      %4015 = vset.pattern.permute.xlu0 0
      %4016 = vperm.xlu0 %4015, %v4002
      %v4017 = vpop.permute.xlu0 %4016
      %4019 = vset.pattern.permute.xlu0 0
      %4020 = vperm.xlu0 %4019, %v4006
      %v4021 = vpop.permute.xlu0 %4020
      %v4023 = vmul.f32 %v4009, %v1666
      %v4024 = vmul.f32 %v4009, %v1667
      %v4025 = vmul.f32 %v4013, %v1666
      %v4026 = vmul.f32 %v4013, %v1667
      %v4027 = vmul.f32 %v4017, %v1666
      %v4028 = vmul.f32 %v4017, %v1667
      %v4029 = vmul.f32 %v4021, %v1666
      %v4030 = vmul.f32 %v4021, %v1667
      %v4039 = vrot.slane %v4023, 1
      %v4040 = vrot.slane %v4024, 1
      %v4041 = vsel %vm2657, %v4039, %v4040
      %v4042 = vrot.slane %v4025, 1
      %v4043 = vrot.slane %v4026, 1
      %v4044 = vsel %vm2657, %v4042, %v4043
      %v4045 = vrot.slane %v4027, 1
      %v4046 = vrot.slane %v4028, 1
      %v4047 = vsel %vm2657, %v4045, %v4046
      %v4048 = vrot.slane %v4029, 1
      %v4049 = vrot.slane %v4030, 1
      %v4050 = vsel %vm2657, %v4048, %v4049
      %4051 = vrot.lane.b32.xlu0 %v4041, 127
      %v4052 = vpop.permute.xlu0 %4051
      %4053 = vrot.lane.b32.xlu0 %v4044, 127
      %v4054 = vpop.permute.xlu0 %4053
      %4055 = vrot.lane.b32.xlu0 %v4047, 127
      %v4056 = vpop.permute.xlu0 %4055
      %4057 = vrot.lane.b32.xlu0 %v4050, 127
      %v4058 = vpop.permute.xlu0 %4057
      %v4063 = vadd.f32 %v3978, %v4052
      %v4064 = vadd.f32 %v3979, %v4054
      %v4065 = vadd.f32 %v3980, %v4056
      %v4066 = vadd.f32 %v3981, %v4058
      %s4067 = scalar_lea.vmem %s6, 120
      %v4068 = vld [vmem:[%s4067] sm:$0x1]
      %v4069 = vld [vmem:[%s4067 + $0x1] sm:$0x1]
      %v4070 = vld [vmem:[%s4067 + $0x2] sm:$0x1]
      %v4071 = vld [vmem:[%s4067 + $0x3] sm:$0x1]
      %v4076 = vlaneseq
      %v4077 = vshrl.u32 %v4076, 7
      %v4078 = vsub.s32 0, %v4077
      %v4079 = vrot.slane %v4068, %v4078
      %v4080 = vlaneseq
      %v4081 = vshrl.u32 %v4080, 7
      %v4082 = vsub.s32 0, %v4081
      %v4083 = vrot.slane %v4069, %v4082
      %v4084 = vlaneseq
      %v4085 = vshrl.u32 %v4084, 7
      %v4086 = vsub.s32 0, %v4085
      %v4087 = vrot.slane %v4070, %v4086
      %v4088 = vlaneseq
      %v4089 = vshrl.u32 %v4088, 7
      %v4090 = vsub.s32 0, %v4089
      %v4091 = vrot.slane %v4071, %v4090
      %4092 = vset.pattern.permute.xlu0 0
      %4093 = vperm.xlu0 %4092, %v4079
      %v4094 = vpop.permute.xlu0 %4093
      %4096 = vset.pattern.permute.xlu0 0
      %4097 = vperm.xlu0 %4096, %v4083
      %v4098 = vpop.permute.xlu0 %4097
      %4100 = vset.pattern.permute.xlu0 0
      %4101 = vperm.xlu0 %4100, %v4087
      %v4102 = vpop.permute.xlu0 %4101
      %4104 = vset.pattern.permute.xlu0 0
      %4105 = vperm.xlu0 %4104, %v4091
      %v4106 = vpop.permute.xlu0 %4105
      %v4108 = vmul.f32 %v4094, %v1668
      %v4109 = vmul.f32 %v4094, %v1669
      %v4110 = vmul.f32 %v4098, %v1668
      %v4111 = vmul.f32 %v4098, %v1669
      %v4112 = vmul.f32 %v4102, %v1668
      %v4113 = vmul.f32 %v4102, %v1669
      %v4114 = vmul.f32 %v4106, %v1668
      %v4115 = vmul.f32 %v4106, %v1669
      %v4124 = vrot.slane %v4108, 1
      %v4125 = vrot.slane %v4109, 1
      %v4126 = vsel %vm2657, %v4124, %v4125
      %v4127 = vrot.slane %v4110, 1
      %v4128 = vrot.slane %v4111, 1
      %v4129 = vsel %vm2657, %v4127, %v4128
      %v4130 = vrot.slane %v4112, 1
      %v4131 = vrot.slane %v4113, 1
      %v4132 = vsel %vm2657, %v4130, %v4131
      %v4133 = vrot.slane %v4114, 1
      %v4134 = vrot.slane %v4115, 1
      %v4135 = vsel %vm2657, %v4133, %v4134
      %4136 = vrot.lane.b32.xlu0 %v4126, 127
      %v4137 = vpop.permute.xlu0 %4136
      %4138 = vrot.lane.b32.xlu0 %v4129, 127
      %v4139 = vpop.permute.xlu0 %4138
      %4140 = vrot.lane.b32.xlu0 %v4132, 127
      %v4141 = vpop.permute.xlu0 %4140
      %4142 = vrot.lane.b32.xlu0 %v4135, 127
      %v4143 = vpop.permute.xlu0 %4142
      %v4148 = vadd.f32 %v4063, %v4137
      %v4149 = vadd.f32 %v4064, %v4139
      %v4150 = vadd.f32 %v4065, %v4141
      %v4151 = vadd.f32 %v4066, %v4143
      %s4152 = scalar_lea.vmem %s6, 124
      %v4153 = vld [vmem:[%s4152] sm:$0x1]
      %v4154 = vld [vmem:[%s4152 + $0x1] sm:$0x1]
      %v4155 = vld [vmem:[%s4152 + $0x2] sm:$0x1]
      %v4156 = vld [vmem:[%s4152 + $0x3] sm:$0x1]
      %v4161 = vlaneseq
      %v4162 = vshrl.u32 %v4161, 7
      %v4163 = vsub.s32 0, %v4162
      %v4164 = vrot.slane %v4153, %v4163
      %v4165 = vlaneseq
      %v4166 = vshrl.u32 %v4165, 7
      %v4167 = vsub.s32 0, %v4166
      %v4168 = vrot.slane %v4154, %v4167
      %v4169 = vlaneseq
      %v4170 = vshrl.u32 %v4169, 7
      %v4171 = vsub.s32 0, %v4170
      %v4172 = vrot.slane %v4155, %v4171
      %v4173 = vlaneseq
      %v4174 = vshrl.u32 %v4173, 7
      %v4175 = vsub.s32 0, %v4174
      %v4176 = vrot.slane %v4156, %v4175
      %4177 = vset.pattern.permute.xlu0 0
      %4178 = vperm.xlu0 %4177, %v4164
      %v4179 = vpop.permute.xlu0 %4178
      %4181 = vset.pattern.permute.xlu0 0
      %4182 = vperm.xlu0 %4181, %v4168
      %v4183 = vpop.permute.xlu0 %4182
      %4185 = vset.pattern.permute.xlu0 0
      %4186 = vperm.xlu0 %4185, %v4172
      %v4187 = vpop.permute.xlu0 %4186
      %4189 = vset.pattern.permute.xlu0 0
      %4190 = vperm.xlu0 %4189, %v4176
      %v4191 = vpop.permute.xlu0 %4190
      %v4193 = vmul.f32 %v4179, %v1670
      %v4194 = vmul.f32 %v4179, %v1671
      %v4195 = vmul.f32 %v4183, %v1670
      %v4196 = vmul.f32 %v4183, %v1671
      %v4197 = vmul.f32 %v4187, %v1670
      %v4198 = vmul.f32 %v4187, %v1671
      %v4199 = vmul.f32 %v4191, %v1670
      %v4200 = vmul.f32 %v4191, %v1671
      %v4209 = vrot.slane %v4193, 1
      %v4210 = vrot.slane %v4194, 1
      %v4211 = vsel %vm2657, %v4209, %v4210
      %v4212 = vrot.slane %v4195, 1
      %v4213 = vrot.slane %v4196, 1
      %v4214 = vsel %vm2657, %v4212, %v4213
      %v4215 = vrot.slane %v4197, 1
      %v4216 = vrot.slane %v4198, 1
      %v4217 = vsel %vm2657, %v4215, %v4216
      %v4218 = vrot.slane %v4199, 1
      %v4219 = vrot.slane %v4200, 1
      %v4220 = vsel %vm2657, %v4218, %v4219
      %4221 = vrot.lane.b32.xlu0 %v4211, 127
      %v4222 = vpop.permute.xlu0 %4221
      %4223 = vrot.lane.b32.xlu0 %v4214, 127
      %v4224 = vpop.permute.xlu0 %4223
      %4225 = vrot.lane.b32.xlu0 %v4217, 127
      %v4226 = vpop.permute.xlu0 %4225
      %4227 = vrot.lane.b32.xlu0 %v4220, 127
      %v4228 = vpop.permute.xlu0 %4227
      %v4233 = vadd.f32 %v4148, %v4222
      %v4234 = vadd.f32 %v4149, %v4224
      %v4235 = vadd.f32 %v4150, %v4226
      %v4236 = vadd.f32 %v4151, %v4228
      %s4237 = scalar_lea.vmem %s6, 128
      %v4238 = vld [vmem:[%s4237] sm:$0x1]
      %v4239 = vld [vmem:[%s4237 + $0x1] sm:$0x1]
      %v4240 = vld [vmem:[%s4237 + $0x2] sm:$0x1]
      %v4241 = vld [vmem:[%s4237 + $0x3] sm:$0x1]
      %v4246 = vlaneseq
      %v4247 = vshrl.u32 %v4246, 7
      %v4248 = vsub.s32 0, %v4247
      %v4249 = vrot.slane %v4238, %v4248
      %v4250 = vlaneseq
      %v4251 = vshrl.u32 %v4250, 7
      %v4252 = vsub.s32 0, %v4251
      %v4253 = vrot.slane %v4239, %v4252
      %v4254 = vlaneseq
      %v4255 = vshrl.u32 %v4254, 7
      %v4256 = vsub.s32 0, %v4255
      %v4257 = vrot.slane %v4240, %v4256
      %v4258 = vlaneseq
      %v4259 = vshrl.u32 %v4258, 7
      %v4260 = vsub.s32 0, %v4259
      %v4261 = vrot.slane %v4241, %v4260
      %4262 = vset.pattern.permute.xlu0 0
      %4263 = vperm.xlu0 %4262, %v4249
      %v4264 = vpop.permute.xlu0 %4263
      %4266 = vset.pattern.permute.xlu0 0
      %4267 = vperm.xlu0 %4266, %v4253
      %v4268 = vpop.permute.xlu0 %4267
      %4270 = vset.pattern.permute.xlu0 0
      %4271 = vperm.xlu0 %4270, %v4257
      %v4272 = vpop.permute.xlu0 %4271
      %4274 = vset.pattern.permute.xlu0 0
      %4275 = vperm.xlu0 %4274, %v4261
      %v4276 = vpop.permute.xlu0 %4275
      %v4278 = vmul.f32 %v4264, %v1881
      %v4279 = vmul.f32 %v4264, %v1882
      %v4280 = vmul.f32 %v4268, %v1881
      %v4281 = vmul.f32 %v4268, %v1882
      %v4282 = vmul.f32 %v4272, %v1881
      %v4283 = vmul.f32 %v4272, %v1882
      %v4284 = vmul.f32 %v4276, %v1881
      %v4285 = vmul.f32 %v4276, %v1882
      %v4294 = vrot.slane %v4278, 1
      %v4295 = vrot.slane %v4279, 1
      %v4296 = vsel %vm2657, %v4294, %v4295
      %v4297 = vrot.slane %v4280, 1
      %v4298 = vrot.slane %v4281, 1
      %v4299 = vsel %vm2657, %v4297, %v4298
      %v4300 = vrot.slane %v4282, 1
      %v4301 = vrot.slane %v4283, 1
      %v4302 = vsel %vm2657, %v4300, %v4301
      %v4303 = vrot.slane %v4284, 1
      %v4304 = vrot.slane %v4285, 1
      %v4305 = vsel %vm2657, %v4303, %v4304
      %4306 = vrot.lane.b32.xlu0 %v4296, 127
      %v4307 = vpop.permute.xlu0 %4306
      %4308 = vrot.lane.b32.xlu0 %v4299, 127
      %v4309 = vpop.permute.xlu0 %4308
      %4310 = vrot.lane.b32.xlu0 %v4302, 127
      %v4311 = vpop.permute.xlu0 %4310
      %4312 = vrot.lane.b32.xlu0 %v4305, 127
      %v4313 = vpop.permute.xlu0 %4312
      %v4318 = vadd.f32 %v4233, %v4307
      %v4319 = vadd.f32 %v4234, %v4309
      %v4320 = vadd.f32 %v4235, %v4311
      %v4321 = vadd.f32 %v4236, %v4313
      %s4322 = scalar_lea.vmem %s6, 132
      %v4323 = vld [vmem:[%s4322] sm:$0x1]
      %v4324 = vld [vmem:[%s4322 + $0x1] sm:$0x1]
      %v4325 = vld [vmem:[%s4322 + $0x2] sm:$0x1]
      %v4326 = vld [vmem:[%s4322 + $0x3] sm:$0x1]
      %v4331 = vlaneseq
      %v4332 = vshrl.u32 %v4331, 7
      %v4333 = vsub.s32 0, %v4332
      %v4334 = vrot.slane %v4323, %v4333
      %v4335 = vlaneseq
      %v4336 = vshrl.u32 %v4335, 7
      %v4337 = vsub.s32 0, %v4336
      %v4338 = vrot.slane %v4324, %v4337
      %v4339 = vlaneseq
      %v4340 = vshrl.u32 %v4339, 7
      %v4341 = vsub.s32 0, %v4340
      %v4342 = vrot.slane %v4325, %v4341
      %v4343 = vlaneseq
      %v4344 = vshrl.u32 %v4343, 7
      %v4345 = vsub.s32 0, %v4344
      %v4346 = vrot.slane %v4326, %v4345
      %4347 = vset.pattern.permute.xlu0 0
      %4348 = vperm.xlu0 %4347, %v4334
      %v4349 = vpop.permute.xlu0 %4348
      %4351 = vset.pattern.permute.xlu0 0
      %4352 = vperm.xlu0 %4351, %v4338
      %v4353 = vpop.permute.xlu0 %4352
      %4355 = vset.pattern.permute.xlu0 0
      %4356 = vperm.xlu0 %4355, %v4342
      %v4357 = vpop.permute.xlu0 %4356
      %4359 = vset.pattern.permute.xlu0 0
      %4360 = vperm.xlu0 %4359, %v4346
      %v4361 = vpop.permute.xlu0 %4360
      %v4363 = vmul.f32 %v4349, %v1883
      %v4364 = vmul.f32 %v4349, %v1884
      %v4365 = vmul.f32 %v4353, %v1883
      %v4366 = vmul.f32 %v4353, %v1884
      %v4367 = vmul.f32 %v4357, %v1883
      %v4368 = vmul.f32 %v4357, %v1884
      %v4369 = vmul.f32 %v4361, %v1883
      %v4370 = vmul.f32 %v4361, %v1884
      %v4379 = vrot.slane %v4363, 1
      %v4380 = vrot.slane %v4364, 1
      %v4381 = vsel %vm2657, %v4379, %v4380
      %v4382 = vrot.slane %v4365, 1
      %v4383 = vrot.slane %v4366, 1
      %v4384 = vsel %vm2657, %v4382, %v4383
      %v4385 = vrot.slane %v4367, 1
      %v4386 = vrot.slane %v4368, 1
      %v4387 = vsel %vm2657, %v4385, %v4386
      %v4388 = vrot.slane %v4369, 1
      %v4389 = vrot.slane %v4370, 1
      %v4390 = vsel %vm2657, %v4388, %v4389
      %4391 = vrot.lane.b32.xlu0 %v4381, 127
      %v4392 = vpop.permute.xlu0 %4391
      %4393 = vrot.lane.b32.xlu0 %v4384, 127
      %v4394 = vpop.permute.xlu0 %4393
      %4395 = vrot.lane.b32.xlu0 %v4387, 127
      %v4396 = vpop.permute.xlu0 %4395
      %4397 = vrot.lane.b32.xlu0 %v4390, 127
      %v4398 = vpop.permute.xlu0 %4397
      %v4403 = vadd.f32 %v4318, %v4392
      %v4404 = vadd.f32 %v4319, %v4394
      %v4405 = vadd.f32 %v4320, %v4396
      %v4406 = vadd.f32 %v4321, %v4398
      %s4407 = scalar_lea.vmem %s6, 136
      %v4408 = vld [vmem:[%s4407] sm:$0x1]
      %v4409 = vld [vmem:[%s4407 + $0x1] sm:$0x1]
      %v4410 = vld [vmem:[%s4407 + $0x2] sm:$0x1]
      %v4411 = vld [vmem:[%s4407 + $0x3] sm:$0x1]
      %v4416 = vlaneseq
      %v4417 = vshrl.u32 %v4416, 7
      %v4418 = vsub.s32 0, %v4417
      %v4419 = vrot.slane %v4408, %v4418
      %v4420 = vlaneseq
      %v4421 = vshrl.u32 %v4420, 7
      %v4422 = vsub.s32 0, %v4421
      %v4423 = vrot.slane %v4409, %v4422
      %v4424 = vlaneseq
      %v4425 = vshrl.u32 %v4424, 7
      %v4426 = vsub.s32 0, %v4425
      %v4427 = vrot.slane %v4410, %v4426
      %v4428 = vlaneseq
      %v4429 = vshrl.u32 %v4428, 7
      %v4430 = vsub.s32 0, %v4429
      %v4431 = vrot.slane %v4411, %v4430
      %4432 = vset.pattern.permute.xlu0 0
      %4433 = vperm.xlu0 %4432, %v4419
      %v4434 = vpop.permute.xlu0 %4433
      %4436 = vset.pattern.permute.xlu0 0
      %4437 = vperm.xlu0 %4436, %v4423
      %v4438 = vpop.permute.xlu0 %4437
      %4440 = vset.pattern.permute.xlu0 0
      %4441 = vperm.xlu0 %4440, %v4427
      %v4442 = vpop.permute.xlu0 %4441
      %4444 = vset.pattern.permute.xlu0 0
      %4445 = vperm.xlu0 %4444, %v4431
      %v4446 = vpop.permute.xlu0 %4445
      %v4448 = vmul.f32 %v4434, %v1885
      %v4449 = vmul.f32 %v4434, %v1886
      %v4450 = vmul.f32 %v4438, %v1885
      %v4451 = vmul.f32 %v4438, %v1886
      %v4452 = vmul.f32 %v4442, %v1885
      %v4453 = vmul.f32 %v4442, %v1886
      %v4454 = vmul.f32 %v4446, %v1885
      %v4455 = vmul.f32 %v4446, %v1886
      %v4464 = vrot.slane %v4448, 1
      %v4465 = vrot.slane %v4449, 1
      %v4466 = vsel %vm2657, %v4464, %v4465
      %v4467 = vrot.slane %v4450, 1
      %v4468 = vrot.slane %v4451, 1
      %v4469 = vsel %vm2657, %v4467, %v4468
      %v4470 = vrot.slane %v4452, 1
      %v4471 = vrot.slane %v4453, 1
      %v4472 = vsel %vm2657, %v4470, %v4471
      %v4473 = vrot.slane %v4454, 1
      %v4474 = vrot.slane %v4455, 1
      %v4475 = vsel %vm2657, %v4473, %v4474
      %4476 = vrot.lane.b32.xlu0 %v4466, 127
      %v4477 = vpop.permute.xlu0 %4476
      %4478 = vrot.lane.b32.xlu0 %v4469, 127
      %v4479 = vpop.permute.xlu0 %4478
      %4480 = vrot.lane.b32.xlu0 %v4472, 127
      %v4481 = vpop.permute.xlu0 %4480
      %4482 = vrot.lane.b32.xlu0 %v4475, 127
      %v4483 = vpop.permute.xlu0 %4482
      %v4488 = vadd.f32 %v4403, %v4477
      %v4489 = vadd.f32 %v4404, %v4479
      %v4490 = vadd.f32 %v4405, %v4481
      %v4491 = vadd.f32 %v4406, %v4483
      %s4492 = scalar_lea.vmem %s6, 140
      %v4493 = vld [vmem:[%s4492] sm:$0x1]
      %v4494 = vld [vmem:[%s4492 + $0x1] sm:$0x1]
      %v4495 = vld [vmem:[%s4492 + $0x2] sm:$0x1]
      %v4496 = vld [vmem:[%s4492 + $0x3] sm:$0x1]
      %v4501 = vlaneseq
      %v4502 = vshrl.u32 %v4501, 7
      %v4503 = vsub.s32 0, %v4502
      %v4504 = vrot.slane %v4493, %v4503
      %v4505 = vlaneseq
      %v4506 = vshrl.u32 %v4505, 7
      %v4507 = vsub.s32 0, %v4506
      %v4508 = vrot.slane %v4494, %v4507
      %v4509 = vlaneseq
      %v4510 = vshrl.u32 %v4509, 7
      %v4511 = vsub.s32 0, %v4510
      %v4512 = vrot.slane %v4495, %v4511
      %v4513 = vlaneseq
      %v4514 = vshrl.u32 %v4513, 7
      %v4515 = vsub.s32 0, %v4514
      %v4516 = vrot.slane %v4496, %v4515
      %4517 = vset.pattern.permute.xlu0 0
      %4518 = vperm.xlu0 %4517, %v4504
      %v4519 = vpop.permute.xlu0 %4518
      %4521 = vset.pattern.permute.xlu0 0
      %4522 = vperm.xlu0 %4521, %v4508
      %v4523 = vpop.permute.xlu0 %4522
      %4525 = vset.pattern.permute.xlu0 0
      %4526 = vperm.xlu0 %4525, %v4512
      %v4527 = vpop.permute.xlu0 %4526
      %4529 = vset.pattern.permute.xlu0 0
      %4530 = vperm.xlu0 %4529, %v4516
      %v4531 = vpop.permute.xlu0 %4530
      %v4533 = vmul.f32 %v4519, %v1887
      %v4534 = vmul.f32 %v4519, %v1888
      %v4535 = vmul.f32 %v4523, %v1887
      %v4536 = vmul.f32 %v4523, %v1888
      %v4537 = vmul.f32 %v4527, %v1887
      %v4538 = vmul.f32 %v4527, %v1888
      %v4539 = vmul.f32 %v4531, %v1887
      %v4540 = vmul.f32 %v4531, %v1888
      %v4549 = vrot.slane %v4533, 1
      %v4550 = vrot.slane %v4534, 1
      %v4551 = vsel %vm2657, %v4549, %v4550
      %v4552 = vrot.slane %v4535, 1
      %v4553 = vrot.slane %v4536, 1
      %v4554 = vsel %vm2657, %v4552, %v4553
      %v4555 = vrot.slane %v4537, 1
      %v4556 = vrot.slane %v4538, 1
      %v4557 = vsel %vm2657, %v4555, %v4556
      %v4558 = vrot.slane %v4539, 1
      %v4559 = vrot.slane %v4540, 1
      %v4560 = vsel %vm2657, %v4558, %v4559
      %4561 = vrot.lane.b32.xlu0 %v4551, 127
      %v4562 = vpop.permute.xlu0 %4561
      %4563 = vrot.lane.b32.xlu0 %v4554, 127
      %v4564 = vpop.permute.xlu0 %4563
      %4565 = vrot.lane.b32.xlu0 %v4557, 127
      %v4566 = vpop.permute.xlu0 %4565
      %4567 = vrot.lane.b32.xlu0 %v4560, 127
      %v4568 = vpop.permute.xlu0 %4567
      %v4573 = vadd.f32 %v4488, %v4562
      %v4574 = vadd.f32 %v4489, %v4564
      %v4575 = vadd.f32 %v4490, %v4566
      %v4576 = vadd.f32 %v4491, %v4568
      %v4577 = vld [vmem:[%s7] sm:$0x1]
      %v4578 = vld [vmem:[%s7 + $0x1] sm:$0x1]
      %v4579 = vld [vmem:[%s7 + $0x2] sm:$0x1]
      %v4580 = vld [vmem:[%s7 + $0x3] sm:$0x1]
      %v4585 = vlaneseq
      %v4586 = vshrl.u32 %v4585, 7
      %v4587 = vsub.s32 0, %v4586
      %v4588 = vrot.slane %v4577, %v4587
      %v4589 = vlaneseq
      %v4590 = vshrl.u32 %v4589, 7
      %v4591 = vsub.s32 0, %v4590
      %v4592 = vrot.slane %v4578, %v4591
      %v4593 = vlaneseq
      %v4594 = vshrl.u32 %v4593, 7
      %v4595 = vsub.s32 0, %v4594
      %v4596 = vrot.slane %v4579, %v4595
      %v4597 = vlaneseq
      %v4598 = vshrl.u32 %v4597, 7
      %v4599 = vsub.s32 0, %v4598
      %v4600 = vrot.slane %v4580, %v4599
      %4601 = vset.pattern.permute.xlu0 0
      %4602 = vperm.xlu0 %4601, %v4588
      %v4603 = vpop.permute.xlu0 %4602
      %4605 = vset.pattern.permute.xlu0 0
      %4606 = vperm.xlu0 %4605, %v4592
      %v4607 = vpop.permute.xlu0 %4606
      %4609 = vset.pattern.permute.xlu0 0
      %4610 = vperm.xlu0 %4609, %v4596
      %v4611 = vpop.permute.xlu0 %4610
      %4613 = vset.pattern.permute.xlu0 0
      %4614 = vperm.xlu0 %4613, %v4600
      %v4615 = vpop.permute.xlu0 %4614
      %v4617 = vmul.f32 %v4573, %v4603
      %v4618 = vmul.f32 %v4574, %v4607
      %v4619 = vmul.f32 %v4575, %v4611
      %v4620 = vmul.f32 %v4576, %v4615
      %v4621 = vld [vmem:[%s8] sm:$0x1]
      %v4622 = vld [vmem:[%s8 + $0x1] sm:$0x1]
      %v4623 = vld [vmem:[%s8 + $0x2] sm:$0x1]
      %v4624 = vld [vmem:[%s8 + $0x3] sm:$0x1]
      %v4629 = vlaneseq
      %v4630 = vshrl.u32 %v4629, 7
      %v4631 = vsub.s32 0, %v4630
      %v4632 = vrot.slane %v4621, %v4631
      %v4633 = vlaneseq
      %v4634 = vshrl.u32 %v4633, 7
      %v4635 = vsub.s32 0, %v4634
      %v4636 = vrot.slane %v4622, %v4635
      %v4637 = vlaneseq
      %v4638 = vshrl.u32 %v4637, 7
      %v4639 = vsub.s32 0, %v4638
      %v4640 = vrot.slane %v4623, %v4639
      %v4641 = vlaneseq
      %v4642 = vshrl.u32 %v4641, 7
      %v4643 = vsub.s32 0, %v4642
      %v4644 = vrot.slane %v4624, %v4643
      %4645 = vset.pattern.permute.xlu0 0
      %4646 = vperm.xlu0 %4645, %v4632
      %v4647 = vpop.permute.xlu0 %4646
      %4649 = vset.pattern.permute.xlu0 0
      %4650 = vperm.xlu0 %4649, %v4636
      %v4651 = vpop.permute.xlu0 %4650
      %4653 = vset.pattern.permute.xlu0 0
      %4654 = vperm.xlu0 %4653, %v4640
      %v4655 = vpop.permute.xlu0 %4654
      %4657 = vset.pattern.permute.xlu0 0
      %4658 = vperm.xlu0 %4657, %v4644
      %v4659 = vpop.permute.xlu0 %4658
      %v4661 = vadd.f32 %v4617, %v4647
      %v4662 = vadd.f32 %v4618, %v4651
      %v4663 = vadd.f32 %v4619, %v4655
      %v4664 = vadd.f32 %v4620, %v4659
      %v4665 = vmax.f32 %v4661, 0.0
      %v4666 = vmax.f32 %v4662, 0.0
      %v4667 = vmax.f32 %v4663, 0.0
      %v4668 = vmax.f32 %v4664, 0.0
      %v4669 = vld [vmem:[%s9] sm:$0x1]
      %v4670 = vld [vmem:[%s9 + $0x1] sm:$0x1]
      %v4671 = vld [vmem:[%s9 + $0x2] sm:$0x1]
      %v4672 = vld [vmem:[%s9 + $0x3] sm:$0x1]
      %v4673 = vld [vmem:[%s9 + $0x4] sm:$0x1]
      %v4674 = vld [vmem:[%s9 + $0x5] sm:$0x1]
      %v4675 = vld [vmem:[%s9 + $0x6] sm:$0x1]
      %v4676 = vld [vmem:[%s9 + $0x7] sm:$0x1]
      %v4677 = vld [vmem:[%s9 + $0x8] sm:$0x1]
      %v4678 = vld [vmem:[%s9 + $0x9] sm:$0x1]
      %v4679 = vld [vmem:[%s9 + $0xa] sm:$0x1]
      %v4680 = vld [vmem:[%s9 + $0xb] sm:$0x1]
      %v4681 = vld [vmem:[%s9 + $0xc] sm:$0x1]
      %v4682 = vld [vmem:[%s9 + $0xd] sm:$0x1]
      %v4683 = vld [vmem:[%s9 + $0xe] sm:$0x1]
      %v4684 = vld [vmem:[%s9 + $0xf] sm:$0x1]
      %v4701 = vlaneseq
      %v4702 = vshrl.u32 %v4701, 7
      %v4703 = vsub.s32 0, %v4702
      %v4704 = vrot.slane %v4669, %v4703
      %v4705 = vlaneseq
      %v4706 = vshrl.u32 %v4705, 7
      %v4707 = vsub.s32 0, %v4706
      %v4708 = vrot.slane %v4670, %v4707
      %v4709 = vlaneseq
      %v4710 = vshrl.u32 %v4709, 7
      %v4711 = vsub.s32 0, %v4710
      %v4712 = vrot.slane %v4671, %v4711
      %v4713 = vlaneseq
      %v4714 = vshrl.u32 %v4713, 7
      %v4715 = vsub.s32 0, %v4714
      %v4716 = vrot.slane %v4672, %v4715
      %v4717 = vlaneseq
      %v4718 = vshrl.u32 %v4717, 7
      %v4719 = vsub.s32 0, %v4718
      %v4720 = vrot.slane %v4673, %v4719
      %v4721 = vlaneseq
      %v4722 = vshrl.u32 %v4721, 7
      %v4723 = vsub.s32 0, %v4722
      %v4724 = vrot.slane %v4674, %v4723
      %v4725 = vlaneseq
      %v4726 = vshrl.u32 %v4725, 7
      %v4727 = vsub.s32 0, %v4726
      %v4728 = vrot.slane %v4675, %v4727
      %v4729 = vlaneseq
      %v4730 = vshrl.u32 %v4729, 7
      %v4731 = vsub.s32 0, %v4730
      %v4732 = vrot.slane %v4676, %v4731
      %v4733 = vlaneseq
      %v4734 = vshrl.u32 %v4733, 7
      %v4735 = vsub.s32 0, %v4734
      %v4736 = vrot.slane %v4677, %v4735
      %v4737 = vlaneseq
      %v4738 = vshrl.u32 %v4737, 7
      %v4739 = vsub.s32 0, %v4738
      %v4740 = vrot.slane %v4678, %v4739
      %v4741 = vlaneseq
      %v4742 = vshrl.u32 %v4741, 7
      %v4743 = vsub.s32 0, %v4742
      %v4744 = vrot.slane %v4679, %v4743
      %v4745 = vlaneseq
      %v4746 = vshrl.u32 %v4745, 7
      %v4747 = vsub.s32 0, %v4746
      %v4748 = vrot.slane %v4680, %v4747
      %v4749 = vlaneseq
      %v4750 = vshrl.u32 %v4749, 7
      %v4751 = vsub.s32 0, %v4750
      %v4752 = vrot.slane %v4681, %v4751
      %v4753 = vlaneseq
      %v4754 = vshrl.u32 %v4753, 7
      %v4755 = vsub.s32 0, %v4754
      %v4756 = vrot.slane %v4682, %v4755
      %v4757 = vlaneseq
      %v4758 = vshrl.u32 %v4757, 7
      %v4759 = vsub.s32 0, %v4758
      %v4760 = vrot.slane %v4683, %v4759
      %v4761 = vlaneseq
      %v4762 = vshrl.u32 %v4761, 7
      %v4763 = vsub.s32 0, %v4762
      %v4764 = vrot.slane %v4684, %v4763
      %4765 = vset.pattern.permute.xlu0 0
      %4766 = vperm.xlu0 %4765, %v4704
      %v4767 = vpop.permute.xlu0 %4766
      %4769 = vset.pattern.permute.xlu0 0
      %4770 = vperm.xlu0 %4769, %v4708
      %v4771 = vpop.permute.xlu0 %4770
      %4773 = vset.pattern.permute.xlu0 0
      %4774 = vperm.xlu0 %4773, %v4712
      %v4775 = vpop.permute.xlu0 %4774
      %4777 = vset.pattern.permute.xlu0 0
      %4778 = vperm.xlu0 %4777, %v4716
      %v4779 = vpop.permute.xlu0 %4778
      %4781 = vset.pattern.permute.xlu0 0
      %4782 = vperm.xlu0 %4781, %v4720
      %v4783 = vpop.permute.xlu0 %4782
      %4785 = vset.pattern.permute.xlu0 0
      %4786 = vperm.xlu0 %4785, %v4724
      %v4787 = vpop.permute.xlu0 %4786
      %4789 = vset.pattern.permute.xlu0 0
      %4790 = vperm.xlu0 %4789, %v4728
      %v4791 = vpop.permute.xlu0 %4790
      %4793 = vset.pattern.permute.xlu0 0
      %4794 = vperm.xlu0 %4793, %v4732
      %v4795 = vpop.permute.xlu0 %4794
      %4797 = vset.pattern.permute.xlu0 0
      %4798 = vperm.xlu0 %4797, %v4736
      %v4799 = vpop.permute.xlu0 %4798
      %4801 = vset.pattern.permute.xlu0 0
      %4802 = vperm.xlu0 %4801, %v4740
      %v4803 = vpop.permute.xlu0 %4802
      %4805 = vset.pattern.permute.xlu0 0
      %4806 = vperm.xlu0 %4805, %v4744
      %v4807 = vpop.permute.xlu0 %4806
      %4809 = vset.pattern.permute.xlu0 0
      %4810 = vperm.xlu0 %4809, %v4748
      %v4811 = vpop.permute.xlu0 %4810
      %4813 = vset.pattern.permute.xlu0 0
      %4814 = vperm.xlu0 %4813, %v4752
      %v4815 = vpop.permute.xlu0 %4814
      %4817 = vset.pattern.permute.xlu0 0
      %4818 = vperm.xlu0 %4817, %v4756
      %v4819 = vpop.permute.xlu0 %4818
      %4821 = vset.pattern.permute.xlu0 0
      %4822 = vperm.xlu0 %4821, %v4760
      %v4823 = vpop.permute.xlu0 %4822
      %4825 = vset.pattern.permute.xlu0 0
      %4826 = vperm.xlu0 %4825, %v4764
      %v4827 = vpop.permute.xlu0 %4826
      %v4829 = vmul.f32 %v4767, %v4665
      %v4830 = vmul.f32 %v4771, %v4665
      %v4831 = vmul.f32 %v4775, %v4665
      %v4832 = vmul.f32 %v4779, %v4665
      %v4833 = vmul.f32 %v4783, %v4665
      %v4834 = vmul.f32 %v4787, %v4665
      %v4835 = vmul.f32 %v4791, %v4665
      %v4836 = vmul.f32 %v4795, %v4665
      %v4837 = vmul.f32 %v4799, %v4665
      %v4838 = vmul.f32 %v4803, %v4665
      %v4839 = vmul.f32 %v4807, %v4665
      %v4840 = vmul.f32 %v4811, %v4665
      %v4841 = vmul.f32 %v4815, %v4665
      %v4842 = vmul.f32 %v4819, %v4665
      %v4843 = vmul.f32 %v4823, %v4665
      %v4844 = vmul.f32 %v4827, %v4665
      %s4845 = scalar_lea.vmem %s9, 16
      %v4846 = vld [vmem:[%s4845] sm:$0x1]
      %v4847 = vld [vmem:[%s4845 + $0x1] sm:$0x1]
      %v4848 = vld [vmem:[%s4845 + $0x2] sm:$0x1]
      %v4849 = vld [vmem:[%s4845 + $0x3] sm:$0x1]
      %v4850 = vld [vmem:[%s4845 + $0x4] sm:$0x1]
      %v4851 = vld [vmem:[%s4845 + $0x5] sm:$0x1]
      %v4852 = vld [vmem:[%s4845 + $0x6] sm:$0x1]
      %v4853 = vld [vmem:[%s4845 + $0x7] sm:$0x1]
      %v4854 = vld [vmem:[%s4845 + $0x8] sm:$0x1]
      %v4855 = vld [vmem:[%s4845 + $0x9] sm:$0x1]
      %v4856 = vld [vmem:[%s4845 + $0xa] sm:$0x1]
      %v4857 = vld [vmem:[%s4845 + $0xb] sm:$0x1]
      %v4858 = vld [vmem:[%s4845 + $0xc] sm:$0x1]
      %v4859 = vld [vmem:[%s4845 + $0xd] sm:$0x1]
      %v4860 = vld [vmem:[%s4845 + $0xe] sm:$0x1]
      %v4861 = vld [vmem:[%s4845 + $0xf] sm:$0x1]
      %v4878 = vlaneseq
      %v4879 = vshrl.u32 %v4878, 7
      %v4880 = vsub.s32 0, %v4879
      %v4881 = vrot.slane %v4846, %v4880
      %v4882 = vlaneseq
      %v4883 = vshrl.u32 %v4882, 7
      %v4884 = vsub.s32 0, %v4883
      %v4885 = vrot.slane %v4847, %v4884
      %v4886 = vlaneseq
      %v4887 = vshrl.u32 %v4886, 7
      %v4888 = vsub.s32 0, %v4887
      %v4889 = vrot.slane %v4848, %v4888
      %v4890 = vlaneseq
      %v4891 = vshrl.u32 %v4890, 7
      %v4892 = vsub.s32 0, %v4891
      %v4893 = vrot.slane %v4849, %v4892
      %v4894 = vlaneseq
      %v4895 = vshrl.u32 %v4894, 7
      %v4896 = vsub.s32 0, %v4895
      %v4897 = vrot.slane %v4850, %v4896
      %v4898 = vlaneseq
      %v4899 = vshrl.u32 %v4898, 7
      %v4900 = vsub.s32 0, %v4899
      %v4901 = vrot.slane %v4851, %v4900
      %v4902 = vlaneseq
      %v4903 = vshrl.u32 %v4902, 7
      %v4904 = vsub.s32 0, %v4903
      %v4905 = vrot.slane %v4852, %v4904
      %v4906 = vlaneseq
      %v4907 = vshrl.u32 %v4906, 7
      %v4908 = vsub.s32 0, %v4907
      %v4909 = vrot.slane %v4853, %v4908
      %v4910 = vlaneseq
      %v4911 = vshrl.u32 %v4910, 7
      %v4912 = vsub.s32 0, %v4911
      %v4913 = vrot.slane %v4854, %v4912
      %v4914 = vlaneseq
      %v4915 = vshrl.u32 %v4914, 7
      %v4916 = vsub.s32 0, %v4915
      %v4917 = vrot.slane %v4855, %v4916
      %v4918 = vlaneseq
      %v4919 = vshrl.u32 %v4918, 7
      %v4920 = vsub.s32 0, %v4919
      %v4921 = vrot.slane %v4856, %v4920
      %v4922 = vlaneseq
      %v4923 = vshrl.u32 %v4922, 7
      %v4924 = vsub.s32 0, %v4923
      %v4925 = vrot.slane %v4857, %v4924
      %v4926 = vlaneseq
      %v4927 = vshrl.u32 %v4926, 7
      %v4928 = vsub.s32 0, %v4927
      %v4929 = vrot.slane %v4858, %v4928
      %v4930 = vlaneseq
      %v4931 = vshrl.u32 %v4930, 7
      %v4932 = vsub.s32 0, %v4931
      %v4933 = vrot.slane %v4859, %v4932
      %v4934 = vlaneseq
      %v4935 = vshrl.u32 %v4934, 7
      %v4936 = vsub.s32 0, %v4935
      %v4937 = vrot.slane %v4860, %v4936
      %v4938 = vlaneseq
      %v4939 = vshrl.u32 %v4938, 7
      %v4940 = vsub.s32 0, %v4939
      %v4941 = vrot.slane %v4861, %v4940
      %4942 = vset.pattern.permute.xlu0 0
      %4943 = vperm.xlu0 %4942, %v4881
      %v4944 = vpop.permute.xlu0 %4943
      %4946 = vset.pattern.permute.xlu0 0
      %4947 = vperm.xlu0 %4946, %v4885
      %v4948 = vpop.permute.xlu0 %4947
      %4950 = vset.pattern.permute.xlu0 0
      %4951 = vperm.xlu0 %4950, %v4889
      %v4952 = vpop.permute.xlu0 %4951
      %4954 = vset.pattern.permute.xlu0 0
      %4955 = vperm.xlu0 %4954, %v4893
      %v4956 = vpop.permute.xlu0 %4955
      %4958 = vset.pattern.permute.xlu0 0
      %4959 = vperm.xlu0 %4958, %v4897
      %v4960 = vpop.permute.xlu0 %4959
      %4962 = vset.pattern.permute.xlu0 0
      %4963 = vperm.xlu0 %4962, %v4901
      %v4964 = vpop.permute.xlu0 %4963
      %4966 = vset.pattern.permute.xlu0 0
      %4967 = vperm.xlu0 %4966, %v4905
      %v4968 = vpop.permute.xlu0 %4967
      %4970 = vset.pattern.permute.xlu0 0
      %4971 = vperm.xlu0 %4970, %v4909
      %v4972 = vpop.permute.xlu0 %4971
      %4974 = vset.pattern.permute.xlu0 0
      %4975 = vperm.xlu0 %4974, %v4913
      %v4976 = vpop.permute.xlu0 %4975
      %4978 = vset.pattern.permute.xlu0 0
      %4979 = vperm.xlu0 %4978, %v4917
      %v4980 = vpop.permute.xlu0 %4979
      %4982 = vset.pattern.permute.xlu0 0
      %4983 = vperm.xlu0 %4982, %v4921
      %v4984 = vpop.permute.xlu0 %4983
      %4986 = vset.pattern.permute.xlu0 0
      %4987 = vperm.xlu0 %4986, %v4925
      %v4988 = vpop.permute.xlu0 %4987
      %4990 = vset.pattern.permute.xlu0 0
      %4991 = vperm.xlu0 %4990, %v4929
      %v4992 = vpop.permute.xlu0 %4991
      %4994 = vset.pattern.permute.xlu0 0
      %4995 = vperm.xlu0 %4994, %v4933
      %v4996 = vpop.permute.xlu0 %4995
      %4998 = vset.pattern.permute.xlu0 0
      %4999 = vperm.xlu0 %4998, %v4937
      %v5000 = vpop.permute.xlu0 %4999
      %5002 = vset.pattern.permute.xlu0 0
      %5003 = vperm.xlu0 %5002, %v4941
      %v5004 = vpop.permute.xlu0 %5003
      %v5006 = vmul.f32 %v4944, %v4666
      %v5007 = vmul.f32 %v4948, %v4666
      %v5008 = vmul.f32 %v4952, %v4666
      %v5009 = vmul.f32 %v4956, %v4666
      %v5010 = vmul.f32 %v4960, %v4666
      %v5011 = vmul.f32 %v4964, %v4666
      %v5012 = vmul.f32 %v4968, %v4666
      %v5013 = vmul.f32 %v4972, %v4666
      %v5014 = vmul.f32 %v4976, %v4666
      %v5015 = vmul.f32 %v4980, %v4666
      %v5016 = vmul.f32 %v4984, %v4666
      %v5017 = vmul.f32 %v4988, %v4666
      %v5018 = vmul.f32 %v4992, %v4666
      %v5019 = vmul.f32 %v4996, %v4666
      %v5020 = vmul.f32 %v5000, %v4666
      %v5021 = vmul.f32 %v5004, %v4666
      %v5022 = vadd.f32 %v4829, %v5006
      %v5023 = vadd.f32 %v4830, %v5007
      %v5024 = vadd.f32 %v4831, %v5008
      %v5025 = vadd.f32 %v4832, %v5009
      %v5026 = vadd.f32 %v4833, %v5010
      %v5027 = vadd.f32 %v4834, %v5011
      %v5028 = vadd.f32 %v4835, %v5012
      %v5029 = vadd.f32 %v4836, %v5013
      %v5030 = vadd.f32 %v4837, %v5014
      %v5031 = vadd.f32 %v4838, %v5015
      %v5032 = vadd.f32 %v4839, %v5016
      %v5033 = vadd.f32 %v4840, %v5017
      %v5034 = vadd.f32 %v4841, %v5018
      %v5035 = vadd.f32 %v4842, %v5019
      %v5036 = vadd.f32 %v4843, %v5020
      %v5037 = vadd.f32 %v4844, %v5021
      %s5038 = scalar_lea.vmem %s9, 32
      %v5039 = vld [vmem:[%s5038] sm:$0x1]
      %v5040 = vld [vmem:[%s5038 + $0x1] sm:$0x1]
      %v5041 = vld [vmem:[%s5038 + $0x2] sm:$0x1]
      %v5042 = vld [vmem:[%s5038 + $0x3] sm:$0x1]
      %v5043 = vld [vmem:[%s5038 + $0x4] sm:$0x1]
      %v5044 = vld [vmem:[%s5038 + $0x5] sm:$0x1]
      %v5045 = vld [vmem:[%s5038 + $0x6] sm:$0x1]
      %v5046 = vld [vmem:[%s5038 + $0x7] sm:$0x1]
      %v5047 = vld [vmem:[%s5038 + $0x8] sm:$0x1]
      %v5048 = vld [vmem:[%s5038 + $0x9] sm:$0x1]
      %v5049 = vld [vmem:[%s5038 + $0xa] sm:$0x1]
      %v5050 = vld [vmem:[%s5038 + $0xb] sm:$0x1]
      %v5051 = vld [vmem:[%s5038 + $0xc] sm:$0x1]
      %v5052 = vld [vmem:[%s5038 + $0xd] sm:$0x1]
      %v5053 = vld [vmem:[%s5038 + $0xe] sm:$0x1]
      %v5054 = vld [vmem:[%s5038 + $0xf] sm:$0x1]
      %v5071 = vlaneseq
      %v5072 = vshrl.u32 %v5071, 7
      %v5073 = vsub.s32 0, %v5072
      %v5074 = vrot.slane %v5039, %v5073
      %v5075 = vlaneseq
      %v5076 = vshrl.u32 %v5075, 7
      %v5077 = vsub.s32 0, %v5076
      %v5078 = vrot.slane %v5040, %v5077
      %v5079 = vlaneseq
      %v5080 = vshrl.u32 %v5079, 7
      %v5081 = vsub.s32 0, %v5080
      %v5082 = vrot.slane %v5041, %v5081
      %v5083 = vlaneseq
      %v5084 = vshrl.u32 %v5083, 7
      %v5085 = vsub.s32 0, %v5084
      %v5086 = vrot.slane %v5042, %v5085
      %v5087 = vlaneseq
      %v5088 = vshrl.u32 %v5087, 7
      %v5089 = vsub.s32 0, %v5088
      %v5090 = vrot.slane %v5043, %v5089
      %v5091 = vlaneseq
      %v5092 = vshrl.u32 %v5091, 7
      %v5093 = vsub.s32 0, %v5092
      %v5094 = vrot.slane %v5044, %v5093
      %v5095 = vlaneseq
      %v5096 = vshrl.u32 %v5095, 7
      %v5097 = vsub.s32 0, %v5096
      %v5098 = vrot.slane %v5045, %v5097
      %v5099 = vlaneseq
      %v5100 = vshrl.u32 %v5099, 7
      %v5101 = vsub.s32 0, %v5100
      %v5102 = vrot.slane %v5046, %v5101
      %v5103 = vlaneseq
      %v5104 = vshrl.u32 %v5103, 7
      %v5105 = vsub.s32 0, %v5104
      %v5106 = vrot.slane %v5047, %v5105
      %v5107 = vlaneseq
      %v5108 = vshrl.u32 %v5107, 7
      %v5109 = vsub.s32 0, %v5108
      %v5110 = vrot.slane %v5048, %v5109
      %v5111 = vlaneseq
      %v5112 = vshrl.u32 %v5111, 7
      %v5113 = vsub.s32 0, %v5112
      %v5114 = vrot.slane %v5049, %v5113
      %v5115 = vlaneseq
      %v5116 = vshrl.u32 %v5115, 7
      %v5117 = vsub.s32 0, %v5116
      %v5118 = vrot.slane %v5050, %v5117
      %v5119 = vlaneseq
      %v5120 = vshrl.u32 %v5119, 7
      %v5121 = vsub.s32 0, %v5120
      %v5122 = vrot.slane %v5051, %v5121
      %v5123 = vlaneseq
      %v5124 = vshrl.u32 %v5123, 7
      %v5125 = vsub.s32 0, %v5124
      %v5126 = vrot.slane %v5052, %v5125
      %v5127 = vlaneseq
      %v5128 = vshrl.u32 %v5127, 7
      %v5129 = vsub.s32 0, %v5128
      %v5130 = vrot.slane %v5053, %v5129
      %v5131 = vlaneseq
      %v5132 = vshrl.u32 %v5131, 7
      %v5133 = vsub.s32 0, %v5132
      %v5134 = vrot.slane %v5054, %v5133
      %5135 = vset.pattern.permute.xlu0 0
      %5136 = vperm.xlu0 %5135, %v5074
      %v5137 = vpop.permute.xlu0 %5136
      %5139 = vset.pattern.permute.xlu0 0
      %5140 = vperm.xlu0 %5139, %v5078
      %v5141 = vpop.permute.xlu0 %5140
      %5143 = vset.pattern.permute.xlu0 0
      %5144 = vperm.xlu0 %5143, %v5082
      %v5145 = vpop.permute.xlu0 %5144
      %5147 = vset.pattern.permute.xlu0 0
      %5148 = vperm.xlu0 %5147, %v5086
      %v5149 = vpop.permute.xlu0 %5148
      %5151 = vset.pattern.permute.xlu0 0
      %5152 = vperm.xlu0 %5151, %v5090
      %v5153 = vpop.permute.xlu0 %5152
      %5155 = vset.pattern.permute.xlu0 0
      %5156 = vperm.xlu0 %5155, %v5094
      %v5157 = vpop.permute.xlu0 %5156
      %5159 = vset.pattern.permute.xlu0 0
      %5160 = vperm.xlu0 %5159, %v5098
      %v5161 = vpop.permute.xlu0 %5160
      %5163 = vset.pattern.permute.xlu0 0
      %5164 = vperm.xlu0 %5163, %v5102
      %v5165 = vpop.permute.xlu0 %5164
      %5167 = vset.pattern.permute.xlu0 0
      %5168 = vperm.xlu0 %5167, %v5106
      %v5169 = vpop.permute.xlu0 %5168
      %5171 = vset.pattern.permute.xlu0 0
      %5172 = vperm.xlu0 %5171, %v5110
      %v5173 = vpop.permute.xlu0 %5172
      %5175 = vset.pattern.permute.xlu0 0
      %5176 = vperm.xlu0 %5175, %v5114
      %v5177 = vpop.permute.xlu0 %5176
      %5179 = vset.pattern.permute.xlu0 0
      %5180 = vperm.xlu0 %5179, %v5118
      %v5181 = vpop.permute.xlu0 %5180
      %5183 = vset.pattern.permute.xlu0 0
      %5184 = vperm.xlu0 %5183, %v5122
      %v5185 = vpop.permute.xlu0 %5184
      %5187 = vset.pattern.permute.xlu0 0
      %5188 = vperm.xlu0 %5187, %v5126
      %v5189 = vpop.permute.xlu0 %5188
      %5191 = vset.pattern.permute.xlu0 0
      %5192 = vperm.xlu0 %5191, %v5130
      %v5193 = vpop.permute.xlu0 %5192
      %5195 = vset.pattern.permute.xlu0 0
      %5196 = vperm.xlu0 %5195, %v5134
      %v5197 = vpop.permute.xlu0 %5196
      %v5199 = vmul.f32 %v5137, %v4667
      %v5200 = vmul.f32 %v5141, %v4667
      %v5201 = vmul.f32 %v5145, %v4667
      %v5202 = vmul.f32 %v5149, %v4667
      %v5203 = vmul.f32 %v5153, %v4667
      %v5204 = vmul.f32 %v5157, %v4667
      %v5205 = vmul.f32 %v5161, %v4667
      %v5206 = vmul.f32 %v5165, %v4667
      %v5207 = vmul.f32 %v5169, %v4667
      %v5208 = vmul.f32 %v5173, %v4667
      %v5209 = vmul.f32 %v5177, %v4667
      %v5210 = vmul.f32 %v5181, %v4667
      %v5211 = vmul.f32 %v5185, %v4667
      %v5212 = vmul.f32 %v5189, %v4667
      %v5213 = vmul.f32 %v5193, %v4667
      %v5214 = vmul.f32 %v5197, %v4667
      %v5215 = vadd.f32 %v5022, %v5199
      %v5216 = vadd.f32 %v5023, %v5200
      %v5217 = vadd.f32 %v5024, %v5201
      %v5218 = vadd.f32 %v5025, %v5202
      %v5219 = vadd.f32 %v5026, %v5203
      %v5220 = vadd.f32 %v5027, %v5204
      %v5221 = vadd.f32 %v5028, %v5205
      %v5222 = vadd.f32 %v5029, %v5206
      %v5223 = vadd.f32 %v5030, %v5207
      %v5224 = vadd.f32 %v5031, %v5208
      %v5225 = vadd.f32 %v5032, %v5209
      %v5226 = vadd.f32 %v5033, %v5210
      %v5227 = vadd.f32 %v5034, %v5211
      %v5228 = vadd.f32 %v5035, %v5212
      %v5229 = vadd.f32 %v5036, %v5213
      %v5230 = vadd.f32 %v5037, %v5214
      %s5231 = scalar_lea.vmem %s9, 48
      %v5232 = vld [vmem:[%s5231] sm:$0x1]
      %v5233 = vld [vmem:[%s5231 + $0x1] sm:$0x1]
      %v5234 = vld [vmem:[%s5231 + $0x2] sm:$0x1]
      %v5235 = vld [vmem:[%s5231 + $0x3] sm:$0x1]
      %v5236 = vld [vmem:[%s5231 + $0x4] sm:$0x1]
      %v5237 = vld [vmem:[%s5231 + $0x5] sm:$0x1]
      %v5238 = vld [vmem:[%s5231 + $0x6] sm:$0x1]
      %v5239 = vld [vmem:[%s5231 + $0x7] sm:$0x1]
      %v5240 = vld [vmem:[%s5231 + $0x8] sm:$0x1]
      %v5241 = vld [vmem:[%s5231 + $0x9] sm:$0x1]
      %v5242 = vld [vmem:[%s5231 + $0xa] sm:$0x1]
      %v5243 = vld [vmem:[%s5231 + $0xb] sm:$0x1]
      %v5244 = vld [vmem:[%s5231 + $0xc] sm:$0x1]
      %v5245 = vld [vmem:[%s5231 + $0xd] sm:$0x1]
      %v5246 = vld [vmem:[%s5231 + $0xe] sm:$0x1]
      %v5247 = vld [vmem:[%s5231 + $0xf] sm:$0x1]
      %v5264 = vlaneseq
      %v5265 = vshrl.u32 %v5264, 7
      %v5266 = vsub.s32 0, %v5265
      %v5267 = vrot.slane %v5232, %v5266
      %v5268 = vlaneseq
      %v5269 = vshrl.u32 %v5268, 7
      %v5270 = vsub.s32 0, %v5269
      %v5271 = vrot.slane %v5233, %v5270
      %v5272 = vlaneseq
      %v5273 = vshrl.u32 %v5272, 7
      %v5274 = vsub.s32 0, %v5273
      %v5275 = vrot.slane %v5234, %v5274
      %v5276 = vlaneseq
      %v5277 = vshrl.u32 %v5276, 7
      %v5278 = vsub.s32 0, %v5277
      %v5279 = vrot.slane %v5235, %v5278
      %v5280 = vlaneseq
      %v5281 = vshrl.u32 %v5280, 7
      %v5282 = vsub.s32 0, %v5281
      %v5283 = vrot.slane %v5236, %v5282
      %v5284 = vlaneseq
      %v5285 = vshrl.u32 %v5284, 7
      %v5286 = vsub.s32 0, %v5285
      %v5287 = vrot.slane %v5237, %v5286
      %v5288 = vlaneseq
      %v5289 = vshrl.u32 %v5288, 7
      %v5290 = vsub.s32 0, %v5289
      %v5291 = vrot.slane %v5238, %v5290
      %v5292 = vlaneseq
      %v5293 = vshrl.u32 %v5292, 7
      %v5294 = vsub.s32 0, %v5293
      %v5295 = vrot.slane %v5239, %v5294
      %v5296 = vlaneseq
      %v5297 = vshrl.u32 %v5296, 7
      %v5298 = vsub.s32 0, %v5297
      %v5299 = vrot.slane %v5240, %v5298
      %v5300 = vlaneseq
      %v5301 = vshrl.u32 %v5300, 7
      %v5302 = vsub.s32 0, %v5301
      %v5303 = vrot.slane %v5241, %v5302
      %v5304 = vlaneseq
      %v5305 = vshrl.u32 %v5304, 7
      %v5306 = vsub.s32 0, %v5305
      %v5307 = vrot.slane %v5242, %v5306
      %v5308 = vlaneseq
      %v5309 = vshrl.u32 %v5308, 7
      %v5310 = vsub.s32 0, %v5309
      %v5311 = vrot.slane %v5243, %v5310
      %v5312 = vlaneseq
      %v5313 = vshrl.u32 %v5312, 7
      %v5314 = vsub.s32 0, %v5313
      %v5315 = vrot.slane %v5244, %v5314
      %v5316 = vlaneseq
      %v5317 = vshrl.u32 %v5316, 7
      %v5318 = vsub.s32 0, %v5317
      %v5319 = vrot.slane %v5245, %v5318
      %v5320 = vlaneseq
      %v5321 = vshrl.u32 %v5320, 7
      %v5322 = vsub.s32 0, %v5321
      %v5323 = vrot.slane %v5246, %v5322
      %v5324 = vlaneseq
      %v5325 = vshrl.u32 %v5324, 7
      %v5326 = vsub.s32 0, %v5325
      %v5327 = vrot.slane %v5247, %v5326
      %5328 = vset.pattern.permute.xlu0 0
      %5329 = vperm.xlu0 %5328, %v5267
      %v5330 = vpop.permute.xlu0 %5329
      %5332 = vset.pattern.permute.xlu0 0
      %5333 = vperm.xlu0 %5332, %v5271
      %v5334 = vpop.permute.xlu0 %5333
      %5336 = vset.pattern.permute.xlu0 0
      %5337 = vperm.xlu0 %5336, %v5275
      %v5338 = vpop.permute.xlu0 %5337
      %5340 = vset.pattern.permute.xlu0 0
      %5341 = vperm.xlu0 %5340, %v5279
      %v5342 = vpop.permute.xlu0 %5341
      %5344 = vset.pattern.permute.xlu0 0
      %5345 = vperm.xlu0 %5344, %v5283
      %v5346 = vpop.permute.xlu0 %5345
      %5348 = vset.pattern.permute.xlu0 0
      %5349 = vperm.xlu0 %5348, %v5287
      %v5350 = vpop.permute.xlu0 %5349
      %5352 = vset.pattern.permute.xlu0 0
      %5353 = vperm.xlu0 %5352, %v5291
      %v5354 = vpop.permute.xlu0 %5353
      %5356 = vset.pattern.permute.xlu0 0
      %5357 = vperm.xlu0 %5356, %v5295
      %v5358 = vpop.permute.xlu0 %5357
      %5360 = vset.pattern.permute.xlu0 0
      %5361 = vperm.xlu0 %5360, %v5299
      %v5362 = vpop.permute.xlu0 %5361
      %5364 = vset.pattern.permute.xlu0 0
      %5365 = vperm.xlu0 %5364, %v5303
      %v5366 = vpop.permute.xlu0 %5365
      %5368 = vset.pattern.permute.xlu0 0
      %5369 = vperm.xlu0 %5368, %v5307
      %v5370 = vpop.permute.xlu0 %5369
      %5372 = vset.pattern.permute.xlu0 0
      %5373 = vperm.xlu0 %5372, %v5311
      %v5374 = vpop.permute.xlu0 %5373
      %5376 = vset.pattern.permute.xlu0 0
      %5377 = vperm.xlu0 %5376, %v5315
      %v5378 = vpop.permute.xlu0 %5377
      %5380 = vset.pattern.permute.xlu0 0
      %5381 = vperm.xlu0 %5380, %v5319
      %v5382 = vpop.permute.xlu0 %5381
      %5384 = vset.pattern.permute.xlu0 0
      %5385 = vperm.xlu0 %5384, %v5323
      %v5386 = vpop.permute.xlu0 %5385
      %5388 = vset.pattern.permute.xlu0 0
      %5389 = vperm.xlu0 %5388, %v5327
      %v5390 = vpop.permute.xlu0 %5389
      %v5392 = vmul.f32 %v5330, %v4668
      %v5393 = vmul.f32 %v5334, %v4668
      %v5394 = vmul.f32 %v5338, %v4668
      %v5395 = vmul.f32 %v5342, %v4668
      %v5396 = vmul.f32 %v5346, %v4668
      %v5397 = vmul.f32 %v5350, %v4668
      %v5398 = vmul.f32 %v5354, %v4668
      %v5399 = vmul.f32 %v5358, %v4668
      %v5400 = vmul.f32 %v5362, %v4668
      %v5401 = vmul.f32 %v5366, %v4668
      %v5402 = vmul.f32 %v5370, %v4668
      %v5403 = vmul.f32 %v5374, %v4668
      %v5404 = vmul.f32 %v5378, %v4668
      %v5405 = vmul.f32 %v5382, %v4668
      %v5406 = vmul.f32 %v5386, %v4668
      %v5407 = vmul.f32 %v5390, %v4668
      %v5408 = vadd.f32 %v5215, %v5392
      %v5409 = vadd.f32 %v5216, %v5393
      %v5410 = vadd.f32 %v5217, %v5394
      %v5411 = vadd.f32 %v5218, %v5395
      %v5412 = vadd.f32 %v5219, %v5396
      %v5413 = vadd.f32 %v5220, %v5397
      %v5414 = vadd.f32 %v5221, %v5398
      %v5415 = vadd.f32 %v5222, %v5399
      %v5416 = vadd.f32 %v5223, %v5400
      %v5417 = vadd.f32 %v5224, %v5401
      %v5418 = vadd.f32 %v5225, %v5402
      %v5419 = vadd.f32 %v5226, %v5403
      %v5420 = vadd.f32 %v5227, %v5404
      %v5421 = vadd.f32 %v5228, %v5405
      %v5422 = vadd.f32 %v5229, %v5406
      %v5423 = vadd.f32 %v5230, %v5407
      %v5424 = vld [vmem:[%s10] sm:$0x1]
      %v5425 = vld [vmem:[%s10 + $0x1] sm:$0x1]
      %v5426 = vld [vmem:[%s10 + $0x2] sm:$0x1]
      %v5427 = vld [vmem:[%s10 + $0x3] sm:$0x1]
      %v5428 = vld [vmem:[%s10 + $0x4] sm:$0x1]
      %v5429 = vld [vmem:[%s10 + $0x5] sm:$0x1]
      %v5430 = vld [vmem:[%s10 + $0x6] sm:$0x1]
      %v5431 = vld [vmem:[%s10 + $0x7] sm:$0x1]
      %v5440 = vlaneseq
      %v5441 = vshrl.u32 %v5440, 7
      %v5442 = vsub.s32 0, %v5441
      %v5443 = vrot.slane %v5424, %v5442
      %v5444 = vlaneseq
      %v5445 = vshrl.u32 %v5444, 7
      %v5446 = vsub.s32 0, %v5445
      %v5447 = vrot.slane %v5425, %v5446
      %v5448 = vlaneseq
      %v5449 = vshrl.u32 %v5448, 7
      %v5450 = vsub.s32 0, %v5449
      %v5451 = vrot.slane %v5426, %v5450
      %v5452 = vlaneseq
      %v5453 = vshrl.u32 %v5452, 7
      %v5454 = vsub.s32 0, %v5453
      %v5455 = vrot.slane %v5427, %v5454
      %v5456 = vlaneseq
      %v5457 = vshrl.u32 %v5456, 7
      %v5458 = vsub.s32 0, %v5457
      %v5459 = vrot.slane %v5428, %v5458
      %v5460 = vlaneseq
      %v5461 = vshrl.u32 %v5460, 7
      %v5462 = vsub.s32 0, %v5461
      %v5463 = vrot.slane %v5429, %v5462
      %v5464 = vlaneseq
      %v5465 = vshrl.u32 %v5464, 7
      %v5466 = vsub.s32 0, %v5465
      %v5467 = vrot.slane %v5430, %v5466
      %v5468 = vlaneseq
      %v5469 = vshrl.u32 %v5468, 7
      %v5470 = vsub.s32 0, %v5469
      %v5471 = vrot.slane %v5431, %v5470
      %5472 = vset.pattern.permute.xlu0 0
      %5473 = vperm.xlu0 %5472, %v5443
      %v5474 = vpop.permute.xlu0 %5473
      %5476 = vset.pattern.permute.xlu0 0
      %5477 = vperm.xlu0 %5476, %v5447
      %v5478 = vpop.permute.xlu0 %5477
      %5480 = vset.pattern.permute.xlu0 0
      %5481 = vperm.xlu0 %5480, %v5451
      %v5482 = vpop.permute.xlu0 %5481
      %5484 = vset.pattern.permute.xlu0 0
      %5485 = vperm.xlu0 %5484, %v5455
      %v5486 = vpop.permute.xlu0 %5485
      %5488 = vset.pattern.permute.xlu0 0
      %5489 = vperm.xlu0 %5488, %v5459
      %v5490 = vpop.permute.xlu0 %5489
      %5492 = vset.pattern.permute.xlu0 0
      %5493 = vperm.xlu0 %5492, %v5463
      %v5494 = vpop.permute.xlu0 %5493
      %5496 = vset.pattern.permute.xlu0 0
      %5497 = vperm.xlu0 %5496, %v5467
      %v5498 = vpop.permute.xlu0 %5497
      %5500 = vset.pattern.permute.xlu0 0
      %5501 = vperm.xlu0 %5500, %v5471
      %v5502 = vpop.permute.xlu0 %5501
      %v5504 = vmul.f32 %v479, %v5474
      %v5505 = vmul.f32 %v480, %v5474
      %v5506 = vmul.f32 %v481, %v5478
      %v5507 = vmul.f32 %v482, %v5478
      %v5508 = vmul.f32 %v483, %v5482
      %v5509 = vmul.f32 %v484, %v5482
      %v5510 = vmul.f32 %v485, %v5486
      %v5511 = vmul.f32 %v486, %v5486
      %v5512 = vmul.f32 %v487, %v5490
      %v5513 = vmul.f32 %v488, %v5490
      %v5514 = vmul.f32 %v489, %v5494
      %v5515 = vmul.f32 %v490, %v5494
      %v5516 = vmul.f32 %v491, %v5498
      %v5517 = vmul.f32 %v492, %v5498
      %v5518 = vmul.f32 %v493, %v5502
      %v5519 = vmul.f32 %v494, %v5502
      %v5520 = vld [vmem:[%s11] sm:$0x1]
      %v5521 = vld [vmem:[%s11 + $0x1] sm:$0x1]
      %v5522 = vld [vmem:[%s11 + $0x2] sm:$0x1]
      %v5523 = vld [vmem:[%s11 + $0x3] sm:$0x1]
      %v5524 = vld [vmem:[%s11 + $0x4] sm:$0x1]
      %v5525 = vld [vmem:[%s11 + $0x5] sm:$0x1]
      %v5526 = vld [vmem:[%s11 + $0x6] sm:$0x1]
      %v5527 = vld [vmem:[%s11 + $0x7] sm:$0x1]
      %v5536 = vlaneseq
      %v5537 = vshrl.u32 %v5536, 7
      %v5538 = vsub.s32 0, %v5537
      %v5539 = vrot.slane %v5520, %v5538
      %v5540 = vlaneseq
      %v5541 = vshrl.u32 %v5540, 7
      %v5542 = vsub.s32 0, %v5541
      %v5543 = vrot.slane %v5521, %v5542
      %v5544 = vlaneseq
      %v5545 = vshrl.u32 %v5544, 7
      %v5546 = vsub.s32 0, %v5545
      %v5547 = vrot.slane %v5522, %v5546
      %v5548 = vlaneseq
      %v5549 = vshrl.u32 %v5548, 7
      %v5550 = vsub.s32 0, %v5549
      %v5551 = vrot.slane %v5523, %v5550
      %v5552 = vlaneseq
      %v5553 = vshrl.u32 %v5552, 7
      %v5554 = vsub.s32 0, %v5553
      %v5555 = vrot.slane %v5524, %v5554
      %v5556 = vlaneseq
      %v5557 = vshrl.u32 %v5556, 7
      %v5558 = vsub.s32 0, %v5557
      %v5559 = vrot.slane %v5525, %v5558
      %v5560 = vlaneseq
      %v5561 = vshrl.u32 %v5560, 7
      %v5562 = vsub.s32 0, %v5561
      %v5563 = vrot.slane %v5526, %v5562
      %v5564 = vlaneseq
      %v5565 = vshrl.u32 %v5564, 7
      %v5566 = vsub.s32 0, %v5565
      %v5567 = vrot.slane %v5527, %v5566
      %5568 = vset.pattern.permute.xlu0 0
      %5569 = vperm.xlu0 %5568, %v5539
      %v5570 = vpop.permute.xlu0 %5569
      %5572 = vset.pattern.permute.xlu0 0
      %5573 = vperm.xlu0 %5572, %v5543
      %v5574 = vpop.permute.xlu0 %5573
      %5576 = vset.pattern.permute.xlu0 0
      %5577 = vperm.xlu0 %5576, %v5547
      %v5578 = vpop.permute.xlu0 %5577
      %5580 = vset.pattern.permute.xlu0 0
      %5581 = vperm.xlu0 %5580, %v5551
      %v5582 = vpop.permute.xlu0 %5581
      %5584 = vset.pattern.permute.xlu0 0
      %5585 = vperm.xlu0 %5584, %v5555
      %v5586 = vpop.permute.xlu0 %5585
      %5588 = vset.pattern.permute.xlu0 0
      %5589 = vperm.xlu0 %5588, %v5559
      %v5590 = vpop.permute.xlu0 %5589
      %5592 = vset.pattern.permute.xlu0 0
      %5593 = vperm.xlu0 %5592, %v5563
      %v5594 = vpop.permute.xlu0 %5593
      %5596 = vset.pattern.permute.xlu0 0
      %5597 = vperm.xlu0 %5596, %v5567
      %v5598 = vpop.permute.xlu0 %5597
      %v5600 = vadd.f32 %v5504, %v5570
      %v5601 = vadd.f32 %v5505, %v5570
      %v5602 = vadd.f32 %v5506, %v5574
      %v5603 = vadd.f32 %v5507, %v5574
      %v5604 = vadd.f32 %v5508, %v5578
      %v5605 = vadd.f32 %v5509, %v5578
      %v5606 = vadd.f32 %v5510, %v5582
      %v5607 = vadd.f32 %v5511, %v5582
      %v5608 = vadd.f32 %v5512, %v5586
      %v5609 = vadd.f32 %v5513, %v5586
      %v5610 = vadd.f32 %v5514, %v5590
      %v5611 = vadd.f32 %v5515, %v5590
      %v5612 = vadd.f32 %v5516, %v5594
      %v5613 = vadd.f32 %v5517, %v5594
      %v5614 = vadd.f32 %v5518, %v5598
      %v5615 = vadd.f32 %v5519, %v5598
      %v5616 = vld [vmem:[%s12] sm:$0x1]
      %v5617 = vld [vmem:[%s12 + $0x1] sm:$0x1]
      %v5618 = vld [vmem:[%s12 + $0x2] sm:$0x1]
      %v5619 = vld [vmem:[%s12 + $0x3] sm:$0x1]
      %v5620 = vld [vmem:[%s12 + $0x4] sm:$0x1]
      %v5621 = vld [vmem:[%s12 + $0x5] sm:$0x1]
      %v5622 = vld [vmem:[%s12 + $0x6] sm:$0x1]
      %v5623 = vld [vmem:[%s12 + $0x7] sm:$0x1]
      %v5624 = vld [vmem:[%s12 + $0x8] sm:$0x1]
      %v5625 = vld [vmem:[%s12 + $0x9] sm:$0x1]
      %v5626 = vld [vmem:[%s12 + $0xa] sm:$0x1]
      %v5627 = vld [vmem:[%s12 + $0xb] sm:$0x1]
      %v5628 = vld [vmem:[%s12 + $0xc] sm:$0x1]
      %v5629 = vld [vmem:[%s12 + $0xd] sm:$0x1]
      %v5630 = vld [vmem:[%s12 + $0xe] sm:$0x1]
      %v5631 = vld [vmem:[%s12 + $0xf] sm:$0x1]
      %v5648 = vlaneseq
      %v5649 = vshrl.u32 %v5648, 7
      %v5650 = vsub.s32 0, %v5649
      %v5651 = vrot.slane %v5616, %v5650
      %v5652 = vlaneseq
      %v5653 = vshrl.u32 %v5652, 7
      %v5654 = vsub.s32 0, %v5653
      %v5655 = vrot.slane %v5617, %v5654
      %v5656 = vlaneseq
      %v5657 = vshrl.u32 %v5656, 7
      %v5658 = vsub.s32 0, %v5657
      %v5659 = vrot.slane %v5618, %v5658
      %v5660 = vlaneseq
      %v5661 = vshrl.u32 %v5660, 7
      %v5662 = vsub.s32 0, %v5661
      %v5663 = vrot.slane %v5619, %v5662
      %v5664 = vlaneseq
      %v5665 = vshrl.u32 %v5664, 7
      %v5666 = vsub.s32 0, %v5665
      %v5667 = vrot.slane %v5620, %v5666
      %v5668 = vlaneseq
      %v5669 = vshrl.u32 %v5668, 7
      %v5670 = vsub.s32 0, %v5669
      %v5671 = vrot.slane %v5621, %v5670
      %v5672 = vlaneseq
      %v5673 = vshrl.u32 %v5672, 7
      %v5674 = vsub.s32 0, %v5673
      %v5675 = vrot.slane %v5622, %v5674
      %v5676 = vlaneseq
      %v5677 = vshrl.u32 %v5676, 7
      %v5678 = vsub.s32 0, %v5677
      %v5679 = vrot.slane %v5623, %v5678
      %v5680 = vlaneseq
      %v5681 = vshrl.u32 %v5680, 7
      %v5682 = vsub.s32 0, %v5681
      %v5683 = vrot.slane %v5624, %v5682
      %v5684 = vlaneseq
      %v5685 = vshrl.u32 %v5684, 7
      %v5686 = vsub.s32 0, %v5685
      %v5687 = vrot.slane %v5625, %v5686
      %v5688 = vlaneseq
      %v5689 = vshrl.u32 %v5688, 7
      %v5690 = vsub.s32 0, %v5689
      %v5691 = vrot.slane %v5626, %v5690
      %v5692 = vlaneseq
      %v5693 = vshrl.u32 %v5692, 7
      %v5694 = vsub.s32 0, %v5693
      %v5695 = vrot.slane %v5627, %v5694
      %v5696 = vlaneseq
      %v5697 = vshrl.u32 %v5696, 7
      %v5698 = vsub.s32 0, %v5697
      %v5699 = vrot.slane %v5628, %v5698
      %v5700 = vlaneseq
      %v5701 = vshrl.u32 %v5700, 7
      %v5702 = vsub.s32 0, %v5701
      %v5703 = vrot.slane %v5629, %v5702
      %v5704 = vlaneseq
      %v5705 = vshrl.u32 %v5704, 7
      %v5706 = vsub.s32 0, %v5705
      %v5707 = vrot.slane %v5630, %v5706
      %v5708 = vlaneseq
      %v5709 = vshrl.u32 %v5708, 7
      %v5710 = vsub.s32 0, %v5709
      %v5711 = vrot.slane %v5631, %v5710
      %5712 = vset.pattern.permute.xlu0 0
      %5713 = vperm.xlu0 %5712, %v5651
      %v5714 = vpop.permute.xlu0 %5713
      %5716 = vset.pattern.permute.xlu0 0
      %5717 = vperm.xlu0 %5716, %v5655
      %v5718 = vpop.permute.xlu0 %5717
      %5720 = vset.pattern.permute.xlu0 0
      %5721 = vperm.xlu0 %5720, %v5659
      %v5722 = vpop.permute.xlu0 %5721
      %5724 = vset.pattern.permute.xlu0 0
      %5725 = vperm.xlu0 %5724, %v5663
      %v5726 = vpop.permute.xlu0 %5725
      %5728 = vset.pattern.permute.xlu0 0
      %5729 = vperm.xlu0 %5728, %v5667
      %v5730 = vpop.permute.xlu0 %5729
      %5732 = vset.pattern.permute.xlu0 0
      %5733 = vperm.xlu0 %5732, %v5671
      %v5734 = vpop.permute.xlu0 %5733
      %5736 = vset.pattern.permute.xlu0 0
      %5737 = vperm.xlu0 %5736, %v5675
      %v5738 = vpop.permute.xlu0 %5737
      %5740 = vset.pattern.permute.xlu0 0
      %5741 = vperm.xlu0 %5740, %v5679
      %v5742 = vpop.permute.xlu0 %5741
      %5744 = vset.pattern.permute.xlu0 0
      %5745 = vperm.xlu0 %5744, %v5683
      %v5746 = vpop.permute.xlu0 %5745
      %5748 = vset.pattern.permute.xlu0 0
      %5749 = vperm.xlu0 %5748, %v5687
      %v5750 = vpop.permute.xlu0 %5749
      %5752 = vset.pattern.permute.xlu0 0
      %5753 = vperm.xlu0 %5752, %v5691
      %v5754 = vpop.permute.xlu0 %5753
      %5756 = vset.pattern.permute.xlu0 0
      %5757 = vperm.xlu0 %5756, %v5695
      %v5758 = vpop.permute.xlu0 %5757
      %5760 = vset.pattern.permute.xlu0 0
      %5761 = vperm.xlu0 %5760, %v5699
      %v5762 = vpop.permute.xlu0 %5761
      %5764 = vset.pattern.permute.xlu0 0
      %5765 = vperm.xlu0 %5764, %v5703
      %v5766 = vpop.permute.xlu0 %5765
      %5768 = vset.pattern.permute.xlu0 0
      %5769 = vperm.xlu0 %5768, %v5707
      %v5770 = vpop.permute.xlu0 %5769
      %5772 = vset.pattern.permute.xlu0 0
      %5773 = vperm.xlu0 %5772, %v5711
      %v5774 = vpop.permute.xlu0 %5773
      %v5776 = vmul.f32 %v5714, %v5600
      %v5777 = vmul.f32 %v5714, %v5601
      %v5778 = vmul.f32 %v5718, %v5600
      %v5779 = vmul.f32 %v5718, %v5601
      %v5780 = vmul.f32 %v5722, %v5600
      %v5781 = vmul.f32 %v5722, %v5601
      %v5782 = vmul.f32 %v5726, %v5600
      %v5783 = vmul.f32 %v5726, %v5601
      %v5784 = vmul.f32 %v5730, %v5600
      %v5785 = vmul.f32 %v5730, %v5601
      %v5786 = vmul.f32 %v5734, %v5600
      %v5787 = vmul.f32 %v5734, %v5601
      %v5788 = vmul.f32 %v5738, %v5600
      %v5789 = vmul.f32 %v5738, %v5601
      %v5790 = vmul.f32 %v5742, %v5600
      %v5791 = vmul.f32 %v5742, %v5601
      %v5792 = vmul.f32 %v5746, %v5600
      %v5793 = vmul.f32 %v5746, %v5601
      %v5794 = vmul.f32 %v5750, %v5600
      %v5795 = vmul.f32 %v5750, %v5601
      %v5796 = vmul.f32 %v5754, %v5600
      %v5797 = vmul.f32 %v5754, %v5601
      %v5798 = vmul.f32 %v5758, %v5600
      %v5799 = vmul.f32 %v5758, %v5601
      %v5800 = vmul.f32 %v5762, %v5600
      %v5801 = vmul.f32 %v5762, %v5601
      %v5802 = vmul.f32 %v5766, %v5600
      %v5803 = vmul.f32 %v5766, %v5601
      %v5804 = vmul.f32 %v5770, %v5600
      %v5805 = vmul.f32 %v5770, %v5601
      %v5806 = vmul.f32 %v5774, %v5600
      %v5807 = vmul.f32 %v5774, %v5601
      %s5808 = scalar_lea.vmem %s12, 16
      %v5809 = vld [vmem:[%s5808] sm:$0x1]
      %v5810 = vld [vmem:[%s5808 + $0x1] sm:$0x1]
      %v5811 = vld [vmem:[%s5808 + $0x2] sm:$0x1]
      %v5812 = vld [vmem:[%s5808 + $0x3] sm:$0x1]
      %v5813 = vld [vmem:[%s5808 + $0x4] sm:$0x1]
      %v5814 = vld [vmem:[%s5808 + $0x5] sm:$0x1]
      %v5815 = vld [vmem:[%s5808 + $0x6] sm:$0x1]
      %v5816 = vld [vmem:[%s5808 + $0x7] sm:$0x1]
      %v5817 = vld [vmem:[%s5808 + $0x8] sm:$0x1]
      %v5818 = vld [vmem:[%s5808 + $0x9] sm:$0x1]
      %v5819 = vld [vmem:[%s5808 + $0xa] sm:$0x1]
      %v5820 = vld [vmem:[%s5808 + $0xb] sm:$0x1]
      %v5821 = vld [vmem:[%s5808 + $0xc] sm:$0x1]
      %v5822 = vld [vmem:[%s5808 + $0xd] sm:$0x1]
      %v5823 = vld [vmem:[%s5808 + $0xe] sm:$0x1]
      %v5824 = vld [vmem:[%s5808 + $0xf] sm:$0x1]
      %v5841 = vlaneseq
      %v5842 = vshrl.u32 %v5841, 7
      %v5843 = vsub.s32 0, %v5842
      %v5844 = vrot.slane %v5809, %v5843
      %v5845 = vlaneseq
      %v5846 = vshrl.u32 %v5845, 7
      %v5847 = vsub.s32 0, %v5846
      %v5848 = vrot.slane %v5810, %v5847
      %v5849 = vlaneseq
      %v5850 = vshrl.u32 %v5849, 7
      %v5851 = vsub.s32 0, %v5850
      %v5852 = vrot.slane %v5811, %v5851
      %v5853 = vlaneseq
      %v5854 = vshrl.u32 %v5853, 7
      %v5855 = vsub.s32 0, %v5854
      %v5856 = vrot.slane %v5812, %v5855
      %v5857 = vlaneseq
      %v5858 = vshrl.u32 %v5857, 7
      %v5859 = vsub.s32 0, %v5858
      %v5860 = vrot.slane %v5813, %v5859
      %v5861 = vlaneseq
      %v5862 = vshrl.u32 %v5861, 7
      %v5863 = vsub.s32 0, %v5862
      %v5864 = vrot.slane %v5814, %v5863
      %v5865 = vlaneseq
      %v5866 = vshrl.u32 %v5865, 7
      %v5867 = vsub.s32 0, %v5866
      %v5868 = vrot.slane %v5815, %v5867
      %v5869 = vlaneseq
      %v5870 = vshrl.u32 %v5869, 7
      %v5871 = vsub.s32 0, %v5870
      %v5872 = vrot.slane %v5816, %v5871
      %v5873 = vlaneseq
      %v5874 = vshrl.u32 %v5873, 7
      %v5875 = vsub.s32 0, %v5874
      %v5876 = vrot.slane %v5817, %v5875
      %v5877 = vlaneseq
      %v5878 = vshrl.u32 %v5877, 7
      %v5879 = vsub.s32 0, %v5878
      %v5880 = vrot.slane %v5818, %v5879
      %v5881 = vlaneseq
      %v5882 = vshrl.u32 %v5881, 7
      %v5883 = vsub.s32 0, %v5882
      %v5884 = vrot.slane %v5819, %v5883
      %v5885 = vlaneseq
      %v5886 = vshrl.u32 %v5885, 7
      %v5887 = vsub.s32 0, %v5886
      %v5888 = vrot.slane %v5820, %v5887
      %v5889 = vlaneseq
      %v5890 = vshrl.u32 %v5889, 7
      %v5891 = vsub.s32 0, %v5890
      %v5892 = vrot.slane %v5821, %v5891
      %v5893 = vlaneseq
      %v5894 = vshrl.u32 %v5893, 7
      %v5895 = vsub.s32 0, %v5894
      %v5896 = vrot.slane %v5822, %v5895
      %v5897 = vlaneseq
      %v5898 = vshrl.u32 %v5897, 7
      %v5899 = vsub.s32 0, %v5898
      %v5900 = vrot.slane %v5823, %v5899
      %v5901 = vlaneseq
      %v5902 = vshrl.u32 %v5901, 7
      %v5903 = vsub.s32 0, %v5902
      %v5904 = vrot.slane %v5824, %v5903
      %5905 = vset.pattern.permute.xlu0 0
      %5906 = vperm.xlu0 %5905, %v5844
      %v5907 = vpop.permute.xlu0 %5906
      %5909 = vset.pattern.permute.xlu0 0
      %5910 = vperm.xlu0 %5909, %v5848
      %v5911 = vpop.permute.xlu0 %5910
      %5913 = vset.pattern.permute.xlu0 0
      %5914 = vperm.xlu0 %5913, %v5852
      %v5915 = vpop.permute.xlu0 %5914
      %5917 = vset.pattern.permute.xlu0 0
      %5918 = vperm.xlu0 %5917, %v5856
      %v5919 = vpop.permute.xlu0 %5918
      %5921 = vset.pattern.permute.xlu0 0
      %5922 = vperm.xlu0 %5921, %v5860
      %v5923 = vpop.permute.xlu0 %5922
      %5925 = vset.pattern.permute.xlu0 0
      %5926 = vperm.xlu0 %5925, %v5864
      %v5927 = vpop.permute.xlu0 %5926
      %5929 = vset.pattern.permute.xlu0 0
      %5930 = vperm.xlu0 %5929, %v5868
      %v5931 = vpop.permute.xlu0 %5930
      %5933 = vset.pattern.permute.xlu0 0
      %5934 = vperm.xlu0 %5933, %v5872
      %v5935 = vpop.permute.xlu0 %5934
      %5937 = vset.pattern.permute.xlu0 0
      %5938 = vperm.xlu0 %5937, %v5876
      %v5939 = vpop.permute.xlu0 %5938
      %5941 = vset.pattern.permute.xlu0 0
      %5942 = vperm.xlu0 %5941, %v5880
      %v5943 = vpop.permute.xlu0 %5942
      %5945 = vset.pattern.permute.xlu0 0
      %5946 = vperm.xlu0 %5945, %v5884
      %v5947 = vpop.permute.xlu0 %5946
      %5949 = vset.pattern.permute.xlu0 0
      %5950 = vperm.xlu0 %5949, %v5888
      %v5951 = vpop.permute.xlu0 %5950
      %5953 = vset.pattern.permute.xlu0 0
      %5954 = vperm.xlu0 %5953, %v5892
      %v5955 = vpop.permute.xlu0 %5954
      %5957 = vset.pattern.permute.xlu0 0
      %5958 = vperm.xlu0 %5957, %v5896
      %v5959 = vpop.permute.xlu0 %5958
      %5961 = vset.pattern.permute.xlu0 0
      %5962 = vperm.xlu0 %5961, %v5900
      %v5963 = vpop.permute.xlu0 %5962
      %5965 = vset.pattern.permute.xlu0 0
      %5966 = vperm.xlu0 %5965, %v5904
      %v5967 = vpop.permute.xlu0 %5966
      %v5969 = vmul.f32 %v5907, %v5602
      %v5970 = vmul.f32 %v5907, %v5603
      %v5971 = vmul.f32 %v5911, %v5602
      %v5972 = vmul.f32 %v5911, %v5603
      %v5973 = vmul.f32 %v5915, %v5602
      %v5974 = vmul.f32 %v5915, %v5603
      %v5975 = vmul.f32 %v5919, %v5602
      %v5976 = vmul.f32 %v5919, %v5603
      %v5977 = vmul.f32 %v5923, %v5602
      %v5978 = vmul.f32 %v5923, %v5603
      %v5979 = vmul.f32 %v5927, %v5602
      %v5980 = vmul.f32 %v5927, %v5603
      %v5981 = vmul.f32 %v5931, %v5602
      %v5982 = vmul.f32 %v5931, %v5603
      %v5983 = vmul.f32 %v5935, %v5602
      %v5984 = vmul.f32 %v5935, %v5603
      %v5985 = vmul.f32 %v5939, %v5602
      %v5986 = vmul.f32 %v5939, %v5603
      %v5987 = vmul.f32 %v5943, %v5602
      %v5988 = vmul.f32 %v5943, %v5603
      %v5989 = vmul.f32 %v5947, %v5602
      %v5990 = vmul.f32 %v5947, %v5603
      %v5991 = vmul.f32 %v5951, %v5602
      %v5992 = vmul.f32 %v5951, %v5603
      %v5993 = vmul.f32 %v5955, %v5602
      %v5994 = vmul.f32 %v5955, %v5603
      %v5995 = vmul.f32 %v5959, %v5602
      %v5996 = vmul.f32 %v5959, %v5603
      %v5997 = vmul.f32 %v5963, %v5602
      %v5998 = vmul.f32 %v5963, %v5603
      %v5999 = vmul.f32 %v5967, %v5602
      %v6000 = vmul.f32 %v5967, %v5603
      %v6001 = vadd.f32 %v5776, %v5969
      %v6002 = vadd.f32 %v5777, %v5970
      %v6003 = vadd.f32 %v5778, %v5971
      %v6004 = vadd.f32 %v5779, %v5972
      %v6005 = vadd.f32 %v5780, %v5973
      %v6006 = vadd.f32 %v5781, %v5974
      %v6007 = vadd.f32 %v5782, %v5975
      %v6008 = vadd.f32 %v5783, %v5976
      %v6009 = vadd.f32 %v5784, %v5977
      %v6010 = vadd.f32 %v5785, %v5978
      %v6011 = vadd.f32 %v5786, %v5979
      %v6012 = vadd.f32 %v5787, %v5980
      %v6013 = vadd.f32 %v5788, %v5981
      %v6014 = vadd.f32 %v5789, %v5982
      %v6015 = vadd.f32 %v5790, %v5983
      %v6016 = vadd.f32 %v5791, %v5984
      %v6017 = vadd.f32 %v5792, %v5985
      %v6018 = vadd.f32 %v5793, %v5986
      %v6019 = vadd.f32 %v5794, %v5987
      %v6020 = vadd.f32 %v5795, %v5988
      %v6021 = vadd.f32 %v5796, %v5989
      %v6022 = vadd.f32 %v5797, %v5990
      %v6023 = vadd.f32 %v5798, %v5991
      %v6024 = vadd.f32 %v5799, %v5992
      %v6025 = vadd.f32 %v5800, %v5993
      %v6026 = vadd.f32 %v5801, %v5994
      %v6027 = vadd.f32 %v5802, %v5995
      %v6028 = vadd.f32 %v5803, %v5996
      %v6029 = vadd.f32 %v5804, %v5997
      %v6030 = vadd.f32 %v5805, %v5998
      %v6031 = vadd.f32 %v5806, %v5999
      %v6032 = vadd.f32 %v5807, %v6000
      %s6033 = scalar_lea.vmem %s12, 32
      %v6034 = vld [vmem:[%s6033] sm:$0x1]
      %v6035 = vld [vmem:[%s6033 + $0x1] sm:$0x1]
      %v6036 = vld [vmem:[%s6033 + $0x2] sm:$0x1]
      %v6037 = vld [vmem:[%s6033 + $0x3] sm:$0x1]
      %v6038 = vld [vmem:[%s6033 + $0x4] sm:$0x1]
      %v6039 = vld [vmem:[%s6033 + $0x5] sm:$0x1]
      %v6040 = vld [vmem:[%s6033 + $0x6] sm:$0x1]
      %v6041 = vld [vmem:[%s6033 + $0x7] sm:$0x1]
      %v6042 = vld [vmem:[%s6033 + $0x8] sm:$0x1]
      %v6043 = vld [vmem:[%s6033 + $0x9] sm:$0x1]
      %v6044 = vld [vmem:[%s6033 + $0xa] sm:$0x1]
      %v6045 = vld [vmem:[%s6033 + $0xb] sm:$0x1]
      %v6046 = vld [vmem:[%s6033 + $0xc] sm:$0x1]
      %v6047 = vld [vmem:[%s6033 + $0xd] sm:$0x1]
      %v6048 = vld [vmem:[%s6033 + $0xe] sm:$0x1]
      %v6049 = vld [vmem:[%s6033 + $0xf] sm:$0x1]
      %v6066 = vlaneseq
      %v6067 = vshrl.u32 %v6066, 7
      %v6068 = vsub.s32 0, %v6067
      %v6069 = vrot.slane %v6034, %v6068
      %v6070 = vlaneseq
      %v6071 = vshrl.u32 %v6070, 7
      %v6072 = vsub.s32 0, %v6071
      %v6073 = vrot.slane %v6035, %v6072
      %v6074 = vlaneseq
      %v6075 = vshrl.u32 %v6074, 7
      %v6076 = vsub.s32 0, %v6075
      %v6077 = vrot.slane %v6036, %v6076
      %v6078 = vlaneseq
      %v6079 = vshrl.u32 %v6078, 7
      %v6080 = vsub.s32 0, %v6079
      %v6081 = vrot.slane %v6037, %v6080
      %v6082 = vlaneseq
      %v6083 = vshrl.u32 %v6082, 7
      %v6084 = vsub.s32 0, %v6083
      %v6085 = vrot.slane %v6038, %v6084
      %v6086 = vlaneseq
      %v6087 = vshrl.u32 %v6086, 7
      %v6088 = vsub.s32 0, %v6087
      %v6089 = vrot.slane %v6039, %v6088
      %v6090 = vlaneseq
      %v6091 = vshrl.u32 %v6090, 7
      %v6092 = vsub.s32 0, %v6091
      %v6093 = vrot.slane %v6040, %v6092
      %v6094 = vlaneseq
      %v6095 = vshrl.u32 %v6094, 7
      %v6096 = vsub.s32 0, %v6095
      %v6097 = vrot.slane %v6041, %v6096
      %v6098 = vlaneseq
      %v6099 = vshrl.u32 %v6098, 7
      %v6100 = vsub.s32 0, %v6099
      %v6101 = vrot.slane %v6042, %v6100
      %v6102 = vlaneseq
      %v6103 = vshrl.u32 %v6102, 7
      %v6104 = vsub.s32 0, %v6103
      %v6105 = vrot.slane %v6043, %v6104
      %v6106 = vlaneseq
      %v6107 = vshrl.u32 %v6106, 7
      %v6108 = vsub.s32 0, %v6107
      %v6109 = vrot.slane %v6044, %v6108
      %v6110 = vlaneseq
      %v6111 = vshrl.u32 %v6110, 7
      %v6112 = vsub.s32 0, %v6111
      %v6113 = vrot.slane %v6045, %v6112
      %v6114 = vlaneseq
      %v6115 = vshrl.u32 %v6114, 7
      %v6116 = vsub.s32 0, %v6115
      %v6117 = vrot.slane %v6046, %v6116
      %v6118 = vlaneseq
      %v6119 = vshrl.u32 %v6118, 7
      %v6120 = vsub.s32 0, %v6119
      %v6121 = vrot.slane %v6047, %v6120
      %v6122 = vlaneseq
      %v6123 = vshrl.u32 %v6122, 7
      %v6124 = vsub.s32 0, %v6123
      %v6125 = vrot.slane %v6048, %v6124
      %v6126 = vlaneseq
      %v6127 = vshrl.u32 %v6126, 7
      %v6128 = vsub.s32 0, %v6127
      %v6129 = vrot.slane %v6049, %v6128
      %6130 = vset.pattern.permute.xlu0 0
      %6131 = vperm.xlu0 %6130, %v6069
      %v6132 = vpop.permute.xlu0 %6131
      %6134 = vset.pattern.permute.xlu0 0
      %6135 = vperm.xlu0 %6134, %v6073
      %v6136 = vpop.permute.xlu0 %6135
      %6138 = vset.pattern.permute.xlu0 0
      %6139 = vperm.xlu0 %6138, %v6077
      %v6140 = vpop.permute.xlu0 %6139
      %6142 = vset.pattern.permute.xlu0 0
      %6143 = vperm.xlu0 %6142, %v6081
      %v6144 = vpop.permute.xlu0 %6143
      %6146 = vset.pattern.permute.xlu0 0
      %6147 = vperm.xlu0 %6146, %v6085
      %v6148 = vpop.permute.xlu0 %6147
      %6150 = vset.pattern.permute.xlu0 0
      %6151 = vperm.xlu0 %6150, %v6089
      %v6152 = vpop.permute.xlu0 %6151
      %6154 = vset.pattern.permute.xlu0 0
      %6155 = vperm.xlu0 %6154, %v6093
      %v6156 = vpop.permute.xlu0 %6155
      %6158 = vset.pattern.permute.xlu0 0
      %6159 = vperm.xlu0 %6158, %v6097
      %v6160 = vpop.permute.xlu0 %6159
      %6162 = vset.pattern.permute.xlu0 0
      %6163 = vperm.xlu0 %6162, %v6101
      %v6164 = vpop.permute.xlu0 %6163
      %6166 = vset.pattern.permute.xlu0 0
      %6167 = vperm.xlu0 %6166, %v6105
      %v6168 = vpop.permute.xlu0 %6167
      %6170 = vset.pattern.permute.xlu0 0
      %6171 = vperm.xlu0 %6170, %v6109
      %v6172 = vpop.permute.xlu0 %6171
      %6174 = vset.pattern.permute.xlu0 0
      %6175 = vperm.xlu0 %6174, %v6113
      %v6176 = vpop.permute.xlu0 %6175
      %6178 = vset.pattern.permute.xlu0 0
      %6179 = vperm.xlu0 %6178, %v6117
      %v6180 = vpop.permute.xlu0 %6179
      %6182 = vset.pattern.permute.xlu0 0
      %6183 = vperm.xlu0 %6182, %v6121
      %v6184 = vpop.permute.xlu0 %6183
      %6186 = vset.pattern.permute.xlu0 0
      %6187 = vperm.xlu0 %6186, %v6125
      %v6188 = vpop.permute.xlu0 %6187
      %6190 = vset.pattern.permute.xlu0 0
      %6191 = vperm.xlu0 %6190, %v6129
      %v6192 = vpop.permute.xlu0 %6191
      %v6194 = vmul.f32 %v6132, %v5604
      %v6195 = vmul.f32 %v6132, %v5605
      %v6196 = vmul.f32 %v6136, %v5604
      %v6197 = vmul.f32 %v6136, %v5605
      %v6198 = vmul.f32 %v6140, %v5604
      %v6199 = vmul.f32 %v6140, %v5605
      %v6200 = vmul.f32 %v6144, %v5604
      %v6201 = vmul.f32 %v6144, %v5605
      %v6202 = vmul.f32 %v6148, %v5604
      %v6203 = vmul.f32 %v6148, %v5605
      %v6204 = vmul.f32 %v6152, %v5604
      %v6205 = vmul.f32 %v6152, %v5605
      %v6206 = vmul.f32 %v6156, %v5604
      %v6207 = vmul.f32 %v6156, %v5605
      %v6208 = vmul.f32 %v6160, %v5604
      %v6209 = vmul.f32 %v6160, %v5605
      %v6210 = vmul.f32 %v6164, %v5604
      %v6211 = vmul.f32 %v6164, %v5605
      %v6212 = vmul.f32 %v6168, %v5604
      %v6213 = vmul.f32 %v6168, %v5605
      %v6214 = vmul.f32 %v6172, %v5604
      %v6215 = vmul.f32 %v6172, %v5605
      %v6216 = vmul.f32 %v6176, %v5604
      %v6217 = vmul.f32 %v6176, %v5605
      %v6218 = vmul.f32 %v6180, %v5604
      %v6219 = vmul.f32 %v6180, %v5605
      %v6220 = vmul.f32 %v6184, %v5604
      %v6221 = vmul.f32 %v6184, %v5605
      %v6222 = vmul.f32 %v6188, %v5604
      %v6223 = vmul.f32 %v6188, %v5605
      %v6224 = vmul.f32 %v6192, %v5604
      %v6225 = vmul.f32 %v6192, %v5605
      %v6226 = vadd.f32 %v6001, %v6194
      %v6227 = vadd.f32 %v6002, %v6195
      %v6228 = vadd.f32 %v6003, %v6196
      %v6229 = vadd.f32 %v6004, %v6197
      %v6230 = vadd.f32 %v6005, %v6198
      %v6231 = vadd.f32 %v6006, %v6199
      %v6232 = vadd.f32 %v6007, %v6200
      %v6233 = vadd.f32 %v6008, %v6201
      %v6234 = vadd.f32 %v6009, %v6202
      %v6235 = vadd.f32 %v6010, %v6203
      %v6236 = vadd.f32 %v6011, %v6204
      %v6237 = vadd.f32 %v6012, %v6205
      %v6238 = vadd.f32 %v6013, %v6206
      %v6239 = vadd.f32 %v6014, %v6207
      %v6240 = vadd.f32 %v6015, %v6208
      %v6241 = vadd.f32 %v6016, %v6209
      %v6242 = vadd.f32 %v6017, %v6210
      %v6243 = vadd.f32 %v6018, %v6211
      %v6244 = vadd.f32 %v6019, %v6212
      %v6245 = vadd.f32 %v6020, %v6213
      %v6246 = vadd.f32 %v6021, %v6214
      %v6247 = vadd.f32 %v6022, %v6215
      %v6248 = vadd.f32 %v6023, %v6216
      %v6249 = vadd.f32 %v6024, %v6217
      %v6250 = vadd.f32 %v6025, %v6218
      %v6251 = vadd.f32 %v6026, %v6219
      %v6252 = vadd.f32 %v6027, %v6220
      %v6253 = vadd.f32 %v6028, %v6221
      %v6254 = vadd.f32 %v6029, %v6222
      %v6255 = vadd.f32 %v6030, %v6223
      %v6256 = vadd.f32 %v6031, %v6224
      %v6257 = vadd.f32 %v6032, %v6225
      %s6258 = scalar_lea.vmem %s12, 48
      %v6259 = vld [vmem:[%s6258] sm:$0x1]
      %v6260 = vld [vmem:[%s6258 + $0x1] sm:$0x1]
      %v6261 = vld [vmem:[%s6258 + $0x2] sm:$0x1]
      %v6262 = vld [vmem:[%s6258 + $0x3] sm:$0x1]
      %v6263 = vld [vmem:[%s6258 + $0x4] sm:$0x1]
      %v6264 = vld [vmem:[%s6258 + $0x5] sm:$0x1]
      %v6265 = vld [vmem:[%s6258 + $0x6] sm:$0x1]
      %v6266 = vld [vmem:[%s6258 + $0x7] sm:$0x1]
      %v6267 = vld [vmem:[%s6258 + $0x8] sm:$0x1]
      %v6268 = vld [vmem:[%s6258 + $0x9] sm:$0x1]
      %v6269 = vld [vmem:[%s6258 + $0xa] sm:$0x1]
      %v6270 = vld [vmem:[%s6258 + $0xb] sm:$0x1]
      %v6271 = vld [vmem:[%s6258 + $0xc] sm:$0x1]
      %v6272 = vld [vmem:[%s6258 + $0xd] sm:$0x1]
      %v6273 = vld [vmem:[%s6258 + $0xe] sm:$0x1]
      %v6274 = vld [vmem:[%s6258 + $0xf] sm:$0x1]
      %v6291 = vlaneseq
      %v6292 = vshrl.u32 %v6291, 7
      %v6293 = vsub.s32 0, %v6292
      %v6294 = vrot.slane %v6259, %v6293
      %v6295 = vlaneseq
      %v6296 = vshrl.u32 %v6295, 7
      %v6297 = vsub.s32 0, %v6296
      %v6298 = vrot.slane %v6260, %v6297
      %v6299 = vlaneseq
      %v6300 = vshrl.u32 %v6299, 7
      %v6301 = vsub.s32 0, %v6300
      %v6302 = vrot.slane %v6261, %v6301
      %v6303 = vlaneseq
      %v6304 = vshrl.u32 %v6303, 7
      %v6305 = vsub.s32 0, %v6304
      %v6306 = vrot.slane %v6262, %v6305
      %v6307 = vlaneseq
      %v6308 = vshrl.u32 %v6307, 7
      %v6309 = vsub.s32 0, %v6308
      %v6310 = vrot.slane %v6263, %v6309
      %v6311 = vlaneseq
      %v6312 = vshrl.u32 %v6311, 7
      %v6313 = vsub.s32 0, %v6312
      %v6314 = vrot.slane %v6264, %v6313
      %v6315 = vlaneseq
      %v6316 = vshrl.u32 %v6315, 7
      %v6317 = vsub.s32 0, %v6316
      %v6318 = vrot.slane %v6265, %v6317
      %v6319 = vlaneseq
      %v6320 = vshrl.u32 %v6319, 7
      %v6321 = vsub.s32 0, %v6320
      %v6322 = vrot.slane %v6266, %v6321
      %v6323 = vlaneseq
      %v6324 = vshrl.u32 %v6323, 7
      %v6325 = vsub.s32 0, %v6324
      %v6326 = vrot.slane %v6267, %v6325
      %v6327 = vlaneseq
      %v6328 = vshrl.u32 %v6327, 7
      %v6329 = vsub.s32 0, %v6328
      %v6330 = vrot.slane %v6268, %v6329
      %v6331 = vlaneseq
      %v6332 = vshrl.u32 %v6331, 7
      %v6333 = vsub.s32 0, %v6332
      %v6334 = vrot.slane %v6269, %v6333
      %v6335 = vlaneseq
      %v6336 = vshrl.u32 %v6335, 7
      %v6337 = vsub.s32 0, %v6336
      %v6338 = vrot.slane %v6270, %v6337
      %v6339 = vlaneseq
      %v6340 = vshrl.u32 %v6339, 7
      %v6341 = vsub.s32 0, %v6340
      %v6342 = vrot.slane %v6271, %v6341
      %v6343 = vlaneseq
      %v6344 = vshrl.u32 %v6343, 7
      %v6345 = vsub.s32 0, %v6344
      %v6346 = vrot.slane %v6272, %v6345
      %v6347 = vlaneseq
      %v6348 = vshrl.u32 %v6347, 7
      %v6349 = vsub.s32 0, %v6348
      %v6350 = vrot.slane %v6273, %v6349
      %v6351 = vlaneseq
      %v6352 = vshrl.u32 %v6351, 7
      %v6353 = vsub.s32 0, %v6352
      %v6354 = vrot.slane %v6274, %v6353
      %6355 = vset.pattern.permute.xlu0 0
      %6356 = vperm.xlu0 %6355, %v6294
      %v6357 = vpop.permute.xlu0 %6356
      %6359 = vset.pattern.permute.xlu0 0
      %6360 = vperm.xlu0 %6359, %v6298
      %v6361 = vpop.permute.xlu0 %6360
      %6363 = vset.pattern.permute.xlu0 0
      %6364 = vperm.xlu0 %6363, %v6302
      %v6365 = vpop.permute.xlu0 %6364
      %6367 = vset.pattern.permute.xlu0 0
      %6368 = vperm.xlu0 %6367, %v6306
      %v6369 = vpop.permute.xlu0 %6368
      %6371 = vset.pattern.permute.xlu0 0
      %6372 = vperm.xlu0 %6371, %v6310
      %v6373 = vpop.permute.xlu0 %6372
      %6375 = vset.pattern.permute.xlu0 0
      %6376 = vperm.xlu0 %6375, %v6314
      %v6377 = vpop.permute.xlu0 %6376
      %6379 = vset.pattern.permute.xlu0 0
      %6380 = vperm.xlu0 %6379, %v6318
      %v6381 = vpop.permute.xlu0 %6380
      %6383 = vset.pattern.permute.xlu0 0
      %6384 = vperm.xlu0 %6383, %v6322
      %v6385 = vpop.permute.xlu0 %6384
      %6387 = vset.pattern.permute.xlu0 0
      %6388 = vperm.xlu0 %6387, %v6326
      %v6389 = vpop.permute.xlu0 %6388
      %6391 = vset.pattern.permute.xlu0 0
      %6392 = vperm.xlu0 %6391, %v6330
      %v6393 = vpop.permute.xlu0 %6392
      %6395 = vset.pattern.permute.xlu0 0
      %6396 = vperm.xlu0 %6395, %v6334
      %v6397 = vpop.permute.xlu0 %6396
      %6399 = vset.pattern.permute.xlu0 0
      %6400 = vperm.xlu0 %6399, %v6338
      %v6401 = vpop.permute.xlu0 %6400
      %6403 = vset.pattern.permute.xlu0 0
      %6404 = vperm.xlu0 %6403, %v6342
      %v6405 = vpop.permute.xlu0 %6404
      %6407 = vset.pattern.permute.xlu0 0
      %6408 = vperm.xlu0 %6407, %v6346
      %v6409 = vpop.permute.xlu0 %6408
      %6411 = vset.pattern.permute.xlu0 0
      %6412 = vperm.xlu0 %6411, %v6350
      %v6413 = vpop.permute.xlu0 %6412
      %6415 = vset.pattern.permute.xlu0 0
      %6416 = vperm.xlu0 %6415, %v6354
      %v6417 = vpop.permute.xlu0 %6416
      %v6419 = vmul.f32 %v6357, %v5606
      %v6420 = vmul.f32 %v6357, %v5607
      %v6421 = vmul.f32 %v6361, %v5606
      %v6422 = vmul.f32 %v6361, %v5607
      %v6423 = vmul.f32 %v6365, %v5606
      %v6424 = vmul.f32 %v6365, %v5607
      %v6425 = vmul.f32 %v6369, %v5606
      %v6426 = vmul.f32 %v6369, %v5607
      %v6427 = vmul.f32 %v6373, %v5606
      %v6428 = vmul.f32 %v6373, %v5607
      %v6429 = vmul.f32 %v6377, %v5606
      %v6430 = vmul.f32 %v6377, %v5607
      %v6431 = vmul.f32 %v6381, %v5606
      %v6432 = vmul.f32 %v6381, %v5607
      %v6433 = vmul.f32 %v6385, %v5606
      %v6434 = vmul.f32 %v6385, %v5607
      %v6435 = vmul.f32 %v6389, %v5606
      %v6436 = vmul.f32 %v6389, %v5607
      %v6437 = vmul.f32 %v6393, %v5606
      %v6438 = vmul.f32 %v6393, %v5607
      %v6439 = vmul.f32 %v6397, %v5606
      %v6440 = vmul.f32 %v6397, %v5607
      %v6441 = vmul.f32 %v6401, %v5606
      %v6442 = vmul.f32 %v6401, %v5607
      %v6443 = vmul.f32 %v6405, %v5606
      %v6444 = vmul.f32 %v6405, %v5607
      %v6445 = vmul.f32 %v6409, %v5606
      %v6446 = vmul.f32 %v6409, %v5607
      %v6447 = vmul.f32 %v6413, %v5606
      %v6448 = vmul.f32 %v6413, %v5607
      %v6449 = vmul.f32 %v6417, %v5606
      %v6450 = vmul.f32 %v6417, %v5607
      %v6451 = vadd.f32 %v6226, %v6419
      %v6452 = vadd.f32 %v6227, %v6420
      %v6453 = vadd.f32 %v6228, %v6421
      %v6454 = vadd.f32 %v6229, %v6422
      %v6455 = vadd.f32 %v6230, %v6423
      %v6456 = vadd.f32 %v6231, %v6424
      %v6457 = vadd.f32 %v6232, %v6425
      %v6458 = vadd.f32 %v6233, %v6426
      %v6459 = vadd.f32 %v6234, %v6427
      %v6460 = vadd.f32 %v6235, %v6428
      %v6461 = vadd.f32 %v6236, %v6429
      %v6462 = vadd.f32 %v6237, %v6430
      %v6463 = vadd.f32 %v6238, %v6431
      %v6464 = vadd.f32 %v6239, %v6432
      %v6465 = vadd.f32 %v6240, %v6433
      %v6466 = vadd.f32 %v6241, %v6434
      %v6467 = vadd.f32 %v6242, %v6435
      %v6468 = vadd.f32 %v6243, %v6436
      %v6469 = vadd.f32 %v6244, %v6437
      %v6470 = vadd.f32 %v6245, %v6438
      %v6471 = vadd.f32 %v6246, %v6439
      %v6472 = vadd.f32 %v6247, %v6440
      %v6473 = vadd.f32 %v6248, %v6441
      %v6474 = vadd.f32 %v6249, %v6442
      %v6475 = vadd.f32 %v6250, %v6443
      %v6476 = vadd.f32 %v6251, %v6444
      %v6477 = vadd.f32 %v6252, %v6445
      %v6478 = vadd.f32 %v6253, %v6446
      %v6479 = vadd.f32 %v6254, %v6447
      %v6480 = vadd.f32 %v6255, %v6448
      %v6481 = vadd.f32 %v6256, %v6449
      %v6482 = vadd.f32 %v6257, %v6450
      %s6483 = scalar_lea.vmem %s12, 64
      %v6484 = vld [vmem:[%s6483] sm:$0x1]
      %v6485 = vld [vmem:[%s6483 + $0x1] sm:$0x1]
      %v6486 = vld [vmem:[%s6483 + $0x2] sm:$0x1]
      %v6487 = vld [vmem:[%s6483 + $0x3] sm:$0x1]
      %v6488 = vld [vmem:[%s6483 + $0x4] sm:$0x1]
      %v6489 = vld [vmem:[%s6483 + $0x5] sm:$0x1]
      %v6490 = vld [vmem:[%s6483 + $0x6] sm:$0x1]
      %v6491 = vld [vmem:[%s6483 + $0x7] sm:$0x1]
      %v6492 = vld [vmem:[%s6483 + $0x8] sm:$0x1]
      %v6493 = vld [vmem:[%s6483 + $0x9] sm:$0x1]
      %v6494 = vld [vmem:[%s6483 + $0xa] sm:$0x1]
      %v6495 = vld [vmem:[%s6483 + $0xb] sm:$0x1]
      %v6496 = vld [vmem:[%s6483 + $0xc] sm:$0x1]
      %v6497 = vld [vmem:[%s6483 + $0xd] sm:$0x1]
      %v6498 = vld [vmem:[%s6483 + $0xe] sm:$0x1]
      %v6499 = vld [vmem:[%s6483 + $0xf] sm:$0x1]
      %v6516 = vlaneseq
      %v6517 = vshrl.u32 %v6516, 7
      %v6518 = vsub.s32 0, %v6517
      %v6519 = vrot.slane %v6484, %v6518
      %v6520 = vlaneseq
      %v6521 = vshrl.u32 %v6520, 7
      %v6522 = vsub.s32 0, %v6521
      %v6523 = vrot.slane %v6485, %v6522
      %v6524 = vlaneseq
      %v6525 = vshrl.u32 %v6524, 7
      %v6526 = vsub.s32 0, %v6525
      %v6527 = vrot.slane %v6486, %v6526
      %v6528 = vlaneseq
      %v6529 = vshrl.u32 %v6528, 7
      %v6530 = vsub.s32 0, %v6529
      %v6531 = vrot.slane %v6487, %v6530
      %v6532 = vlaneseq
      %v6533 = vshrl.u32 %v6532, 7
      %v6534 = vsub.s32 0, %v6533
      %v6535 = vrot.slane %v6488, %v6534
      %v6536 = vlaneseq
      %v6537 = vshrl.u32 %v6536, 7
      %v6538 = vsub.s32 0, %v6537
      %v6539 = vrot.slane %v6489, %v6538
      %v6540 = vlaneseq
      %v6541 = vshrl.u32 %v6540, 7
      %v6542 = vsub.s32 0, %v6541
      %v6543 = vrot.slane %v6490, %v6542
      %v6544 = vlaneseq
      %v6545 = vshrl.u32 %v6544, 7
      %v6546 = vsub.s32 0, %v6545
      %v6547 = vrot.slane %v6491, %v6546
      %v6548 = vlaneseq
      %v6549 = vshrl.u32 %v6548, 7
      %v6550 = vsub.s32 0, %v6549
      %v6551 = vrot.slane %v6492, %v6550
      %v6552 = vlaneseq
      %v6553 = vshrl.u32 %v6552, 7
      %v6554 = vsub.s32 0, %v6553
      %v6555 = vrot.slane %v6493, %v6554
      %v6556 = vlaneseq
      %v6557 = vshrl.u32 %v6556, 7
      %v6558 = vsub.s32 0, %v6557
      %v6559 = vrot.slane %v6494, %v6558
      %v6560 = vlaneseq
      %v6561 = vshrl.u32 %v6560, 7
      %v6562 = vsub.s32 0, %v6561
      %v6563 = vrot.slane %v6495, %v6562
      %v6564 = vlaneseq
      %v6565 = vshrl.u32 %v6564, 7
      %v6566 = vsub.s32 0, %v6565
      %v6567 = vrot.slane %v6496, %v6566
      %v6568 = vlaneseq
      %v6569 = vshrl.u32 %v6568, 7
      %v6570 = vsub.s32 0, %v6569
      %v6571 = vrot.slane %v6497, %v6570
      %v6572 = vlaneseq
      %v6573 = vshrl.u32 %v6572, 7
      %v6574 = vsub.s32 0, %v6573
      %v6575 = vrot.slane %v6498, %v6574
      %v6576 = vlaneseq
      %v6577 = vshrl.u32 %v6576, 7
      %v6578 = vsub.s32 0, %v6577
      %v6579 = vrot.slane %v6499, %v6578
      %6580 = vset.pattern.permute.xlu0 0
      %6581 = vperm.xlu0 %6580, %v6519
      %v6582 = vpop.permute.xlu0 %6581
      %6584 = vset.pattern.permute.xlu0 0
      %6585 = vperm.xlu0 %6584, %v6523
      %v6586 = vpop.permute.xlu0 %6585
      %6588 = vset.pattern.permute.xlu0 0
      %6589 = vperm.xlu0 %6588, %v6527
      %v6590 = vpop.permute.xlu0 %6589
      %6592 = vset.pattern.permute.xlu0 0
      %6593 = vperm.xlu0 %6592, %v6531
      %v6594 = vpop.permute.xlu0 %6593
      %6596 = vset.pattern.permute.xlu0 0
      %6597 = vperm.xlu0 %6596, %v6535
      %v6598 = vpop.permute.xlu0 %6597
      %6600 = vset.pattern.permute.xlu0 0
      %6601 = vperm.xlu0 %6600, %v6539
      %v6602 = vpop.permute.xlu0 %6601
      %6604 = vset.pattern.permute.xlu0 0
      %6605 = vperm.xlu0 %6604, %v6543
      %v6606 = vpop.permute.xlu0 %6605
      %6608 = vset.pattern.permute.xlu0 0
      %6609 = vperm.xlu0 %6608, %v6547
      %v6610 = vpop.permute.xlu0 %6609
      %6612 = vset.pattern.permute.xlu0 0
      %6613 = vperm.xlu0 %6612, %v6551
      %v6614 = vpop.permute.xlu0 %6613
      %6616 = vset.pattern.permute.xlu0 0
      %6617 = vperm.xlu0 %6616, %v6555
      %v6618 = vpop.permute.xlu0 %6617
      %6620 = vset.pattern.permute.xlu0 0
      %6621 = vperm.xlu0 %6620, %v6559
      %v6622 = vpop.permute.xlu0 %6621
      %6624 = vset.pattern.permute.xlu0 0
      %6625 = vperm.xlu0 %6624, %v6563
      %v6626 = vpop.permute.xlu0 %6625
      %6628 = vset.pattern.permute.xlu0 0
      %6629 = vperm.xlu0 %6628, %v6567
      %v6630 = vpop.permute.xlu0 %6629
      %6632 = vset.pattern.permute.xlu0 0
      %6633 = vperm.xlu0 %6632, %v6571
      %v6634 = vpop.permute.xlu0 %6633
      %6636 = vset.pattern.permute.xlu0 0
      %6637 = vperm.xlu0 %6636, %v6575
      %v6638 = vpop.permute.xlu0 %6637
      %6640 = vset.pattern.permute.xlu0 0
      %6641 = vperm.xlu0 %6640, %v6579
      %v6642 = vpop.permute.xlu0 %6641
      %v6644 = vmul.f32 %v6582, %v5608
      %v6645 = vmul.f32 %v6582, %v5609
      %v6646 = vmul.f32 %v6586, %v5608
      %v6647 = vmul.f32 %v6586, %v5609
      %v6648 = vmul.f32 %v6590, %v5608
      %v6649 = vmul.f32 %v6590, %v5609
      %v6650 = vmul.f32 %v6594, %v5608
      %v6651 = vmul.f32 %v6594, %v5609
      %v6652 = vmul.f32 %v6598, %v5608
      %v6653 = vmul.f32 %v6598, %v5609
      %v6654 = vmul.f32 %v6602, %v5608
      %v6655 = vmul.f32 %v6602, %v5609
      %v6656 = vmul.f32 %v6606, %v5608
      %v6657 = vmul.f32 %v6606, %v5609
      %v6658 = vmul.f32 %v6610, %v5608
      %v6659 = vmul.f32 %v6610, %v5609
      %v6660 = vmul.f32 %v6614, %v5608
      %v6661 = vmul.f32 %v6614, %v5609
      %v6662 = vmul.f32 %v6618, %v5608
      %v6663 = vmul.f32 %v6618, %v5609
      %v6664 = vmul.f32 %v6622, %v5608
      %v6665 = vmul.f32 %v6622, %v5609
      %v6666 = vmul.f32 %v6626, %v5608
      %v6667 = vmul.f32 %v6626, %v5609
      %v6668 = vmul.f32 %v6630, %v5608
      %v6669 = vmul.f32 %v6630, %v5609
      %v6670 = vmul.f32 %v6634, %v5608
      %v6671 = vmul.f32 %v6634, %v5609
      %v6672 = vmul.f32 %v6638, %v5608
      %v6673 = vmul.f32 %v6638, %v5609
      %v6674 = vmul.f32 %v6642, %v5608
      %v6675 = vmul.f32 %v6642, %v5609
      %v6676 = vadd.f32 %v6451, %v6644
      %v6677 = vadd.f32 %v6452, %v6645
      %v6678 = vadd.f32 %v6453, %v6646
      %v6679 = vadd.f32 %v6454, %v6647
      %v6680 = vadd.f32 %v6455, %v6648
      %v6681 = vadd.f32 %v6456, %v6649
      %v6682 = vadd.f32 %v6457, %v6650
      %v6683 = vadd.f32 %v6458, %v6651
      %v6684 = vadd.f32 %v6459, %v6652
      %v6685 = vadd.f32 %v6460, %v6653
      %v6686 = vadd.f32 %v6461, %v6654
      %v6687 = vadd.f32 %v6462, %v6655
      %v6688 = vadd.f32 %v6463, %v6656
      %v6689 = vadd.f32 %v6464, %v6657
      %v6690 = vadd.f32 %v6465, %v6658
      %v6691 = vadd.f32 %v6466, %v6659
      %v6692 = vadd.f32 %v6467, %v6660
      %v6693 = vadd.f32 %v6468, %v6661
      %v6694 = vadd.f32 %v6469, %v6662
      %v6695 = vadd.f32 %v6470, %v6663
      %v6696 = vadd.f32 %v6471, %v6664
      %v6697 = vadd.f32 %v6472, %v6665
      %v6698 = vadd.f32 %v6473, %v6666
      %v6699 = vadd.f32 %v6474, %v6667
      %v6700 = vadd.f32 %v6475, %v6668
      %v6701 = vadd.f32 %v6476, %v6669
      %v6702 = vadd.f32 %v6477, %v6670
      %v6703 = vadd.f32 %v6478, %v6671
      %v6704 = vadd.f32 %v6479, %v6672
      %v6705 = vadd.f32 %v6480, %v6673
      %v6706 = vadd.f32 %v6481, %v6674
      %v6707 = vadd.f32 %v6482, %v6675
      %s6708 = scalar_lea.vmem %s12, 80
      %v6709 = vld [vmem:[%s6708] sm:$0x1]
      %v6710 = vld [vmem:[%s6708 + $0x1] sm:$0x1]
      %v6711 = vld [vmem:[%s6708 + $0x2] sm:$0x1]
      %v6712 = vld [vmem:[%s6708 + $0x3] sm:$0x1]
      %v6713 = vld [vmem:[%s6708 + $0x4] sm:$0x1]
      %v6714 = vld [vmem:[%s6708 + $0x5] sm:$0x1]
      %v6715 = vld [vmem:[%s6708 + $0x6] sm:$0x1]
      %v6716 = vld [vmem:[%s6708 + $0x7] sm:$0x1]
      %v6717 = vld [vmem:[%s6708 + $0x8] sm:$0x1]
      %v6718 = vld [vmem:[%s6708 + $0x9] sm:$0x1]
      %v6719 = vld [vmem:[%s6708 + $0xa] sm:$0x1]
      %v6720 = vld [vmem:[%s6708 + $0xb] sm:$0x1]
      %v6721 = vld [vmem:[%s6708 + $0xc] sm:$0x1]
      %v6722 = vld [vmem:[%s6708 + $0xd] sm:$0x1]
      %v6723 = vld [vmem:[%s6708 + $0xe] sm:$0x1]
      %v6724 = vld [vmem:[%s6708 + $0xf] sm:$0x1]
      %v6741 = vlaneseq
      %v6742 = vshrl.u32 %v6741, 7
      %v6743 = vsub.s32 0, %v6742
      %v6744 = vrot.slane %v6709, %v6743
      %v6745 = vlaneseq
      %v6746 = vshrl.u32 %v6745, 7
      %v6747 = vsub.s32 0, %v6746
      %v6748 = vrot.slane %v6710, %v6747
      %v6749 = vlaneseq
      %v6750 = vshrl.u32 %v6749, 7
      %v6751 = vsub.s32 0, %v6750
      %v6752 = vrot.slane %v6711, %v6751
      %v6753 = vlaneseq
      %v6754 = vshrl.u32 %v6753, 7
      %v6755 = vsub.s32 0, %v6754
      %v6756 = vrot.slane %v6712, %v6755
      %v6757 = vlaneseq
      %v6758 = vshrl.u32 %v6757, 7
      %v6759 = vsub.s32 0, %v6758
      %v6760 = vrot.slane %v6713, %v6759
      %v6761 = vlaneseq
      %v6762 = vshrl.u32 %v6761, 7
      %v6763 = vsub.s32 0, %v6762
      %v6764 = vrot.slane %v6714, %v6763
      %v6765 = vlaneseq
      %v6766 = vshrl.u32 %v6765, 7
      %v6767 = vsub.s32 0, %v6766
      %v6768 = vrot.slane %v6715, %v6767
      %v6769 = vlaneseq
      %v6770 = vshrl.u32 %v6769, 7
      %v6771 = vsub.s32 0, %v6770
      %v6772 = vrot.slane %v6716, %v6771
      %v6773 = vlaneseq
      %v6774 = vshrl.u32 %v6773, 7
      %v6775 = vsub.s32 0, %v6774
      %v6776 = vrot.slane %v6717, %v6775
      %v6777 = vlaneseq
      %v6778 = vshrl.u32 %v6777, 7
      %v6779 = vsub.s32 0, %v6778
      %v6780 = vrot.slane %v6718, %v6779
      %v6781 = vlaneseq
      %v6782 = vshrl.u32 %v6781, 7
      %v6783 = vsub.s32 0, %v6782
      %v6784 = vrot.slane %v6719, %v6783
      %v6785 = vlaneseq
      %v6786 = vshrl.u32 %v6785, 7
      %v6787 = vsub.s32 0, %v6786
      %v6788 = vrot.slane %v6720, %v6787
      %v6789 = vlaneseq
      %v6790 = vshrl.u32 %v6789, 7
      %v6791 = vsub.s32 0, %v6790
      %v6792 = vrot.slane %v6721, %v6791
      %v6793 = vlaneseq
      %v6794 = vshrl.u32 %v6793, 7
      %v6795 = vsub.s32 0, %v6794
      %v6796 = vrot.slane %v6722, %v6795
      %v6797 = vlaneseq
      %v6798 = vshrl.u32 %v6797, 7
      %v6799 = vsub.s32 0, %v6798
      %v6800 = vrot.slane %v6723, %v6799
      %v6801 = vlaneseq
      %v6802 = vshrl.u32 %v6801, 7
      %v6803 = vsub.s32 0, %v6802
      %v6804 = vrot.slane %v6724, %v6803
      %6805 = vset.pattern.permute.xlu0 0
      %6806 = vperm.xlu0 %6805, %v6744
      %v6807 = vpop.permute.xlu0 %6806
      %6809 = vset.pattern.permute.xlu0 0
      %6810 = vperm.xlu0 %6809, %v6748
      %v6811 = vpop.permute.xlu0 %6810
      %6813 = vset.pattern.permute.xlu0 0
      %6814 = vperm.xlu0 %6813, %v6752
      %v6815 = vpop.permute.xlu0 %6814
      %6817 = vset.pattern.permute.xlu0 0
      %6818 = vperm.xlu0 %6817, %v6756
      %v6819 = vpop.permute.xlu0 %6818
      %6821 = vset.pattern.permute.xlu0 0
      %6822 = vperm.xlu0 %6821, %v6760
      %v6823 = vpop.permute.xlu0 %6822
      %6825 = vset.pattern.permute.xlu0 0
      %6826 = vperm.xlu0 %6825, %v6764
      %v6827 = vpop.permute.xlu0 %6826
      %6829 = vset.pattern.permute.xlu0 0
      %6830 = vperm.xlu0 %6829, %v6768
      %v6831 = vpop.permute.xlu0 %6830
      %6833 = vset.pattern.permute.xlu0 0
      %6834 = vperm.xlu0 %6833, %v6772
      %v6835 = vpop.permute.xlu0 %6834
      %6837 = vset.pattern.permute.xlu0 0
      %6838 = vperm.xlu0 %6837, %v6776
      %v6839 = vpop.permute.xlu0 %6838
      %6841 = vset.pattern.permute.xlu0 0
      %6842 = vperm.xlu0 %6841, %v6780
      %v6843 = vpop.permute.xlu0 %6842
      %6845 = vset.pattern.permute.xlu0 0
      %6846 = vperm.xlu0 %6845, %v6784
      %v6847 = vpop.permute.xlu0 %6846
      %6849 = vset.pattern.permute.xlu0 0
      %6850 = vperm.xlu0 %6849, %v6788
      %v6851 = vpop.permute.xlu0 %6850
      %6853 = vset.pattern.permute.xlu0 0
      %6854 = vperm.xlu0 %6853, %v6792
      %v6855 = vpop.permute.xlu0 %6854
      %6857 = vset.pattern.permute.xlu0 0
      %6858 = vperm.xlu0 %6857, %v6796
      %v6859 = vpop.permute.xlu0 %6858
      %6861 = vset.pattern.permute.xlu0 0
      %6862 = vperm.xlu0 %6861, %v6800
      %v6863 = vpop.permute.xlu0 %6862
      %6865 = vset.pattern.permute.xlu0 0
      %6866 = vperm.xlu0 %6865, %v6804
      %v6867 = vpop.permute.xlu0 %6866
      %v6869 = vmul.f32 %v6807, %v5610
      %v6870 = vmul.f32 %v6807, %v5611
      %v6871 = vmul.f32 %v6811, %v5610
      %v6872 = vmul.f32 %v6811, %v5611
      %v6873 = vmul.f32 %v6815, %v5610
      %v6874 = vmul.f32 %v6815, %v5611
      %v6875 = vmul.f32 %v6819, %v5610
      %v6876 = vmul.f32 %v6819, %v5611
      %v6877 = vmul.f32 %v6823, %v5610
      %v6878 = vmul.f32 %v6823, %v5611
      %v6879 = vmul.f32 %v6827, %v5610
      %v6880 = vmul.f32 %v6827, %v5611
      %v6881 = vmul.f32 %v6831, %v5610
      %v6882 = vmul.f32 %v6831, %v5611
      %v6883 = vmul.f32 %v6835, %v5610
      %v6884 = vmul.f32 %v6835, %v5611
      %v6885 = vmul.f32 %v6839, %v5610
      %v6886 = vmul.f32 %v6839, %v5611
      %v6887 = vmul.f32 %v6843, %v5610
      %v6888 = vmul.f32 %v6843, %v5611
      %v6889 = vmul.f32 %v6847, %v5610
      %v6890 = vmul.f32 %v6847, %v5611
      %v6891 = vmul.f32 %v6851, %v5610
      %v6892 = vmul.f32 %v6851, %v5611
      %v6893 = vmul.f32 %v6855, %v5610
      %v6894 = vmul.f32 %v6855, %v5611
      %v6895 = vmul.f32 %v6859, %v5610
      %v6896 = vmul.f32 %v6859, %v5611
      %v6897 = vmul.f32 %v6863, %v5610
      %v6898 = vmul.f32 %v6863, %v5611
      %v6899 = vmul.f32 %v6867, %v5610
      %v6900 = vmul.f32 %v6867, %v5611
      %v6901 = vadd.f32 %v6676, %v6869
      %v6902 = vadd.f32 %v6677, %v6870
      %v6903 = vadd.f32 %v6678, %v6871
      %v6904 = vadd.f32 %v6679, %v6872
      %v6905 = vadd.f32 %v6680, %v6873
      %v6906 = vadd.f32 %v6681, %v6874
      %v6907 = vadd.f32 %v6682, %v6875
      %v6908 = vadd.f32 %v6683, %v6876
      %v6909 = vadd.f32 %v6684, %v6877
      %v6910 = vadd.f32 %v6685, %v6878
      %v6911 = vadd.f32 %v6686, %v6879
      %v6912 = vadd.f32 %v6687, %v6880
      %v6913 = vadd.f32 %v6688, %v6881
      %v6914 = vadd.f32 %v6689, %v6882
      %v6915 = vadd.f32 %v6690, %v6883
      %v6916 = vadd.f32 %v6691, %v6884
      %v6917 = vadd.f32 %v6692, %v6885
      %v6918 = vadd.f32 %v6693, %v6886
      %v6919 = vadd.f32 %v6694, %v6887
      %v6920 = vadd.f32 %v6695, %v6888
      %v6921 = vadd.f32 %v6696, %v6889
      %v6922 = vadd.f32 %v6697, %v6890
      %v6923 = vadd.f32 %v6698, %v6891
      %v6924 = vadd.f32 %v6699, %v6892
      %v6925 = vadd.f32 %v6700, %v6893
      %v6926 = vadd.f32 %v6701, %v6894
      %v6927 = vadd.f32 %v6702, %v6895
      %v6928 = vadd.f32 %v6703, %v6896
      %v6929 = vadd.f32 %v6704, %v6897
      %v6930 = vadd.f32 %v6705, %v6898
      %v6931 = vadd.f32 %v6706, %v6899
      %v6932 = vadd.f32 %v6707, %v6900
      %s6933 = scalar_lea.vmem %s12, 96
      %v6934 = vld [vmem:[%s6933] sm:$0x1]
      %v6935 = vld [vmem:[%s6933 + $0x1] sm:$0x1]
      %v6936 = vld [vmem:[%s6933 + $0x2] sm:$0x1]
      %v6937 = vld [vmem:[%s6933 + $0x3] sm:$0x1]
      %v6938 = vld [vmem:[%s6933 + $0x4] sm:$0x1]
      %v6939 = vld [vmem:[%s6933 + $0x5] sm:$0x1]
      %v6940 = vld [vmem:[%s6933 + $0x6] sm:$0x1]
      %v6941 = vld [vmem:[%s6933 + $0x7] sm:$0x1]
      %v6942 = vld [vmem:[%s6933 + $0x8] sm:$0x1]
      %v6943 = vld [vmem:[%s6933 + $0x9] sm:$0x1]
      %v6944 = vld [vmem:[%s6933 + $0xa] sm:$0x1]
      %v6945 = vld [vmem:[%s6933 + $0xb] sm:$0x1]
      %v6946 = vld [vmem:[%s6933 + $0xc] sm:$0x1]
      %v6947 = vld [vmem:[%s6933 + $0xd] sm:$0x1]
      %v6948 = vld [vmem:[%s6933 + $0xe] sm:$0x1]
      %v6949 = vld [vmem:[%s6933 + $0xf] sm:$0x1]
      %v6966 = vlaneseq
      %v6967 = vshrl.u32 %v6966, 7
      %v6968 = vsub.s32 0, %v6967
      %v6969 = vrot.slane %v6934, %v6968
      %v6970 = vlaneseq
      %v6971 = vshrl.u32 %v6970, 7
      %v6972 = vsub.s32 0, %v6971
      %v6973 = vrot.slane %v6935, %v6972
      %v6974 = vlaneseq
      %v6975 = vshrl.u32 %v6974, 7
      %v6976 = vsub.s32 0, %v6975
      %v6977 = vrot.slane %v6936, %v6976
      %v6978 = vlaneseq
      %v6979 = vshrl.u32 %v6978, 7
      %v6980 = vsub.s32 0, %v6979
      %v6981 = vrot.slane %v6937, %v6980
      %v6982 = vlaneseq
      %v6983 = vshrl.u32 %v6982, 7
      %v6984 = vsub.s32 0, %v6983
      %v6985 = vrot.slane %v6938, %v6984
      %v6986 = vlaneseq
      %v6987 = vshrl.u32 %v6986, 7
      %v6988 = vsub.s32 0, %v6987
      %v6989 = vrot.slane %v6939, %v6988
      %v6990 = vlaneseq
      %v6991 = vshrl.u32 %v6990, 7
      %v6992 = vsub.s32 0, %v6991
      %v6993 = vrot.slane %v6940, %v6992
      %v6994 = vlaneseq
      %v6995 = vshrl.u32 %v6994, 7
      %v6996 = vsub.s32 0, %v6995
      %v6997 = vrot.slane %v6941, %v6996
      %v6998 = vlaneseq
      %v6999 = vshrl.u32 %v6998, 7
      %v7000 = vsub.s32 0, %v6999
      %v7001 = vrot.slane %v6942, %v7000
      %v7002 = vlaneseq
      %v7003 = vshrl.u32 %v7002, 7
      %v7004 = vsub.s32 0, %v7003
      %v7005 = vrot.slane %v6943, %v7004
      %v7006 = vlaneseq
      %v7007 = vshrl.u32 %v7006, 7
      %v7008 = vsub.s32 0, %v7007
      %v7009 = vrot.slane %v6944, %v7008
      %v7010 = vlaneseq
      %v7011 = vshrl.u32 %v7010, 7
      %v7012 = vsub.s32 0, %v7011
      %v7013 = vrot.slane %v6945, %v7012
      %v7014 = vlaneseq
      %v7015 = vshrl.u32 %v7014, 7
      %v7016 = vsub.s32 0, %v7015
      %v7017 = vrot.slane %v6946, %v7016
      %v7018 = vlaneseq
      %v7019 = vshrl.u32 %v7018, 7
      %v7020 = vsub.s32 0, %v7019
      %v7021 = vrot.slane %v6947, %v7020
      %v7022 = vlaneseq
      %v7023 = vshrl.u32 %v7022, 7
      %v7024 = vsub.s32 0, %v7023
      %v7025 = vrot.slane %v6948, %v7024
      %v7026 = vlaneseq
      %v7027 = vshrl.u32 %v7026, 7
      %v7028 = vsub.s32 0, %v7027
      %v7029 = vrot.slane %v6949, %v7028
      %7030 = vset.pattern.permute.xlu0 0
      %7031 = vperm.xlu0 %7030, %v6969
      %v7032 = vpop.permute.xlu0 %7031
      %7034 = vset.pattern.permute.xlu0 0
      %7035 = vperm.xlu0 %7034, %v6973
      %v7036 = vpop.permute.xlu0 %7035
      %7038 = vset.pattern.permute.xlu0 0
      %7039 = vperm.xlu0 %7038, %v6977
      %v7040 = vpop.permute.xlu0 %7039
      %7042 = vset.pattern.permute.xlu0 0
      %7043 = vperm.xlu0 %7042, %v6981
      %v7044 = vpop.permute.xlu0 %7043
      %7046 = vset.pattern.permute.xlu0 0
      %7047 = vperm.xlu0 %7046, %v6985
      %v7048 = vpop.permute.xlu0 %7047
      %7050 = vset.pattern.permute.xlu0 0
      %7051 = vperm.xlu0 %7050, %v6989
      %v7052 = vpop.permute.xlu0 %7051
      %7054 = vset.pattern.permute.xlu0 0
      %7055 = vperm.xlu0 %7054, %v6993
      %v7056 = vpop.permute.xlu0 %7055
      %7058 = vset.pattern.permute.xlu0 0
      %7059 = vperm.xlu0 %7058, %v6997
      %v7060 = vpop.permute.xlu0 %7059
      %7062 = vset.pattern.permute.xlu0 0
      %7063 = vperm.xlu0 %7062, %v7001
      %v7064 = vpop.permute.xlu0 %7063
      %7066 = vset.pattern.permute.xlu0 0
      %7067 = vperm.xlu0 %7066, %v7005
      %v7068 = vpop.permute.xlu0 %7067
      %7070 = vset.pattern.permute.xlu0 0
      %7071 = vperm.xlu0 %7070, %v7009
      %v7072 = vpop.permute.xlu0 %7071
      %7074 = vset.pattern.permute.xlu0 0
      %7075 = vperm.xlu0 %7074, %v7013
      %v7076 = vpop.permute.xlu0 %7075
      %7078 = vset.pattern.permute.xlu0 0
      %7079 = vperm.xlu0 %7078, %v7017
      %v7080 = vpop.permute.xlu0 %7079
      %7082 = vset.pattern.permute.xlu0 0
      %7083 = vperm.xlu0 %7082, %v7021
      %v7084 = vpop.permute.xlu0 %7083
      %7086 = vset.pattern.permute.xlu0 0
      %7087 = vperm.xlu0 %7086, %v7025
      %v7088 = vpop.permute.xlu0 %7087
      %7090 = vset.pattern.permute.xlu0 0
      %7091 = vperm.xlu0 %7090, %v7029
      %v7092 = vpop.permute.xlu0 %7091
      %v7094 = vmul.f32 %v7032, %v5612
      %v7095 = vmul.f32 %v7032, %v5613
      %v7096 = vmul.f32 %v7036, %v5612
      %v7097 = vmul.f32 %v7036, %v5613
      %v7098 = vmul.f32 %v7040, %v5612
      %v7099 = vmul.f32 %v7040, %v5613
      %v7100 = vmul.f32 %v7044, %v5612
      %v7101 = vmul.f32 %v7044, %v5613
      %v7102 = vmul.f32 %v7048, %v5612
      %v7103 = vmul.f32 %v7048, %v5613
      %v7104 = vmul.f32 %v7052, %v5612
      %v7105 = vmul.f32 %v7052, %v5613
      %v7106 = vmul.f32 %v7056, %v5612
      %v7107 = vmul.f32 %v7056, %v5613
      %v7108 = vmul.f32 %v7060, %v5612
      %v7109 = vmul.f32 %v7060, %v5613
      %v7110 = vmul.f32 %v7064, %v5612
      %v7111 = vmul.f32 %v7064, %v5613
      %v7112 = vmul.f32 %v7068, %v5612
      %v7113 = vmul.f32 %v7068, %v5613
      %v7114 = vmul.f32 %v7072, %v5612
      %v7115 = vmul.f32 %v7072, %v5613
      %v7116 = vmul.f32 %v7076, %v5612
      %v7117 = vmul.f32 %v7076, %v5613
      %v7118 = vmul.f32 %v7080, %v5612
      %v7119 = vmul.f32 %v7080, %v5613
      %v7120 = vmul.f32 %v7084, %v5612
      %v7121 = vmul.f32 %v7084, %v5613
      %v7122 = vmul.f32 %v7088, %v5612
      %v7123 = vmul.f32 %v7088, %v5613
      %v7124 = vmul.f32 %v7092, %v5612
      %v7125 = vmul.f32 %v7092, %v5613
      %v7126 = vadd.f32 %v6901, %v7094
      %v7127 = vadd.f32 %v6902, %v7095
      %v7128 = vadd.f32 %v6903, %v7096
      %v7129 = vadd.f32 %v6904, %v7097
      %v7130 = vadd.f32 %v6905, %v7098
      %v7131 = vadd.f32 %v6906, %v7099
      %v7132 = vadd.f32 %v6907, %v7100
      %v7133 = vadd.f32 %v6908, %v7101
      %v7134 = vadd.f32 %v6909, %v7102
      %v7135 = vadd.f32 %v6910, %v7103
      %v7136 = vadd.f32 %v6911, %v7104
      %v7137 = vadd.f32 %v6912, %v7105
      %v7138 = vadd.f32 %v6913, %v7106
      %v7139 = vadd.f32 %v6914, %v7107
      %v7140 = vadd.f32 %v6915, %v7108
      %v7141 = vadd.f32 %v6916, %v7109
      %v7142 = vadd.f32 %v6917, %v7110
      %v7143 = vadd.f32 %v6918, %v7111
      %v7144 = vadd.f32 %v6919, %v7112
      %v7145 = vadd.f32 %v6920, %v7113
      %v7146 = vadd.f32 %v6921, %v7114
      %v7147 = vadd.f32 %v6922, %v7115
      %v7148 = vadd.f32 %v6923, %v7116
      %v7149 = vadd.f32 %v6924, %v7117
      %v7150 = vadd.f32 %v6925, %v7118
      %v7151 = vadd.f32 %v6926, %v7119
      %v7152 = vadd.f32 %v6927, %v7120
      %v7153 = vadd.f32 %v6928, %v7121
      %v7154 = vadd.f32 %v6929, %v7122
      %v7155 = vadd.f32 %v6930, %v7123
      %v7156 = vadd.f32 %v6931, %v7124
      %v7157 = vadd.f32 %v6932, %v7125
      %s7158 = scalar_lea.vmem %s12, 112
      %v7159 = vld [vmem:[%s7158] sm:$0x1]
      %v7160 = vld [vmem:[%s7158 + $0x1] sm:$0x1]
      %v7161 = vld [vmem:[%s7158 + $0x2] sm:$0x1]
      %v7162 = vld [vmem:[%s7158 + $0x3] sm:$0x1]
      %v7163 = vld [vmem:[%s7158 + $0x4] sm:$0x1]
      %v7164 = vld [vmem:[%s7158 + $0x5] sm:$0x1]
      %v7165 = vld [vmem:[%s7158 + $0x6] sm:$0x1]
      %v7166 = vld [vmem:[%s7158 + $0x7] sm:$0x1]
      %v7167 = vld [vmem:[%s7158 + $0x8] sm:$0x1]
      %v7168 = vld [vmem:[%s7158 + $0x9] sm:$0x1]
      %v7169 = vld [vmem:[%s7158 + $0xa] sm:$0x1]
      %v7170 = vld [vmem:[%s7158 + $0xb] sm:$0x1]
      %v7171 = vld [vmem:[%s7158 + $0xc] sm:$0x1]
      %v7172 = vld [vmem:[%s7158 + $0xd] sm:$0x1]
      %v7173 = vld [vmem:[%s7158 + $0xe] sm:$0x1]
      %v7174 = vld [vmem:[%s7158 + $0xf] sm:$0x1]
      %v7191 = vlaneseq
      %v7192 = vshrl.u32 %v7191, 7
      %v7193 = vsub.s32 0, %v7192
      %v7194 = vrot.slane %v7159, %v7193
      %v7195 = vlaneseq
      %v7196 = vshrl.u32 %v7195, 7
      %v7197 = vsub.s32 0, %v7196
      %v7198 = vrot.slane %v7160, %v7197
      %v7199 = vlaneseq
      %v7200 = vshrl.u32 %v7199, 7
      %v7201 = vsub.s32 0, %v7200
      %v7202 = vrot.slane %v7161, %v7201
      %v7203 = vlaneseq
      %v7204 = vshrl.u32 %v7203, 7
      %v7205 = vsub.s32 0, %v7204
      %v7206 = vrot.slane %v7162, %v7205
      %v7207 = vlaneseq
      %v7208 = vshrl.u32 %v7207, 7
      %v7209 = vsub.s32 0, %v7208
      %v7210 = vrot.slane %v7163, %v7209
      %v7211 = vlaneseq
      %v7212 = vshrl.u32 %v7211, 7
      %v7213 = vsub.s32 0, %v7212
      %v7214 = vrot.slane %v7164, %v7213
      %v7215 = vlaneseq
      %v7216 = vshrl.u32 %v7215, 7
      %v7217 = vsub.s32 0, %v7216
      %v7218 = vrot.slane %v7165, %v7217
      %v7219 = vlaneseq
      %v7220 = vshrl.u32 %v7219, 7
      %v7221 = vsub.s32 0, %v7220
      %v7222 = vrot.slane %v7166, %v7221
      %v7223 = vlaneseq
      %v7224 = vshrl.u32 %v7223, 7
      %v7225 = vsub.s32 0, %v7224
      %v7226 = vrot.slane %v7167, %v7225
      %v7227 = vlaneseq
      %v7228 = vshrl.u32 %v7227, 7
      %v7229 = vsub.s32 0, %v7228
      %v7230 = vrot.slane %v7168, %v7229
      %v7231 = vlaneseq
      %v7232 = vshrl.u32 %v7231, 7
      %v7233 = vsub.s32 0, %v7232
      %v7234 = vrot.slane %v7169, %v7233
      %v7235 = vlaneseq
      %v7236 = vshrl.u32 %v7235, 7
      %v7237 = vsub.s32 0, %v7236
      %v7238 = vrot.slane %v7170, %v7237
      %v7239 = vlaneseq
      %v7240 = vshrl.u32 %v7239, 7
      %v7241 = vsub.s32 0, %v7240
      %v7242 = vrot.slane %v7171, %v7241
      %v7243 = vlaneseq
      %v7244 = vshrl.u32 %v7243, 7
      %v7245 = vsub.s32 0, %v7244
      %v7246 = vrot.slane %v7172, %v7245
      %v7247 = vlaneseq
      %v7248 = vshrl.u32 %v7247, 7
      %v7249 = vsub.s32 0, %v7248
      %v7250 = vrot.slane %v7173, %v7249
      %v7251 = vlaneseq
      %v7252 = vshrl.u32 %v7251, 7
      %v7253 = vsub.s32 0, %v7252
      %v7254 = vrot.slane %v7174, %v7253
      %7255 = vset.pattern.permute.xlu0 0
      %7256 = vperm.xlu0 %7255, %v7194
      %v7257 = vpop.permute.xlu0 %7256
      %7259 = vset.pattern.permute.xlu0 0
      %7260 = vperm.xlu0 %7259, %v7198
      %v7261 = vpop.permute.xlu0 %7260
      %7263 = vset.pattern.permute.xlu0 0
      %7264 = vperm.xlu0 %7263, %v7202
      %v7265 = vpop.permute.xlu0 %7264
      %7267 = vset.pattern.permute.xlu0 0
      %7268 = vperm.xlu0 %7267, %v7206
      %v7269 = vpop.permute.xlu0 %7268
      %7271 = vset.pattern.permute.xlu0 0
      %7272 = vperm.xlu0 %7271, %v7210
      %v7273 = vpop.permute.xlu0 %7272
      %7275 = vset.pattern.permute.xlu0 0
      %7276 = vperm.xlu0 %7275, %v7214
      %v7277 = vpop.permute.xlu0 %7276
      %7279 = vset.pattern.permute.xlu0 0
      %7280 = vperm.xlu0 %7279, %v7218
      %v7281 = vpop.permute.xlu0 %7280
      %7283 = vset.pattern.permute.xlu0 0
      %7284 = vperm.xlu0 %7283, %v7222
      %v7285 = vpop.permute.xlu0 %7284
      %7287 = vset.pattern.permute.xlu0 0
      %7288 = vperm.xlu0 %7287, %v7226
      %v7289 = vpop.permute.xlu0 %7288
      %7291 = vset.pattern.permute.xlu0 0
      %7292 = vperm.xlu0 %7291, %v7230
      %v7293 = vpop.permute.xlu0 %7292
      %7295 = vset.pattern.permute.xlu0 0
      %7296 = vperm.xlu0 %7295, %v7234
      %v7297 = vpop.permute.xlu0 %7296
      %7299 = vset.pattern.permute.xlu0 0
      %7300 = vperm.xlu0 %7299, %v7238
      %v7301 = vpop.permute.xlu0 %7300
      %7303 = vset.pattern.permute.xlu0 0
      %7304 = vperm.xlu0 %7303, %v7242
      %v7305 = vpop.permute.xlu0 %7304
      %7307 = vset.pattern.permute.xlu0 0
      %7308 = vperm.xlu0 %7307, %v7246
      %v7309 = vpop.permute.xlu0 %7308
      %7311 = vset.pattern.permute.xlu0 0
      %7312 = vperm.xlu0 %7311, %v7250
      %v7313 = vpop.permute.xlu0 %7312
      %7315 = vset.pattern.permute.xlu0 0
      %7316 = vperm.xlu0 %7315, %v7254
      %v7317 = vpop.permute.xlu0 %7316
      %v7319 = vmul.f32 %v7257, %v5614
      %v7320 = vmul.f32 %v7257, %v5615
      %v7321 = vmul.f32 %v7261, %v5614
      %v7322 = vmul.f32 %v7261, %v5615
      %v7323 = vmul.f32 %v7265, %v5614
      %v7324 = vmul.f32 %v7265, %v5615
      %v7325 = vmul.f32 %v7269, %v5614
      %v7326 = vmul.f32 %v7269, %v5615
      %v7327 = vmul.f32 %v7273, %v5614
      %v7328 = vmul.f32 %v7273, %v5615
      %v7329 = vmul.f32 %v7277, %v5614
      %v7330 = vmul.f32 %v7277, %v5615
      %v7331 = vmul.f32 %v7281, %v5614
      %v7332 = vmul.f32 %v7281, %v5615
      %v7333 = vmul.f32 %v7285, %v5614
      %v7334 = vmul.f32 %v7285, %v5615
      %v7335 = vmul.f32 %v7289, %v5614
      %v7336 = vmul.f32 %v7289, %v5615
      %v7337 = vmul.f32 %v7293, %v5614
      %v7338 = vmul.f32 %v7293, %v5615
      %v7339 = vmul.f32 %v7297, %v5614
      %v7340 = vmul.f32 %v7297, %v5615
      %v7341 = vmul.f32 %v7301, %v5614
      %v7342 = vmul.f32 %v7301, %v5615
      %v7343 = vmul.f32 %v7305, %v5614
      %v7344 = vmul.f32 %v7305, %v5615
      %v7345 = vmul.f32 %v7309, %v5614
      %v7346 = vmul.f32 %v7309, %v5615
      %v7347 = vmul.f32 %v7313, %v5614
      %v7348 = vmul.f32 %v7313, %v5615
      %v7349 = vmul.f32 %v7317, %v5614
      %v7350 = vmul.f32 %v7317, %v5615
      %v7351 = vadd.f32 %v7126, %v7319
      %v7352 = vadd.f32 %v7127, %v7320
      %v7353 = vadd.f32 %v7128, %v7321
      %v7354 = vadd.f32 %v7129, %v7322
      %v7355 = vadd.f32 %v7130, %v7323
      %v7356 = vadd.f32 %v7131, %v7324
      %v7357 = vadd.f32 %v7132, %v7325
      %v7358 = vadd.f32 %v7133, %v7326
      %v7359 = vadd.f32 %v7134, %v7327
      %v7360 = vadd.f32 %v7135, %v7328
      %v7361 = vadd.f32 %v7136, %v7329
      %v7362 = vadd.f32 %v7137, %v7330
      %v7363 = vadd.f32 %v7138, %v7331
      %v7364 = vadd.f32 %v7139, %v7332
      %v7365 = vadd.f32 %v7140, %v7333
      %v7366 = vadd.f32 %v7141, %v7334
      %v7367 = vadd.f32 %v7142, %v7335
      %v7368 = vadd.f32 %v7143, %v7336
      %v7369 = vadd.f32 %v7144, %v7337
      %v7370 = vadd.f32 %v7145, %v7338
      %v7371 = vadd.f32 %v7146, %v7339
      %v7372 = vadd.f32 %v7147, %v7340
      %v7373 = vadd.f32 %v7148, %v7341
      %v7374 = vadd.f32 %v7149, %v7342
      %v7375 = vadd.f32 %v7150, %v7343
      %v7376 = vadd.f32 %v7151, %v7344
      %v7377 = vadd.f32 %v7152, %v7345
      %v7378 = vadd.f32 %v7153, %v7346
      %v7379 = vadd.f32 %v7154, %v7347
      %v7380 = vadd.f32 %v7155, %v7348
      %v7381 = vadd.f32 %v7156, %v7349
      %v7382 = vadd.f32 %v7157, %v7350
      %v7415 = vrot.slane %v7351, 1
      %v7416 = vrot.slane %v7352, 1
      %v7417 = vsel %vm2657, %v7415, %v7416
      %v7418 = vrot.slane %v7353, 1
      %v7419 = vrot.slane %v7354, 1
      %v7420 = vsel %vm2657, %v7418, %v7419
      %v7421 = vrot.slane %v7355, 1
      %v7422 = vrot.slane %v7356, 1
      %v7423 = vsel %vm2657, %v7421, %v7422
      %v7424 = vrot.slane %v7357, 1
      %v7425 = vrot.slane %v7358, 1
      %v7426 = vsel %vm2657, %v7424, %v7425
      %v7427 = vrot.slane %v7359, 1
      %v7428 = vrot.slane %v7360, 1
      %v7429 = vsel %vm2657, %v7427, %v7428
      %v7430 = vrot.slane %v7361, 1
      %v7431 = vrot.slane %v7362, 1
      %v7432 = vsel %vm2657, %v7430, %v7431
      %v7433 = vrot.slane %v7363, 1
      %v7434 = vrot.slane %v7364, 1
      %v7435 = vsel %vm2657, %v7433, %v7434
      %v7436 = vrot.slane %v7365, 1
      %v7437 = vrot.slane %v7366, 1
      %v7438 = vsel %vm2657, %v7436, %v7437
      %v7439 = vrot.slane %v7367, 1
      %v7440 = vrot.slane %v7368, 1
      %v7441 = vsel %vm2657, %v7439, %v7440
      %v7442 = vrot.slane %v7369, 1
      %v7443 = vrot.slane %v7370, 1
      %v7444 = vsel %vm2657, %v7442, %v7443
      %v7445 = vrot.slane %v7371, 1
      %v7446 = vrot.slane %v7372, 1
      %v7447 = vsel %vm2657, %v7445, %v7446
      %v7448 = vrot.slane %v7373, 1
      %v7449 = vrot.slane %v7374, 1
      %v7450 = vsel %vm2657, %v7448, %v7449
      %v7451 = vrot.slane %v7375, 1
      %v7452 = vrot.slane %v7376, 1
      %v7453 = vsel %vm2657, %v7451, %v7452
      %v7454 = vrot.slane %v7377, 1
      %v7455 = vrot.slane %v7378, 1
      %v7456 = vsel %vm2657, %v7454, %v7455
      %v7457 = vrot.slane %v7379, 1
      %v7458 = vrot.slane %v7380, 1
      %v7459 = vsel %vm2657, %v7457, %v7458
      %v7460 = vrot.slane %v7381, 1
      %v7461 = vrot.slane %v7382, 1
      %v7462 = vsel %vm2657, %v7460, %v7461
      %7463 = vrot.lane.b32.xlu0 %v7417, 127
      %v7464 = vpop.permute.xlu0 %7463
      %7465 = vrot.lane.b32.xlu0 %v7420, 127
      %v7466 = vpop.permute.xlu0 %7465
      %7467 = vrot.lane.b32.xlu0 %v7423, 127
      %v7468 = vpop.permute.xlu0 %7467
      %7469 = vrot.lane.b32.xlu0 %v7426, 127
      %v7470 = vpop.permute.xlu0 %7469
      %7471 = vrot.lane.b32.xlu0 %v7429, 127
      %v7472 = vpop.permute.xlu0 %7471
      %7473 = vrot.lane.b32.xlu0 %v7432, 127
      %v7474 = vpop.permute.xlu0 %7473
      %7475 = vrot.lane.b32.xlu0 %v7435, 127
      %v7476 = vpop.permute.xlu0 %7475
      %7477 = vrot.lane.b32.xlu0 %v7438, 127
      %v7478 = vpop.permute.xlu0 %7477
      %7479 = vrot.lane.b32.xlu0 %v7441, 127
      %v7480 = vpop.permute.xlu0 %7479
      %7481 = vrot.lane.b32.xlu0 %v7444, 127
      %v7482 = vpop.permute.xlu0 %7481
      %7483 = vrot.lane.b32.xlu0 %v7447, 127
      %v7484 = vpop.permute.xlu0 %7483
      %7485 = vrot.lane.b32.xlu0 %v7450, 127
      %v7486 = vpop.permute.xlu0 %7485
      %7487 = vrot.lane.b32.xlu0 %v7453, 127
      %v7488 = vpop.permute.xlu0 %7487
      %7489 = vrot.lane.b32.xlu0 %v7456, 127
      %v7490 = vpop.permute.xlu0 %7489
      %7491 = vrot.lane.b32.xlu0 %v7459, 127
      %v7492 = vpop.permute.xlu0 %7491
      %7493 = vrot.lane.b32.xlu0 %v7462, 127
      %v7494 = vpop.permute.xlu0 %7493
      %v7511 = vadd.f32 %v5408, %v7464
      %v7512 = vadd.f32 %v5409, %v7466
      %v7513 = vadd.f32 %v5410, %v7468
      %v7514 = vadd.f32 %v5411, %v7470
      %v7515 = vadd.f32 %v5412, %v7472
      %v7516 = vadd.f32 %v5413, %v7474
      %v7517 = vadd.f32 %v5414, %v7476
      %v7518 = vadd.f32 %v5415, %v7478
      %v7519 = vadd.f32 %v5416, %v7480
      %v7520 = vadd.f32 %v5417, %v7482
      %v7521 = vadd.f32 %v5418, %v7484
      %v7522 = vadd.f32 %v5419, %v7486
      %v7523 = vadd.f32 %v5420, %v7488
      %v7524 = vadd.f32 %v5421, %v7490
      %v7525 = vadd.f32 %v5422, %v7492
      %v7526 = vadd.f32 %v5423, %v7494
      %vm7527 = vcmask 64512
      %7528 = vst.msk [vmem:[%s440] sm:$0xff] %vm7527, %v7511
      %7529 = vst.msk [vmem:[%s440 + $0x8] sm:$0xff] %vm7527, %v7512
      %7530 = vst.msk [vmem:[%s440 + $0x10] sm:$0xff] %vm7527, %v7513
      %7531 = vst.msk [vmem:[%s440 + $0x18] sm:$0xff] %vm7527, %v7514
      %7532 = vst.msk [vmem:[%s440 + $0x20] sm:$0xff] %vm7527, %v7515
      %7533 = vst.msk [vmem:[%s440 + $0x28] sm:$0xff] %vm7527, %v7516
      %7534 = vst.msk [vmem:[%s440 + $0x30] sm:$0xff] %vm7527, %v7517
      %7535 = vst.msk [vmem:[%s440 + $0x38] sm:$0xff] %vm7527, %v7518
      %7536 = vst.msk [vmem:[%s440 + $0x40] sm:$0xff] %vm7527, %v7519
      %7537 = vst.msk [vmem:[%s440 + $0x48] sm:$0xff] %vm7527, %v7520
      %7538 = vst.msk [vmem:[%s440 + $0x50] sm:$0xff] %vm7527, %v7521
      %7539 = vst.msk [vmem:[%s440 + $0x58] sm:$0xff] %vm7527, %v7522
      %7540 = vst.msk [vmem:[%s440 + $0x60] sm:$0xff] %vm7527, %v7523
      %7541 = vst.msk [vmem:[%s440 + $0x68] sm:$0xff] %vm7527, %v7524
      %7542 = vst.msk [vmem:[%s440 + $0x70] sm:$0xff] %vm7527, %v7525
      %7543 = vst.msk [vmem:[%s440 + $0x78] sm:$0xff] %vm7527, %v7526
      %p7544 = scmp.lt.s32.totalorder %s24, 1
      %s7545 = scalar_select %p7544, %s24, 1
      %s7546 = smul.addr %s7545, 16
      %s7547 = smul.addr %s7546, 8
      %s7548 = scalar_lea.vmem %s13, %s7547
      // Predicated region
      $region73: #{preact_bottleneck_forward.1} parent=71 // pred_check
        %p7549 = pneg %p320
      $region74: #{preact_bottleneck_forward.1} parent=71 // pred_check_branch
        %7551 = sbr.rel (%p7549) target = $region76
      $region75: #{preact_bottleneck_forward.1} parent=71 // pred_region
        _
      $region76: #{preact_bottleneck_forward.1} parent=71 // pred_fallthru
        _
    $region72: #{preact_bottleneck_forward.1} parent=5 // pred_fallthru
      _
    %p7552 = scmp.le.s32.totalorder 2, %s19
    // Predicated region
    $region77: #{preact_bottleneck_forward.1} parent=5 // pred_check
      %p7553 = pneg %p7552
    $region78: #{preact_bottleneck_forward.1} parent=5 // pred_check_branch
      %7555 = sbr.rel (%p7553) target = $region80
    $region79: #{preact_bottleneck_forward.1} parent=5 // pred_region
      %s7556 = ssub.s32 %s19, 2
      // Predicated region
      $region81: #{preact_bottleneck_forward.1} parent=79 // pred_check
        %p7557 = pneg %p326
      $region82: #{preact_bottleneck_forward.1} parent=79 // pred_check_branch
        %7559 = sbr.rel (%p7557) target = $region84
      $region83: #{preact_bottleneck_forward.1} parent=79 // pred_region
        %p7560 = scmp.lt.s32.totalorder %s25, 1
        %s7561 = scalar_select %p7560, %s25, 1
        %s7562 = smul.addr %s7561, 16
        %s7563 = smul.addr %s7562, 8
        %s7564 = scalar_lea.vmem %s13, %s7563
      $region84: #{preact_bottleneck_forward.1} parent=79 // pred_fallthru
        _
    $region80: #{preact_bottleneck_forward.1} parent=5 // pred_fallthru
      _
  $region6: #{preact_bottleneck_forward.1} parent=0 // loop_footer
    %s23 = sadd.s32 1, %s19
  $region7: #{preact_bottleneck_forward.1} parent=0 // loop_footer_branch
    %18 = sbr.rel target = $region3
  $region8: #{preact_bottleneck_forward.1} parent=0 // loop_exit
    _

</llo_original>
